<compile_context>
chip_gen: v5e
topology: v5e:2x2
jax: 0.10.0
libtpu: 0.0.40
codegen_flags: <defaults>
</compile_context>

<pallas_src>
import functools

import jax
import jax.numpy as jnp
from jax import lax
from jax.experimental import pallas as pl
from jax.experimental.pallas import tpu as pltpu


def _tap_slice(x_ref, k, dilation, stride, t_out):
    """Static per-tap temporal window of the padded input block."""
    start = k * dilation
    if stride == 1:
        return x_ref[:, start:start + t_out, :, :]
    return x_ref[:, pl.ds(start, t_out, stride), :, :]


def _stats_kernel(x_ref, w_ref, sum_ref, sq_ref, acc_ref, *,
                  kernel_k, dilation, stride, t_out):
    """Pass 1: bias-free conv into VMEM scratch, emit per-block channel stats.

    x_ref:   (g, T_pad, V, C_in)   temporally padded input (compute dtype)
    w_ref:   (K, C_in, C_pad)      per-tap weights, channel-padded
    sum_ref: (1, 1, C_pad)         per-block channel sum of conv output
    sq_ref:  (1, 1, C_pad)         per-block channel sum of squares
    acc_ref: (rows, C_pad) f32     VMEM scratch holding the conv output
    """
    g, _, v, c_in = x_ref.shape
    rows, c_pad = acc_ref.shape

    x0 = _tap_slice(x_ref, 0, dilation, stride, t_out).reshape(rows, c_in)
    acc_ref[...] = jnp.dot(x0, w_ref[0], preferred_element_type=jnp.float32)
    for k in range(1, kernel_k):
        xk = _tap_slice(x_ref, k, dilation, stride, t_out).reshape(rows, c_in)
        acc_ref[...] += jnp.dot(xk, w_ref[k],
                                preferred_element_type=jnp.float32)

    y = acc_ref[...]
    sum_ref[...] = jnp.sum(y, axis=0).reshape(1, 1, c_pad)
    sq_ref[...] = jnp.sum(y * y, axis=0).reshape(1, 1, c_pad)


def _conv_bn_kernel(x_ref, w_ref, shift_ref, o_ref, *,
                    kernel_k, dilation, stride, t_out):
    """Pass 2: conv with BN-scaled weights + folded shift, single HBM write.

    x_ref:     (g, T_pad, V, C_in)
    w_ref:     (K, C_in, C_pad)   weights already multiplied by BN scale
    shift_ref: (1, C_pad)         folded per-channel shift (f32)
    o_ref:     (rows, C_pad) f32  final (channel-padded) output block
    """
    g, _, v, c_in = x_ref.shape
    rows, c_pad = o_ref.shape

    x0 = _tap_slice(x_ref, 0, dilation, stride, t_out).reshape(rows, c_in)
    o_ref[...] = (jnp.broadcast_to(shift_ref[...], (rows, c_pad))
                  + jnp.dot(x0, w_ref[0], preferred_element_type=jnp.float32))
    for k in range(1, kernel_k):
        xk = _tap_slice(x_ref, k, dilation, stride, t_out).reshape(rows, c_in)
        o_ref[...] += jnp.dot(xk, w_ref[k],
                              preferred_element_type=jnp.float32)


def _pick_group(n, rows_per_sample, target_rows=1024, max_rows=4096):
    """Largest divisor g of n giving a VMEM-friendly row block.

    Row blocks must be a multiple of 8 (sublane constraint) unless a single
    block covers the whole batch. Bigger blocks amortize per-step overhead.
    """
    best = None
    for cand in range(1, n + 1):
        if n % cand:
            continue
        rows = cand * rows_per_sample
        if rows % 8 != 0 and cand != n:
            continue
        if best is None or rows <= max_rows:
            best = cand
        if rows >= target_rows and best is not None:
            break
    return best if best is not None else n


def t_lsu_forward(x, conv_w, conv_b, bn_gamma, bn_beta, *,
                  kernel_size=9, stride=1, dilation=1, autopad=True,
                  eps=1e-5, compute_dtype=jnp.float32):
    """Forward of T_LSU: BatchNorm2d(Conv2d(x)) with kernel (K, 1).

    x:       (N, C_in, T, V)  float32, NCHW (PyTorch convention)
    conv_w:  (C_out, C_in, K, 1)
    conv_b:  (C_out,)
    bn_gamma, bn_beta: (C_out,)
    returns: (N, C_out, T_out, V) float32
    """
    N, C_in, T, V = x.shape
    C_out = conv_w.shape[0]
    K = kernel_size
    pad = int((K - 1) * dilation // 2) if autopad else 0
    T_out = (T + 2 * pad - dilation * (K - 1) - 1) // stride + 1

    LANE = 128
    C_pad = ((C_out + LANE - 1) // LANE) * LANE

    # ---- layout prep (one cheap XLA pass over the small input) -------------
    # NCHW -> (N, T, V, C_in), zero-pad the temporal axis on both sides.
    x_r = jnp.transpose(x, (0, 2, 3, 1)).astype(jnp.float32)
    x_r = jnp.pad(x_r, ((0, 0), (pad, pad), (0, 0), (0, 0)))
    T_pad_len = T + 2 * pad
    x_r = x_r.astype(compute_dtype)

    # weights: (C_out, C_in, K, 1) -> (K, C_in, C_pad), zero-padded channels.
    w_f32 = jnp.transpose(conv_w[..., 0].astype(jnp.float32), (2, 1, 0))
    w_f32 = jnp.pad(w_f32, ((0, 0), (0, 0), (0, C_pad - C_out)))
    w_a = w_f32.astype(compute_dtype)

    rows_per_sample = T_out * V
    g = _pick_group(N, rows_per_sample)
    n_blocks = N // g
    rows_blk = g * rows_per_sample
    M = N * rows_per_sample

    x_spec = pl.BlockSpec((g, T_pad_len, V, C_in), lambda i: (i, 0, 0, 0))
    w_spec = pl.BlockSpec((K, C_in, C_pad), lambda i: (0, 0, 0))

    # ---- pass 1: conv in VMEM, emit per-block channel stats only -----------
    kern_a = functools.partial(_stats_kernel, kernel_k=K, dilation=dilation,
                               stride=stride, t_out=T_out)
    psum, psq = pl.pallas_call(
        kern_a,
        out_shape=(jax.ShapeDtypeStruct((n_blocks, 1, C_pad), jnp.float32),
                   jax.ShapeDtypeStruct((n_blocks, 1, C_pad), jnp.float32)),
        grid_spec=pltpu.PrefetchScalarGridSpec(
            num_scalar_prefetch=0,
            grid=(n_blocks,),
            in_specs=[x_spec, w_spec],
            out_specs=[pl.BlockSpec((1, 1, C_pad), lambda i: (i, 0, 0)),
                       pl.BlockSpec((1, 1, C_pad), lambda i: (i, 0, 0))],
            scratch_shapes=[pltpu.VMEM((rows_blk, C_pad), jnp.float32)]),
        compiler_params=pltpu.CompilerParams(
            dimension_semantics=("parallel",)),
    )(x_r, w_a)

    # ---- tiny JAX: fold train-mode BN into the conv weights / a shift ------
    mean = jnp.sum(psum, axis=(0, 1)) / M                     # bias-free mean
    var = jnp.maximum(jnp.sum(psq, axis=(0, 1)) / M - mean * mean, 0.0)
    gamma_p = jnp.pad(bn_gamma.astype(jnp.float32), (0, C_pad - C_out))
    beta_p = jnp.pad(bn_beta.astype(jnp.float32), (0, C_pad - C_out))
    b_pad = jnp.pad(conv_b.astype(jnp.float32), (0, C_pad - C_out))
    scale = gamma_p * lax.rsqrt(var + eps)
    # conv bias cancels under batch-stat BN: shift == beta - mean * scale.
    mean_y = mean + b_pad
    shift = beta_p + (b_pad - mean_y) * scale
    w_b = (w_f32 * scale.reshape(1, 1, C_pad)).astype(compute_dtype)
    shift_row = shift.reshape(1, C_pad)

    # ---- pass 2: conv with folded weights, lane-dense single write ---------
    kern_b = functools.partial(_conv_bn_kernel, kernel_k=K, dilation=dilation,
                               stride=stride, t_out=T_out)
    y = pl.pallas_call(
        kern_b,
        out_shape=jax.ShapeDtypeStruct((M, C_pad), jnp.float32),
        grid_spec=pltpu.PrefetchScalarGridSpec(
            num_scalar_prefetch=0,
            grid=(n_blocks,),
            in_specs=[x_spec, w_spec,
                      pl.BlockSpec((1, C_pad), lambda i: (0, 0))],
            out_specs=pl.BlockSpec((rows_blk, C_pad), lambda i: (i, 0))),
        compiler_params=pltpu.CompilerParams(
            dimension_semantics=("parallel",)),
    )(x_r, w_b, shift_row)

    # strip channel padding, back to NCHW (single small fused XLA pass).
    out = y[:, :C_out].reshape(N, T_out, V, C_out).transpose(0, 3, 1, 2)
    return out


def _reference_forward(x, conv_w, conv_b, bn_gamma, bn_beta, *,
                       kernel_size, stride, dilation, autopad, eps=1e-5):
    """Pure-JAX reference (mirrors PyTorch Conv2d + train-mode BatchNorm2d)."""
    K = kernel_size
    pad = int((K - 1) * dilation // 2) if autopad else 0
    y = lax.conv_general_dilated(
        x, conv_w, window_strides=(stride, 1),
        padding=[(pad, pad), (0, 0)],
        rhs_dilation=(dilation, 1),
        dimension_numbers=('NCHW', 'OIHW', 'NCHW'))
    y = y + conv_b.reshape(1, -1, 1, 1)
    mean = jnp.mean(y, axis=(0, 2, 3), keepdims=True)
    var = jnp.mean((y - mean) ** 2, axis=(0, 2, 3), keepdims=True)
    y = (y - mean) * lax.rsqrt(var + eps)
    return y * bn_gamma.reshape(1, -1, 1, 1) + bn_beta.reshape(1, -1, 1, 1)


if __name__ == "__main__":
    # small shapes consistent with the module's (N, C, T, V) usage
    N, C_in, C_out, T, V = 2, 4, 8, 16, 16
    K, stride, dilation, autopad = 9, 1, 1, True

    key = jax.random.PRNGKey(0)
    kx, kw = jax.random.split(key)

    x = jax.random.normal(kx, (N, C_in, T, V), dtype=jnp.float32)

    # deterministic parameter init matching the module's __init__:
    #   conv: kaiming_normal_(mode='fan_out') -> N(0, 2/(C_out*K*1)); bias = 0
    #   bn:   weight = 1, bias = 0
    fan_out = C_out * K * 1
    conv_w = (jax.random.normal(kw, (C_out, C_in, K, 1), dtype=jnp.float32)
              * jnp.sqrt(2.0 / fan_out))
    conv_b = jnp.zeros((C_out,), dtype=jnp.float32)
    bn_gamma = jnp.ones((C_out,), dtype=jnp.float32)
    bn_beta = jnp.zeros((C_out,), dtype=jnp.float32)

    ref = _reference_forward(x, conv_w, conv_b, bn_gamma, bn_beta,
                             kernel_size=K, stride=stride,
                             dilation=dilation, autopad=autopad)

    # f32 path: must match the PyTorch-equivalent reference tightly.
    fwd = functools.partial(t_lsu_forward, kernel_size=K, stride=stride,
                            dilation=dilation, autopad=autopad,
                            compute_dtype=jnp.float32)
    out = jax.block_until_ready(jax.jit(fwd)(x, conv_w, conv_b,
                                             bn_gamma, bn_beta))
    assert out.shape == (N, C_out, T, V), out.shape
    assert jnp.allclose(out, ref, atol=1e-4, rtol=1e-4), \
        float(jnp.max(jnp.abs(out - ref)))

    # bf16 matmul-input path (halves activation read bandwidth); f32 accum,
    # stats and BN math -> only small rounding error vs the f32 reference.
    fwd_bf16 = functools.partial(t_lsu_forward, kernel_size=K, stride=stride,
                                 dilation=dilation, autopad=autopad,
                                 compute_dtype=jnp.bfloat16)
    out_bf16 = jax.block_until_ready(jax.jit(fwd_bf16)(x, conv_w, conv_b,
                                                       bn_gamma, bn_beta))
    assert jnp.allclose(out_bf16, ref, atol=5e-2, rtol=5e-2), \
        float(jnp.max(jnp.abs(out_bf16 - ref)))

    print("KERNEL_OK")
</pallas_src>

<mosaic_0001>
module attributes {stable_mosaic.version = 11 : i64} {
  func.func @_stats_kernel(%arg0: i32, %arg1: memref<2x24x16x4xf32, #tpu.memory_space<vmem>>, %arg2: memref<9x4x128xf32, #tpu.memory_space<vmem>>, %arg3: memref<1x1x128xf32, #tpu.memory_space<vmem>>, %arg4: memref<1x1x128xf32, #tpu.memory_space<vmem>>, %arg5: memref<512x128xf32, #tpu.memory_space<vmem>>) attributes {dimension_semantics = [#tpu.dimension_semantics<parallel>], iteration_bounds = array<i64: 1>, scalar_prefetch = 0 : i64, scratch_operands = 1 : i64, tpu.core_type = #tpu.core_type<tc>, window_params = [{transform_indices = @transform_0, window_bounds = array<i64: 2, 24, 16, 4>}, {pipeline_mode = #tpu.pipeline_mode<synchronous>, transform_indices = @transform_1, window_bounds = array<i64: 9, 4, 128>}, {transform_indices = @transform_2, window_bounds = array<i64: 1, 1, 128>}, {transform_indices = @transform_3, window_bounds = array<i64: 1, 1, 128>}]} {
    %c0 = arith.constant 0 : index
    %c0_0 = arith.constant 0 : index
    %c0_1 = arith.constant 0 : index
    %c0_2 = arith.constant 0 : index
    %0 = vector.load %arg1[%c0, %c0_0, %c0_1, %c0_2] : memref<2x24x16x4xf32, #tpu.memory_space<vmem>>, vector<2x16x16x4xf32>
    %1 = vector.shape_cast %0 : vector<2x16x16x4xf32> to vector<512x4xf32>
    %c0_3 = arith.constant 0 : index
    %c0_4 = arith.constant 0 : index
    %c0_5 = arith.constant 0 : index
    %2 = vector.load %arg2[%c0_3, %c0_4, %c0_5] : memref<9x4x128xf32, #tpu.memory_space<vmem>>, vector<1x4x128xf32>
    %3 = vector.shape_cast %2 : vector<1x4x128xf32> to vector<4x128xf32>
    %cst = arith.constant dense<0.000000e+00> : vector<512x128xf32>
    %4 = tpu.matmul %1, %3, %cst {dimension_numbers = #tpu.dot_dimension_numbers<[1], [0], [0], [1], [0, 0, 1, 1], [], []>} : vector<512x4xf32>, vector<4x128xf32>, vector<512x128xf32> -> vector<512x128xf32>
    %c0_6 = arith.constant 0 : index
    %c0_7 = arith.constant 0 : index
    %5 = vector.load %arg5[%c0_6, %c0_7] : memref<512x128xf32, #tpu.memory_space<vmem>>, vector<512x128xf32>
    tpu.vector_store %arg5[%c0_6, %c0_7], %4 {strides = array<i32>} : memref<512x128xf32, #tpu.memory_space<vmem>>, vector<512x128xf32>,
    %c0_8 = arith.constant 0 : index
    %c1 = arith.constant 1 : index
    %c0_9 = arith.constant 0 : index
    %c0_10 = arith.constant 0 : index
    %6 = vector.load %arg1[%c0_8, %c1, %c0_9, %c0_10] : memref<2x24x16x4xf32, #tpu.memory_space<vmem>>, vector<2x16x16x4xf32>
    %7 = vector.shape_cast %6 : vector<2x16x16x4xf32> to vector<512x4xf32>
    %c0_11 = arith.constant 0 : index
    %c0_12 = arith.constant 0 : index
    %8 = vector.load %arg5[%c0_11, %c0_12] : memref<512x128xf32, #tpu.memory_space<vmem>>, vector<512x128xf32>
    %c1_13 = arith.constant 1 : index
    %c0_14 = arith.constant 0 : index
    %c0_15 = arith.constant 0 : index
    %9 = vector.load %arg2[%c1_13, %c0_14, %c0_15] : memref<9x4x128xf32, #tpu.memory_space<vmem>>, vector<1x4x128xf32>
    %10 = vector.shape_cast %9 : vector<1x4x128xf32> to vector<4x128xf32>
    %cst_16 = arith.constant dense<0.000000e+00> : vector<512x128xf32>
    %11 = tpu.matmul %7, %10, %cst_16 {dimension_numbers = #tpu.dot_dimension_numbers<[1], [0], [0], [1], [0, 0, 1, 1], [], []>} : vector<512x4xf32>, vector<4x128xf32>, vector<512x128xf32> -> vector<512x128xf32>
    %12 = arith.addf %8, %11 : vector<512x128xf32>
    %c0_17 = arith.constant 0 : index
    %c0_18 = arith.constant 0 : index
    %13 = vector.load %arg5[%c0_17, %c0_18] : memref<512x128xf32, #tpu.memory_space<vmem>>, vector<512x128xf32>
    tpu.vector_store %arg5[%c0_17, %c0_18], %12 {strides = array<i32>} : memref<512x128xf32, #tpu.memory_space<vmem>>, vector<512x128xf32>,
    %c0_19 = arith.constant 0 : index
    %c2 = arith.constant 2 : index
    %c0_20 = arith.constant 0 : index
    %c0_21 = arith.constant 0 : index
    %14 = vector.load %arg1[%c0_19, %c2, %c0_20, %c0_21] : memref<2x24x16x4xf32, #tpu.memory_space<vmem>>, vector<2x16x16x4xf32>
    %15 = vector.shape_cast %14 : vector<2x16x16x4xf32> to vector<512x4xf32>
    %c0_22 = arith.constant 0 : index
    %c0_23 = arith.constant 0 : index
    %16 = vector.load %arg5[%c0_22, %c0_23] : memref<512x128xf32, #tpu.memory_space<vmem>>, vector<512x128xf32>
    %c2_24 = arith.constant 2 : index
    %c0_25 = arith.constant 0 : index
    %c0_26 = arith.constant 0 : index
    %17 = vector.load %arg2[%c2_24, %c0_25, %c0_26] : memref<9x4x128xf32, #tpu.memory_space<vmem>>, vector<1x4x128xf32>
    %18 = vector.shape_cast %17 : vector<1x4x128xf32> to vector<4x128xf32>
    %cst_27 = arith.constant dense<0.000000e+00> : vector<512x128xf32>
    %19 = tpu.matmul %15, %18, %cst_27 {dimension_numbers = #tpu.dot_dimension_numbers<[1], [0], [0], [1], [0, 0, 1, 1], [], []>} : vector<512x4xf32>, vector<4x128xf32>, vector<512x128xf32> -> vector<512x128xf32>
    %20 = arith.addf %16, %19 : vector<512x128xf32>
    %c0_28 = arith.constant 0 : index
    %c0_29 = arith.constant 0 : index
    %21 = vector.load %arg5[%c0_28, %c0_29] : memref<512x128xf32, #tpu.memory_space<vmem>>, vector<512x128xf32>
    tpu.vector_store %arg5[%c0_28, %c0_29], %20 {strides = array<i32>} : memref<512x128xf32, #tpu.memory_space<vmem>>, vector<512x128xf32>,
    %c0_30 = arith.constant 0 : index
    %c3 = arith.constant 3 : index
    %c0_31 = arith.constant 0 : index
    %c0_32 = arith.constant 0 : index
    %22 = vector.load %arg1[%c0_30, %c3, %c0_31, %c0_32] : memref<2x24x16x4xf32, #tpu.memory_space<vmem>>, vector<2x16x16x4xf32>
    %23 = vector.shape_cast %22 : vector<2x16x16x4xf32> to vector<512x4xf32>
    %c0_33 = arith.constant 0 : index
    %c0_34 = arith.constant 0 : index
    %24 = vector.load %arg5[%c0_33, %c0_34] : memref<512x128xf32, #tpu.memory_space<vmem>>, vector<512x128xf32>
    %c3_35 = arith.constant 3 : index
    %c0_36 = arith.constant 0 : index
    %c0_37 = arith.constant 0 : index
    %25 = vector.load %arg2[%c3_35, %c0_36, %c0_37] : memref<9x4x128xf32, #tpu.memory_space<vmem>>, vector<1x4x128xf32>
    %26 = vector.shape_cast %25 : vector<1x4x128xf32> to vector<4x128xf32>
    %cst_38 = arith.constant dense<0.000000e+00> : vector<512x128xf32>
    %27 = tpu.matmul %23, %26, %cst_38 {dimension_numbers = #tpu.dot_dimension_numbers<[1], [0], [0], [1], [0, 0, 1, 1], [], []>} : vector<512x4xf32>, vector<4x128xf32>, vector<512x128xf32> -> vector<512x128xf32>
    %28 = arith.addf %24, %27 : vector<512x128xf32>
    %c0_39 = arith.constant 0 : index
    %c0_40 = arith.constant 0 : index
    %29 = vector.load %arg5[%c0_39, %c0_40] : memref<512x128xf32, #tpu.memory_space<vmem>>, vector<512x128xf32>
    tpu.vector_store %arg5[%c0_39, %c0_40], %28 {strides = array<i32>} : memref<512x128xf32, #tpu.memory_space<vmem>>, vector<512x128xf32>,
    %c0_41 = arith.constant 0 : index
    %c4 = arith.constant 4 : index
    %c0_42 = arith.constant 0 : index
    %c0_43 = arith.constant 0 : index
    %30 = vector.load %arg1[%c0_41, %c4, %c0_42, %c0_43] : memref<2x24x16x4xf32, #tpu.memory_space<vmem>>, vector<2x16x16x4xf32>
    %31 = vector.shape_cast %30 : vector<2x16x16x4xf32> to vector<512x4xf32>
    %c0_44 = arith.constant 0 : index
    %c0_45 = arith.constant 0 : index
    %32 = vector.load %arg5[%c0_44, %c0_45] : memref<512x128xf32, #tpu.memory_space<vmem>>, vector<512x128xf32>
    %c4_46 = arith.constant 4 : index
    %c0_47 = arith.constant 0 : index
    %c0_48 = arith.constant 0 : index
    %33 = vector.load %arg2[%c4_46, %c0_47, %c0_48] : memref<9x4x128xf32, #tpu.memory_space<vmem>>, vector<1x4x128xf32>
    %34 = vector.shape_cast %33 : vector<1x4x128xf32> to vector<4x128xf32>
    %cst_49 = arith.constant dense<0.000000e+00> : vector<512x128xf32>
    %35 = tpu.matmul %31, %34, %cst_49 {dimension_numbers = #tpu.dot_dimension_numbers<[1], [0], [0], [1], [0, 0, 1, 1], [], []>} : vector<512x4xf32>, vector<4x128xf32>, vector<512x128xf32> -> vector<512x128xf32>
    %36 = arith.addf %32, %35 : vector<512x128xf32>
    %c0_50 = arith.constant 0 : index
    %c0_51 = arith.constant 0 : index
    %37 = vector.load %arg5[%c0_50, %c0_51] : memref<512x128xf32, #tpu.memory_space<vmem>>, vector<512x128xf32>
    tpu.vector_store %arg5[%c0_50, %c0_51], %36 {strides = array<i32>} : memref<512x128xf32, #tpu.memory_space<vmem>>, vector<512x128xf32>,
    %c0_52 = arith.constant 0 : index
    %c5 = arith.constant 5 : index
    %c0_53 = arith.constant 0 : index
    %c0_54 = arith.constant 0 : index
    %38 = vector.load %arg1[%c0_52, %c5, %c0_53, %c0_54] : memref<2x24x16x4xf32, #tpu.memory_space<vmem>>, vector<2x16x16x4xf32>
    %39 = vector.shape_cast %38 : vector<2x16x16x4xf32> to vector<512x4xf32>
    %c0_55 = arith.constant 0 : index
    %c0_56 = arith.constant 0 : index
    %40 = vector.load %arg5[%c0_55, %c0_56] : memref<512x128xf32, #tpu.memory_space<vmem>>, vector<512x128xf32>
    %c5_57 = arith.constant 5 : index
    %c0_58 = arith.constant 0 : index
    %c0_59 = arith.constant 0 : index
    %41 = vector.load %arg2[%c5_57, %c0_58, %c0_59] : memref<9x4x128xf32, #tpu.memory_space<vmem>>, vector<1x4x128xf32>
    %42 = vector.shape_cast %41 : vector<1x4x128xf32> to vector<4x128xf32>
    %cst_60 = arith.constant dense<0.000000e+00> : vector<512x128xf32>
    %43 = tpu.matmul %39, %42, %cst_60 {dimension_numbers = #tpu.dot_dimension_numbers<[1], [0], [0], [1], [0, 0, 1, 1], [], []>} : vector<512x4xf32>, vector<4x128xf32>, vector<512x128xf32> -> vector<512x128xf32>
    %44 = arith.addf %40, %43 : vector<512x128xf32>
    %c0_61 = arith.constant 0 : index
    %c0_62 = arith.constant 0 : index
    %45 = vector.load %arg5[%c0_61, %c0_62] : memref<512x128xf32, #tpu.memory_space<vmem>>, vector<512x128xf32>
    tpu.vector_store %arg5[%c0_61, %c0_62], %44 {strides = array<i32>} : memref<512x128xf32, #tpu.memory_space<vmem>>, vector<512x128xf32>,
    %c0_63 = arith.constant 0 : index
    %c6 = arith.constant 6 : index
    %c0_64 = arith.constant 0 : index
    %c0_65 = arith.constant 0 : index
    %46 = vector.load %arg1[%c0_63, %c6, %c0_64, %c0_65] : memref<2x24x16x4xf32, #tpu.memory_space<vmem>>, vector<2x16x16x4xf32>
    %47 = vector.shape_cast %46 : vector<2x16x16x4xf32> to vector<512x4xf32>
    %c0_66 = arith.constant 0 : index
    %c0_67 = arith.constant 0 : index
    %48 = vector.load %arg5[%c0_66, %c0_67] : memref<512x128xf32, #tpu.memory_space<vmem>>, vector<512x128xf32>
    %c6_68 = arith.constant 6 : index
    %c0_69 = arith.constant 0 : index
    %c0_70 = arith.constant 0 : index
    %49 = vector.load %arg2[%c6_68, %c0_69, %c0_70] : memref<9x4x128xf32, #tpu.memory_space<vmem>>, vector<1x4x128xf32>
    %50 = vector.shape_cast %49 : vector<1x4x128xf32> to vector<4x128xf32>
    %cst_71 = arith.constant dense<0.000000e+00> : vector<512x128xf32>
    %51 = tpu.matmul %47, %50, %cst_71 {dimension_numbers = #tpu.dot_dimension_numbers<[1], [0], [0], [1], [0, 0, 1, 1], [], []>} : vector<512x4xf32>, vector<4x128xf32>, vector<512x128xf32> -> vector<512x128xf32>
    %52 = arith.addf %48, %51 : vector<512x128xf32>
    %c0_72 = arith.constant 0 : index
    %c0_73 = arith.constant 0 : index
    %53 = vector.load %arg5[%c0_72, %c0_73] : memref<512x128xf32, #tpu.memory_space<vmem>>, vector<512x128xf32>
    tpu.vector_store %arg5[%c0_72, %c0_73], %52 {strides = array<i32>} : memref<512x128xf32, #tpu.memory_space<vmem>>, vector<512x128xf32>,
    %c0_74 = arith.constant 0 : index
    %c7 = arith.constant 7 : index
    %c0_75 = arith.constant 0 : index
    %c0_76 = arith.constant 0 : index
    %54 = vector.load %arg1[%c0_74, %c7, %c0_75, %c0_76] : memref<2x24x16x4xf32, #tpu.memory_space<vmem>>, vector<2x16x16x4xf32>
    %55 = vector.shape_cast %54 : vector<2x16x16x4xf32> to vector<512x4xf32>
    %c0_77 = arith.constant 0 : index
    %c0_78 = arith.constant 0 : index
    %56 = vector.load %arg5[%c0_77, %c0_78] : memref<512x128xf32, #tpu.memory_space<vmem>>, vector<512x128xf32>
    %c7_79 = arith.constant 7 : index
    %c0_80 = arith.constant 0 : index
    %c0_81 = arith.constant 0 : index
    %57 = vector.load %arg2[%c7_79, %c0_80, %c0_81] : memref<9x4x128xf32, #tpu.memory_space<vmem>>, vector<1x4x128xf32>
    %58 = vector.shape_cast %57 : vector<1x4x128xf32> to vector<4x128xf32>
    %cst_82 = arith.constant dense<0.000000e+00> : vector<512x128xf32>
    %59 = tpu.matmul %55, %58, %cst_82 {dimension_numbers = #tpu.dot_dimension_numbers<[1], [0], [0], [1], [0, 0, 1, 1], [], []>} : vector<512x4xf32>, vector<4x128xf32>, vector<512x128xf32> -> vector<512x128xf32>
    %60 = arith.addf %56, %59 : vector<512x128xf32>
    %c0_83 = arith.constant 0 : index
    %c0_84 = arith.constant 0 : index
    %61 = vector.load %arg5[%c0_83, %c0_84] : memref<512x128xf32, #tpu.memory_space<vmem>>, vector<512x128xf32>
    tpu.vector_store %arg5[%c0_83, %c0_84], %60 {strides = array<i32>} : memref<512x128xf32, #tpu.memory_space<vmem>>, vector<512x128xf32>,
    %c0_85 = arith.constant 0 : index
    %c8 = arith.constant 8 : index
    %c0_86 = arith.constant 0 : index
    %c0_87 = arith.constant 0 : index
    %62 = vector.load %arg1[%c0_85, %c8, %c0_86, %c0_87] : memref<2x24x16x4xf32, #tpu.memory_space<vmem>>, vector<2x16x16x4xf32>
    %63 = vector.shape_cast %62 : vector<2x16x16x4xf32> to vector<512x4xf32>
    %c0_88 = arith.constant 0 : index
    %c0_89 = arith.constant 0 : index
    %64 = vector.load %arg5[%c0_88, %c0_89] : memref<512x128xf32, #tpu.memory_space<vmem>>, vector<512x128xf32>
    %c8_90 = arith.constant 8 : index
    %c0_91 = arith.constant 0 : index
    %c0_92 = arith.constant 0 : index
    %65 = vector.load %arg2[%c8_90, %c0_91, %c0_92] : memref<9x4x128xf32, #tpu.memory_space<vmem>>, vector<1x4x128xf32>
    %66 = vector.shape_cast %65 : vector<1x4x128xf32> to vector<4x128xf32>
    %cst_93 = arith.constant dense<0.000000e+00> : vector<512x128xf32>
    %67 = tpu.matmul %63, %66, %cst_93 {dimension_numbers = #tpu.dot_dimension_numbers<[1], [0], [0], [1], [0, 0, 1, 1], [], []>} : vector<512x4xf32>, vector<4x128xf32>, vector<512x128xf32> -> vector<512x128xf32>
    %68 = arith.addf %64, %67 : vector<512x128xf32>
    %c0_94 = arith.constant 0 : index
    %c0_95 = arith.constant 0 : index
    %69 = vector.load %arg5[%c0_94, %c0_95] : memref<512x128xf32, #tpu.memory_space<vmem>>, vector<512x128xf32>
    tpu.vector_store %arg5[%c0_94, %c0_95], %68 {strides = array<i32>} : memref<512x128xf32, #tpu.memory_space<vmem>>, vector<512x128xf32>,
    %c0_96 = arith.constant 0 : index
    %c0_97 = arith.constant 0 : index
    %70 = vector.load %arg5[%c0_96, %c0_97] : memref<512x128xf32, #tpu.memory_space<vmem>>, vector<512x128xf32>
    %cst_98 = arith.constant dense<0.000000e+00> : vector<128xf32>
    %71 = vector.multi_reduction <add>, %70, %cst_98 [0] : vector<512x128xf32> to vector<128xf32>
    %72 = vector.shape_cast %71 : vector<128xf32> to vector<1x1x128xf32>
    %c0_99 = arith.constant 0 : index
    %c0_100 = arith.constant 0 : index
    %c0_101 = arith.constant 0 : index
    %73 = vector.load %arg3[%c0_99, %c0_100, %c0_101] : memref<1x1x128xf32, #tpu.memory_space<vmem>>, vector<1x1x128xf32>
    tpu.vector_store %arg3[%c0_99, %c0_100, %c0_101], %72 {strides = array<i32>} : memref<1x1x128xf32, #tpu.memory_space<vmem>>, vector<1x1x128xf32>,
    %74 = arith.mulf %70, %70 : vector<512x128xf32>
    %cst_102 = arith.constant dense<0.000000e+00> : vector<128xf32>
    %75 = vector.multi_reduction <add>, %74, %cst_102 [0] : vector<512x128xf32> to vector<128xf32>
    %76 = vector.shape_cast %75 : vector<128xf32> to vector<1x1x128xf32>
    %c0_103 = arith.constant 0 : index
    %c0_104 = arith.constant 0 : index
    %c0_105 = arith.constant 0 : index
    %77 = vector.load %arg4[%c0_103, %c0_104, %c0_105] : memref<1x1x128xf32, #tpu.memory_space<vmem>>, vector<1x1x128xf32>
    tpu.vector_store %arg4[%c0_103, %c0_104, %c0_105], %76 {strides = array<i32>} : memref<1x1x128xf32, #tpu.memory_space<vmem>>, vector<1x1x128xf32>,
    return
  }
  func.func @transform_0(%arg0: i32) -> (i32, i32, i32, i32) {
    %c0_i32 = arith.constant 0 : i32
    %c0_i32_0 = arith.constant 0 : i32
    %c0_i32_1 = arith.constant 0 : i32
    %c0_i32_2 = arith.constant 0 : i32
    return %arg0, %c0_i32, %c0_i32_0, %c0_i32_1 : i32, i32, i32, i32
  }
  func.func @transform_1(%arg0: i32) -> (i32, i32, i32) {
    %c0_i32 = arith.constant 0 : i32
    %c0_i32_0 = arith.constant 0 : i32
    %c0_i32_1 = arith.constant 0 : i32
    %c0_i32_2 = arith.constant 0 : i32
    return %c0_i32, %c0_i32_0, %c0_i32_1 : i32, i32, i32
  }
  func.func @transform_2(%arg0: i32) -> (i32, i32, i32) {
    %c0_i32 = arith.constant 0 : i32
    %c0_i32_0 = arith.constant 0 : i32
    %c0_i32_1 = arith.constant 0 : i32
    return %arg0, %c0_i32, %c0_i32_0 : i32, i32, i32
  }
  func.func @transform_3(%arg0: i32) -> (i32, i32, i32) {
    %c0_i32 = arith.constant 0 : i32
    %c0_i32_0 = arith.constant 0 : i32
    %c0_i32_1 = arith.constant 0 : i32
    return %arg0, %c0_i32, %c0_i32_0 : i32, i32, i32
  }
}

module attributes {stable_mosaic.version = 11 : i64} {
  func.func @_conv_bn_kernel(%arg0: i32, %arg1: memref<2x24x16x4xf32, #tpu.memory_space<vmem>>, %arg2: memref<9x4x128xf32, #tpu.memory_space<vmem>>, %arg3: memref<1x128xf32, #tpu.memory_space<vmem>>, %arg4: memref<512x128xf32, #tpu.memory_space<vmem>>) attributes {dimension_semantics = [#tpu.dimension_semantics<parallel>], iteration_bounds = array<i64: 1>, scalar_prefetch = 0 : i64, scratch_operands = 0 : i64, tpu.core_type = #tpu.core_type<tc>, window_params = [{transform_indices = @transform_0, window_bounds = array<i64: 2, 24, 16, 4>}, {pipeline_mode = #tpu.pipeline_mode<synchronous>, transform_indices = @transform_1, window_bounds = array<i64: 9, 4, 128>}, {pipeline_mode = #tpu.pipeline_mode<synchronous>, transform_indices = @transform_2, window_bounds = array<i64: 1, 128>}, {transform_indices = @transform_3, window_bounds = array<i64: 512, 128>}]} {
    %c0 = arith.constant 0 : index
    %c0_0 = arith.constant 0 : index
    %c0_1 = arith.constant 0 : index
    %c0_2 = arith.constant 0 : index
    %0 = vector.load %arg1[%c0, %c0_0, %c0_1, %c0_2] : memref<2x24x16x4xf32, #tpu.memory_space<vmem>>, vector<2x16x16x4xf32>
    %1 = vector.shape_cast %0 : vector<2x16x16x4xf32> to vector<512x4xf32>
    %c0_3 = arith.constant 0 : index
    %c0_4 = arith.constant 0 : index
    %2 = vector.load %arg3[%c0_3, %c0_4] : memref<1x128xf32, #tpu.memory_space<vmem>>, vector<1x128xf32>
    %3 = vector.shape_cast %2 : vector<1x128xf32> to vector<1x128xf32>
    %4 = vector.broadcast %3 : vector<1x128xf32> to vector<512x128xf32>
    %c0_5 = arith.constant 0 : index
    %c0_6 = arith.constant 0 : index
    %c0_7 = arith.constant 0 : index
    %5 = vector.load %arg2[%c0_5, %c0_6, %c0_7] : memref<9x4x128xf32, #tpu.memory_space<vmem>>, vector<1x4x128xf32>
    %6 = vector.shape_cast %5 : vector<1x4x128xf32> to vector<4x128xf32>
    %cst = arith.constant dense<0.000000e+00> : vector<512x128xf32>
    %7 = tpu.matmul %1, %6, %cst {dimension_numbers = #tpu.dot_dimension_numbers<[1], [0], [0], [1], [0, 0, 1, 1], [], []>} : vector<512x4xf32>, vector<4x128xf32>, vector<512x128xf32> -> vector<512x128xf32>
    %8 = arith.addf %4, %7 : vector<512x128xf32>
    %c0_8 = arith.constant 0 : index
    %c0_9 = arith.constant 0 : index
    %9 = vector.load %arg4[%c0_8, %c0_9] : memref<512x128xf32, #tpu.memory_space<vmem>>, vector<512x128xf32>
    tpu.vector_store %arg4[%c0_8, %c0_9], %8 {strides = array<i32>} : memref<512x128xf32, #tpu.memory_space<vmem>>, vector<512x128xf32>,
    %c0_10 = arith.constant 0 : index
    %c1 = arith.constant 1 : index
    %c0_11 = arith.constant 0 : index
    %c0_12 = arith.constant 0 : index
    %10 = vector.load %arg1[%c0_10, %c1, %c0_11, %c0_12] : memref<2x24x16x4xf32, #tpu.memory_space<vmem>>, vector<2x16x16x4xf32>
    %11 = vector.shape_cast %10 : vector<2x16x16x4xf32> to vector<512x4xf32>
    %c0_13 = arith.constant 0 : index
    %c0_14 = arith.constant 0 : index
    %12 = vector.load %arg4[%c0_13, %c0_14] : memref<512x128xf32, #tpu.memory_space<vmem>>, vector<512x128xf32>
    %c1_15 = arith.constant 1 : index
    %c0_16 = arith.constant 0 : index
    %c0_17 = arith.constant 0 : index
    %13 = vector.load %arg2[%c1_15, %c0_16, %c0_17] : memref<9x4x128xf32, #tpu.memory_space<vmem>>, vector<1x4x128xf32>
    %14 = vector.shape_cast %13 : vector<1x4x128xf32> to vector<4x128xf32>
    %cst_18 = arith.constant dense<0.000000e+00> : vector<512x128xf32>
    %15 = tpu.matmul %11, %14, %cst_18 {dimension_numbers = #tpu.dot_dimension_numbers<[1], [0], [0], [1], [0, 0, 1, 1], [], []>} : vector<512x4xf32>, vector<4x128xf32>, vector<512x128xf32> -> vector<512x128xf32>
    %16 = arith.addf %12, %15 : vector<512x128xf32>
    %c0_19 = arith.constant 0 : index
    %c0_20 = arith.constant 0 : index
    %17 = vector.load %arg4[%c0_19, %c0_20] : memref<512x128xf32, #tpu.memory_space<vmem>>, vector<512x128xf32>
    tpu.vector_store %arg4[%c0_19, %c0_20], %16 {strides = array<i32>} : memref<512x128xf32, #tpu.memory_space<vmem>>, vector<512x128xf32>,
    %c0_21 = arith.constant 0 : index
    %c2 = arith.constant 2 : index
    %c0_22 = arith.constant 0 : index
    %c0_23 = arith.constant 0 : index
    %18 = vector.load %arg1[%c0_21, %c2, %c0_22, %c0_23] : memref<2x24x16x4xf32, #tpu.memory_space<vmem>>, vector<2x16x16x4xf32>
    %19 = vector.shape_cast %18 : vector<2x16x16x4xf32> to vector<512x4xf32>
    %c0_24 = arith.constant 0 : index
    %c0_25 = arith.constant 0 : index
    %20 = vector.load %arg4[%c0_24, %c0_25] : memref<512x128xf32, #tpu.memory_space<vmem>>, vector<512x128xf32>
    %c2_26 = arith.constant 2 : index
    %c0_27 = arith.constant 0 : index
    %c0_28 = arith.constant 0 : index
    %21 = vector.load %arg2[%c2_26, %c0_27, %c0_28] : memref<9x4x128xf32, #tpu.memory_space<vmem>>, vector<1x4x128xf32>
    %22 = vector.shape_cast %21 : vector<1x4x128xf32> to vector<4x128xf32>
    %cst_29 = arith.constant dense<0.000000e+00> : vector<512x128xf32>
    %23 = tpu.matmul %19, %22, %cst_29 {dimension_numbers = #tpu.dot_dimension_numbers<[1], [0], [0], [1], [0, 0, 1, 1], [], []>} : vector<512x4xf32>, vector<4x128xf32>, vector<512x128xf32> -> vector<512x128xf32>
    %24 = arith.addf %20, %23 : vector<512x128xf32>
    %c0_30 = arith.constant 0 : index
    %c0_31 = arith.constant 0 : index
    %25 = vector.load %arg4[%c0_30, %c0_31] : memref<512x128xf32, #tpu.memory_space<vmem>>, vector<512x128xf32>
    tpu.vector_store %arg4[%c0_30, %c0_31], %24 {strides = array<i32>} : memref<512x128xf32, #tpu.memory_space<vmem>>, vector<512x128xf32>,
    %c0_32 = arith.constant 0 : index
    %c3 = arith.constant 3 : index
    %c0_33 = arith.constant 0 : index
    %c0_34 = arith.constant 0 : index
    %26 = vector.load %arg1[%c0_32, %c3, %c0_33, %c0_34] : memref<2x24x16x4xf32, #tpu.memory_space<vmem>>, vector<2x16x16x4xf32>
    %27 = vector.shape_cast %26 : vector<2x16x16x4xf32> to vector<512x4xf32>
    %c0_35 = arith.constant 0 : index
    %c0_36 = arith.constant 0 : index
    %28 = vector.load %arg4[%c0_35, %c0_36] : memref<512x128xf32, #tpu.memory_space<vmem>>, vector<512x128xf32>
    %c3_37 = arith.constant 3 : index
    %c0_38 = arith.constant 0 : index
    %c0_39 = arith.constant 0 : index
    %29 = vector.load %arg2[%c3_37, %c0_38, %c0_39] : memref<9x4x128xf32, #tpu.memory_space<vmem>>, vector<1x4x128xf32>
    %30 = vector.shape_cast %29 : vector<1x4x128xf32> to vector<4x128xf32>
    %cst_40 = arith.constant dense<0.000000e+00> : vector<512x128xf32>
    %31 = tpu.matmul %27, %30, %cst_40 {dimension_numbers = #tpu.dot_dimension_numbers<[1], [0], [0], [1], [0, 0, 1, 1], [], []>} : vector<512x4xf32>, vector<4x128xf32>, vector<512x128xf32> -> vector<512x128xf32>
    %32 = arith.addf %28, %31 : vector<512x128xf32>
    %c0_41 = arith.constant 0 : index
    %c0_42 = arith.constant 0 : index
    %33 = vector.load %arg4[%c0_41, %c0_42] : memref<512x128xf32, #tpu.memory_space<vmem>>, vector<512x128xf32>
    tpu.vector_store %arg4[%c0_41, %c0_42], %32 {strides = array<i32>} : memref<512x128xf32, #tpu.memory_space<vmem>>, vector<512x128xf32>,
    %c0_43 = arith.constant 0 : index
    %c4 = arith.constant 4 : index
    %c0_44 = arith.constant 0 : index
    %c0_45 = arith.constant 0 : index
    %34 = vector.load %arg1[%c0_43, %c4, %c0_44, %c0_45] : memref<2x24x16x4xf32, #tpu.memory_space<vmem>>, vector<2x16x16x4xf32>
    %35 = vector.shape_cast %34 : vector<2x16x16x4xf32> to vector<512x4xf32>
    %c0_46 = arith.constant 0 : index
    %c0_47 = arith.constant 0 : index
    %36 = vector.load %arg4[%c0_46, %c0_47] : memref<512x128xf32, #tpu.memory_space<vmem>>, vector<512x128xf32>
    %c4_48 = arith.constant 4 : index
    %c0_49 = arith.constant 0 : index
    %c0_50 = arith.constant 0 : index
    %37 = vector.load %arg2[%c4_48, %c0_49, %c0_50] : memref<9x4x128xf32, #tpu.memory_space<vmem>>, vector<1x4x128xf32>
    %38 = vector.shape_cast %37 : vector<1x4x128xf32> to vector<4x128xf32>
    %cst_51 = arith.constant dense<0.000000e+00> : vector<512x128xf32>
    %39 = tpu.matmul %35, %38, %cst_51 {dimension_numbers = #tpu.dot_dimension_numbers<[1], [0], [0], [1], [0, 0, 1, 1], [], []>} : vector<512x4xf32>, vector<4x128xf32>, vector<512x128xf32> -> vector<512x128xf32>
    %40 = arith.addf %36, %39 : vector<512x128xf32>
    %c0_52 = arith.constant 0 : index
    %c0_53 = arith.constant 0 : index
    %41 = vector.load %arg4[%c0_52, %c0_53] : memref<512x128xf32, #tpu.memory_space<vmem>>, vector<512x128xf32>
    tpu.vector_store %arg4[%c0_52, %c0_53], %40 {strides = array<i32>} : memref<512x128xf32, #tpu.memory_space<vmem>>, vector<512x128xf32>,
    %c0_54 = arith.constant 0 : index
    %c5 = arith.constant 5 : index
    %c0_55 = arith.constant 0 : index
    %c0_56 = arith.constant 0 : index
    %42 = vector.load %arg1[%c0_54, %c5, %c0_55, %c0_56] : memref<2x24x16x4xf32, #tpu.memory_space<vmem>>, vector<2x16x16x4xf32>
    %43 = vector.shape_cast %42 : vector<2x16x16x4xf32> to vector<512x4xf32>
    %c0_57 = arith.constant 0 : index
    %c0_58 = arith.constant 0 : index
    %44 = vector.load %arg4[%c0_57, %c0_58] : memref<512x128xf32, #tpu.memory_space<vmem>>, vector<512x128xf32>
    %c5_59 = arith.constant 5 : index
    %c0_60 = arith.constant 0 : index
    %c0_61 = arith.constant 0 : index
    %45 = vector.load %arg2[%c5_59, %c0_60, %c0_61] : memref<9x4x128xf32, #tpu.memory_space<vmem>>, vector<1x4x128xf32>
    %46 = vector.shape_cast %45 : vector<1x4x128xf32> to vector<4x128xf32>
    %cst_62 = arith.constant dense<0.000000e+00> : vector<512x128xf32>
    %47 = tpu.matmul %43, %46, %cst_62 {dimension_numbers = #tpu.dot_dimension_numbers<[1], [0], [0], [1], [0, 0, 1, 1], [], []>} : vector<512x4xf32>, vector<4x128xf32>, vector<512x128xf32> -> vector<512x128xf32>
    %48 = arith.addf %44, %47 : vector<512x128xf32>
    %c0_63 = arith.constant 0 : index
    %c0_64 = arith.constant 0 : index
    %49 = vector.load %arg4[%c0_63, %c0_64] : memref<512x128xf32, #tpu.memory_space<vmem>>, vector<512x128xf32>
    tpu.vector_store %arg4[%c0_63, %c0_64], %48 {strides = array<i32>} : memref<512x128xf32, #tpu.memory_space<vmem>>, vector<512x128xf32>,
    %c0_65 = arith.constant 0 : index
    %c6 = arith.constant 6 : index
    %c0_66 = arith.constant 0 : index
    %c0_67 = arith.constant 0 : index
    %50 = vector.load %arg1[%c0_65, %c6, %c0_66, %c0_67] : memref<2x24x16x4xf32, #tpu.memory_space<vmem>>, vector<2x16x16x4xf32>
    %51 = vector.shape_cast %50 : vector<2x16x16x4xf32> to vector<512x4xf32>
    %c0_68 = arith.constant 0 : index
    %c0_69 = arith.constant 0 : index
    %52 = vector.load %arg4[%c0_68, %c0_69] : memref<512x128xf32, #tpu.memory_space<vmem>>, vector<512x128xf32>
    %c6_70 = arith.constant 6 : index
    %c0_71 = arith.constant 0 : index
    %c0_72 = arith.constant 0 : index
    %53 = vector.load %arg2[%c6_70, %c0_71, %c0_72] : memref<9x4x128xf32, #tpu.memory_space<vmem>>, vector<1x4x128xf32>
    %54 = vector.shape_cast %53 : vector<1x4x128xf32> to vector<4x128xf32>
    %cst_73 = arith.constant dense<0.000000e+00> : vector<512x128xf32>
    %55 = tpu.matmul %51, %54, %cst_73 {dimension_numbers = #tpu.dot_dimension_numbers<[1], [0], [0], [1], [0, 0, 1, 1], [], []>} : vector<512x4xf32>, vector<4x128xf32>, vector<512x128xf32> -> vector<512x128xf32>
    %56 = arith.addf %52, %55 : vector<512x128xf32>
    %c0_74 = arith.constant 0 : index
    %c0_75 = arith.constant 0 : index
    %57 = vector.load %arg4[%c0_74, %c0_75] : memref<512x128xf32, #tpu.memory_space<vmem>>, vector<512x128xf32>
    tpu.vector_store %arg4[%c0_74, %c0_75], %56 {strides = array<i32>} : memref<512x128xf32, #tpu.memory_space<vmem>>, vector<512x128xf32>,
    %c0_76 = arith.constant 0 : index
    %c7 = arith.constant 7 : index
    %c0_77 = arith.constant 0 : index
    %c0_78 = arith.constant 0 : index
    %58 = vector.load %arg1[%c0_76, %c7, %c0_77, %c0_78] : memref<2x24x16x4xf32, #tpu.memory_space<vmem>>, vector<2x16x16x4xf32>
    %59 = vector.shape_cast %58 : vector<2x16x16x4xf32> to vector<512x4xf32>
    %c0_79 = arith.constant 0 : index
    %c0_80 = arith.constant 0 : index
    %60 = vector.load %arg4[%c0_79, %c0_80] : memref<512x128xf32, #tpu.memory_space<vmem>>, vector<512x128xf32>
    %c7_81 = arith.constant 7 : index
    %c0_82 = arith.constant 0 : index
    %c0_83 = arith.constant 0 : index
    %61 = vector.load %arg2[%c7_81, %c0_82, %c0_83] : memref<9x4x128xf32, #tpu.memory_space<vmem>>, vector<1x4x128xf32>
    %62 = vector.shape_cast %61 : vector<1x4x128xf32> to vector<4x128xf32>
    %cst_84 = arith.constant dense<0.000000e+00> : vector<512x128xf32>
    %63 = tpu.matmul %59, %62, %cst_84 {dimension_numbers = #tpu.dot_dimension_numbers<[1], [0], [0], [1], [0, 0, 1, 1], [], []>} : vector<512x4xf32>, vector<4x128xf32>, vector<512x128xf32> -> vector<512x128xf32>
    %64 = arith.addf %60, %63 : vector<512x128xf32>
    %c0_85 = arith.constant 0 : index
    %c0_86 = arith.constant 0 : index
    %65 = vector.load %arg4[%c0_85, %c0_86] : memref<512x128xf32, #tpu.memory_space<vmem>>, vector<512x128xf32>
    tpu.vector_store %arg4[%c0_85, %c0_86], %64 {strides = array<i32>} : memref<512x128xf32, #tpu.memory_space<vmem>>, vector<512x128xf32>,
    %c0_87 = arith.constant 0 : index
    %c8 = arith.constant 8 : index
    %c0_88 = arith.constant 0 : index
    %c0_89 = arith.constant 0 : index
    %66 = vector.load %arg1[%c0_87, %c8, %c0_88, %c0_89] : memref<2x24x16x4xf32, #tpu.memory_space<vmem>>, vector<2x16x16x4xf32>
    %67 = vector.shape_cast %66 : vector<2x16x16x4xf32> to vector<512x4xf32>
    %c0_90 = arith.constant 0 : index
    %c0_91 = arith.constant 0 : index
    %68 = vector.load %arg4[%c0_90, %c0_91] : memref<512x128xf32, #tpu.memory_space<vmem>>, vector<512x128xf32>
    %c8_92 = arith.constant 8 : index
    %c0_93 = arith.constant 0 : index
    %c0_94 = arith.constant 0 : index
    %69 = vector.load %arg2[%c8_92, %c0_93, %c0_94] : memref<9x4x128xf32, #tpu.memory_space<vmem>>, vector<1x4x128xf32>
    %70 = vector.shape_cast %69 : vector<1x4x128xf32> to vector<4x128xf32>
    %cst_95 = arith.constant dense<0.000000e+00> : vector<512x128xf32>
    %71 = tpu.matmul %67, %70, %cst_95 {dimension_numbers = #tpu.dot_dimension_numbers<[1], [0], [0], [1], [0, 0, 1, 1], [], []>} : vector<512x4xf32>, vector<4x128xf32>, vector<512x128xf32> -> vector<512x128xf32>
    %72 = arith.addf %68, %71 : vector<512x128xf32>
    %c0_96 = arith.constant 0 : index
    %c0_97 = arith.constant 0 : index
    %73 = vector.load %arg4[%c0_96, %c0_97] : memref<512x128xf32, #tpu.memory_space<vmem>>, vector<512x128xf32>
    tpu.vector_store %arg4[%c0_96, %c0_97], %72 {strides = array<i32>} : memref<512x128xf32, #tpu.memory_space<vmem>>, vector<512x128xf32>,
    return
  }
  func.func @transform_0(%arg0: i32) -> (i32, i32, i32, i32) {
    %c0_i32 = arith.constant 0 : i32
    %c0_i32_0 = arith.constant 0 : i32
    %c0_i32_1 = arith.constant 0 : i32
    %c0_i32_2 = arith.constant 0 : i32
    return %arg0, %c0_i32, %c0_i32_0, %c0_i32_1 : i32, i32, i32, i32
  }
  func.func @transform_1(%arg0: i32) -> (i32, i32, i32) {
    %c0_i32 = arith.constant 0 : i32
    %c0_i32_0 = arith.constant 0 : i32
    %c0_i32_1 = arith.constant 0 : i32
    %c0_i32_2 = arith.constant 0 : i32
    return %c0_i32, %c0_i32_0, %c0_i32_1 : i32, i32, i32
  }
  func.func @transform_2(%arg0: i32) -> (i32, i32) {
    %c0_i32 = arith.constant 0 : i32
    %c0_i32_0 = arith.constant 0 : i32
    %c0_i32_1 = arith.constant 0 : i32
    return %c0_i32, %c0_i32_0 : i32, i32
  }
  func.func @transform_3(%arg0: i32) -> (i32, i32) {
    %c0_i32 = arith.constant 0 : i32
    %c0_i32_0 = arith.constant 0 : i32
    return %arg0, %c0_i32 : i32, i32
  }
}

</mosaic_0001>

<llo_original>
// kernel: t_lsu_forward.2
$region0: #{t_lsu_forward.2}
  #allocation0 [shape = 'u32[]', space=smem, size = 0x4, offset = 0x4, fixed_abs, tag = 'smem constant byte address 0x4 - core index']
  #allocation1 [shape = 'u32[72,128]{1,0:T(1,128)}', space=vmem, size = 0x9000, scoped, tag = 'internal scratch']
  #allocation2 [shape = 'f32[512,128]{1,0:T(8,128)}', space=vmem, size = 0x40000, scoped, tag = 'scratch operand']
  %s0 = inlined_call_operand.vmem [shape: f32[2,24,16,4], index: 0, kind: input, shape index: {}]
  %s1 = inlined_call_operand.vmem [shape: f32[9,4,128], index: 1, kind: input, shape index: {}]
  %s2 = inlined_call_operand.vmem [shape: f32[1,1,128], index: 2, kind: output, shape index: {0}]
  %s3 = inlined_call_operand.vmem [shape: f32[1,1,128], index: 3, kind: output, shape index: {1}]
  %4 = xla_tuple %s2, %s3
  %s5 = sld [smem:[#allocation0]]
  $region26: #{t_lsu_forward.2} parent=0
    _
  %s7 = ssub.s32 1, %s5
  %s8 = scalar_select 0, %s7, %s5
  // Predicated region
  $region2: #{t_lsu_forward.2} parent=0 // pred_check
    _
  $region3: #{t_lsu_forward.2} parent=0 // pred_check_branch
    %10 = sbr.rel (0) target = $region5
  $region4: #{t_lsu_forward.2} parent=0 // pred_region
    _
  $region5: #{t_lsu_forward.2} parent=0 // pred_fallthru
    _
  // Predicated region
  $region6: #{t_lsu_forward.2} parent=0 // pred_check
    _
  $region7: #{t_lsu_forward.2} parent=0 // pred_check_branch
    %12 = sbr.rel (0) target = $region9
  $region8: #{t_lsu_forward.2} parent=0 // pred_region
    _
  $region9: #{t_lsu_forward.2} parent=0 // pred_fallthru
    _
  %v13 = vld [vmem:[%s0] sm:$0xff]
  %v14 = vld [vmem:[%s0 + $0x8] sm:$0xff]
  %v15 = vld [vmem:[%s0 + $0x10] sm:$0xff]
  %v16 = vld [vmem:[%s0 + $0x18] sm:$0xff]
  %v17 = vld [vmem:[%s0 + $0x20] sm:$0xff]
  %v18 = vld [vmem:[%s0 + $0x28] sm:$0xff]
  %v19 = vld [vmem:[%s0 + $0x30] sm:$0xff]
  %v20 = vld [vmem:[%s0 + $0x38] sm:$0xff]
  %v21 = vld [vmem:[%s0 + $0x40] sm:$0xff]
  %v22 = vld [vmem:[%s0 + $0x48] sm:$0xff]
  %v23 = vld [vmem:[%s0 + $0x50] sm:$0xff]
  %v24 = vld [vmem:[%s0 + $0x58] sm:$0xff]
  %v25 = vld [vmem:[%s0 + $0x60] sm:$0xff]
  %v26 = vld [vmem:[%s0 + $0x68] sm:$0xff]
  %v27 = vld [vmem:[%s0 + $0x70] sm:$0xff]
  %v28 = vld [vmem:[%s0 + $0x78] sm:$0xff]
  %v29 = vld [vmem:[%s0 + $0x80] sm:$0xff]
  %v30 = vld [vmem:[%s0 + $0x88] sm:$0xff]
  %v31 = vld [vmem:[%s0 + $0x90] sm:$0xff]
  %v32 = vld [vmem:[%s0 + $0x98] sm:$0xff]
  %v33 = vld [vmem:[%s0 + $0xa0] sm:$0xff]
  %v34 = vld [vmem:[%s0 + $0xa8] sm:$0xff]
  %v35 = vld [vmem:[%s0 + $0xb0] sm:$0xff]
  %v36 = vld [vmem:[%s0 + $0xb8] sm:$0xff]
  %v37 = vld [vmem:[%s0 + $0xc0] sm:$0xff]
  %v38 = vld [vmem:[%s0 + $0xc8] sm:$0xff]
  %v39 = vld [vmem:[%s0 + $0xd0] sm:$0xff]
  %v40 = vld [vmem:[%s0 + $0xd8] sm:$0xff]
  %v41 = vld [vmem:[%s0 + $0xe0] sm:$0xff]
  %v42 = vld [vmem:[%s0 + $0xe8] sm:$0xff]
  %v43 = vld [vmem:[%s0 + $0xf0] sm:$0xff]
  %v44 = vld [vmem:[%s0 + $0xf8] sm:$0xff]
  %v45 = vld [vmem:[%s0 + $0x180] sm:$0xff]
  %v46 = vld [vmem:[%s0 + $0x188] sm:$0xff]
  %v47 = vld [vmem:[%s0 + $0x190] sm:$0xff]
  %v48 = vld [vmem:[%s0 + $0x198] sm:$0xff]
  %v49 = vld [vmem:[%s0 + $0x1a0] sm:$0xff]
  %v50 = vld [vmem:[%s0 + $0x1a8] sm:$0xff]
  %v51 = vld [vmem:[%s0 + $0x1b0] sm:$0xff]
  %v52 = vld [vmem:[%s0 + $0x1b8] sm:$0xff]
  %v53 = vld [vmem:[%s0 + $0x1c0] sm:$0xff]
  %v54 = vld [vmem:[%s0 + $0x1c8] sm:$0xff]
  %v55 = vld [vmem:[%s0 + $0x1d0] sm:$0xff]
  %v56 = vld [vmem:[%s0 + $0x1d8] sm:$0xff]
  %v57 = vld [vmem:[%s0 + $0x1e0] sm:$0xff]
  %v58 = vld [vmem:[%s0 + $0x1e8] sm:$0xff]
  %v59 = vld [vmem:[%s0 + $0x1f0] sm:$0xff]
  %v60 = vld [vmem:[%s0 + $0x1f8] sm:$0xff]
  %v61 = vld [vmem:[%s0 + $0x200] sm:$0xff]
  %v62 = vld [vmem:[%s0 + $0x208] sm:$0xff]
  %v63 = vld [vmem:[%s0 + $0x210] sm:$0xff]
  %v64 = vld [vmem:[%s0 + $0x218] sm:$0xff]
  %v65 = vld [vmem:[%s0 + $0x220] sm:$0xff]
  %v66 = vld [vmem:[%s0 + $0x228] sm:$0xff]
  %v67 = vld [vmem:[%s0 + $0x230] sm:$0xff]
  %v68 = vld [vmem:[%s0 + $0x238] sm:$0xff]
  %v69 = vld [vmem:[%s0 + $0x240] sm:$0xff]
  %v70 = vld [vmem:[%s0 + $0x248] sm:$0xff]
  %v71 = vld [vmem:[%s0 + $0x250] sm:$0xff]
  %v72 = vld [vmem:[%s0 + $0x258] sm:$0xff]
  %v73 = vld [vmem:[%s0 + $0x260] sm:$0xff]
  %v74 = vld [vmem:[%s0 + $0x268] sm:$0xff]
  %v75 = vld [vmem:[%s0 + $0x270] sm:$0xff]
  %v76 = vld [vmem:[%s0 + $0x278] sm:$0xff]
  %v77 = vld [vmem:[%s1] sm:$0xf]
  %vm78 = vcmask 31744
  %v80 = vsel %vm78, %v13, 0
  %v83 = vsel %vm78, %v14, 0
  %v86 = vsel %vm78, %v15, 0
  %v89 = vsel %vm78, %v16, 0
  %v92 = vsel %vm78, %v17, 0
  %v95 = vsel %vm78, %v18, 0
  %v98 = vsel %vm78, %v19, 0
  %v101 = vsel %vm78, %v20, 0
  %v104 = vsel %vm78, %v21, 0
  %v107 = vsel %vm78, %v22, 0
  %v110 = vsel %vm78, %v23, 0
  %v113 = vsel %vm78, %v24, 0
  %v116 = vsel %vm78, %v25, 0
  %v119 = vsel %vm78, %v26, 0
  %v122 = vsel %vm78, %v27, 0
  %v125 = vsel %vm78, %v28, 0
  %v128 = vsel %vm78, %v29, 0
  %v131 = vsel %vm78, %v30, 0
  %v134 = vsel %vm78, %v31, 0
  %v137 = vsel %vm78, %v32, 0
  %v140 = vsel %vm78, %v33, 0
  %v143 = vsel %vm78, %v34, 0
  %v146 = vsel %vm78, %v35, 0
  %v149 = vsel %vm78, %v36, 0
  %v152 = vsel %vm78, %v37, 0
  %v155 = vsel %vm78, %v38, 0
  %v158 = vsel %vm78, %v39, 0
  %v161 = vsel %vm78, %v40, 0
  %v164 = vsel %vm78, %v41, 0
  %v167 = vsel %vm78, %v42, 0
  %v170 = vsel %vm78, %v43, 0
  %v173 = vsel %vm78, %v44, 0
  %v176 = vsel %vm78, %v45, 0
  %v179 = vsel %vm78, %v46, 0
  %v182 = vsel %vm78, %v47, 0
  %v185 = vsel %vm78, %v48, 0
  %v188 = vsel %vm78, %v49, 0
  %v191 = vsel %vm78, %v50, 0
  %v194 = vsel %vm78, %v51, 0
  %v197 = vsel %vm78, %v52, 0
  %v200 = vsel %vm78, %v53, 0
  %v203 = vsel %vm78, %v54, 0
  %v206 = vsel %vm78, %v55, 0
  %v209 = vsel %vm78, %v56, 0
  %v212 = vsel %vm78, %v57, 0
  %v215 = vsel %vm78, %v58, 0
  %v218 = vsel %vm78, %v59, 0
  %v221 = vsel %vm78, %v60, 0
  %v224 = vsel %vm78, %v61, 0
  %v227 = vsel %vm78, %v62, 0
  %v230 = vsel %vm78, %v63, 0
  %v233 = vsel %vm78, %v64, 0
  %v236 = vsel %vm78, %v65, 0
  %v239 = vsel %vm78, %v66, 0
  %v242 = vsel %vm78, %v67, 0
  %v245 = vsel %vm78, %v68, 0
  %v248 = vsel %vm78, %v69, 0
  %v251 = vsel %vm78, %v70, 0
  %v254 = vsel %vm78, %v71, 0
  %v257 = vsel %vm78, %v72, 0
  %v260 = vsel %vm78, %v73, 0
  %v263 = vsel %vm78, %v74, 0
  %v266 = vsel %vm78, %v75, 0
  %v269 = vsel %vm78, %v76, 0
  %vm271 = vcmask 1043456
  %v273 = vsel %vm271, %v77, 0
  %275 = vmatpush.msra.mxu0 0.0
  %276 = vmatpush.msra.mxu0 0.0
  %277 = vmatpush.msra.mxu0 0.0
  %278 = vmatpush.msra.mxu0 0.0
  %279 = vmatpush.msra.mxu0 0.0
  %280 = vmatpush.msra.mxu0 0.0
  %281 = vmatpush.msra.mxu0 0.0
  %282 = vmatpush.msra.mxu0 0.0
  %283 = vmatpush.msra.mxu0 0.0
  %284 = vmatpush.msra.mxu0 0.0
  %285 = vmatpush.msra.mxu0 0.0
  %286 = vmatpush.msra.mxu0 0.0
  %287 = vmatpush.msra.mxu0 0.0
  %288 = vmatpush.msra.mxu0 0.0
  %289 = vmatpush.msra.mxu0 0.0
  %290 = vmatpush.msra.mxu0 %v273
  %291 = vmatmul.f32.gmra.mxu0 %v80
  %v292 = vpop.f32.mrf.mxu0
  %v293 = vadd.f32 0.0, %v292
  %294 = vmatmul.f32.gmra.mxu0 %v83
  %v295 = vpop.f32.mrf.mxu0
  %v296 = vadd.f32 0.0, %v295
  %297 = vmatmul.f32.gmra.mxu0 %v86
  %v298 = vpop.f32.mrf.mxu0
  %v299 = vadd.f32 0.0, %v298
  %300 = vmatmul.f32.gmra.mxu0 %v89
  %v301 = vpop.f32.mrf.mxu0
  %v302 = vadd.f32 0.0, %v301
  %303 = vmatmul.f32.gmra.mxu0 %v92
  %v304 = vpop.f32.mrf.mxu0
  %v305 = vadd.f32 0.0, %v304
  %306 = vmatmul.f32.gmra.mxu0 %v95
  %v307 = vpop.f32.mrf.mxu0
  %v308 = vadd.f32 0.0, %v307
  %309 = vmatmul.f32.gmra.mxu0 %v98
  %v310 = vpop.f32.mrf.mxu0
  %v311 = vadd.f32 0.0, %v310
  %312 = vmatmul.f32.gmra.mxu0 %v101
  %v313 = vpop.f32.mrf.mxu0
  %v314 = vadd.f32 0.0, %v313
  %315 = vmatmul.f32.gmra.mxu0 %v104
  %v316 = vpop.f32.mrf.mxu0
  %v317 = vadd.f32 0.0, %v316
  %318 = vmatmul.f32.gmra.mxu0 %v107
  %v319 = vpop.f32.mrf.mxu0
  %v320 = vadd.f32 0.0, %v319
  %321 = vmatmul.f32.gmra.mxu0 %v110
  %v322 = vpop.f32.mrf.mxu0
  %v323 = vadd.f32 0.0, %v322
  %324 = vmatmul.f32.gmra.mxu0 %v113
  %v325 = vpop.f32.mrf.mxu0
  %v326 = vadd.f32 0.0, %v325
  %327 = vmatmul.f32.gmra.mxu0 %v116
  %v328 = vpop.f32.mrf.mxu0
  %v329 = vadd.f32 0.0, %v328
  %330 = vmatmul.f32.gmra.mxu0 %v119
  %v331 = vpop.f32.mrf.mxu0
  %v332 = vadd.f32 0.0, %v331
  %333 = vmatmul.f32.gmra.mxu0 %v122
  %v334 = vpop.f32.mrf.mxu0
  %v335 = vadd.f32 0.0, %v334
  %336 = vmatmul.f32.gmra.mxu0 %v125
  %v337 = vpop.f32.mrf.mxu0
  %v338 = vadd.f32 0.0, %v337
  %339 = vmatmul.f32.gmra.mxu0 %v128
  %v340 = vpop.f32.mrf.mxu0
  %v341 = vadd.f32 0.0, %v340
  %342 = vmatmul.f32.gmra.mxu0 %v131
  %v343 = vpop.f32.mrf.mxu0
  %v344 = vadd.f32 0.0, %v343
  %345 = vmatmul.f32.gmra.mxu0 %v134
  %v346 = vpop.f32.mrf.mxu0
  %v347 = vadd.f32 0.0, %v346
  %348 = vmatmul.f32.gmra.mxu0 %v137
  %v349 = vpop.f32.mrf.mxu0
  %v350 = vadd.f32 0.0, %v349
  %351 = vmatmul.f32.gmra.mxu0 %v140
  %v352 = vpop.f32.mrf.mxu0
  %v353 = vadd.f32 0.0, %v352
  %354 = vmatmul.f32.gmra.mxu0 %v143
  %v355 = vpop.f32.mrf.mxu0
  %v356 = vadd.f32 0.0, %v355
  %357 = vmatmul.f32.gmra.mxu0 %v146
  %v358 = vpop.f32.mrf.mxu0
  %v359 = vadd.f32 0.0, %v358
  %360 = vmatmul.f32.gmra.mxu0 %v149
  %v361 = vpop.f32.mrf.mxu0
  %v362 = vadd.f32 0.0, %v361
  %363 = vmatmul.f32.gmra.mxu0 %v152
  %v364 = vpop.f32.mrf.mxu0
  %v365 = vadd.f32 0.0, %v364
  %366 = vmatmul.f32.gmra.mxu0 %v155
  %v367 = vpop.f32.mrf.mxu0
  %v368 = vadd.f32 0.0, %v367
  %369 = vmatmul.f32.gmra.mxu0 %v158
  %v370 = vpop.f32.mrf.mxu0
  %v371 = vadd.f32 0.0, %v370
  %372 = vmatmul.f32.gmra.mxu0 %v161
  %v373 = vpop.f32.mrf.mxu0
  %v374 = vadd.f32 0.0, %v373
  %375 = vmatmul.f32.gmra.mxu0 %v164
  %v376 = vpop.f32.mrf.mxu0
  %v377 = vadd.f32 0.0, %v376
  %378 = vmatmul.f32.gmra.mxu0 %v167
  %v379 = vpop.f32.mrf.mxu0
  %v380 = vadd.f32 0.0, %v379
  %381 = vmatmul.f32.gmra.mxu0 %v170
  %v382 = vpop.f32.mrf.mxu0
  %v383 = vadd.f32 0.0, %v382
  %384 = vmatmul.f32.gmra.mxu0 %v173
  %v385 = vpop.f32.mrf.mxu0
  %v386 = vadd.f32 0.0, %v385
  %387 = vmatmul.f32.gmra.mxu0 %v176
  %v388 = vpop.f32.mrf.mxu0
  %v389 = vadd.f32 0.0, %v388
  %390 = vmatmul.f32.gmra.mxu0 %v179
  %v391 = vpop.f32.mrf.mxu0
  %v392 = vadd.f32 0.0, %v391
  %393 = vmatmul.f32.gmra.mxu0 %v182
  %v394 = vpop.f32.mrf.mxu0
  %v395 = vadd.f32 0.0, %v394
  %396 = vmatmul.f32.gmra.mxu0 %v185
  %v397 = vpop.f32.mrf.mxu0
  %v398 = vadd.f32 0.0, %v397
  %399 = vmatmul.f32.gmra.mxu0 %v188
  %v400 = vpop.f32.mrf.mxu0
  %v401 = vadd.f32 0.0, %v400
  %402 = vmatmul.f32.gmra.mxu0 %v191
  %v403 = vpop.f32.mrf.mxu0
  %v404 = vadd.f32 0.0, %v403
  %405 = vmatmul.f32.gmra.mxu0 %v194
  %v406 = vpop.f32.mrf.mxu0
  %v407 = vadd.f32 0.0, %v406
  %408 = vmatmul.f32.gmra.mxu0 %v197
  %v409 = vpop.f32.mrf.mxu0
  %v410 = vadd.f32 0.0, %v409
  %411 = vmatmul.f32.gmra.mxu0 %v200
  %v412 = vpop.f32.mrf.mxu0
  %v413 = vadd.f32 0.0, %v412
  %414 = vmatmul.f32.gmra.mxu0 %v203
  %v415 = vpop.f32.mrf.mxu0
  %v416 = vadd.f32 0.0, %v415
  %417 = vmatmul.f32.gmra.mxu0 %v206
  %v418 = vpop.f32.mrf.mxu0
  %v419 = vadd.f32 0.0, %v418
  %420 = vmatmul.f32.gmra.mxu0 %v209
  %v421 = vpop.f32.mrf.mxu0
  %v422 = vadd.f32 0.0, %v421
  %423 = vmatmul.f32.gmra.mxu0 %v212
  %v424 = vpop.f32.mrf.mxu0
  %v425 = vadd.f32 0.0, %v424
  %426 = vmatmul.f32.gmra.mxu0 %v215
  %v427 = vpop.f32.mrf.mxu0
  %v428 = vadd.f32 0.0, %v427
  %429 = vmatmul.f32.gmra.mxu0 %v218
  %v430 = vpop.f32.mrf.mxu0
  %v431 = vadd.f32 0.0, %v430
  %432 = vmatmul.f32.gmra.mxu0 %v221
  %v433 = vpop.f32.mrf.mxu0
  %v434 = vadd.f32 0.0, %v433
  %435 = vmatmul.f32.gmra.mxu0 %v224
  %v436 = vpop.f32.mrf.mxu0
  %v437 = vadd.f32 0.0, %v436
  %438 = vmatmul.f32.gmra.mxu0 %v227
  %v439 = vpop.f32.mrf.mxu0
  %v440 = vadd.f32 0.0, %v439
  %441 = vmatmul.f32.gmra.mxu0 %v230
  %v442 = vpop.f32.mrf.mxu0
  %v443 = vadd.f32 0.0, %v442
  %444 = vmatmul.f32.gmra.mxu0 %v233
  %v445 = vpop.f32.mrf.mxu0
  %v446 = vadd.f32 0.0, %v445
  %447 = vmatmul.f32.gmra.mxu0 %v236
  %v448 = vpop.f32.mrf.mxu0
  %v449 = vadd.f32 0.0, %v448
  %450 = vmatmul.f32.gmra.mxu0 %v239
  %v451 = vpop.f32.mrf.mxu0
  %v452 = vadd.f32 0.0, %v451
  %453 = vmatmul.f32.gmra.mxu0 %v242
  %v454 = vpop.f32.mrf.mxu0
  %v455 = vadd.f32 0.0, %v454
  %456 = vmatmul.f32.gmra.mxu0 %v245
  %v457 = vpop.f32.mrf.mxu0
  %v458 = vadd.f32 0.0, %v457
  %459 = vmatmul.f32.gmra.mxu0 %v248
  %v460 = vpop.f32.mrf.mxu0
  %v461 = vadd.f32 0.0, %v460
  %462 = vmatmul.f32.gmra.mxu0 %v251
  %v463 = vpop.f32.mrf.mxu0
  %v464 = vadd.f32 0.0, %v463
  %465 = vmatmul.f32.gmra.mxu0 %v254
  %v466 = vpop.f32.mrf.mxu0
  %v467 = vadd.f32 0.0, %v466
  %468 = vmatmul.f32.gmra.mxu0 %v257
  %v469 = vpop.f32.mrf.mxu0
  %v470 = vadd.f32 0.0, %v469
  %471 = vmatmul.f32.gmra.mxu0 %v260
  %v472 = vpop.f32.mrf.mxu0
  %v473 = vadd.f32 0.0, %v472
  %474 = vmatmul.f32.gmra.mxu0 %v263
  %v475 = vpop.f32.mrf.mxu0
  %v476 = vadd.f32 0.0, %v475
  %477 = vmatmul.f32.gmra.mxu0 %v266
  %v478 = vpop.f32.mrf.mxu0
  %v479 = vadd.f32 0.0, %v478
  %480 = vmatmul.f32.gmra.mxu0 %v269
  %v481 = vpop.f32.mrf.mxu0
  %v482 = vadd.f32 0.0, %v481
  %483 = vdwg.mxu0
  %484 = vst [vmem:[#allocation2] sm:$0xff] %v293
  %485 = vst [vmem:[#allocation2 + $0x8] sm:$0xff] %v296
  %486 = vst [vmem:[#allocation2 + $0x10] sm:$0xff] %v299
  %487 = vst [vmem:[#allocation2 + $0x18] sm:$0xff] %v302
  %488 = vst [vmem:[#allocation2 + $0x20] sm:$0xff] %v305
  %489 = vst [vmem:[#allocation2 + $0x28] sm:$0xff] %v308
  %490 = vst [vmem:[#allocation2 + $0x30] sm:$0xff] %v311
  %491 = vst [vmem:[#allocation2 + $0x38] sm:$0xff] %v314
  %492 = vst [vmem:[#allocation2 + $0x40] sm:$0xff] %v317
  %493 = vst [vmem:[#allocation2 + $0x48] sm:$0xff] %v320
  %494 = vst [vmem:[#allocation2 + $0x50] sm:$0xff] %v323
  %495 = vst [vmem:[#allocation2 + $0x58] sm:$0xff] %v326
  %496 = vst [vmem:[#allocation2 + $0x60] sm:$0xff] %v329
  %497 = vst [vmem:[#allocation2 + $0x68] sm:$0xff] %v332
  %498 = vst [vmem:[#allocation2 + $0x70] sm:$0xff] %v335
  %499 = vst [vmem:[#allocation2 + $0x78] sm:$0xff] %v338
  %500 = vst [vmem:[#allocation2 + $0x80] sm:$0xff] %v341
  %501 = vst [vmem:[#allocation2 + $0x88] sm:$0xff] %v344
  %502 = vst [vmem:[#allocation2 + $0x90] sm:$0xff] %v347
  %503 = vst [vmem:[#allocation2 + $0x98] sm:$0xff] %v350
  %504 = vst [vmem:[#allocation2 + $0xa0] sm:$0xff] %v353
  %505 = vst [vmem:[#allocation2 + $0xa8] sm:$0xff] %v356
  %506 = vst [vmem:[#allocation2 + $0xb0] sm:$0xff] %v359
  %507 = vst [vmem:[#allocation2 + $0xb8] sm:$0xff] %v362
  %508 = vst [vmem:[#allocation2 + $0xc0] sm:$0xff] %v365
  %509 = vst [vmem:[#allocation2 + $0xc8] sm:$0xff] %v368
  %510 = vst [vmem:[#allocation2 + $0xd0] sm:$0xff] %v371
  %511 = vst [vmem:[#allocation2 + $0xd8] sm:$0xff] %v374
  %512 = vst [vmem:[#allocation2 + $0xe0] sm:$0xff] %v377
  %513 = vst [vmem:[#allocation2 + $0xe8] sm:$0xff] %v380
  %514 = vst [vmem:[#allocation2 + $0xf0] sm:$0xff] %v383
  %515 = vst [vmem:[#allocation2 + $0xf8] sm:$0xff] %v386
  %516 = vst [vmem:[#allocation2 + $0x100] sm:$0xff] %v389
  %517 = vst [vmem:[#allocation2 + $0x108] sm:$0xff] %v392
  %518 = vst [vmem:[#allocation2 + $0x110] sm:$0xff] %v395
  %519 = vst [vmem:[#allocation2 + $0x118] sm:$0xff] %v398
  %520 = vst [vmem:[#allocation2 + $0x120] sm:$0xff] %v401
  %521 = vst [vmem:[#allocation2 + $0x128] sm:$0xff] %v404
  %522 = vst [vmem:[#allocation2 + $0x130] sm:$0xff] %v407
  %523 = vst [vmem:[#allocation2 + $0x138] sm:$0xff] %v410
  %524 = vst [vmem:[#allocation2 + $0x140] sm:$0xff] %v413
  %525 = vst [vmem:[#allocation2 + $0x148] sm:$0xff] %v416
  %526 = vst [vmem:[#allocation2 + $0x150] sm:$0xff] %v419
  %527 = vst [vmem:[#allocation2 + $0x158] sm:$0xff] %v422
  %528 = vst [vmem:[#allocation2 + $0x160] sm:$0xff] %v425
  %529 = vst [vmem:[#allocation2 + $0x168] sm:$0xff] %v428
  %530 = vst [vmem:[#allocation2 + $0x170] sm:$0xff] %v431
  %531 = vst [vmem:[#allocation2 + $0x178] sm:$0xff] %v434
  %532 = vst [vmem:[#allocation2 + $0x180] sm:$0xff] %v437
  %533 = vst [vmem:[#allocation2 + $0x188] sm:$0xff] %v440
  %534 = vst [vmem:[#allocation2 + $0x190] sm:$0xff] %v443
  %535 = vst [vmem:[#allocation2 + $0x198] sm:$0xff] %v446
  %536 = vst [vmem:[#allocation2 + $0x1a0] sm:$0xff] %v449
  %537 = vst [vmem:[#allocation2 + $0x1a8] sm:$0xff] %v452
  %538 = vst [vmem:[#allocation2 + $0x1b0] sm:$0xff] %v455
  %539 = vst [vmem:[#allocation2 + $0x1b8] sm:$0xff] %v458
  %540 = vst [vmem:[#allocation2 + $0x1c0] sm:$0xff] %v461
  %541 = vst [vmem:[#allocation2 + $0x1c8] sm:$0xff] %v464
  %542 = vst [vmem:[#allocation2 + $0x1d0] sm:$0xff] %v467
  %543 = vst [vmem:[#allocation2 + $0x1d8] sm:$0xff] %v470
  %544 = vst [vmem:[#allocation2 + $0x1e0] sm:$0xff] %v473
  %545 = vst [vmem:[#allocation2 + $0x1e8] sm:$0xff] %v476
  %546 = vst [vmem:[#allocation2 + $0x1f0] sm:$0xff] %v479
  %547 = vst [vmem:[#allocation2 + $0x1f8] sm:$0xff] %v482
  %s548 = scalar_lea.vmem %s0, 16
  %v549 = vld [vmem:[%s548] sm:$0xff]
  %v550 = vld [vmem:[%s548 + $0x8] sm:$0xff]
  %v551 = vld [vmem:[%s548 + $0x10] sm:$0xff]
  %v552 = vld [vmem:[%s548 + $0x18] sm:$0xff]
  %v553 = vld [vmem:[%s548 + $0x20] sm:$0xff]
  %v554 = vld [vmem:[%s548 + $0x28] sm:$0xff]
  %v555 = vld [vmem:[%s548 + $0x30] sm:$0xff]
  %v556 = vld [vmem:[%s548 + $0x38] sm:$0xff]
  %v557 = vld [vmem:[%s548 + $0x40] sm:$0xff]
  %v558 = vld [vmem:[%s548 + $0x48] sm:$0xff]
  %v559 = vld [vmem:[%s548 + $0x50] sm:$0xff]
  %v560 = vld [vmem:[%s548 + $0x58] sm:$0xff]
  %v561 = vld [vmem:[%s548 + $0x60] sm:$0xff]
  %v562 = vld [vmem:[%s548 + $0x68] sm:$0xff]
  %v563 = vld [vmem:[%s548 + $0x70] sm:$0xff]
  %v564 = vld [vmem:[%s548 + $0x78] sm:$0xff]
  %v565 = vld [vmem:[%s548 + $0x80] sm:$0xff]
  %v566 = vld [vmem:[%s548 + $0x88] sm:$0xff]
  %v567 = vld [vmem:[%s548 + $0x90] sm:$0xff]
  %v568 = vld [vmem:[%s548 + $0x98] sm:$0xff]
  %v569 = vld [vmem:[%s548 + $0xa0] sm:$0xff]
  %v570 = vld [vmem:[%s548 + $0xa8] sm:$0xff]
  %v571 = vld [vmem:[%s548 + $0xb0] sm:$0xff]
  %v572 = vld [vmem:[%s548 + $0xb8] sm:$0xff]
  %v573 = vld [vmem:[%s548 + $0xc0] sm:$0xff]
  %v574 = vld [vmem:[%s548 + $0xc8] sm:$0xff]
  %v575 = vld [vmem:[%s548 + $0xd0] sm:$0xff]
  %v576 = vld [vmem:[%s548 + $0xd8] sm:$0xff]
  %v577 = vld [vmem:[%s548 + $0xe0] sm:$0xff]
  %v578 = vld [vmem:[%s548 + $0xe8] sm:$0xff]
  %v579 = vld [vmem:[%s548 + $0xf0] sm:$0xff]
  %v580 = vld [vmem:[%s548 + $0xf8] sm:$0xff]
  %v581 = vld [vmem:[%s548 + $0x180] sm:$0xff]
  %v582 = vld [vmem:[%s548 + $0x188] sm:$0xff]
  %v583 = vld [vmem:[%s548 + $0x190] sm:$0xff]
  %v584 = vld [vmem:[%s548 + $0x198] sm:$0xff]
  %v585 = vld [vmem:[%s548 + $0x1a0] sm:$0xff]
  %v586 = vld [vmem:[%s548 + $0x1a8] sm:$0xff]
  %v587 = vld [vmem:[%s548 + $0x1b0] sm:$0xff]
  %v588 = vld [vmem:[%s548 + $0x1b8] sm:$0xff]
  %v589 = vld [vmem:[%s548 + $0x1c0] sm:$0xff]
  %v590 = vld [vmem:[%s548 + $0x1c8] sm:$0xff]
  %v591 = vld [vmem:[%s548 + $0x1d0] sm:$0xff]
  %v592 = vld [vmem:[%s548 + $0x1d8] sm:$0xff]
  %v593 = vld [vmem:[%s548 + $0x1e0] sm:$0xff]
  %v594 = vld [vmem:[%s548 + $0x1e8] sm:$0xff]
  %v595 = vld [vmem:[%s548 + $0x1f0] sm:$0xff]
  %v596 = vld [vmem:[%s548 + $0x1f8] sm:$0xff]
  %v597 = vld [vmem:[%s548 + $0x200] sm:$0xff]
  %v598 = vld [vmem:[%s548 + $0x208] sm:$0xff]
  %v599 = vld [vmem:[%s548 + $0x210] sm:$0xff]
  %v600 = vld [vmem:[%s548 + $0x218] sm:$0xff]
  %v601 = vld [vmem:[%s548 + $0x220] sm:$0xff]
  %v602 = vld [vmem:[%s548 + $0x228] sm:$0xff]
  %v603 = vld [vmem:[%s548 + $0x230] sm:$0xff]
  %v604 = vld [vmem:[%s548 + $0x238] sm:$0xff]
  %v605 = vld [vmem:[%s548 + $0x240] sm:$0xff]
  %v606 = vld [vmem:[%s548 + $0x248] sm:$0xff]
  %v607 = vld [vmem:[%s548 + $0x250] sm:$0xff]
  %v608 = vld [vmem:[%s548 + $0x258] sm:$0xff]
  %v609 = vld [vmem:[%s548 + $0x260] sm:$0xff]
  %v610 = vld [vmem:[%s548 + $0x268] sm:$0xff]
  %v611 = vld [vmem:[%s548 + $0x270] sm:$0xff]
  %v612 = vld [vmem:[%s548 + $0x278] sm:$0xff]
  %v613 = vld [vmem:[#allocation2] sm:$0xff]
  %v614 = vld [vmem:[#allocation2 + $0x8] sm:$0xff]
  %v615 = vld [vmem:[#allocation2 + $0x10] sm:$0xff]
  %v616 = vld [vmem:[#allocation2 + $0x18] sm:$0xff]
  %v617 = vld [vmem:[#allocation2 + $0x20] sm:$0xff]
  %v618 = vld [vmem:[#allocation2 + $0x28] sm:$0xff]
  %v619 = vld [vmem:[#allocation2 + $0x30] sm:$0xff]
  %v620 = vld [vmem:[#allocation2 + $0x38] sm:$0xff]
  %v621 = vld [vmem:[#allocation2 + $0x40] sm:$0xff]
  %v622 = vld [vmem:[#allocation2 + $0x48] sm:$0xff]
  %v623 = vld [vmem:[#allocation2 + $0x50] sm:$0xff]
  %v624 = vld [vmem:[#allocation2 + $0x58] sm:$0xff]
  %v625 = vld [vmem:[#allocation2 + $0x60] sm:$0xff]
  %v626 = vld [vmem:[#allocation2 + $0x68] sm:$0xff]
  %v627 = vld [vmem:[#allocation2 + $0x70] sm:$0xff]
  %v628 = vld [vmem:[#allocation2 + $0x78] sm:$0xff]
  %v629 = vld [vmem:[#allocation2 + $0x80] sm:$0xff]
  %v630 = vld [vmem:[#allocation2 + $0x88] sm:$0xff]
  %v631 = vld [vmem:[#allocation2 + $0x90] sm:$0xff]
  %v632 = vld [vmem:[#allocation2 + $0x98] sm:$0xff]
  %v633 = vld [vmem:[#allocation2 + $0xa0] sm:$0xff]
  %v634 = vld [vmem:[#allocation2 + $0xa8] sm:$0xff]
  %v635 = vld [vmem:[#allocation2 + $0xb0] sm:$0xff]
  %v636 = vld [vmem:[#allocation2 + $0xb8] sm:$0xff]
  %v637 = vld [vmem:[#allocation2 + $0xc0] sm:$0xff]
  %v638 = vld [vmem:[#allocation2 + $0xc8] sm:$0xff]
  %v639 = vld [vmem:[#allocation2 + $0xd0] sm:$0xff]
  %v640 = vld [vmem:[#allocation2 + $0xd8] sm:$0xff]
  %v641 = vld [vmem:[#allocation2 + $0xe0] sm:$0xff]
  %v642 = vld [vmem:[#allocation2 + $0xe8] sm:$0xff]
  %v643 = vld [vmem:[#allocation2 + $0xf0] sm:$0xff]
  %v644 = vld [vmem:[#allocation2 + $0xf8] sm:$0xff]
  %v645 = vld [vmem:[#allocation2 + $0x100] sm:$0xff]
  %v646 = vld [vmem:[#allocation2 + $0x108] sm:$0xff]
  %v647 = vld [vmem:[#allocation2 + $0x110] sm:$0xff]
  %v648 = vld [vmem:[#allocation2 + $0x118] sm:$0xff]
  %v649 = vld [vmem:[#allocation2 + $0x120] sm:$0xff]
  %v650 = vld [vmem:[#allocation2 + $0x128] sm:$0xff]
  %v651 = vld [vmem:[#allocation2 + $0x130] sm:$0xff]
  %v652 = vld [vmem:[#allocation2 + $0x138] sm:$0xff]
  %v653 = vld [vmem:[#allocation2 + $0x140] sm:$0xff]
  %v654 = vld [vmem:[#allocation2 + $0x148] sm:$0xff]
  %v655 = vld [vmem:[#allocation2 + $0x150] sm:$0xff]
  %v656 = vld [vmem:[#allocation2 + $0x158] sm:$0xff]
  %v657 = vld [vmem:[#allocation2 + $0x160] sm:$0xff]
  %v658 = vld [vmem:[#allocation2 + $0x168] sm:$0xff]
  %v659 = vld [vmem:[#allocation2 + $0x170] sm:$0xff]
  %v660 = vld [vmem:[#allocation2 + $0x178] sm:$0xff]
  %v661 = vld [vmem:[#allocation2 + $0x180] sm:$0xff]
  %v662 = vld [vmem:[#allocation2 + $0x188] sm:$0xff]
  %v663 = vld [vmem:[#allocation2 + $0x190] sm:$0xff]
  %v664 = vld [vmem:[#allocation2 + $0x198] sm:$0xff]
  %v665 = vld [vmem:[#allocation2 + $0x1a0] sm:$0xff]
  %v666 = vld [vmem:[#allocation2 + $0x1a8] sm:$0xff]
  %v667 = vld [vmem:[#allocation2 + $0x1b0] sm:$0xff]
  %v668 = vld [vmem:[#allocation2 + $0x1b8] sm:$0xff]
  %v669 = vld [vmem:[#allocation2 + $0x1c0] sm:$0xff]
  %v670 = vld [vmem:[#allocation2 + $0x1c8] sm:$0xff]
  %v671 = vld [vmem:[#allocation2 + $0x1d0] sm:$0xff]
  %v672 = vld [vmem:[#allocation2 + $0x1d8] sm:$0xff]
  %v673 = vld [vmem:[#allocation2 + $0x1e0] sm:$0xff]
  %v674 = vld [vmem:[#allocation2 + $0x1e8] sm:$0xff]
  %v675 = vld [vmem:[#allocation2 + $0x1f0] sm:$0xff]
  %v676 = vld [vmem:[#allocation2 + $0x1f8] sm:$0xff]
  %s677 = scalar_lea.vmem %s1, 4
  %v678 = vld [vmem:[%s677] sm:$0xf]
  %v680 = vsel %vm78, %v549, 0
  %v683 = vsel %vm78, %v550, 0
  %v686 = vsel %vm78, %v551, 0
  %v689 = vsel %vm78, %v552, 0
  %v692 = vsel %vm78, %v553, 0
  %v695 = vsel %vm78, %v554, 0
  %v698 = vsel %vm78, %v555, 0
  %v701 = vsel %vm78, %v556, 0
  %v704 = vsel %vm78, %v557, 0
  %v707 = vsel %vm78, %v558, 0
  %v710 = vsel %vm78, %v559, 0
  %v713 = vsel %vm78, %v560, 0
  %v716 = vsel %vm78, %v561, 0
  %v719 = vsel %vm78, %v562, 0
  %v722 = vsel %vm78, %v563, 0
  %v725 = vsel %vm78, %v564, 0
  %v728 = vsel %vm78, %v565, 0
  %v731 = vsel %vm78, %v566, 0
  %v734 = vsel %vm78, %v567, 0
  %v737 = vsel %vm78, %v568, 0
  %v740 = vsel %vm78, %v569, 0
  %v743 = vsel %vm78, %v570, 0
  %v746 = vsel %vm78, %v571, 0
  %v749 = vsel %vm78, %v572, 0
  %v752 = vsel %vm78, %v573, 0
  %v755 = vsel %vm78, %v574, 0
  %v758 = vsel %vm78, %v575, 0
  %v761 = vsel %vm78, %v576, 0
  %v764 = vsel %vm78, %v577, 0
  %v767 = vsel %vm78, %v578, 0
  %v770 = vsel %vm78, %v579, 0
  %v773 = vsel %vm78, %v580, 0
  %v776 = vsel %vm78, %v581, 0
  %v779 = vsel %vm78, %v582, 0
  %v782 = vsel %vm78, %v583, 0
  %v785 = vsel %vm78, %v584, 0
  %v788 = vsel %vm78, %v585, 0
  %v791 = vsel %vm78, %v586, 0
  %v794 = vsel %vm78, %v587, 0
  %v797 = vsel %vm78, %v588, 0
  %v800 = vsel %vm78, %v589, 0
  %v803 = vsel %vm78, %v590, 0
  %v806 = vsel %vm78, %v591, 0
  %v809 = vsel %vm78, %v592, 0
  %v812 = vsel %vm78, %v593, 0
  %v815 = vsel %vm78, %v594, 0
  %v818 = vsel %vm78, %v595, 0
  %v821 = vsel %vm78, %v596, 0
  %v824 = vsel %vm78, %v597, 0
  %v827 = vsel %vm78, %v598, 0
  %v830 = vsel %vm78, %v599, 0
  %v833 = vsel %vm78, %v600, 0
  %v836 = vsel %vm78, %v601, 0
  %v839 = vsel %vm78, %v602, 0
  %v842 = vsel %vm78, %v603, 0
  %v845 = vsel %vm78, %v604, 0
  %v848 = vsel %vm78, %v605, 0
  %v851 = vsel %vm78, %v606, 0
  %v854 = vsel %vm78, %v607, 0
  %v857 = vsel %vm78, %v608, 0
  %v860 = vsel %vm78, %v609, 0
  %v863 = vsel %vm78, %v610, 0
  %v866 = vsel %vm78, %v611, 0
  %v869 = vsel %vm78, %v612, 0
  %v872 = vsel %vm271, %v678, 0
  %874 = vmatpush.msra.mxu0 0.0
  %875 = vmatpush.msra.mxu0 0.0
  %876 = vmatpush.msra.mxu0 0.0
  %877 = vmatpush.msra.mxu0 0.0
  %878 = vmatpush.msra.mxu0 0.0
  %879 = vmatpush.msra.mxu0 0.0
  %880 = vmatpush.msra.mxu0 0.0
  %881 = vmatpush.msra.mxu0 0.0
  %882 = vmatpush.msra.mxu0 0.0
  %883 = vmatpush.msra.mxu0 0.0
  %884 = vmatpush.msra.mxu0 0.0
  %885 = vmatpush.msra.mxu0 0.0
  %886 = vmatpush.msra.mxu0 0.0
  %887 = vmatpush.msra.mxu0 0.0
  %888 = vmatpush.msra.mxu0 0.0
  %889 = vmatpush.msra.mxu0 %v872
  %890 = vmatmul.f32.gmra.mxu0 %v680
  %v891 = vpop.f32.mrf.mxu0
  %v892 = vadd.f32 0.0, %v891
  %893 = vmatmul.f32.gmra.mxu0 %v683
  %v894 = vpop.f32.mrf.mxu0
  %v895 = vadd.f32 0.0, %v894
  %896 = vmatmul.f32.gmra.mxu0 %v686
  %v897 = vpop.f32.mrf.mxu0
  %v898 = vadd.f32 0.0, %v897
  %899 = vmatmul.f32.gmra.mxu0 %v689
  %v900 = vpop.f32.mrf.mxu0
  %v901 = vadd.f32 0.0, %v900
  %902 = vmatmul.f32.gmra.mxu0 %v692
  %v903 = vpop.f32.mrf.mxu0
  %v904 = vadd.f32 0.0, %v903
  %905 = vmatmul.f32.gmra.mxu0 %v695
  %v906 = vpop.f32.mrf.mxu0
  %v907 = vadd.f32 0.0, %v906
  %908 = vmatmul.f32.gmra.mxu0 %v698
  %v909 = vpop.f32.mrf.mxu0
  %v910 = vadd.f32 0.0, %v909
  %911 = vmatmul.f32.gmra.mxu0 %v701
  %v912 = vpop.f32.mrf.mxu0
  %v913 = vadd.f32 0.0, %v912
  %914 = vmatmul.f32.gmra.mxu0 %v704
  %v915 = vpop.f32.mrf.mxu0
  %v916 = vadd.f32 0.0, %v915
  %917 = vmatmul.f32.gmra.mxu0 %v707
  %v918 = vpop.f32.mrf.mxu0
  %v919 = vadd.f32 0.0, %v918
  %920 = vmatmul.f32.gmra.mxu0 %v710
  %v921 = vpop.f32.mrf.mxu0
  %v922 = vadd.f32 0.0, %v921
  %923 = vmatmul.f32.gmra.mxu0 %v713
  %v924 = vpop.f32.mrf.mxu0
  %v925 = vadd.f32 0.0, %v924
  %926 = vmatmul.f32.gmra.mxu0 %v716
  %v927 = vpop.f32.mrf.mxu0
  %v928 = vadd.f32 0.0, %v927
  %929 = vmatmul.f32.gmra.mxu0 %v719
  %v930 = vpop.f32.mrf.mxu0
  %v931 = vadd.f32 0.0, %v930
  %932 = vmatmul.f32.gmra.mxu0 %v722
  %v933 = vpop.f32.mrf.mxu0
  %v934 = vadd.f32 0.0, %v933
  %935 = vmatmul.f32.gmra.mxu0 %v725
  %v936 = vpop.f32.mrf.mxu0
  %v937 = vadd.f32 0.0, %v936
  %938 = vmatmul.f32.gmra.mxu0 %v728
  %v939 = vpop.f32.mrf.mxu0
  %v940 = vadd.f32 0.0, %v939
  %941 = vmatmul.f32.gmra.mxu0 %v731
  %v942 = vpop.f32.mrf.mxu0
  %v943 = vadd.f32 0.0, %v942
  %944 = vmatmul.f32.gmra.mxu0 %v734
  %v945 = vpop.f32.mrf.mxu0
  %v946 = vadd.f32 0.0, %v945
  %947 = vmatmul.f32.gmra.mxu0 %v737
  %v948 = vpop.f32.mrf.mxu0
  %v949 = vadd.f32 0.0, %v948
  %950 = vmatmul.f32.gmra.mxu0 %v740
  %v951 = vpop.f32.mrf.mxu0
  %v952 = vadd.f32 0.0, %v951
  %953 = vmatmul.f32.gmra.mxu0 %v743
  %v954 = vpop.f32.mrf.mxu0
  %v955 = vadd.f32 0.0, %v954
  %956 = vmatmul.f32.gmra.mxu0 %v746
  %v957 = vpop.f32.mrf.mxu0
  %v958 = vadd.f32 0.0, %v957
  %959 = vmatmul.f32.gmra.mxu0 %v749
  %v960 = vpop.f32.mrf.mxu0
  %v961 = vadd.f32 0.0, %v960
  %962 = vmatmul.f32.gmra.mxu0 %v752
  %v963 = vpop.f32.mrf.mxu0
  %v964 = vadd.f32 0.0, %v963
  %965 = vmatmul.f32.gmra.mxu0 %v755
  %v966 = vpop.f32.mrf.mxu0
  %v967 = vadd.f32 0.0, %v966
  %968 = vmatmul.f32.gmra.mxu0 %v758
  %v969 = vpop.f32.mrf.mxu0
  %v970 = vadd.f32 0.0, %v969
  %971 = vmatmul.f32.gmra.mxu0 %v761
  %v972 = vpop.f32.mrf.mxu0
  %v973 = vadd.f32 0.0, %v972
  %974 = vmatmul.f32.gmra.mxu0 %v764
  %v975 = vpop.f32.mrf.mxu0
  %v976 = vadd.f32 0.0, %v975
  %977 = vmatmul.f32.gmra.mxu0 %v767
  %v978 = vpop.f32.mrf.mxu0
  %v979 = vadd.f32 0.0, %v978
  %980 = vmatmul.f32.gmra.mxu0 %v770
  %v981 = vpop.f32.mrf.mxu0
  %v982 = vadd.f32 0.0, %v981
  %983 = vmatmul.f32.gmra.mxu0 %v773
  %v984 = vpop.f32.mrf.mxu0
  %v985 = vadd.f32 0.0, %v984
  %986 = vmatmul.f32.gmra.mxu0 %v776
  %v987 = vpop.f32.mrf.mxu0
  %v988 = vadd.f32 0.0, %v987
  %989 = vmatmul.f32.gmra.mxu0 %v779
  %v990 = vpop.f32.mrf.mxu0
  %v991 = vadd.f32 0.0, %v990
  %992 = vmatmul.f32.gmra.mxu0 %v782
  %v993 = vpop.f32.mrf.mxu0
  %v994 = vadd.f32 0.0, %v993
  %995 = vmatmul.f32.gmra.mxu0 %v785
  %v996 = vpop.f32.mrf.mxu0
  %v997 = vadd.f32 0.0, %v996
  %998 = vmatmul.f32.gmra.mxu0 %v788
  %v999 = vpop.f32.mrf.mxu0
  %v1000 = vadd.f32 0.0, %v999
  %1001 = vmatmul.f32.gmra.mxu0 %v791
  %v1002 = vpop.f32.mrf.mxu0
  %v1003 = vadd.f32 0.0, %v1002
  %1004 = vmatmul.f32.gmra.mxu0 %v794
  %v1005 = vpop.f32.mrf.mxu0
  %v1006 = vadd.f32 0.0, %v1005
  %1007 = vmatmul.f32.gmra.mxu0 %v797
  %v1008 = vpop.f32.mrf.mxu0
  %v1009 = vadd.f32 0.0, %v1008
  %1010 = vmatmul.f32.gmra.mxu0 %v800
  %v1011 = vpop.f32.mrf.mxu0
  %v1012 = vadd.f32 0.0, %v1011
  %1013 = vmatmul.f32.gmra.mxu0 %v803
  %v1014 = vpop.f32.mrf.mxu0
  %v1015 = vadd.f32 0.0, %v1014
  %1016 = vmatmul.f32.gmra.mxu0 %v806
  %v1017 = vpop.f32.mrf.mxu0
  %v1018 = vadd.f32 0.0, %v1017
  %1019 = vmatmul.f32.gmra.mxu0 %v809
  %v1020 = vpop.f32.mrf.mxu0
  %v1021 = vadd.f32 0.0, %v1020
  %1022 = vmatmul.f32.gmra.mxu0 %v812
  %v1023 = vpop.f32.mrf.mxu0
  %v1024 = vadd.f32 0.0, %v1023
  %1025 = vmatmul.f32.gmra.mxu0 %v815
  %v1026 = vpop.f32.mrf.mxu0
  %v1027 = vadd.f32 0.0, %v1026
  %1028 = vmatmul.f32.gmra.mxu0 %v818
  %v1029 = vpop.f32.mrf.mxu0
  %v1030 = vadd.f32 0.0, %v1029
  %1031 = vmatmul.f32.gmra.mxu0 %v821
  %v1032 = vpop.f32.mrf.mxu0
  %v1033 = vadd.f32 0.0, %v1032
  %1034 = vmatmul.f32.gmra.mxu0 %v824
  %v1035 = vpop.f32.mrf.mxu0
  %v1036 = vadd.f32 0.0, %v1035
  %1037 = vmatmul.f32.gmra.mxu0 %v827
  %v1038 = vpop.f32.mrf.mxu0
  %v1039 = vadd.f32 0.0, %v1038
  %1040 = vmatmul.f32.gmra.mxu0 %v830
  %v1041 = vpop.f32.mrf.mxu0
  %v1042 = vadd.f32 0.0, %v1041
  %1043 = vmatmul.f32.gmra.mxu0 %v833
  %v1044 = vpop.f32.mrf.mxu0
  %v1045 = vadd.f32 0.0, %v1044
  %1046 = vmatmul.f32.gmra.mxu0 %v836
  %v1047 = vpop.f32.mrf.mxu0
  %v1048 = vadd.f32 0.0, %v1047
  %1049 = vmatmul.f32.gmra.mxu0 %v839
  %v1050 = vpop.f32.mrf.mxu0
  %v1051 = vadd.f32 0.0, %v1050
  %1052 = vmatmul.f32.gmra.mxu0 %v842
  %v1053 = vpop.f32.mrf.mxu0
  %v1054 = vadd.f32 0.0, %v1053
  %1055 = vmatmul.f32.gmra.mxu0 %v845
  %v1056 = vpop.f32.mrf.mxu0
  %v1057 = vadd.f32 0.0, %v1056
  %1058 = vmatmul.f32.gmra.mxu0 %v848
  %v1059 = vpop.f32.mrf.mxu0
  %v1060 = vadd.f32 0.0, %v1059
  %1061 = vmatmul.f32.gmra.mxu0 %v851
  %v1062 = vpop.f32.mrf.mxu0
  %v1063 = vadd.f32 0.0, %v1062
  %1064 = vmatmul.f32.gmra.mxu0 %v854
  %v1065 = vpop.f32.mrf.mxu0
  %v1066 = vadd.f32 0.0, %v1065
  %1067 = vmatmul.f32.gmra.mxu0 %v857
  %v1068 = vpop.f32.mrf.mxu0
  %v1069 = vadd.f32 0.0, %v1068
  %1070 = vmatmul.f32.gmra.mxu0 %v860
  %v1071 = vpop.f32.mrf.mxu0
  %v1072 = vadd.f32 0.0, %v1071
  %1073 = vmatmul.f32.gmra.mxu0 %v863
  %v1074 = vpop.f32.mrf.mxu0
  %v1075 = vadd.f32 0.0, %v1074
  %1076 = vmatmul.f32.gmra.mxu0 %v866
  %v1077 = vpop.f32.mrf.mxu0
  %v1078 = vadd.f32 0.0, %v1077
  %1079 = vmatmul.f32.gmra.mxu0 %v869
  %v1080 = vpop.f32.mrf.mxu0
  %v1081 = vadd.f32 0.0, %v1080
  %1082 = vdwg.mxu0
  %v1083 = vadd.f32 %v613, %v892
  %v1084 = vadd.f32 %v614, %v895
  %v1085 = vadd.f32 %v615, %v898
  %v1086 = vadd.f32 %v616, %v901
  %v1087 = vadd.f32 %v617, %v904
  %v1088 = vadd.f32 %v618, %v907
  %v1089 = vadd.f32 %v619, %v910
  %v1090 = vadd.f32 %v620, %v913
  %v1091 = vadd.f32 %v621, %v916
  %v1092 = vadd.f32 %v622, %v919
  %v1093 = vadd.f32 %v623, %v922
  %v1094 = vadd.f32 %v624, %v925
  %v1095 = vadd.f32 %v625, %v928
  %v1096 = vadd.f32 %v626, %v931
  %v1097 = vadd.f32 %v627, %v934
  %v1098 = vadd.f32 %v628, %v937
  %v1099 = vadd.f32 %v629, %v940
  %v1100 = vadd.f32 %v630, %v943
  %v1101 = vadd.f32 %v631, %v946
  %v1102 = vadd.f32 %v632, %v949
  %v1103 = vadd.f32 %v633, %v952
  %v1104 = vadd.f32 %v634, %v955
  %v1105 = vadd.f32 %v635, %v958
  %v1106 = vadd.f32 %v636, %v961
  %v1107 = vadd.f32 %v637, %v964
  %v1108 = vadd.f32 %v638, %v967
  %v1109 = vadd.f32 %v639, %v970
  %v1110 = vadd.f32 %v640, %v973
  %v1111 = vadd.f32 %v641, %v976
  %v1112 = vadd.f32 %v642, %v979
  %v1113 = vadd.f32 %v643, %v982
  %v1114 = vadd.f32 %v644, %v985
  %v1115 = vadd.f32 %v645, %v988
  %v1116 = vadd.f32 %v646, %v991
  %v1117 = vadd.f32 %v647, %v994
  %v1118 = vadd.f32 %v648, %v997
  %v1119 = vadd.f32 %v649, %v1000
  %v1120 = vadd.f32 %v650, %v1003
  %v1121 = vadd.f32 %v651, %v1006
  %v1122 = vadd.f32 %v652, %v1009
  %v1123 = vadd.f32 %v653, %v1012
  %v1124 = vadd.f32 %v654, %v1015
  %v1125 = vadd.f32 %v655, %v1018
  %v1126 = vadd.f32 %v656, %v1021
  %v1127 = vadd.f32 %v657, %v1024
  %v1128 = vadd.f32 %v658, %v1027
  %v1129 = vadd.f32 %v659, %v1030
  %v1130 = vadd.f32 %v660, %v1033
  %v1131 = vadd.f32 %v661, %v1036
  %v1132 = vadd.f32 %v662, %v1039
  %v1133 = vadd.f32 %v663, %v1042
  %v1134 = vadd.f32 %v664, %v1045
  %v1135 = vadd.f32 %v665, %v1048
  %v1136 = vadd.f32 %v666, %v1051
  %v1137 = vadd.f32 %v667, %v1054
  %v1138 = vadd.f32 %v668, %v1057
  %v1139 = vadd.f32 %v669, %v1060
  %v1140 = vadd.f32 %v670, %v1063
  %v1141 = vadd.f32 %v671, %v1066
  %v1142 = vadd.f32 %v672, %v1069
  %v1143 = vadd.f32 %v673, %v1072
  %v1144 = vadd.f32 %v674, %v1075
  %v1145 = vadd.f32 %v675, %v1078
  %v1146 = vadd.f32 %v676, %v1081
  %1147 = vst [vmem:[#allocation2] sm:$0xff] %v1083
  %1148 = vst [vmem:[#allocation2 + $0x8] sm:$0xff] %v1084
  %1149 = vst [vmem:[#allocation2 + $0x10] sm:$0xff] %v1085
  %1150 = vst [vmem:[#allocation2 + $0x18] sm:$0xff] %v1086
  %1151 = vst [vmem:[#allocation2 + $0x20] sm:$0xff] %v1087
  %1152 = vst [vmem:[#allocation2 + $0x28] sm:$0xff] %v1088
  %1153 = vst [vmem:[#allocation2 + $0x30] sm:$0xff] %v1089
  %1154 = vst [vmem:[#allocation2 + $0x38] sm:$0xff] %v1090
  %1155 = vst [vmem:[#allocation2 + $0x40] sm:$0xff] %v1091
  %1156 = vst [vmem:[#allocation2 + $0x48] sm:$0xff] %v1092
  %1157 = vst [vmem:[#allocation2 + $0x50] sm:$0xff] %v1093
  %1158 = vst [vmem:[#allocation2 + $0x58] sm:$0xff] %v1094
  %1159 = vst [vmem:[#allocation2 + $0x60] sm:$0xff] %v1095
  %1160 = vst [vmem:[#allocation2 + $0x68] sm:$0xff] %v1096
  %1161 = vst [vmem:[#allocation2 + $0x70] sm:$0xff] %v1097
  %1162 = vst [vmem:[#allocation2 + $0x78] sm:$0xff] %v1098
  %1163 = vst [vmem:[#allocation2 + $0x80] sm:$0xff] %v1099
  %1164 = vst [vmem:[#allocation2 + $0x88] sm:$0xff] %v1100
  %1165 = vst [vmem:[#allocation2 + $0x90] sm:$0xff] %v1101
  %1166 = vst [vmem:[#allocation2 + $0x98] sm:$0xff] %v1102
  %1167 = vst [vmem:[#allocation2 + $0xa0] sm:$0xff] %v1103
  %1168 = vst [vmem:[#allocation2 + $0xa8] sm:$0xff] %v1104
  %1169 = vst [vmem:[#allocation2 + $0xb0] sm:$0xff] %v1105
  %1170 = vst [vmem:[#allocation2 + $0xb8] sm:$0xff] %v1106
  %1171 = vst [vmem:[#allocation2 + $0xc0] sm:$0xff] %v1107
  %1172 = vst [vmem:[#allocation2 + $0xc8] sm:$0xff] %v1108
  %1173 = vst [vmem:[#allocation2 + $0xd0] sm:$0xff] %v1109
  %1174 = vst [vmem:[#allocation2 + $0xd8] sm:$0xff] %v1110
  %1175 = vst [vmem:[#allocation2 + $0xe0] sm:$0xff] %v1111
  %1176 = vst [vmem:[#allocation2 + $0xe8] sm:$0xff] %v1112
  %1177 = vst [vmem:[#allocation2 + $0xf0] sm:$0xff] %v1113
  %1178 = vst [vmem:[#allocation2 + $0xf8] sm:$0xff] %v1114
  %1179 = vst [vmem:[#allocation2 + $0x100] sm:$0xff] %v1115
  %1180 = vst [vmem:[#allocation2 + $0x108] sm:$0xff] %v1116
  %1181 = vst [vmem:[#allocation2 + $0x110] sm:$0xff] %v1117
  %1182 = vst [vmem:[#allocation2 + $0x118] sm:$0xff] %v1118
  %1183 = vst [vmem:[#allocation2 + $0x120] sm:$0xff] %v1119
  %1184 = vst [vmem:[#allocation2 + $0x128] sm:$0xff] %v1120
  %1185 = vst [vmem:[#allocation2 + $0x130] sm:$0xff] %v1121
  %1186 = vst [vmem:[#allocation2 + $0x138] sm:$0xff] %v1122
  %1187 = vst [vmem:[#allocation2 + $0x140] sm:$0xff] %v1123
  %1188 = vst [vmem:[#allocation2 + $0x148] sm:$0xff] %v1124
  %1189 = vst [vmem:[#allocation2 + $0x150] sm:$0xff] %v1125
  %1190 = vst [vmem:[#allocation2 + $0x158] sm:$0xff] %v1126
  %1191 = vst [vmem:[#allocation2 + $0x160] sm:$0xff] %v1127
  %1192 = vst [vmem:[#allocation2 + $0x168] sm:$0xff] %v1128
  %1193 = vst [vmem:[#allocation2 + $0x170] sm:$0xff] %v1129
  %1194 = vst [vmem:[#allocation2 + $0x178] sm:$0xff] %v1130
  %1195 = vst [vmem:[#allocation2 + $0x180] sm:$0xff] %v1131
  %1196 = vst [vmem:[#allocation2 + $0x188] sm:$0xff] %v1132
  %1197 = vst [vmem:[#allocation2 + $0x190] sm:$0xff] %v1133
  %1198 = vst [vmem:[#allocation2 + $0x198] sm:$0xff] %v1134
  %1199 = vst [vmem:[#allocation2 + $0x1a0] sm:$0xff] %v1135
  %1200 = vst [vmem:[#allocation2 + $0x1a8] sm:$0xff] %v1136
  %1201 = vst [vmem:[#allocation2 + $0x1b0] sm:$0xff] %v1137
  %1202 = vst [vmem:[#allocation2 + $0x1b8] sm:$0xff] %v1138
  %1203 = vst [vmem:[#allocation2 + $0x1c0] sm:$0xff] %v1139
  %1204 = vst [vmem:[#allocation2 + $0x1c8] sm:$0xff] %v1140
  %1205 = vst [vmem:[#allocation2 + $0x1d0] sm:$0xff] %v1141
  %1206 = vst [vmem:[#allocation2 + $0x1d8] sm:$0xff] %v1142
  %1207 = vst [vmem:[#allocation2 + $0x1e0] sm:$0xff] %v1143
  %1208 = vst [vmem:[#allocation2 + $0x1e8] sm:$0xff] %v1144
  %1209 = vst [vmem:[#allocation2 + $0x1f0] sm:$0xff] %v1145
  %1210 = vst [vmem:[#allocation2 + $0x1f8] sm:$0xff] %v1146
  %s1211 = scalar_lea.vmem %s0, 32
  %v1212 = vld [vmem:[%s1211] sm:$0xff]
  %v1213 = vld [vmem:[%s1211 + $0x8] sm:$0xff]
  %v1214 = vld [vmem:[%s1211 + $0x10] sm:$0xff]
  %v1215 = vld [vmem:[%s1211 + $0x18] sm:$0xff]
  %v1216 = vld [vmem:[%s1211 + $0x20] sm:$0xff]
  %v1217 = vld [vmem:[%s1211 + $0x28] sm:$0xff]
  %v1218 = vld [vmem:[%s1211 + $0x30] sm:$0xff]
  %v1219 = vld [vmem:[%s1211 + $0x38] sm:$0xff]
  %v1220 = vld [vmem:[%s1211 + $0x40] sm:$0xff]
  %v1221 = vld [vmem:[%s1211 + $0x48] sm:$0xff]
  %v1222 = vld [vmem:[%s1211 + $0x50] sm:$0xff]
  %v1223 = vld [vmem:[%s1211 + $0x58] sm:$0xff]
  %v1224 = vld [vmem:[%s1211 + $0x60] sm:$0xff]
  %v1225 = vld [vmem:[%s1211 + $0x68] sm:$0xff]
  %v1226 = vld [vmem:[%s1211 + $0x70] sm:$0xff]
  %v1227 = vld [vmem:[%s1211 + $0x78] sm:$0xff]
  %v1228 = vld [vmem:[%s1211 + $0x80] sm:$0xff]
  %v1229 = vld [vmem:[%s1211 + $0x88] sm:$0xff]
  %v1230 = vld [vmem:[%s1211 + $0x90] sm:$0xff]
  %v1231 = vld [vmem:[%s1211 + $0x98] sm:$0xff]
  %v1232 = vld [vmem:[%s1211 + $0xa0] sm:$0xff]
  %v1233 = vld [vmem:[%s1211 + $0xa8] sm:$0xff]
  %v1234 = vld [vmem:[%s1211 + $0xb0] sm:$0xff]
  %v1235 = vld [vmem:[%s1211 + $0xb8] sm:$0xff]
  %v1236 = vld [vmem:[%s1211 + $0xc0] sm:$0xff]
  %v1237 = vld [vmem:[%s1211 + $0xc8] sm:$0xff]
  %v1238 = vld [vmem:[%s1211 + $0xd0] sm:$0xff]
  %v1239 = vld [vmem:[%s1211 + $0xd8] sm:$0xff]
  %v1240 = vld [vmem:[%s1211 + $0xe0] sm:$0xff]
  %v1241 = vld [vmem:[%s1211 + $0xe8] sm:$0xff]
  %v1242 = vld [vmem:[%s1211 + $0xf0] sm:$0xff]
  %v1243 = vld [vmem:[%s1211 + $0xf8] sm:$0xff]
  %v1244 = vld [vmem:[%s1211 + $0x180] sm:$0xff]
  %v1245 = vld [vmem:[%s1211 + $0x188] sm:$0xff]
  %v1246 = vld [vmem:[%s1211 + $0x190] sm:$0xff]
  %v1247 = vld [vmem:[%s1211 + $0x198] sm:$0xff]
  %v1248 = vld [vmem:[%s1211 + $0x1a0] sm:$0xff]
  %v1249 = vld [vmem:[%s1211 + $0x1a8] sm:$0xff]
  %v1250 = vld [vmem:[%s1211 + $0x1b0] sm:$0xff]
  %v1251 = vld [vmem:[%s1211 + $0x1b8] sm:$0xff]
  %v1252 = vld [vmem:[%s1211 + $0x1c0] sm:$0xff]
  %v1253 = vld [vmem:[%s1211 + $0x1c8] sm:$0xff]
  %v1254 = vld [vmem:[%s1211 + $0x1d0] sm:$0xff]
  %v1255 = vld [vmem:[%s1211 + $0x1d8] sm:$0xff]
  %v1256 = vld [vmem:[%s1211 + $0x1e0] sm:$0xff]
  %v1257 = vld [vmem:[%s1211 + $0x1e8] sm:$0xff]
  %v1258 = vld [vmem:[%s1211 + $0x1f0] sm:$0xff]
  %v1259 = vld [vmem:[%s1211 + $0x1f8] sm:$0xff]
  %v1260 = vld [vmem:[%s1211 + $0x200] sm:$0xff]
  %v1261 = vld [vmem:[%s1211 + $0x208] sm:$0xff]
  %v1262 = vld [vmem:[%s1211 + $0x210] sm:$0xff]
  %v1263 = vld [vmem:[%s1211 + $0x218] sm:$0xff]
  %v1264 = vld [vmem:[%s1211 + $0x220] sm:$0xff]
  %v1265 = vld [vmem:[%s1211 + $0x228] sm:$0xff]
  %v1266 = vld [vmem:[%s1211 + $0x230] sm:$0xff]
  %v1267 = vld [vmem:[%s1211 + $0x238] sm:$0xff]
  %v1268 = vld [vmem:[%s1211 + $0x240] sm:$0xff]
  %v1269 = vld [vmem:[%s1211 + $0x248] sm:$0xff]
  %v1270 = vld [vmem:[%s1211 + $0x250] sm:$0xff]
  %v1271 = vld [vmem:[%s1211 + $0x258] sm:$0xff]
  %v1272 = vld [vmem:[%s1211 + $0x260] sm:$0xff]
  %v1273 = vld [vmem:[%s1211 + $0x268] sm:$0xff]
  %v1274 = vld [vmem:[%s1211 + $0x270] sm:$0xff]
  %v1275 = vld [vmem:[%s1211 + $0x278] sm:$0xff]
  %v1276 = vld [vmem:[#allocation2] sm:$0xff]
  %v1277 = vld [vmem:[#allocation2 + $0x8] sm:$0xff]
  %v1278 = vld [vmem:[#allocation2 + $0x10] sm:$0xff]
  %v1279 = vld [vmem:[#allocation2 + $0x18] sm:$0xff]
  %v1280 = vld [vmem:[#allocation2 + $0x20] sm:$0xff]
  %v1281 = vld [vmem:[#allocation2 + $0x28] sm:$0xff]
  %v1282 = vld [vmem:[#allocation2 + $0x30] sm:$0xff]
  %v1283 = vld [vmem:[#allocation2 + $0x38] sm:$0xff]
  %v1284 = vld [vmem:[#allocation2 + $0x40] sm:$0xff]
  %v1285 = vld [vmem:[#allocation2 + $0x48] sm:$0xff]
  %v1286 = vld [vmem:[#allocation2 + $0x50] sm:$0xff]
  %v1287 = vld [vmem:[#allocation2 + $0x58] sm:$0xff]
  %v1288 = vld [vmem:[#allocation2 + $0x60] sm:$0xff]
  %v1289 = vld [vmem:[#allocation2 + $0x68] sm:$0xff]
  %v1290 = vld [vmem:[#allocation2 + $0x70] sm:$0xff]
  %v1291 = vld [vmem:[#allocation2 + $0x78] sm:$0xff]
  %v1292 = vld [vmem:[#allocation2 + $0x80] sm:$0xff]
  %v1293 = vld [vmem:[#allocation2 + $0x88] sm:$0xff]
  %v1294 = vld [vmem:[#allocation2 + $0x90] sm:$0xff]
  %v1295 = vld [vmem:[#allocation2 + $0x98] sm:$0xff]
  %v1296 = vld [vmem:[#allocation2 + $0xa0] sm:$0xff]
  %v1297 = vld [vmem:[#allocation2 + $0xa8] sm:$0xff]
  %v1298 = vld [vmem:[#allocation2 + $0xb0] sm:$0xff]
  %v1299 = vld [vmem:[#allocation2 + $0xb8] sm:$0xff]
  %v1300 = vld [vmem:[#allocation2 + $0xc0] sm:$0xff]
  %v1301 = vld [vmem:[#allocation2 + $0xc8] sm:$0xff]
  %v1302 = vld [vmem:[#allocation2 + $0xd0] sm:$0xff]
  %v1303 = vld [vmem:[#allocation2 + $0xd8] sm:$0xff]
  %v1304 = vld [vmem:[#allocation2 + $0xe0] sm:$0xff]
  %v1305 = vld [vmem:[#allocation2 + $0xe8] sm:$0xff]
  %v1306 = vld [vmem:[#allocation2 + $0xf0] sm:$0xff]
  %v1307 = vld [vmem:[#allocation2 + $0xf8] sm:$0xff]
  %v1308 = vld [vmem:[#allocation2 + $0x100] sm:$0xff]
  %v1309 = vld [vmem:[#allocation2 + $0x108] sm:$0xff]
  %v1310 = vld [vmem:[#allocation2 + $0x110] sm:$0xff]
  %v1311 = vld [vmem:[#allocation2 + $0x118] sm:$0xff]
  %v1312 = vld [vmem:[#allocation2 + $0x120] sm:$0xff]
  %v1313 = vld [vmem:[#allocation2 + $0x128] sm:$0xff]
  %v1314 = vld [vmem:[#allocation2 + $0x130] sm:$0xff]
  %v1315 = vld [vmem:[#allocation2 + $0x138] sm:$0xff]
  %v1316 = vld [vmem:[#allocation2 + $0x140] sm:$0xff]
  %v1317 = vld [vmem:[#allocation2 + $0x148] sm:$0xff]
  %v1318 = vld [vmem:[#allocation2 + $0x150] sm:$0xff]
  %v1319 = vld [vmem:[#allocation2 + $0x158] sm:$0xff]
  %v1320 = vld [vmem:[#allocation2 + $0x160] sm:$0xff]
  %v1321 = vld [vmem:[#allocation2 + $0x168] sm:$0xff]
  %v1322 = vld [vmem:[#allocation2 + $0x170] sm:$0xff]
  %v1323 = vld [vmem:[#allocation2 + $0x178] sm:$0xff]
  %v1324 = vld [vmem:[#allocation2 + $0x180] sm:$0xff]
  %v1325 = vld [vmem:[#allocation2 + $0x188] sm:$0xff]
  %v1326 = vld [vmem:[#allocation2 + $0x190] sm:$0xff]
  %v1327 = vld [vmem:[#allocation2 + $0x198] sm:$0xff]
  %v1328 = vld [vmem:[#allocation2 + $0x1a0] sm:$0xff]
  %v1329 = vld [vmem:[#allocation2 + $0x1a8] sm:$0xff]
  %v1330 = vld [vmem:[#allocation2 + $0x1b0] sm:$0xff]
  %v1331 = vld [vmem:[#allocation2 + $0x1b8] sm:$0xff]
  %v1332 = vld [vmem:[#allocation2 + $0x1c0] sm:$0xff]
  %v1333 = vld [vmem:[#allocation2 + $0x1c8] sm:$0xff]
  %v1334 = vld [vmem:[#allocation2 + $0x1d0] sm:$0xff]
  %v1335 = vld [vmem:[#allocation2 + $0x1d8] sm:$0xff]
  %v1336 = vld [vmem:[#allocation2 + $0x1e0] sm:$0xff]
  %v1337 = vld [vmem:[#allocation2 + $0x1e8] sm:$0xff]
  %v1338 = vld [vmem:[#allocation2 + $0x1f0] sm:$0xff]
  %v1339 = vld [vmem:[#allocation2 + $0x1f8] sm:$0xff]
  %s1340 = scalar_lea.vmem %s1, 8
  %v1341 = vld [vmem:[%s1340] sm:$0xf]
  %v1343 = vsel %vm78, %v1212, 0
  %v1346 = vsel %vm78, %v1213, 0
  %v1349 = vsel %vm78, %v1214, 0
  %v1352 = vsel %vm78, %v1215, 0
  %v1355 = vsel %vm78, %v1216, 0
  %v1358 = vsel %vm78, %v1217, 0
  %v1361 = vsel %vm78, %v1218, 0
  %v1364 = vsel %vm78, %v1219, 0
  %v1367 = vsel %vm78, %v1220, 0
  %v1370 = vsel %vm78, %v1221, 0
  %v1373 = vsel %vm78, %v1222, 0
  %v1376 = vsel %vm78, %v1223, 0
  %v1379 = vsel %vm78, %v1224, 0
  %v1382 = vsel %vm78, %v1225, 0
  %v1385 = vsel %vm78, %v1226, 0
  %v1388 = vsel %vm78, %v1227, 0
  %v1391 = vsel %vm78, %v1228, 0
  %v1394 = vsel %vm78, %v1229, 0
  %v1397 = vsel %vm78, %v1230, 0
  %v1400 = vsel %vm78, %v1231, 0
  %v1403 = vsel %vm78, %v1232, 0
  %v1406 = vsel %vm78, %v1233, 0
  %v1409 = vsel %vm78, %v1234, 0
  %v1412 = vsel %vm78, %v1235, 0
  %v1415 = vsel %vm78, %v1236, 0
  %v1418 = vsel %vm78, %v1237, 0
  %v1421 = vsel %vm78, %v1238, 0
  %v1424 = vsel %vm78, %v1239, 0
  %v1427 = vsel %vm78, %v1240, 0
  %v1430 = vsel %vm78, %v1241, 0
  %v1433 = vsel %vm78, %v1242, 0
  %v1436 = vsel %vm78, %v1243, 0
  %v1439 = vsel %vm78, %v1244, 0
  %v1442 = vsel %vm78, %v1245, 0
  %v1445 = vsel %vm78, %v1246, 0
  %v1448 = vsel %vm78, %v1247, 0
  %v1451 = vsel %vm78, %v1248, 0
  %v1454 = vsel %vm78, %v1249, 0
  %v1457 = vsel %vm78, %v1250, 0
  %v1460 = vsel %vm78, %v1251, 0
  %v1463 = vsel %vm78, %v1252, 0
  %v1466 = vsel %vm78, %v1253, 0
  %v1469 = vsel %vm78, %v1254, 0
  %v1472 = vsel %vm78, %v1255, 0
  %v1475 = vsel %vm78, %v1256, 0
  %v1478 = vsel %vm78, %v1257, 0
  %v1481 = vsel %vm78, %v1258, 0
  %v1484 = vsel %vm78, %v1259, 0
  %v1487 = vsel %vm78, %v1260, 0
  %v1490 = vsel %vm78, %v1261, 0
  %v1493 = vsel %vm78, %v1262, 0
  %v1496 = vsel %vm78, %v1263, 0
  %v1499 = vsel %vm78, %v1264, 0
  %v1502 = vsel %vm78, %v1265, 0
  %v1505 = vsel %vm78, %v1266, 0
  %v1508 = vsel %vm78, %v1267, 0
  %v1511 = vsel %vm78, %v1268, 0
  %v1514 = vsel %vm78, %v1269, 0
  %v1517 = vsel %vm78, %v1270, 0
  %v1520 = vsel %vm78, %v1271, 0
  %v1523 = vsel %vm78, %v1272, 0
  %v1526 = vsel %vm78, %v1273, 0
  %v1529 = vsel %vm78, %v1274, 0
  %v1532 = vsel %vm78, %v1275, 0
  %v1535 = vsel %vm271, %v1341, 0
  %1537 = vmatpush.msra.mxu0 0.0
  %1538 = vmatpush.msra.mxu0 0.0
  %1539 = vmatpush.msra.mxu0 0.0
  %1540 = vmatpush.msra.mxu0 0.0
  %1541 = vmatpush.msra.mxu0 0.0
  %1542 = vmatpush.msra.mxu0 0.0
  %1543 = vmatpush.msra.mxu0 0.0
  %1544 = vmatpush.msra.mxu0 0.0
  %1545 = vmatpush.msra.mxu0 0.0
  %1546 = vmatpush.msra.mxu0 0.0
  %1547 = vmatpush.msra.mxu0 0.0
  %1548 = vmatpush.msra.mxu0 0.0
  %1549 = vmatpush.msra.mxu0 0.0
  %1550 = vmatpush.msra.mxu0 0.0
  %1551 = vmatpush.msra.mxu0 0.0
  %1552 = vmatpush.msra.mxu0 %v1535
  %1553 = vmatmul.f32.gmra.mxu0 %v1343
  %v1554 = vpop.f32.mrf.mxu0
  %v1555 = vadd.f32 0.0, %v1554
  %1556 = vmatmul.f32.gmra.mxu0 %v1346
  %v1557 = vpop.f32.mrf.mxu0
  %v1558 = vadd.f32 0.0, %v1557
  %1559 = vmatmul.f32.gmra.mxu0 %v1349
  %v1560 = vpop.f32.mrf.mxu0
  %v1561 = vadd.f32 0.0, %v1560
  %1562 = vmatmul.f32.gmra.mxu0 %v1352
  %v1563 = vpop.f32.mrf.mxu0
  %v1564 = vadd.f32 0.0, %v1563
  %1565 = vmatmul.f32.gmra.mxu0 %v1355
  %v1566 = vpop.f32.mrf.mxu0
  %v1567 = vadd.f32 0.0, %v1566
  %1568 = vmatmul.f32.gmra.mxu0 %v1358
  %v1569 = vpop.f32.mrf.mxu0
  %v1570 = vadd.f32 0.0, %v1569
  %1571 = vmatmul.f32.gmra.mxu0 %v1361
  %v1572 = vpop.f32.mrf.mxu0
  %v1573 = vadd.f32 0.0, %v1572
  %1574 = vmatmul.f32.gmra.mxu0 %v1364
  %v1575 = vpop.f32.mrf.mxu0
  %v1576 = vadd.f32 0.0, %v1575
  %1577 = vmatmul.f32.gmra.mxu0 %v1367
  %v1578 = vpop.f32.mrf.mxu0
  %v1579 = vadd.f32 0.0, %v1578
  %1580 = vmatmul.f32.gmra.mxu0 %v1370
  %v1581 = vpop.f32.mrf.mxu0
  %v1582 = vadd.f32 0.0, %v1581
  %1583 = vmatmul.f32.gmra.mxu0 %v1373
  %v1584 = vpop.f32.mrf.mxu0
  %v1585 = vadd.f32 0.0, %v1584
  %1586 = vmatmul.f32.gmra.mxu0 %v1376
  %v1587 = vpop.f32.mrf.mxu0
  %v1588 = vadd.f32 0.0, %v1587
  %1589 = vmatmul.f32.gmra.mxu0 %v1379
  %v1590 = vpop.f32.mrf.mxu0
  %v1591 = vadd.f32 0.0, %v1590
  %1592 = vmatmul.f32.gmra.mxu0 %v1382
  %v1593 = vpop.f32.mrf.mxu0
  %v1594 = vadd.f32 0.0, %v1593
  %1595 = vmatmul.f32.gmra.mxu0 %v1385
  %v1596 = vpop.f32.mrf.mxu0
  %v1597 = vadd.f32 0.0, %v1596
  %1598 = vmatmul.f32.gmra.mxu0 %v1388
  %v1599 = vpop.f32.mrf.mxu0
  %v1600 = vadd.f32 0.0, %v1599
  %1601 = vmatmul.f32.gmra.mxu0 %v1391
  %v1602 = vpop.f32.mrf.mxu0
  %v1603 = vadd.f32 0.0, %v1602
  %1604 = vmatmul.f32.gmra.mxu0 %v1394
  %v1605 = vpop.f32.mrf.mxu0
  %v1606 = vadd.f32 0.0, %v1605
  %1607 = vmatmul.f32.gmra.mxu0 %v1397
  %v1608 = vpop.f32.mrf.mxu0
  %v1609 = vadd.f32 0.0, %v1608
  %1610 = vmatmul.f32.gmra.mxu0 %v1400
  %v1611 = vpop.f32.mrf.mxu0
  %v1612 = vadd.f32 0.0, %v1611
  %1613 = vmatmul.f32.gmra.mxu0 %v1403
  %v1614 = vpop.f32.mrf.mxu0
  %v1615 = vadd.f32 0.0, %v1614
  %1616 = vmatmul.f32.gmra.mxu0 %v1406
  %v1617 = vpop.f32.mrf.mxu0
  %v1618 = vadd.f32 0.0, %v1617
  %1619 = vmatmul.f32.gmra.mxu0 %v1409
  %v1620 = vpop.f32.mrf.mxu0
  %v1621 = vadd.f32 0.0, %v1620
  %1622 = vmatmul.f32.gmra.mxu0 %v1412
  %v1623 = vpop.f32.mrf.mxu0
  %v1624 = vadd.f32 0.0, %v1623
  %1625 = vmatmul.f32.gmra.mxu0 %v1415
  %v1626 = vpop.f32.mrf.mxu0
  %v1627 = vadd.f32 0.0, %v1626
  %1628 = vmatmul.f32.gmra.mxu0 %v1418
  %v1629 = vpop.f32.mrf.mxu0
  %v1630 = vadd.f32 0.0, %v1629
  %1631 = vmatmul.f32.gmra.mxu0 %v1421
  %v1632 = vpop.f32.mrf.mxu0
  %v1633 = vadd.f32 0.0, %v1632
  %1634 = vmatmul.f32.gmra.mxu0 %v1424
  %v1635 = vpop.f32.mrf.mxu0
  %v1636 = vadd.f32 0.0, %v1635
  %1637 = vmatmul.f32.gmra.mxu0 %v1427
  %v1638 = vpop.f32.mrf.mxu0
  %v1639 = vadd.f32 0.0, %v1638
  %1640 = vmatmul.f32.gmra.mxu0 %v1430
  %v1641 = vpop.f32.mrf.mxu0
  %v1642 = vadd.f32 0.0, %v1641
  %1643 = vmatmul.f32.gmra.mxu0 %v1433
  %v1644 = vpop.f32.mrf.mxu0
  %v1645 = vadd.f32 0.0, %v1644
  %1646 = vmatmul.f32.gmra.mxu0 %v1436
  %v1647 = vpop.f32.mrf.mxu0
  %v1648 = vadd.f32 0.0, %v1647
  %1649 = vmatmul.f32.gmra.mxu0 %v1439
  %v1650 = vpop.f32.mrf.mxu0
  %v1651 = vadd.f32 0.0, %v1650
  %1652 = vmatmul.f32.gmra.mxu0 %v1442
  %v1653 = vpop.f32.mrf.mxu0
  %v1654 = vadd.f32 0.0, %v1653
  %1655 = vmatmul.f32.gmra.mxu0 %v1445
  %v1656 = vpop.f32.mrf.mxu0
  %v1657 = vadd.f32 0.0, %v1656
  %1658 = vmatmul.f32.gmra.mxu0 %v1448
  %v1659 = vpop.f32.mrf.mxu0
  %v1660 = vadd.f32 0.0, %v1659
  %1661 = vmatmul.f32.gmra.mxu0 %v1451
  %v1662 = vpop.f32.mrf.mxu0
  %v1663 = vadd.f32 0.0, %v1662
  %1664 = vmatmul.f32.gmra.mxu0 %v1454
  %v1665 = vpop.f32.mrf.mxu0
  %v1666 = vadd.f32 0.0, %v1665
  %1667 = vmatmul.f32.gmra.mxu0 %v1457
  %v1668 = vpop.f32.mrf.mxu0
  %v1669 = vadd.f32 0.0, %v1668
  %1670 = vmatmul.f32.gmra.mxu0 %v1460
  %v1671 = vpop.f32.mrf.mxu0
  %v1672 = vadd.f32 0.0, %v1671
  %1673 = vmatmul.f32.gmra.mxu0 %v1463
  %v1674 = vpop.f32.mrf.mxu0
  %v1675 = vadd.f32 0.0, %v1674
  %1676 = vmatmul.f32.gmra.mxu0 %v1466
  %v1677 = vpop.f32.mrf.mxu0
  %v1678 = vadd.f32 0.0, %v1677
  %1679 = vmatmul.f32.gmra.mxu0 %v1469
  %v1680 = vpop.f32.mrf.mxu0
  %v1681 = vadd.f32 0.0, %v1680
  %1682 = vmatmul.f32.gmra.mxu0 %v1472
  %v1683 = vpop.f32.mrf.mxu0
  %v1684 = vadd.f32 0.0, %v1683
  %1685 = vmatmul.f32.gmra.mxu0 %v1475
  %v1686 = vpop.f32.mrf.mxu0
  %v1687 = vadd.f32 0.0, %v1686
  %1688 = vmatmul.f32.gmra.mxu0 %v1478
  %v1689 = vpop.f32.mrf.mxu0
  %v1690 = vadd.f32 0.0, %v1689
  %1691 = vmatmul.f32.gmra.mxu0 %v1481
  %v1692 = vpop.f32.mrf.mxu0
  %v1693 = vadd.f32 0.0, %v1692
  %1694 = vmatmul.f32.gmra.mxu0 %v1484
  %v1695 = vpop.f32.mrf.mxu0
  %v1696 = vadd.f32 0.0, %v1695
  %1697 = vmatmul.f32.gmra.mxu0 %v1487
  %v1698 = vpop.f32.mrf.mxu0
  %v1699 = vadd.f32 0.0, %v1698
  %1700 = vmatmul.f32.gmra.mxu0 %v1490
  %v1701 = vpop.f32.mrf.mxu0
  %v1702 = vadd.f32 0.0, %v1701
  %1703 = vmatmul.f32.gmra.mxu0 %v1493
  %v1704 = vpop.f32.mrf.mxu0
  %v1705 = vadd.f32 0.0, %v1704
  %1706 = vmatmul.f32.gmra.mxu0 %v1496
  %v1707 = vpop.f32.mrf.mxu0
  %v1708 = vadd.f32 0.0, %v1707
  %1709 = vmatmul.f32.gmra.mxu0 %v1499
  %v1710 = vpop.f32.mrf.mxu0
  %v1711 = vadd.f32 0.0, %v1710
  %1712 = vmatmul.f32.gmra.mxu0 %v1502
  %v1713 = vpop.f32.mrf.mxu0
  %v1714 = vadd.f32 0.0, %v1713
  %1715 = vmatmul.f32.gmra.mxu0 %v1505
  %v1716 = vpop.f32.mrf.mxu0
  %v1717 = vadd.f32 0.0, %v1716
  %1718 = vmatmul.f32.gmra.mxu0 %v1508
  %v1719 = vpop.f32.mrf.mxu0
  %v1720 = vadd.f32 0.0, %v1719
  %1721 = vmatmul.f32.gmra.mxu0 %v1511
  %v1722 = vpop.f32.mrf.mxu0
  %v1723 = vadd.f32 0.0, %v1722
  %1724 = vmatmul.f32.gmra.mxu0 %v1514
  %v1725 = vpop.f32.mrf.mxu0
  %v1726 = vadd.f32 0.0, %v1725
  %1727 = vmatmul.f32.gmra.mxu0 %v1517
  %v1728 = vpop.f32.mrf.mxu0
  %v1729 = vadd.f32 0.0, %v1728
  %1730 = vmatmul.f32.gmra.mxu0 %v1520
  %v1731 = vpop.f32.mrf.mxu0
  %v1732 = vadd.f32 0.0, %v1731
  %1733 = vmatmul.f32.gmra.mxu0 %v1523
  %v1734 = vpop.f32.mrf.mxu0
  %v1735 = vadd.f32 0.0, %v1734
  %1736 = vmatmul.f32.gmra.mxu0 %v1526
  %v1737 = vpop.f32.mrf.mxu0
  %v1738 = vadd.f32 0.0, %v1737
  %1739 = vmatmul.f32.gmra.mxu0 %v1529
  %v1740 = vpop.f32.mrf.mxu0
  %v1741 = vadd.f32 0.0, %v1740
  %1742 = vmatmul.f32.gmra.mxu0 %v1532
  %v1743 = vpop.f32.mrf.mxu0
  %v1744 = vadd.f32 0.0, %v1743
  %1745 = vdwg.mxu0
  %v1746 = vadd.f32 %v1276, %v1555
  %v1747 = vadd.f32 %v1277, %v1558
  %v1748 = vadd.f32 %v1278, %v1561
  %v1749 = vadd.f32 %v1279, %v1564
  %v1750 = vadd.f32 %v1280, %v1567
  %v1751 = vadd.f32 %v1281, %v1570
  %v1752 = vadd.f32 %v1282, %v1573
  %v1753 = vadd.f32 %v1283, %v1576
  %v1754 = vadd.f32 %v1284, %v1579
  %v1755 = vadd.f32 %v1285, %v1582
  %v1756 = vadd.f32 %v1286, %v1585
  %v1757 = vadd.f32 %v1287, %v1588
  %v1758 = vadd.f32 %v1288, %v1591
  %v1759 = vadd.f32 %v1289, %v1594
  %v1760 = vadd.f32 %v1290, %v1597
  %v1761 = vadd.f32 %v1291, %v1600
  %v1762 = vadd.f32 %v1292, %v1603
  %v1763 = vadd.f32 %v1293, %v1606
  %v1764 = vadd.f32 %v1294, %v1609
  %v1765 = vadd.f32 %v1295, %v1612
  %v1766 = vadd.f32 %v1296, %v1615
  %v1767 = vadd.f32 %v1297, %v1618
  %v1768 = vadd.f32 %v1298, %v1621
  %v1769 = vadd.f32 %v1299, %v1624
  %v1770 = vadd.f32 %v1300, %v1627
  %v1771 = vadd.f32 %v1301, %v1630
  %v1772 = vadd.f32 %v1302, %v1633
  %v1773 = vadd.f32 %v1303, %v1636
  %v1774 = vadd.f32 %v1304, %v1639
  %v1775 = vadd.f32 %v1305, %v1642
  %v1776 = vadd.f32 %v1306, %v1645
  %v1777 = vadd.f32 %v1307, %v1648
  %v1778 = vadd.f32 %v1308, %v1651
  %v1779 = vadd.f32 %v1309, %v1654
  %v1780 = vadd.f32 %v1310, %v1657
  %v1781 = vadd.f32 %v1311, %v1660
  %v1782 = vadd.f32 %v1312, %v1663
  %v1783 = vadd.f32 %v1313, %v1666
  %v1784 = vadd.f32 %v1314, %v1669
  %v1785 = vadd.f32 %v1315, %v1672
  %v1786 = vadd.f32 %v1316, %v1675
  %v1787 = vadd.f32 %v1317, %v1678
  %v1788 = vadd.f32 %v1318, %v1681
  %v1789 = vadd.f32 %v1319, %v1684
  %v1790 = vadd.f32 %v1320, %v1687
  %v1791 = vadd.f32 %v1321, %v1690
  %v1792 = vadd.f32 %v1322, %v1693
  %v1793 = vadd.f32 %v1323, %v1696
  %v1794 = vadd.f32 %v1324, %v1699
  %v1795 = vadd.f32 %v1325, %v1702
  %v1796 = vadd.f32 %v1326, %v1705
  %v1797 = vadd.f32 %v1327, %v1708
  %v1798 = vadd.f32 %v1328, %v1711
  %v1799 = vadd.f32 %v1329, %v1714
  %v1800 = vadd.f32 %v1330, %v1717
  %v1801 = vadd.f32 %v1331, %v1720
  %v1802 = vadd.f32 %v1332, %v1723
  %v1803 = vadd.f32 %v1333, %v1726
  %v1804 = vadd.f32 %v1334, %v1729
  %v1805 = vadd.f32 %v1335, %v1732
  %v1806 = vadd.f32 %v1336, %v1735
  %v1807 = vadd.f32 %v1337, %v1738
  %v1808 = vadd.f32 %v1338, %v1741
  %v1809 = vadd.f32 %v1339, %v1744
  %1810 = vst [vmem:[#allocation2] sm:$0xff] %v1746
  %1811 = vst [vmem:[#allocation2 + $0x8] sm:$0xff] %v1747
  %1812 = vst [vmem:[#allocation2 + $0x10] sm:$0xff] %v1748
  %1813 = vst [vmem:[#allocation2 + $0x18] sm:$0xff] %v1749
  %1814 = vst [vmem:[#allocation2 + $0x20] sm:$0xff] %v1750
  %1815 = vst [vmem:[#allocation2 + $0x28] sm:$0xff] %v1751
  %1816 = vst [vmem:[#allocation2 + $0x30] sm:$0xff] %v1752
  %1817 = vst [vmem:[#allocation2 + $0x38] sm:$0xff] %v1753
  %1818 = vst [vmem:[#allocation2 + $0x40] sm:$0xff] %v1754
  %1819 = vst [vmem:[#allocation2 + $0x48] sm:$0xff] %v1755
  %1820 = vst [vmem:[#allocation2 + $0x50] sm:$0xff] %v1756
  %1821 = vst [vmem:[#allocation2 + $0x58] sm:$0xff] %v1757
  %1822 = vst [vmem:[#allocation2 + $0x60] sm:$0xff] %v1758
  %1823 = vst [vmem:[#allocation2 + $0x68] sm:$0xff] %v1759
  %1824 = vst [vmem:[#allocation2 + $0x70] sm:$0xff] %v1760
  %1825 = vst [vmem:[#allocation2 + $0x78] sm:$0xff] %v1761
  %1826 = vst [vmem:[#allocation2 + $0x80] sm:$0xff] %v1762
  %1827 = vst [vmem:[#allocation2 + $0x88] sm:$0xff] %v1763
  %1828 = vst [vmem:[#allocation2 + $0x90] sm:$0xff] %v1764
  %1829 = vst [vmem:[#allocation2 + $0x98] sm:$0xff] %v1765
  %1830 = vst [vmem:[#allocation2 + $0xa0] sm:$0xff] %v1766
  %1831 = vst [vmem:[#allocation2 + $0xa8] sm:$0xff] %v1767
  %1832 = vst [vmem:[#allocation2 + $0xb0] sm:$0xff] %v1768
  %1833 = vst [vmem:[#allocation2 + $0xb8] sm:$0xff] %v1769
  %1834 = vst [vmem:[#allocation2 + $0xc0] sm:$0xff] %v1770
  %1835 = vst [vmem:[#allocation2 + $0xc8] sm:$0xff] %v1771
  %1836 = vst [vmem:[#allocation2 + $0xd0] sm:$0xff] %v1772
  %1837 = vst [vmem:[#allocation2 + $0xd8] sm:$0xff] %v1773
  %1838 = vst [vmem:[#allocation2 + $0xe0] sm:$0xff] %v1774
  %1839 = vst [vmem:[#allocation2 + $0xe8] sm:$0xff] %v1775
  %1840 = vst [vmem:[#allocation2 + $0xf0] sm:$0xff] %v1776
  %1841 = vst [vmem:[#allocation2 + $0xf8] sm:$0xff] %v1777
  %1842 = vst [vmem:[#allocation2 + $0x100] sm:$0xff] %v1778
  %1843 = vst [vmem:[#allocation2 + $0x108] sm:$0xff] %v1779
  %1844 = vst [vmem:[#allocation2 + $0x110] sm:$0xff] %v1780
  %1845 = vst [vmem:[#allocation2 + $0x118] sm:$0xff] %v1781
  %1846 = vst [vmem:[#allocation2 + $0x120] sm:$0xff] %v1782
  %1847 = vst [vmem:[#allocation2 + $0x128] sm:$0xff] %v1783
  %1848 = vst [vmem:[#allocation2 + $0x130] sm:$0xff] %v1784
  %1849 = vst [vmem:[#allocation2 + $0x138] sm:$0xff] %v1785
  %1850 = vst [vmem:[#allocation2 + $0x140] sm:$0xff] %v1786
  %1851 = vst [vmem:[#allocation2 + $0x148] sm:$0xff] %v1787
  %1852 = vst [vmem:[#allocation2 + $0x150] sm:$0xff] %v1788
  %1853 = vst [vmem:[#allocation2 + $0x158] sm:$0xff] %v1789
  %1854 = vst [vmem:[#allocation2 + $0x160] sm:$0xff] %v1790
  %1855 = vst [vmem:[#allocation2 + $0x168] sm:$0xff] %v1791
  %1856 = vst [vmem:[#allocation2 + $0x170] sm:$0xff] %v1792
  %1857 = vst [vmem:[#allocation2 + $0x178] sm:$0xff] %v1793
  %1858 = vst [vmem:[#allocation2 + $0x180] sm:$0xff] %v1794
  %1859 = vst [vmem:[#allocation2 + $0x188] sm:$0xff] %v1795
  %1860 = vst [vmem:[#allocation2 + $0x190] sm:$0xff] %v1796
  %1861 = vst [vmem:[#allocation2 + $0x198] sm:$0xff] %v1797
  %1862 = vst [vmem:[#allocation2 + $0x1a0] sm:$0xff] %v1798
  %1863 = vst [vmem:[#allocation2 + $0x1a8] sm:$0xff] %v1799
  %1864 = vst [vmem:[#allocation2 + $0x1b0] sm:$0xff] %v1800
  %1865 = vst [vmem:[#allocation2 + $0x1b8] sm:$0xff] %v1801
  %1866 = vst [vmem:[#allocation2 + $0x1c0] sm:$0xff] %v1802
  %1867 = vst [vmem:[#allocation2 + $0x1c8] sm:$0xff] %v1803
  %1868 = vst [vmem:[#allocation2 + $0x1d0] sm:$0xff] %v1804
  %1869 = vst [vmem:[#allocation2 + $0x1d8] sm:$0xff] %v1805
  %1870 = vst [vmem:[#allocation2 + $0x1e0] sm:$0xff] %v1806
  %1871 = vst [vmem:[#allocation2 + $0x1e8] sm:$0xff] %v1807
  %1872 = vst [vmem:[#allocation2 + $0x1f0] sm:$0xff] %v1808
  %1873 = vst [vmem:[#allocation2 + $0x1f8] sm:$0xff] %v1809
  %s1874 = scalar_lea.vmem %s0, 48
  %v1875 = vld [vmem:[%s1874] sm:$0xff]
  %v1876 = vld [vmem:[%s1874 + $0x8] sm:$0xff]
  %v1877 = vld [vmem:[%s1874 + $0x10] sm:$0xff]
  %v1878 = vld [vmem:[%s1874 + $0x18] sm:$0xff]
  %v1879 = vld [vmem:[%s1874 + $0x20] sm:$0xff]
  %v1880 = vld [vmem:[%s1874 + $0x28] sm:$0xff]
  %v1881 = vld [vmem:[%s1874 + $0x30] sm:$0xff]
  %v1882 = vld [vmem:[%s1874 + $0x38] sm:$0xff]
  %v1883 = vld [vmem:[%s1874 + $0x40] sm:$0xff]
  %v1884 = vld [vmem:[%s1874 + $0x48] sm:$0xff]
  %v1885 = vld [vmem:[%s1874 + $0x50] sm:$0xff]
  %v1886 = vld [vmem:[%s1874 + $0x58] sm:$0xff]
  %v1887 = vld [vmem:[%s1874 + $0x60] sm:$0xff]
  %v1888 = vld [vmem:[%s1874 + $0x68] sm:$0xff]
  %v1889 = vld [vmem:[%s1874 + $0x70] sm:$0xff]
  %v1890 = vld [vmem:[%s1874 + $0x78] sm:$0xff]
  %v1891 = vld [vmem:[%s1874 + $0x80] sm:$0xff]
  %v1892 = vld [vmem:[%s1874 + $0x88] sm:$0xff]
  %v1893 = vld [vmem:[%s1874 + $0x90] sm:$0xff]
  %v1894 = vld [vmem:[%s1874 + $0x98] sm:$0xff]
  %v1895 = vld [vmem:[%s1874 + $0xa0] sm:$0xff]
  %v1896 = vld [vmem:[%s1874 + $0xa8] sm:$0xff]
  %v1897 = vld [vmem:[%s1874 + $0xb0] sm:$0xff]
  %v1898 = vld [vmem:[%s1874 + $0xb8] sm:$0xff]
  %v1899 = vld [vmem:[%s1874 + $0xc0] sm:$0xff]
  %v1900 = vld [vmem:[%s1874 + $0xc8] sm:$0xff]
  %v1901 = vld [vmem:[%s1874 + $0xd0] sm:$0xff]
  %v1902 = vld [vmem:[%s1874 + $0xd8] sm:$0xff]
  %v1903 = vld [vmem:[%s1874 + $0xe0] sm:$0xff]
  %v1904 = vld [vmem:[%s1874 + $0xe8] sm:$0xff]
  %v1905 = vld [vmem:[%s1874 + $0xf0] sm:$0xff]
  %v1906 = vld [vmem:[%s1874 + $0xf8] sm:$0xff]
  %v1907 = vld [vmem:[%s1874 + $0x180] sm:$0xff]
  %v1908 = vld [vmem:[%s1874 + $0x188] sm:$0xff]
  %v1909 = vld [vmem:[%s1874 + $0x190] sm:$0xff]
  %v1910 = vld [vmem:[%s1874 + $0x198] sm:$0xff]
  %v1911 = vld [vmem:[%s1874 + $0x1a0] sm:$0xff]
  %v1912 = vld [vmem:[%s1874 + $0x1a8] sm:$0xff]
  %v1913 = vld [vmem:[%s1874 + $0x1b0] sm:$0xff]
  %v1914 = vld [vmem:[%s1874 + $0x1b8] sm:$0xff]
  %v1915 = vld [vmem:[%s1874 + $0x1c0] sm:$0xff]
  %v1916 = vld [vmem:[%s1874 + $0x1c8] sm:$0xff]
  %v1917 = vld [vmem:[%s1874 + $0x1d0] sm:$0xff]
  %v1918 = vld [vmem:[%s1874 + $0x1d8] sm:$0xff]
  %v1919 = vld [vmem:[%s1874 + $0x1e0] sm:$0xff]
  %v1920 = vld [vmem:[%s1874 + $0x1e8] sm:$0xff]
  %v1921 = vld [vmem:[%s1874 + $0x1f0] sm:$0xff]
  %v1922 = vld [vmem:[%s1874 + $0x1f8] sm:$0xff]
  %v1923 = vld [vmem:[%s1874 + $0x200] sm:$0xff]
  %v1924 = vld [vmem:[%s1874 + $0x208] sm:$0xff]
  %v1925 = vld [vmem:[%s1874 + $0x210] sm:$0xff]
  %v1926 = vld [vmem:[%s1874 + $0x218] sm:$0xff]
  %v1927 = vld [vmem:[%s1874 + $0x220] sm:$0xff]
  %v1928 = vld [vmem:[%s1874 + $0x228] sm:$0xff]
  %v1929 = vld [vmem:[%s1874 + $0x230] sm:$0xff]
  %v1930 = vld [vmem:[%s1874 + $0x238] sm:$0xff]
  %v1931 = vld [vmem:[%s1874 + $0x240] sm:$0xff]
  %v1932 = vld [vmem:[%s1874 + $0x248] sm:$0xff]
  %v1933 = vld [vmem:[%s1874 + $0x250] sm:$0xff]
  %v1934 = vld [vmem:[%s1874 + $0x258] sm:$0xff]
  %v1935 = vld [vmem:[%s1874 + $0x260] sm:$0xff]
  %v1936 = vld [vmem:[%s1874 + $0x268] sm:$0xff]
  %v1937 = vld [vmem:[%s1874 + $0x270] sm:$0xff]
  %v1938 = vld [vmem:[%s1874 + $0x278] sm:$0xff]
  %v1939 = vld [vmem:[#allocation2] sm:$0xff]
  %v1940 = vld [vmem:[#allocation2 + $0x8] sm:$0xff]
  %v1941 = vld [vmem:[#allocation2 + $0x10] sm:$0xff]
  %v1942 = vld [vmem:[#allocation2 + $0x18] sm:$0xff]
  %v1943 = vld [vmem:[#allocation2 + $0x20] sm:$0xff]
  %v1944 = vld [vmem:[#allocation2 + $0x28] sm:$0xff]
  %v1945 = vld [vmem:[#allocation2 + $0x30] sm:$0xff]
  %v1946 = vld [vmem:[#allocation2 + $0x38] sm:$0xff]
  %v1947 = vld [vmem:[#allocation2 + $0x40] sm:$0xff]
  %v1948 = vld [vmem:[#allocation2 + $0x48] sm:$0xff]
  %v1949 = vld [vmem:[#allocation2 + $0x50] sm:$0xff]
  %v1950 = vld [vmem:[#allocation2 + $0x58] sm:$0xff]
  %v1951 = vld [vmem:[#allocation2 + $0x60] sm:$0xff]
  %v1952 = vld [vmem:[#allocation2 + $0x68] sm:$0xff]
  %v1953 = vld [vmem:[#allocation2 + $0x70] sm:$0xff]
  %v1954 = vld [vmem:[#allocation2 + $0x78] sm:$0xff]
  %v1955 = vld [vmem:[#allocation2 + $0x80] sm:$0xff]
  %v1956 = vld [vmem:[#allocation2 + $0x88] sm:$0xff]
  %v1957 = vld [vmem:[#allocation2 + $0x90] sm:$0xff]
  %v1958 = vld [vmem:[#allocation2 + $0x98] sm:$0xff]
  %v1959 = vld [vmem:[#allocation2 + $0xa0] sm:$0xff]
  %v1960 = vld [vmem:[#allocation2 + $0xa8] sm:$0xff]
  %v1961 = vld [vmem:[#allocation2 + $0xb0] sm:$0xff]
  %v1962 = vld [vmem:[#allocation2 + $0xb8] sm:$0xff]
  %v1963 = vld [vmem:[#allocation2 + $0xc0] sm:$0xff]
  %v1964 = vld [vmem:[#allocation2 + $0xc8] sm:$0xff]
  %v1965 = vld [vmem:[#allocation2 + $0xd0] sm:$0xff]
  %v1966 = vld [vmem:[#allocation2 + $0xd8] sm:$0xff]
  %v1967 = vld [vmem:[#allocation2 + $0xe0] sm:$0xff]
  %v1968 = vld [vmem:[#allocation2 + $0xe8] sm:$0xff]
  %v1969 = vld [vmem:[#allocation2 + $0xf0] sm:$0xff]
  %v1970 = vld [vmem:[#allocation2 + $0xf8] sm:$0xff]
  %v1971 = vld [vmem:[#allocation2 + $0x100] sm:$0xff]
  %v1972 = vld [vmem:[#allocation2 + $0x108] sm:$0xff]
  %v1973 = vld [vmem:[#allocation2 + $0x110] sm:$0xff]
  %v1974 = vld [vmem:[#allocation2 + $0x118] sm:$0xff]
  %v1975 = vld [vmem:[#allocation2 + $0x120] sm:$0xff]
  %v1976 = vld [vmem:[#allocation2 + $0x128] sm:$0xff]
  %v1977 = vld [vmem:[#allocation2 + $0x130] sm:$0xff]
  %v1978 = vld [vmem:[#allocation2 + $0x138] sm:$0xff]
  %v1979 = vld [vmem:[#allocation2 + $0x140] sm:$0xff]
  %v1980 = vld [vmem:[#allocation2 + $0x148] sm:$0xff]
  %v1981 = vld [vmem:[#allocation2 + $0x150] sm:$0xff]
  %v1982 = vld [vmem:[#allocation2 + $0x158] sm:$0xff]
  %v1983 = vld [vmem:[#allocation2 + $0x160] sm:$0xff]
  %v1984 = vld [vmem:[#allocation2 + $0x168] sm:$0xff]
  %v1985 = vld [vmem:[#allocation2 + $0x170] sm:$0xff]
  %v1986 = vld [vmem:[#allocation2 + $0x178] sm:$0xff]
  %v1987 = vld [vmem:[#allocation2 + $0x180] sm:$0xff]
  %v1988 = vld [vmem:[#allocation2 + $0x188] sm:$0xff]
  %v1989 = vld [vmem:[#allocation2 + $0x190] sm:$0xff]
  %v1990 = vld [vmem:[#allocation2 + $0x198] sm:$0xff]
  %v1991 = vld [vmem:[#allocation2 + $0x1a0] sm:$0xff]
  %v1992 = vld [vmem:[#allocation2 + $0x1a8] sm:$0xff]
  %v1993 = vld [vmem:[#allocation2 + $0x1b0] sm:$0xff]
  %v1994 = vld [vmem:[#allocation2 + $0x1b8] sm:$0xff]
  %v1995 = vld [vmem:[#allocation2 + $0x1c0] sm:$0xff]
  %v1996 = vld [vmem:[#allocation2 + $0x1c8] sm:$0xff]
  %v1997 = vld [vmem:[#allocation2 + $0x1d0] sm:$0xff]
  %v1998 = vld [vmem:[#allocation2 + $0x1d8] sm:$0xff]
  %v1999 = vld [vmem:[#allocation2 + $0x1e0] sm:$0xff]
  %v2000 = vld [vmem:[#allocation2 + $0x1e8] sm:$0xff]
  %v2001 = vld [vmem:[#allocation2 + $0x1f0] sm:$0xff]
  %v2002 = vld [vmem:[#allocation2 + $0x1f8] sm:$0xff]
  %s2003 = scalar_lea.vmem %s1, 12
  %v2004 = vld [vmem:[%s2003] sm:$0xf]
  %v2006 = vsel %vm78, %v1875, 0
  %v2009 = vsel %vm78, %v1876, 0
  %v2012 = vsel %vm78, %v1877, 0
  %v2015 = vsel %vm78, %v1878, 0
  %v2018 = vsel %vm78, %v1879, 0
  %v2021 = vsel %vm78, %v1880, 0
  %v2024 = vsel %vm78, %v1881, 0
  %v2027 = vsel %vm78, %v1882, 0
  %v2030 = vsel %vm78, %v1883, 0
  %v2033 = vsel %vm78, %v1884, 0
  %v2036 = vsel %vm78, %v1885, 0
  %v2039 = vsel %vm78, %v1886, 0
  %v2042 = vsel %vm78, %v1887, 0
  %v2045 = vsel %vm78, %v1888, 0
  %v2048 = vsel %vm78, %v1889, 0
  %v2051 = vsel %vm78, %v1890, 0
  %v2054 = vsel %vm78, %v1891, 0
  %v2057 = vsel %vm78, %v1892, 0
  %v2060 = vsel %vm78, %v1893, 0
  %v2063 = vsel %vm78, %v1894, 0
  %v2066 = vsel %vm78, %v1895, 0
  %v2069 = vsel %vm78, %v1896, 0
  %v2072 = vsel %vm78, %v1897, 0
  %v2075 = vsel %vm78, %v1898, 0
  %v2078 = vsel %vm78, %v1899, 0
  %v2081 = vsel %vm78, %v1900, 0
  %v2084 = vsel %vm78, %v1901, 0
  %v2087 = vsel %vm78, %v1902, 0
  %v2090 = vsel %vm78, %v1903, 0
  %v2093 = vsel %vm78, %v1904, 0
  %v2096 = vsel %vm78, %v1905, 0
  %v2099 = vsel %vm78, %v1906, 0
  %v2102 = vsel %vm78, %v1907, 0
  %v2105 = vsel %vm78, %v1908, 0
  %v2108 = vsel %vm78, %v1909, 0
  %v2111 = vsel %vm78, %v1910, 0
  %v2114 = vsel %vm78, %v1911, 0
  %v2117 = vsel %vm78, %v1912, 0
  %v2120 = vsel %vm78, %v1913, 0
  %v2123 = vsel %vm78, %v1914, 0
  %v2126 = vsel %vm78, %v1915, 0
  %v2129 = vsel %vm78, %v1916, 0
  %v2132 = vsel %vm78, %v1917, 0
  %v2135 = vsel %vm78, %v1918, 0
  %v2138 = vsel %vm78, %v1919, 0
  %v2141 = vsel %vm78, %v1920, 0
  %v2144 = vsel %vm78, %v1921, 0
  %v2147 = vsel %vm78, %v1922, 0
  %v2150 = vsel %vm78, %v1923, 0
  %v2153 = vsel %vm78, %v1924, 0
  %v2156 = vsel %vm78, %v1925, 0
  %v2159 = vsel %vm78, %v1926, 0
  %v2162 = vsel %vm78, %v1927, 0
  %v2165 = vsel %vm78, %v1928, 0
  %v2168 = vsel %vm78, %v1929, 0
  %v2171 = vsel %vm78, %v1930, 0
  %v2174 = vsel %vm78, %v1931, 0
  %v2177 = vsel %vm78, %v1932, 0
  %v2180 = vsel %vm78, %v1933, 0
  %v2183 = vsel %vm78, %v1934, 0
  %v2186 = vsel %vm78, %v1935, 0
  %v2189 = vsel %vm78, %v1936, 0
  %v2192 = vsel %vm78, %v1937, 0
  %v2195 = vsel %vm78, %v1938, 0
  %v2198 = vsel %vm271, %v2004, 0
  %2200 = vmatpush.msra.mxu0 0.0
  %2201 = vmatpush.msra.mxu0 0.0
  %2202 = vmatpush.msra.mxu0 0.0
  %2203 = vmatpush.msra.mxu0 0.0
  %2204 = vmatpush.msra.mxu0 0.0
  %2205 = vmatpush.msra.mxu0 0.0
  %2206 = vmatpush.msra.mxu0 0.0
  %2207 = vmatpush.msra.mxu0 0.0
  %2208 = vmatpush.msra.mxu0 0.0
  %2209 = vmatpush.msra.mxu0 0.0
  %2210 = vmatpush.msra.mxu0 0.0
  %2211 = vmatpush.msra.mxu0 0.0
  %2212 = vmatpush.msra.mxu0 0.0
  %2213 = vmatpush.msra.mxu0 0.0
  %2214 = vmatpush.msra.mxu0 0.0
  %2215 = vmatpush.msra.mxu0 %v2198
  %2216 = vmatmul.f32.gmra.mxu0 %v2006
  %v2217 = vpop.f32.mrf.mxu0
  %v2218 = vadd.f32 0.0, %v2217
  %2219 = vmatmul.f32.gmra.mxu0 %v2009
  %v2220 = vpop.f32.mrf.mxu0
  %v2221 = vadd.f32 0.0, %v2220
  %2222 = vmatmul.f32.gmra.mxu0 %v2012
  %v2223 = vpop.f32.mrf.mxu0
  %v2224 = vadd.f32 0.0, %v2223
  %2225 = vmatmul.f32.gmra.mxu0 %v2015
  %v2226 = vpop.f32.mrf.mxu0
  %v2227 = vadd.f32 0.0, %v2226
  %2228 = vmatmul.f32.gmra.mxu0 %v2018
  %v2229 = vpop.f32.mrf.mxu0
  %v2230 = vadd.f32 0.0, %v2229
  %2231 = vmatmul.f32.gmra.mxu0 %v2021
  %v2232 = vpop.f32.mrf.mxu0
  %v2233 = vadd.f32 0.0, %v2232
  %2234 = vmatmul.f32.gmra.mxu0 %v2024
  %v2235 = vpop.f32.mrf.mxu0
  %v2236 = vadd.f32 0.0, %v2235
  %2237 = vmatmul.f32.gmra.mxu0 %v2027
  %v2238 = vpop.f32.mrf.mxu0
  %v2239 = vadd.f32 0.0, %v2238
  %2240 = vmatmul.f32.gmra.mxu0 %v2030
  %v2241 = vpop.f32.mrf.mxu0
  %v2242 = vadd.f32 0.0, %v2241
  %2243 = vmatmul.f32.gmra.mxu0 %v2033
  %v2244 = vpop.f32.mrf.mxu0
  %v2245 = vadd.f32 0.0, %v2244
  %2246 = vmatmul.f32.gmra.mxu0 %v2036
  %v2247 = vpop.f32.mrf.mxu0
  %v2248 = vadd.f32 0.0, %v2247
  %2249 = vmatmul.f32.gmra.mxu0 %v2039
  %v2250 = vpop.f32.mrf.mxu0
  %v2251 = vadd.f32 0.0, %v2250
  %2252 = vmatmul.f32.gmra.mxu0 %v2042
  %v2253 = vpop.f32.mrf.mxu0
  %v2254 = vadd.f32 0.0, %v2253
  %2255 = vmatmul.f32.gmra.mxu0 %v2045
  %v2256 = vpop.f32.mrf.mxu0
  %v2257 = vadd.f32 0.0, %v2256
  %2258 = vmatmul.f32.gmra.mxu0 %v2048
  %v2259 = vpop.f32.mrf.mxu0
  %v2260 = vadd.f32 0.0, %v2259
  %2261 = vmatmul.f32.gmra.mxu0 %v2051
  %v2262 = vpop.f32.mrf.mxu0
  %v2263 = vadd.f32 0.0, %v2262
  %2264 = vmatmul.f32.gmra.mxu0 %v2054
  %v2265 = vpop.f32.mrf.mxu0
  %v2266 = vadd.f32 0.0, %v2265
  %2267 = vmatmul.f32.gmra.mxu0 %v2057
  %v2268 = vpop.f32.mrf.mxu0
  %v2269 = vadd.f32 0.0, %v2268
  %2270 = vmatmul.f32.gmra.mxu0 %v2060
  %v2271 = vpop.f32.mrf.mxu0
  %v2272 = vadd.f32 0.0, %v2271
  %2273 = vmatmul.f32.gmra.mxu0 %v2063
  %v2274 = vpop.f32.mrf.mxu0
  %v2275 = vadd.f32 0.0, %v2274
  %2276 = vmatmul.f32.gmra.mxu0 %v2066
  %v2277 = vpop.f32.mrf.mxu0
  %v2278 = vadd.f32 0.0, %v2277
  %2279 = vmatmul.f32.gmra.mxu0 %v2069
  %v2280 = vpop.f32.mrf.mxu0
  %v2281 = vadd.f32 0.0, %v2280
  %2282 = vmatmul.f32.gmra.mxu0 %v2072
  %v2283 = vpop.f32.mrf.mxu0
  %v2284 = vadd.f32 0.0, %v2283
  %2285 = vmatmul.f32.gmra.mxu0 %v2075
  %v2286 = vpop.f32.mrf.mxu0
  %v2287 = vadd.f32 0.0, %v2286
  %2288 = vmatmul.f32.gmra.mxu0 %v2078
  %v2289 = vpop.f32.mrf.mxu0
  %v2290 = vadd.f32 0.0, %v2289
  %2291 = vmatmul.f32.gmra.mxu0 %v2081
  %v2292 = vpop.f32.mrf.mxu0
  %v2293 = vadd.f32 0.0, %v2292
  %2294 = vmatmul.f32.gmra.mxu0 %v2084
  %v2295 = vpop.f32.mrf.mxu0
  %v2296 = vadd.f32 0.0, %v2295
  %2297 = vmatmul.f32.gmra.mxu0 %v2087
  %v2298 = vpop.f32.mrf.mxu0
  %v2299 = vadd.f32 0.0, %v2298
  %2300 = vmatmul.f32.gmra.mxu0 %v2090
  %v2301 = vpop.f32.mrf.mxu0
  %v2302 = vadd.f32 0.0, %v2301
  %2303 = vmatmul.f32.gmra.mxu0 %v2093
  %v2304 = vpop.f32.mrf.mxu0
  %v2305 = vadd.f32 0.0, %v2304
  %2306 = vmatmul.f32.gmra.mxu0 %v2096
  %v2307 = vpop.f32.mrf.mxu0
  %v2308 = vadd.f32 0.0, %v2307
  %2309 = vmatmul.f32.gmra.mxu0 %v2099
  %v2310 = vpop.f32.mrf.mxu0
  %v2311 = vadd.f32 0.0, %v2310
  %2312 = vmatmul.f32.gmra.mxu0 %v2102
  %v2313 = vpop.f32.mrf.mxu0
  %v2314 = vadd.f32 0.0, %v2313
  %2315 = vmatmul.f32.gmra.mxu0 %v2105
  %v2316 = vpop.f32.mrf.mxu0
  %v2317 = vadd.f32 0.0, %v2316
  %2318 = vmatmul.f32.gmra.mxu0 %v2108
  %v2319 = vpop.f32.mrf.mxu0
  %v2320 = vadd.f32 0.0, %v2319
  %2321 = vmatmul.f32.gmra.mxu0 %v2111
  %v2322 = vpop.f32.mrf.mxu0
  %v2323 = vadd.f32 0.0, %v2322
  %2324 = vmatmul.f32.gmra.mxu0 %v2114
  %v2325 = vpop.f32.mrf.mxu0
  %v2326 = vadd.f32 0.0, %v2325
  %2327 = vmatmul.f32.gmra.mxu0 %v2117
  %v2328 = vpop.f32.mrf.mxu0
  %v2329 = vadd.f32 0.0, %v2328
  %2330 = vmatmul.f32.gmra.mxu0 %v2120
  %v2331 = vpop.f32.mrf.mxu0
  %v2332 = vadd.f32 0.0, %v2331
  %2333 = vmatmul.f32.gmra.mxu0 %v2123
  %v2334 = vpop.f32.mrf.mxu0
  %v2335 = vadd.f32 0.0, %v2334
  %2336 = vmatmul.f32.gmra.mxu0 %v2126
  %v2337 = vpop.f32.mrf.mxu0
  %v2338 = vadd.f32 0.0, %v2337
  %2339 = vmatmul.f32.gmra.mxu0 %v2129
  %v2340 = vpop.f32.mrf.mxu0
  %v2341 = vadd.f32 0.0, %v2340
  %2342 = vmatmul.f32.gmra.mxu0 %v2132
  %v2343 = vpop.f32.mrf.mxu0
  %v2344 = vadd.f32 0.0, %v2343
  %2345 = vmatmul.f32.gmra.mxu0 %v2135
  %v2346 = vpop.f32.mrf.mxu0
  %v2347 = vadd.f32 0.0, %v2346
  %2348 = vmatmul.f32.gmra.mxu0 %v2138
  %v2349 = vpop.f32.mrf.mxu0
  %v2350 = vadd.f32 0.0, %v2349
  %2351 = vmatmul.f32.gmra.mxu0 %v2141
  %v2352 = vpop.f32.mrf.mxu0
  %v2353 = vadd.f32 0.0, %v2352
  %2354 = vmatmul.f32.gmra.mxu0 %v2144
  %v2355 = vpop.f32.mrf.mxu0
  %v2356 = vadd.f32 0.0, %v2355
  %2357 = vmatmul.f32.gmra.mxu0 %v2147
  %v2358 = vpop.f32.mrf.mxu0
  %v2359 = vadd.f32 0.0, %v2358
  %2360 = vmatmul.f32.gmra.mxu0 %v2150
  %v2361 = vpop.f32.mrf.mxu0
  %v2362 = vadd.f32 0.0, %v2361
  %2363 = vmatmul.f32.gmra.mxu0 %v2153
  %v2364 = vpop.f32.mrf.mxu0
  %v2365 = vadd.f32 0.0, %v2364
  %2366 = vmatmul.f32.gmra.mxu0 %v2156
  %v2367 = vpop.f32.mrf.mxu0
  %v2368 = vadd.f32 0.0, %v2367
  %2369 = vmatmul.f32.gmra.mxu0 %v2159
  %v2370 = vpop.f32.mrf.mxu0
  %v2371 = vadd.f32 0.0, %v2370
  %2372 = vmatmul.f32.gmra.mxu0 %v2162
  %v2373 = vpop.f32.mrf.mxu0
  %v2374 = vadd.f32 0.0, %v2373
  %2375 = vmatmul.f32.gmra.mxu0 %v2165
  %v2376 = vpop.f32.mrf.mxu0
  %v2377 = vadd.f32 0.0, %v2376
  %2378 = vmatmul.f32.gmra.mxu0 %v2168
  %v2379 = vpop.f32.mrf.mxu0
  %v2380 = vadd.f32 0.0, %v2379
  %2381 = vmatmul.f32.gmra.mxu0 %v2171
  %v2382 = vpop.f32.mrf.mxu0
  %v2383 = vadd.f32 0.0, %v2382
  %2384 = vmatmul.f32.gmra.mxu0 %v2174
  %v2385 = vpop.f32.mrf.mxu0
  %v2386 = vadd.f32 0.0, %v2385
  %2387 = vmatmul.f32.gmra.mxu0 %v2177
  %v2388 = vpop.f32.mrf.mxu0
  %v2389 = vadd.f32 0.0, %v2388
  %2390 = vmatmul.f32.gmra.mxu0 %v2180
  %v2391 = vpop.f32.mrf.mxu0
  %v2392 = vadd.f32 0.0, %v2391
  %2393 = vmatmul.f32.gmra.mxu0 %v2183
  %v2394 = vpop.f32.mrf.mxu0
  %v2395 = vadd.f32 0.0, %v2394
  %2396 = vmatmul.f32.gmra.mxu0 %v2186
  %v2397 = vpop.f32.mrf.mxu0
  %v2398 = vadd.f32 0.0, %v2397
  %2399 = vmatmul.f32.gmra.mxu0 %v2189
  %v2400 = vpop.f32.mrf.mxu0
  %v2401 = vadd.f32 0.0, %v2400
  %2402 = vmatmul.f32.gmra.mxu0 %v2192
  %v2403 = vpop.f32.mrf.mxu0
  %v2404 = vadd.f32 0.0, %v2403
  %2405 = vmatmul.f32.gmra.mxu0 %v2195
  %v2406 = vpop.f32.mrf.mxu0
  %v2407 = vadd.f32 0.0, %v2406
  %2408 = vdwg.mxu0
  %v2409 = vadd.f32 %v1939, %v2218
  %v2410 = vadd.f32 %v1940, %v2221
  %v2411 = vadd.f32 %v1941, %v2224
  %v2412 = vadd.f32 %v1942, %v2227
  %v2413 = vadd.f32 %v1943, %v2230
  %v2414 = vadd.f32 %v1944, %v2233
  %v2415 = vadd.f32 %v1945, %v2236
  %v2416 = vadd.f32 %v1946, %v2239
  %v2417 = vadd.f32 %v1947, %v2242
  %v2418 = vadd.f32 %v1948, %v2245
  %v2419 = vadd.f32 %v1949, %v2248
  %v2420 = vadd.f32 %v1950, %v2251
  %v2421 = vadd.f32 %v1951, %v2254
  %v2422 = vadd.f32 %v1952, %v2257
  %v2423 = vadd.f32 %v1953, %v2260
  %v2424 = vadd.f32 %v1954, %v2263
  %v2425 = vadd.f32 %v1955, %v2266
  %v2426 = vadd.f32 %v1956, %v2269
  %v2427 = vadd.f32 %v1957, %v2272
  %v2428 = vadd.f32 %v1958, %v2275
  %v2429 = vadd.f32 %v1959, %v2278
  %v2430 = vadd.f32 %v1960, %v2281
  %v2431 = vadd.f32 %v1961, %v2284
  %v2432 = vadd.f32 %v1962, %v2287
  %v2433 = vadd.f32 %v1963, %v2290
  %v2434 = vadd.f32 %v1964, %v2293
  %v2435 = vadd.f32 %v1965, %v2296
  %v2436 = vadd.f32 %v1966, %v2299
  %v2437 = vadd.f32 %v1967, %v2302
  %v2438 = vadd.f32 %v1968, %v2305
  %v2439 = vadd.f32 %v1969, %v2308
  %v2440 = vadd.f32 %v1970, %v2311
  %v2441 = vadd.f32 %v1971, %v2314
  %v2442 = vadd.f32 %v1972, %v2317
  %v2443 = vadd.f32 %v1973, %v2320
  %v2444 = vadd.f32 %v1974, %v2323
  %v2445 = vadd.f32 %v1975, %v2326
  %v2446 = vadd.f32 %v1976, %v2329
  %v2447 = vadd.f32 %v1977, %v2332
  %v2448 = vadd.f32 %v1978, %v2335
  %v2449 = vadd.f32 %v1979, %v2338
  %v2450 = vadd.f32 %v1980, %v2341
  %v2451 = vadd.f32 %v1981, %v2344
  %v2452 = vadd.f32 %v1982, %v2347
  %v2453 = vadd.f32 %v1983, %v2350
  %v2454 = vadd.f32 %v1984, %v2353
  %v2455 = vadd.f32 %v1985, %v2356
  %v2456 = vadd.f32 %v1986, %v2359
  %v2457 = vadd.f32 %v1987, %v2362
  %v2458 = vadd.f32 %v1988, %v2365
  %v2459 = vadd.f32 %v1989, %v2368
  %v2460 = vadd.f32 %v1990, %v2371
  %v2461 = vadd.f32 %v1991, %v2374
  %v2462 = vadd.f32 %v1992, %v2377
  %v2463 = vadd.f32 %v1993, %v2380
  %v2464 = vadd.f32 %v1994, %v2383
  %v2465 = vadd.f32 %v1995, %v2386
  %v2466 = vadd.f32 %v1996, %v2389
  %v2467 = vadd.f32 %v1997, %v2392
  %v2468 = vadd.f32 %v1998, %v2395
  %v2469 = vadd.f32 %v1999, %v2398
  %v2470 = vadd.f32 %v2000, %v2401
  %v2471 = vadd.f32 %v2001, %v2404
  %v2472 = vadd.f32 %v2002, %v2407
  %2473 = vst [vmem:[#allocation2] sm:$0xff] %v2409
  %2474 = vst [vmem:[#allocation2 + $0x8] sm:$0xff] %v2410
  %2475 = vst [vmem:[#allocation2 + $0x10] sm:$0xff] %v2411
  %2476 = vst [vmem:[#allocation2 + $0x18] sm:$0xff] %v2412
  %2477 = vst [vmem:[#allocation2 + $0x20] sm:$0xff] %v2413
  %2478 = vst [vmem:[#allocation2 + $0x28] sm:$0xff] %v2414
  %2479 = vst [vmem:[#allocation2 + $0x30] sm:$0xff] %v2415
  %2480 = vst [vmem:[#allocation2 + $0x38] sm:$0xff] %v2416
  %2481 = vst [vmem:[#allocation2 + $0x40] sm:$0xff] %v2417
  %2482 = vst [vmem:[#allocation2 + $0x48] sm:$0xff] %v2418
  %2483 = vst [vmem:[#allocation2 + $0x50] sm:$0xff] %v2419
  %2484 = vst [vmem:[#allocation2 + $0x58] sm:$0xff] %v2420
  %2485 = vst [vmem:[#allocation2 + $0x60] sm:$0xff] %v2421
  %2486 = vst [vmem:[#allocation2 + $0x68] sm:$0xff] %v2422
  %2487 = vst [vmem:[#allocation2 + $0x70] sm:$0xff] %v2423
  %2488 = vst [vmem:[#allocation2 + $0x78] sm:$0xff] %v2424
  %2489 = vst [vmem:[#allocation2 + $0x80] sm:$0xff] %v2425
  %2490 = vst [vmem:[#allocation2 + $0x88] sm:$0xff] %v2426
  %2491 = vst [vmem:[#allocation2 + $0x90] sm:$0xff] %v2427
  %2492 = vst [vmem:[#allocation2 + $0x98] sm:$0xff] %v2428
  %2493 = vst [vmem:[#allocation2 + $0xa0] sm:$0xff] %v2429
  %2494 = vst [vmem:[#allocation2 + $0xa8] sm:$0xff] %v2430
  %2495 = vst [vmem:[#allocation2 + $0xb0] sm:$0xff] %v2431
  %2496 = vst [vmem:[#allocation2 + $0xb8] sm:$0xff] %v2432
  %2497 = vst [vmem:[#allocation2 + $0xc0] sm:$0xff] %v2433
  %2498 = vst [vmem:[#allocation2 + $0xc8] sm:$0xff] %v2434
  %2499 = vst [vmem:[#allocation2 + $0xd0] sm:$0xff] %v2435
  %2500 = vst [vmem:[#allocation2 + $0xd8] sm:$0xff] %v2436
  %2501 = vst [vmem:[#allocation2 + $0xe0] sm:$0xff] %v2437
  %2502 = vst [vmem:[#allocation2 + $0xe8] sm:$0xff] %v2438
  %2503 = vst [vmem:[#allocation2 + $0xf0] sm:$0xff] %v2439
  %2504 = vst [vmem:[#allocation2 + $0xf8] sm:$0xff] %v2440
  %2505 = vst [vmem:[#allocation2 + $0x100] sm:$0xff] %v2441
  %2506 = vst [vmem:[#allocation2 + $0x108] sm:$0xff] %v2442
  %2507 = vst [vmem:[#allocation2 + $0x110] sm:$0xff] %v2443
  %2508 = vst [vmem:[#allocation2 + $0x118] sm:$0xff] %v2444
  %2509 = vst [vmem:[#allocation2 + $0x120] sm:$0xff] %v2445
  %2510 = vst [vmem:[#allocation2 + $0x128] sm:$0xff] %v2446
  %2511 = vst [vmem:[#allocation2 + $0x130] sm:$0xff] %v2447
  %2512 = vst [vmem:[#allocation2 + $0x138] sm:$0xff] %v2448
  %2513 = vst [vmem:[#allocation2 + $0x140] sm:$0xff] %v2449
  %2514 = vst [vmem:[#allocation2 + $0x148] sm:$0xff] %v2450
  %2515 = vst [vmem:[#allocation2 + $0x150] sm:$0xff] %v2451
  %2516 = vst [vmem:[#allocation2 + $0x158] sm:$0xff] %v2452
  %2517 = vst [vmem:[#allocation2 + $0x160] sm:$0xff] %v2453
  %2518 = vst [vmem:[#allocation2 + $0x168] sm:$0xff] %v2454
  %2519 = vst [vmem:[#allocation2 + $0x170] sm:$0xff] %v2455
  %2520 = vst [vmem:[#allocation2 + $0x178] sm:$0xff] %v2456
  %2521 = vst [vmem:[#allocation2 + $0x180] sm:$0xff] %v2457
  %2522 = vst [vmem:[#allocation2 + $0x188] sm:$0xff] %v2458
  %2523 = vst [vmem:[#allocation2 + $0x190] sm:$0xff] %v2459
  %2524 = vst [vmem:[#allocation2 + $0x198] sm:$0xff] %v2460
  %2525 = vst [vmem:[#allocation2 + $0x1a0] sm:$0xff] %v2461
  %2526 = vst [vmem:[#allocation2 + $0x1a8] sm:$0xff] %v2462
  %2527 = vst [vmem:[#allocation2 + $0x1b0] sm:$0xff] %v2463
  %2528 = vst [vmem:[#allocation2 + $0x1b8] sm:$0xff] %v2464
  %2529 = vst [vmem:[#allocation2 + $0x1c0] sm:$0xff] %v2465
  %2530 = vst [vmem:[#allocation2 + $0x1c8] sm:$0xff] %v2466
  %2531 = vst [vmem:[#allocation2 + $0x1d0] sm:$0xff] %v2467
  %2532 = vst [vmem:[#allocation2 + $0x1d8] sm:$0xff] %v2468
  %2533 = vst [vmem:[#allocation2 + $0x1e0] sm:$0xff] %v2469
  %2534 = vst [vmem:[#allocation2 + $0x1e8] sm:$0xff] %v2470
  %2535 = vst [vmem:[#allocation2 + $0x1f0] sm:$0xff] %v2471
  %2536 = vst [vmem:[#allocation2 + $0x1f8] sm:$0xff] %v2472
  %s2537 = scalar_lea.vmem %s0, 64
  %v2538 = vld [vmem:[%s2537] sm:$0xff]
  %v2539 = vld [vmem:[%s2537 + $0x8] sm:$0xff]
  %v2540 = vld [vmem:[%s2537 + $0x10] sm:$0xff]
  %v2541 = vld [vmem:[%s2537 + $0x18] sm:$0xff]
  %v2542 = vld [vmem:[%s2537 + $0x20] sm:$0xff]
  %v2543 = vld [vmem:[%s2537 + $0x28] sm:$0xff]
  %v2544 = vld [vmem:[%s2537 + $0x30] sm:$0xff]
  %v2545 = vld [vmem:[%s2537 + $0x38] sm:$0xff]
  %v2546 = vld [vmem:[%s2537 + $0x40] sm:$0xff]
  %v2547 = vld [vmem:[%s2537 + $0x48] sm:$0xff]
  %v2548 = vld [vmem:[%s2537 + $0x50] sm:$0xff]
  %v2549 = vld [vmem:[%s2537 + $0x58] sm:$0xff]
  %v2550 = vld [vmem:[%s2537 + $0x60] sm:$0xff]
  %v2551 = vld [vmem:[%s2537 + $0x68] sm:$0xff]
  %v2552 = vld [vmem:[%s2537 + $0x70] sm:$0xff]
  %v2553 = vld [vmem:[%s2537 + $0x78] sm:$0xff]
  %v2554 = vld [vmem:[%s2537 + $0x80] sm:$0xff]
  %v2555 = vld [vmem:[%s2537 + $0x88] sm:$0xff]
  %v2556 = vld [vmem:[%s2537 + $0x90] sm:$0xff]
  %v2557 = vld [vmem:[%s2537 + $0x98] sm:$0xff]
  %v2558 = vld [vmem:[%s2537 + $0xa0] sm:$0xff]
  %v2559 = vld [vmem:[%s2537 + $0xa8] sm:$0xff]
  %v2560 = vld [vmem:[%s2537 + $0xb0] sm:$0xff]
  %v2561 = vld [vmem:[%s2537 + $0xb8] sm:$0xff]
  %v2562 = vld [vmem:[%s2537 + $0xc0] sm:$0xff]
  %v2563 = vld [vmem:[%s2537 + $0xc8] sm:$0xff]
  %v2564 = vld [vmem:[%s2537 + $0xd0] sm:$0xff]
  %v2565 = vld [vmem:[%s2537 + $0xd8] sm:$0xff]
  %v2566 = vld [vmem:[%s2537 + $0xe0] sm:$0xff]
  %v2567 = vld [vmem:[%s2537 + $0xe8] sm:$0xff]
  %v2568 = vld [vmem:[%s2537 + $0xf0] sm:$0xff]
  %v2569 = vld [vmem:[%s2537 + $0xf8] sm:$0xff]
  %v2570 = vld [vmem:[%s2537 + $0x180] sm:$0xff]
  %v2571 = vld [vmem:[%s2537 + $0x188] sm:$0xff]
  %v2572 = vld [vmem:[%s2537 + $0x190] sm:$0xff]
  %v2573 = vld [vmem:[%s2537 + $0x198] sm:$0xff]
  %v2574 = vld [vmem:[%s2537 + $0x1a0] sm:$0xff]
  %v2575 = vld [vmem:[%s2537 + $0x1a8] sm:$0xff]
  %v2576 = vld [vmem:[%s2537 + $0x1b0] sm:$0xff]
  %v2577 = vld [vmem:[%s2537 + $0x1b8] sm:$0xff]
  %v2578 = vld [vmem:[%s2537 + $0x1c0] sm:$0xff]
  %v2579 = vld [vmem:[%s2537 + $0x1c8] sm:$0xff]
  %v2580 = vld [vmem:[%s2537 + $0x1d0] sm:$0xff]
  %v2581 = vld [vmem:[%s2537 + $0x1d8] sm:$0xff]
  %v2582 = vld [vmem:[%s2537 + $0x1e0] sm:$0xff]
  %v2583 = vld [vmem:[%s2537 + $0x1e8] sm:$0xff]
  %v2584 = vld [vmem:[%s2537 + $0x1f0] sm:$0xff]
  %v2585 = vld [vmem:[%s2537 + $0x1f8] sm:$0xff]
  %v2586 = vld [vmem:[%s2537 + $0x200] sm:$0xff]
  %v2587 = vld [vmem:[%s2537 + $0x208] sm:$0xff]
  %v2588 = vld [vmem:[%s2537 + $0x210] sm:$0xff]
  %v2589 = vld [vmem:[%s2537 + $0x218] sm:$0xff]
  %v2590 = vld [vmem:[%s2537 + $0x220] sm:$0xff]
  %v2591 = vld [vmem:[%s2537 + $0x228] sm:$0xff]
  %v2592 = vld [vmem:[%s2537 + $0x230] sm:$0xff]
  %v2593 = vld [vmem:[%s2537 + $0x238] sm:$0xff]
  %v2594 = vld [vmem:[%s2537 + $0x240] sm:$0xff]
  %v2595 = vld [vmem:[%s2537 + $0x248] sm:$0xff]
  %v2596 = vld [vmem:[%s2537 + $0x250] sm:$0xff]
  %v2597 = vld [vmem:[%s2537 + $0x258] sm:$0xff]
  %v2598 = vld [vmem:[%s2537 + $0x260] sm:$0xff]
  %v2599 = vld [vmem:[%s2537 + $0x268] sm:$0xff]
  %v2600 = vld [vmem:[%s2537 + $0x270] sm:$0xff]
  %v2601 = vld [vmem:[%s2537 + $0x278] sm:$0xff]
  %v2602 = vld [vmem:[#allocation2] sm:$0xff]
  %v2603 = vld [vmem:[#allocation2 + $0x8] sm:$0xff]
  %v2604 = vld [vmem:[#allocation2 + $0x10] sm:$0xff]
  %v2605 = vld [vmem:[#allocation2 + $0x18] sm:$0xff]
  %v2606 = vld [vmem:[#allocation2 + $0x20] sm:$0xff]
  %v2607 = vld [vmem:[#allocation2 + $0x28] sm:$0xff]
  %v2608 = vld [vmem:[#allocation2 + $0x30] sm:$0xff]
  %v2609 = vld [vmem:[#allocation2 + $0x38] sm:$0xff]
  %v2610 = vld [vmem:[#allocation2 + $0x40] sm:$0xff]
  %v2611 = vld [vmem:[#allocation2 + $0x48] sm:$0xff]
  %v2612 = vld [vmem:[#allocation2 + $0x50] sm:$0xff]
  %v2613 = vld [vmem:[#allocation2 + $0x58] sm:$0xff]
  %v2614 = vld [vmem:[#allocation2 + $0x60] sm:$0xff]
  %v2615 = vld [vmem:[#allocation2 + $0x68] sm:$0xff]
  %v2616 = vld [vmem:[#allocation2 + $0x70] sm:$0xff]
  %v2617 = vld [vmem:[#allocation2 + $0x78] sm:$0xff]
  %v2618 = vld [vmem:[#allocation2 + $0x80] sm:$0xff]
  %v2619 = vld [vmem:[#allocation2 + $0x88] sm:$0xff]
  %v2620 = vld [vmem:[#allocation2 + $0x90] sm:$0xff]
  %v2621 = vld [vmem:[#allocation2 + $0x98] sm:$0xff]
  %v2622 = vld [vmem:[#allocation2 + $0xa0] sm:$0xff]
  %v2623 = vld [vmem:[#allocation2 + $0xa8] sm:$0xff]
  %v2624 = vld [vmem:[#allocation2 + $0xb0] sm:$0xff]
  %v2625 = vld [vmem:[#allocation2 + $0xb8] sm:$0xff]
  %v2626 = vld [vmem:[#allocation2 + $0xc0] sm:$0xff]
  %v2627 = vld [vmem:[#allocation2 + $0xc8] sm:$0xff]
  %v2628 = vld [vmem:[#allocation2 + $0xd0] sm:$0xff]
  %v2629 = vld [vmem:[#allocation2 + $0xd8] sm:$0xff]
  %v2630 = vld [vmem:[#allocation2 + $0xe0] sm:$0xff]
  %v2631 = vld [vmem:[#allocation2 + $0xe8] sm:$0xff]
  %v2632 = vld [vmem:[#allocation2 + $0xf0] sm:$0xff]
  %v2633 = vld [vmem:[#allocation2 + $0xf8] sm:$0xff]
  %v2634 = vld [vmem:[#allocation2 + $0x100] sm:$0xff]
  %v2635 = vld [vmem:[#allocation2 + $0x108] sm:$0xff]
  %v2636 = vld [vmem:[#allocation2 + $0x110] sm:$0xff]
  %v2637 = vld [vmem:[#allocation2 + $0x118] sm:$0xff]
  %v2638 = vld [vmem:[#allocation2 + $0x120] sm:$0xff]
  %v2639 = vld [vmem:[#allocation2 + $0x128] sm:$0xff]
  %v2640 = vld [vmem:[#allocation2 + $0x130] sm:$0xff]
  %v2641 = vld [vmem:[#allocation2 + $0x138] sm:$0xff]
  %v2642 = vld [vmem:[#allocation2 + $0x140] sm:$0xff]
  %v2643 = vld [vmem:[#allocation2 + $0x148] sm:$0xff]
  %v2644 = vld [vmem:[#allocation2 + $0x150] sm:$0xff]
  %v2645 = vld [vmem:[#allocation2 + $0x158] sm:$0xff]
  %v2646 = vld [vmem:[#allocation2 + $0x160] sm:$0xff]
  %v2647 = vld [vmem:[#allocation2 + $0x168] sm:$0xff]
  %v2648 = vld [vmem:[#allocation2 + $0x170] sm:$0xff]
  %v2649 = vld [vmem:[#allocation2 + $0x178] sm:$0xff]
  %v2650 = vld [vmem:[#allocation2 + $0x180] sm:$0xff]
  %v2651 = vld [vmem:[#allocation2 + $0x188] sm:$0xff]
  %v2652 = vld [vmem:[#allocation2 + $0x190] sm:$0xff]
  %v2653 = vld [vmem:[#allocation2 + $0x198] sm:$0xff]
  %v2654 = vld [vmem:[#allocation2 + $0x1a0] sm:$0xff]
  %v2655 = vld [vmem:[#allocation2 + $0x1a8] sm:$0xff]
  %v2656 = vld [vmem:[#allocation2 + $0x1b0] sm:$0xff]
  %v2657 = vld [vmem:[#allocation2 + $0x1b8] sm:$0xff]
  %v2658 = vld [vmem:[#allocation2 + $0x1c0] sm:$0xff]
  %v2659 = vld [vmem:[#allocation2 + $0x1c8] sm:$0xff]
  %v2660 = vld [vmem:[#allocation2 + $0x1d0] sm:$0xff]
  %v2661 = vld [vmem:[#allocation2 + $0x1d8] sm:$0xff]
  %v2662 = vld [vmem:[#allocation2 + $0x1e0] sm:$0xff]
  %v2663 = vld [vmem:[#allocation2 + $0x1e8] sm:$0xff]
  %v2664 = vld [vmem:[#allocation2 + $0x1f0] sm:$0xff]
  %v2665 = vld [vmem:[#allocation2 + $0x1f8] sm:$0xff]
  %s2666 = scalar_lea.vmem %s1, 16
  %v2667 = vld [vmem:[%s2666] sm:$0xf]
  %v2669 = vsel %vm78, %v2538, 0
  %v2672 = vsel %vm78, %v2539, 0
  %v2675 = vsel %vm78, %v2540, 0
  %v2678 = vsel %vm78, %v2541, 0
  %v2681 = vsel %vm78, %v2542, 0
  %v2684 = vsel %vm78, %v2543, 0
  %v2687 = vsel %vm78, %v2544, 0
  %v2690 = vsel %vm78, %v2545, 0
  %v2693 = vsel %vm78, %v2546, 0
  %v2696 = vsel %vm78, %v2547, 0
  %v2699 = vsel %vm78, %v2548, 0
  %v2702 = vsel %vm78, %v2549, 0
  %v2705 = vsel %vm78, %v2550, 0
  %v2708 = vsel %vm78, %v2551, 0
  %v2711 = vsel %vm78, %v2552, 0
  %v2714 = vsel %vm78, %v2553, 0
  %v2717 = vsel %vm78, %v2554, 0
  %v2720 = vsel %vm78, %v2555, 0
  %v2723 = vsel %vm78, %v2556, 0
  %v2726 = vsel %vm78, %v2557, 0
  %v2729 = vsel %vm78, %v2558, 0
  %v2732 = vsel %vm78, %v2559, 0
  %v2735 = vsel %vm78, %v2560, 0
  %v2738 = vsel %vm78, %v2561, 0
  %v2741 = vsel %vm78, %v2562, 0
  %v2744 = vsel %vm78, %v2563, 0
  %v2747 = vsel %vm78, %v2564, 0
  %v2750 = vsel %vm78, %v2565, 0
  %v2753 = vsel %vm78, %v2566, 0
  %v2756 = vsel %vm78, %v2567, 0
  %v2759 = vsel %vm78, %v2568, 0
  %v2762 = vsel %vm78, %v2569, 0
  %v2765 = vsel %vm78, %v2570, 0
  %v2768 = vsel %vm78, %v2571, 0
  %v2771 = vsel %vm78, %v2572, 0
  %v2774 = vsel %vm78, %v2573, 0
  %v2777 = vsel %vm78, %v2574, 0
  %v2780 = vsel %vm78, %v2575, 0
  %v2783 = vsel %vm78, %v2576, 0
  %v2786 = vsel %vm78, %v2577, 0
  %v2789 = vsel %vm78, %v2578, 0
  %v2792 = vsel %vm78, %v2579, 0
  %v2795 = vsel %vm78, %v2580, 0
  %v2798 = vsel %vm78, %v2581, 0
  %v2801 = vsel %vm78, %v2582, 0
  %v2804 = vsel %vm78, %v2583, 0
  %v2807 = vsel %vm78, %v2584, 0
  %v2810 = vsel %vm78, %v2585, 0
  %v2813 = vsel %vm78, %v2586, 0
  %v2816 = vsel %vm78, %v2587, 0
  %v2819 = vsel %vm78, %v2588, 0
  %v2822 = vsel %vm78, %v2589, 0
  %v2825 = vsel %vm78, %v2590, 0
  %v2828 = vsel %vm78, %v2591, 0
  %v2831 = vsel %vm78, %v2592, 0
  %v2834 = vsel %vm78, %v2593, 0
  %v2837 = vsel %vm78, %v2594, 0
  %v2840 = vsel %vm78, %v2595, 0
  %v2843 = vsel %vm78, %v2596, 0
  %v2846 = vsel %vm78, %v2597, 0
  %v2849 = vsel %vm78, %v2598, 0
  %v2852 = vsel %vm78, %v2599, 0
  %v2855 = vsel %vm78, %v2600, 0
  %v2858 = vsel %vm78, %v2601, 0
  %v2861 = vsel %vm271, %v2667, 0
  %2863 = vmatpush.msra.mxu0 0.0
  %2864 = vmatpush.msra.mxu0 0.0
  %2865 = vmatpush.msra.mxu0 0.0
  %2866 = vmatpush.msra.mxu0 0.0
  %2867 = vmatpush.msra.mxu0 0.0
  %2868 = vmatpush.msra.mxu0 0.0
  %2869 = vmatpush.msra.mxu0 0.0
  %2870 = vmatpush.msra.mxu0 0.0
  %2871 = vmatpush.msra.mxu0 0.0
  %2872 = vmatpush.msra.mxu0 0.0
  %2873 = vmatpush.msra.mxu0 0.0
  %2874 = vmatpush.msra.mxu0 0.0
  %2875 = vmatpush.msra.mxu0 0.0
  %2876 = vmatpush.msra.mxu0 0.0
  %2877 = vmatpush.msra.mxu0 0.0
  %2878 = vmatpush.msra.mxu0 %v2861
  %2879 = vmatmul.f32.gmra.mxu0 %v2669
  %v2880 = vpop.f32.mrf.mxu0
  %v2881 = vadd.f32 0.0, %v2880
  %2882 = vmatmul.f32.gmra.mxu0 %v2672
  %v2883 = vpop.f32.mrf.mxu0
  %v2884 = vadd.f32 0.0, %v2883
  %2885 = vmatmul.f32.gmra.mxu0 %v2675
  %v2886 = vpop.f32.mrf.mxu0
  %v2887 = vadd.f32 0.0, %v2886
  %2888 = vmatmul.f32.gmra.mxu0 %v2678
  %v2889 = vpop.f32.mrf.mxu0
  %v2890 = vadd.f32 0.0, %v2889
  %2891 = vmatmul.f32.gmra.mxu0 %v2681
  %v2892 = vpop.f32.mrf.mxu0
  %v2893 = vadd.f32 0.0, %v2892
  %2894 = vmatmul.f32.gmra.mxu0 %v2684
  %v2895 = vpop.f32.mrf.mxu0
  %v2896 = vadd.f32 0.0, %v2895
  %2897 = vmatmul.f32.gmra.mxu0 %v2687
  %v2898 = vpop.f32.mrf.mxu0
  %v2899 = vadd.f32 0.0, %v2898
  %2900 = vmatmul.f32.gmra.mxu0 %v2690
  %v2901 = vpop.f32.mrf.mxu0
  %v2902 = vadd.f32 0.0, %v2901
  %2903 = vmatmul.f32.gmra.mxu0 %v2693
  %v2904 = vpop.f32.mrf.mxu0
  %v2905 = vadd.f32 0.0, %v2904
  %2906 = vmatmul.f32.gmra.mxu0 %v2696
  %v2907 = vpop.f32.mrf.mxu0
  %v2908 = vadd.f32 0.0, %v2907
  %2909 = vmatmul.f32.gmra.mxu0 %v2699
  %v2910 = vpop.f32.mrf.mxu0
  %v2911 = vadd.f32 0.0, %v2910
  %2912 = vmatmul.f32.gmra.mxu0 %v2702
  %v2913 = vpop.f32.mrf.mxu0
  %v2914 = vadd.f32 0.0, %v2913
  %2915 = vmatmul.f32.gmra.mxu0 %v2705
  %v2916 = vpop.f32.mrf.mxu0
  %v2917 = vadd.f32 0.0, %v2916
  %2918 = vmatmul.f32.gmra.mxu0 %v2708
  %v2919 = vpop.f32.mrf.mxu0
  %v2920 = vadd.f32 0.0, %v2919
  %2921 = vmatmul.f32.gmra.mxu0 %v2711
  %v2922 = vpop.f32.mrf.mxu0
  %v2923 = vadd.f32 0.0, %v2922
  %2924 = vmatmul.f32.gmra.mxu0 %v2714
  %v2925 = vpop.f32.mrf.mxu0
  %v2926 = vadd.f32 0.0, %v2925
  %2927 = vmatmul.f32.gmra.mxu0 %v2717
  %v2928 = vpop.f32.mrf.mxu0
  %v2929 = vadd.f32 0.0, %v2928
  %2930 = vmatmul.f32.gmra.mxu0 %v2720
  %v2931 = vpop.f32.mrf.mxu0
  %v2932 = vadd.f32 0.0, %v2931
  %2933 = vmatmul.f32.gmra.mxu0 %v2723
  %v2934 = vpop.f32.mrf.mxu0
  %v2935 = vadd.f32 0.0, %v2934
  %2936 = vmatmul.f32.gmra.mxu0 %v2726
  %v2937 = vpop.f32.mrf.mxu0
  %v2938 = vadd.f32 0.0, %v2937
  %2939 = vmatmul.f32.gmra.mxu0 %v2729
  %v2940 = vpop.f32.mrf.mxu0
  %v2941 = vadd.f32 0.0, %v2940
  %2942 = vmatmul.f32.gmra.mxu0 %v2732
  %v2943 = vpop.f32.mrf.mxu0
  %v2944 = vadd.f32 0.0, %v2943
  %2945 = vmatmul.f32.gmra.mxu0 %v2735
  %v2946 = vpop.f32.mrf.mxu0
  %v2947 = vadd.f32 0.0, %v2946
  %2948 = vmatmul.f32.gmra.mxu0 %v2738
  %v2949 = vpop.f32.mrf.mxu0
  %v2950 = vadd.f32 0.0, %v2949
  %2951 = vmatmul.f32.gmra.mxu0 %v2741
  %v2952 = vpop.f32.mrf.mxu0
  %v2953 = vadd.f32 0.0, %v2952
  %2954 = vmatmul.f32.gmra.mxu0 %v2744
  %v2955 = vpop.f32.mrf.mxu0
  %v2956 = vadd.f32 0.0, %v2955
  %2957 = vmatmul.f32.gmra.mxu0 %v2747
  %v2958 = vpop.f32.mrf.mxu0
  %v2959 = vadd.f32 0.0, %v2958
  %2960 = vmatmul.f32.gmra.mxu0 %v2750
  %v2961 = vpop.f32.mrf.mxu0
  %v2962 = vadd.f32 0.0, %v2961
  %2963 = vmatmul.f32.gmra.mxu0 %v2753
  %v2964 = vpop.f32.mrf.mxu0
  %v2965 = vadd.f32 0.0, %v2964
  %2966 = vmatmul.f32.gmra.mxu0 %v2756
  %v2967 = vpop.f32.mrf.mxu0
  %v2968 = vadd.f32 0.0, %v2967
  %2969 = vmatmul.f32.gmra.mxu0 %v2759
  %v2970 = vpop.f32.mrf.mxu0
  %v2971 = vadd.f32 0.0, %v2970
  %2972 = vmatmul.f32.gmra.mxu0 %v2762
  %v2973 = vpop.f32.mrf.mxu0
  %v2974 = vadd.f32 0.0, %v2973
  %2975 = vmatmul.f32.gmra.mxu0 %v2765
  %v2976 = vpop.f32.mrf.mxu0
  %v2977 = vadd.f32 0.0, %v2976
  %2978 = vmatmul.f32.gmra.mxu0 %v2768
  %v2979 = vpop.f32.mrf.mxu0
  %v2980 = vadd.f32 0.0, %v2979
  %2981 = vmatmul.f32.gmra.mxu0 %v2771
  %v2982 = vpop.f32.mrf.mxu0
  %v2983 = vadd.f32 0.0, %v2982
  %2984 = vmatmul.f32.gmra.mxu0 %v2774
  %v2985 = vpop.f32.mrf.mxu0
  %v2986 = vadd.f32 0.0, %v2985
  %2987 = vmatmul.f32.gmra.mxu0 %v2777
  %v2988 = vpop.f32.mrf.mxu0
  %v2989 = vadd.f32 0.0, %v2988
  %2990 = vmatmul.f32.gmra.mxu0 %v2780
  %v2991 = vpop.f32.mrf.mxu0
  %v2992 = vadd.f32 0.0, %v2991
  %2993 = vmatmul.f32.gmra.mxu0 %v2783
  %v2994 = vpop.f32.mrf.mxu0
  %v2995 = vadd.f32 0.0, %v2994
  %2996 = vmatmul.f32.gmra.mxu0 %v2786
  %v2997 = vpop.f32.mrf.mxu0
  %v2998 = vadd.f32 0.0, %v2997
  %2999 = vmatmul.f32.gmra.mxu0 %v2789
  %v3000 = vpop.f32.mrf.mxu0
  %v3001 = vadd.f32 0.0, %v3000
  %3002 = vmatmul.f32.gmra.mxu0 %v2792
  %v3003 = vpop.f32.mrf.mxu0
  %v3004 = vadd.f32 0.0, %v3003
  %3005 = vmatmul.f32.gmra.mxu0 %v2795
  %v3006 = vpop.f32.mrf.mxu0
  %v3007 = vadd.f32 0.0, %v3006
  %3008 = vmatmul.f32.gmra.mxu0 %v2798
  %v3009 = vpop.f32.mrf.mxu0
  %v3010 = vadd.f32 0.0, %v3009
  %3011 = vmatmul.f32.gmra.mxu0 %v2801
  %v3012 = vpop.f32.mrf.mxu0
  %v3013 = vadd.f32 0.0, %v3012
  %3014 = vmatmul.f32.gmra.mxu0 %v2804
  %v3015 = vpop.f32.mrf.mxu0
  %v3016 = vadd.f32 0.0, %v3015
  %3017 = vmatmul.f32.gmra.mxu0 %v2807
  %v3018 = vpop.f32.mrf.mxu0
  %v3019 = vadd.f32 0.0, %v3018
  %3020 = vmatmul.f32.gmra.mxu0 %v2810
  %v3021 = vpop.f32.mrf.mxu0
  %v3022 = vadd.f32 0.0, %v3021
  %3023 = vmatmul.f32.gmra.mxu0 %v2813
  %v3024 = vpop.f32.mrf.mxu0
  %v3025 = vadd.f32 0.0, %v3024
  %3026 = vmatmul.f32.gmra.mxu0 %v2816
  %v3027 = vpop.f32.mrf.mxu0
  %v3028 = vadd.f32 0.0, %v3027
  %3029 = vmatmul.f32.gmra.mxu0 %v2819
  %v3030 = vpop.f32.mrf.mxu0
  %v3031 = vadd.f32 0.0, %v3030
  %3032 = vmatmul.f32.gmra.mxu0 %v2822
  %v3033 = vpop.f32.mrf.mxu0
  %v3034 = vadd.f32 0.0, %v3033
  %3035 = vmatmul.f32.gmra.mxu0 %v2825
  %v3036 = vpop.f32.mrf.mxu0
  %v3037 = vadd.f32 0.0, %v3036
  %3038 = vmatmul.f32.gmra.mxu0 %v2828
  %v3039 = vpop.f32.mrf.mxu0
  %v3040 = vadd.f32 0.0, %v3039
  %3041 = vmatmul.f32.gmra.mxu0 %v2831
  %v3042 = vpop.f32.mrf.mxu0
  %v3043 = vadd.f32 0.0, %v3042
  %3044 = vmatmul.f32.gmra.mxu0 %v2834
  %v3045 = vpop.f32.mrf.mxu0
  %v3046 = vadd.f32 0.0, %v3045
  %3047 = vmatmul.f32.gmra.mxu0 %v2837
  %v3048 = vpop.f32.mrf.mxu0
  %v3049 = vadd.f32 0.0, %v3048
  %3050 = vmatmul.f32.gmra.mxu0 %v2840
  %v3051 = vpop.f32.mrf.mxu0
  %v3052 = vadd.f32 0.0, %v3051
  %3053 = vmatmul.f32.gmra.mxu0 %v2843
  %v3054 = vpop.f32.mrf.mxu0
  %v3055 = vadd.f32 0.0, %v3054
  %3056 = vmatmul.f32.gmra.mxu0 %v2846
  %v3057 = vpop.f32.mrf.mxu0
  %v3058 = vadd.f32 0.0, %v3057
  %3059 = vmatmul.f32.gmra.mxu0 %v2849
  %v3060 = vpop.f32.mrf.mxu0
  %v3061 = vadd.f32 0.0, %v3060
  %3062 = vmatmul.f32.gmra.mxu0 %v2852
  %v3063 = vpop.f32.mrf.mxu0
  %v3064 = vadd.f32 0.0, %v3063
  %3065 = vmatmul.f32.gmra.mxu0 %v2855
  %v3066 = vpop.f32.mrf.mxu0
  %v3067 = vadd.f32 0.0, %v3066
  %3068 = vmatmul.f32.gmra.mxu0 %v2858
  %v3069 = vpop.f32.mrf.mxu0
  %v3070 = vadd.f32 0.0, %v3069
  %3071 = vdwg.mxu0
  %v3072 = vadd.f32 %v2602, %v2881
  %v3073 = vadd.f32 %v2603, %v2884
  %v3074 = vadd.f32 %v2604, %v2887
  %v3075 = vadd.f32 %v2605, %v2890
  %v3076 = vadd.f32 %v2606, %v2893
  %v3077 = vadd.f32 %v2607, %v2896
  %v3078 = vadd.f32 %v2608, %v2899
  %v3079 = vadd.f32 %v2609, %v2902
  %v3080 = vadd.f32 %v2610, %v2905
  %v3081 = vadd.f32 %v2611, %v2908
  %v3082 = vadd.f32 %v2612, %v2911
  %v3083 = vadd.f32 %v2613, %v2914
  %v3084 = vadd.f32 %v2614, %v2917
  %v3085 = vadd.f32 %v2615, %v2920
  %v3086 = vadd.f32 %v2616, %v2923
  %v3087 = vadd.f32 %v2617, %v2926
  %v3088 = vadd.f32 %v2618, %v2929
  %v3089 = vadd.f32 %v2619, %v2932
  %v3090 = vadd.f32 %v2620, %v2935
  %v3091 = vadd.f32 %v2621, %v2938
  %v3092 = vadd.f32 %v2622, %v2941
  %v3093 = vadd.f32 %v2623, %v2944
  %v3094 = vadd.f32 %v2624, %v2947
  %v3095 = vadd.f32 %v2625, %v2950
  %v3096 = vadd.f32 %v2626, %v2953
  %v3097 = vadd.f32 %v2627, %v2956
  %v3098 = vadd.f32 %v2628, %v2959
  %v3099 = vadd.f32 %v2629, %v2962
  %v3100 = vadd.f32 %v2630, %v2965
  %v3101 = vadd.f32 %v2631, %v2968
  %v3102 = vadd.f32 %v2632, %v2971
  %v3103 = vadd.f32 %v2633, %v2974
  %v3104 = vadd.f32 %v2634, %v2977
  %v3105 = vadd.f32 %v2635, %v2980
  %v3106 = vadd.f32 %v2636, %v2983
  %v3107 = vadd.f32 %v2637, %v2986
  %v3108 = vadd.f32 %v2638, %v2989
  %v3109 = vadd.f32 %v2639, %v2992
  %v3110 = vadd.f32 %v2640, %v2995
  %v3111 = vadd.f32 %v2641, %v2998
  %v3112 = vadd.f32 %v2642, %v3001
  %v3113 = vadd.f32 %v2643, %v3004
  %v3114 = vadd.f32 %v2644, %v3007
  %v3115 = vadd.f32 %v2645, %v3010
  %v3116 = vadd.f32 %v2646, %v3013
  %v3117 = vadd.f32 %v2647, %v3016
  %v3118 = vadd.f32 %v2648, %v3019
  %v3119 = vadd.f32 %v2649, %v3022
  %v3120 = vadd.f32 %v2650, %v3025
  %v3121 = vadd.f32 %v2651, %v3028
  %v3122 = vadd.f32 %v2652, %v3031
  %v3123 = vadd.f32 %v2653, %v3034
  %v3124 = vadd.f32 %v2654, %v3037
  %v3125 = vadd.f32 %v2655, %v3040
  %v3126 = vadd.f32 %v2656, %v3043
  %v3127 = vadd.f32 %v2657, %v3046
  %v3128 = vadd.f32 %v2658, %v3049
  %v3129 = vadd.f32 %v2659, %v3052
  %v3130 = vadd.f32 %v2660, %v3055
  %v3131 = vadd.f32 %v2661, %v3058
  %v3132 = vadd.f32 %v2662, %v3061
  %v3133 = vadd.f32 %v2663, %v3064
  %v3134 = vadd.f32 %v2664, %v3067
  %v3135 = vadd.f32 %v2665, %v3070
  %3136 = vst [vmem:[#allocation2] sm:$0xff] %v3072
  %3137 = vst [vmem:[#allocation2 + $0x8] sm:$0xff] %v3073
  %3138 = vst [vmem:[#allocation2 + $0x10] sm:$0xff] %v3074
  %3139 = vst [vmem:[#allocation2 + $0x18] sm:$0xff] %v3075
  %3140 = vst [vmem:[#allocation2 + $0x20] sm:$0xff] %v3076
  %3141 = vst [vmem:[#allocation2 + $0x28] sm:$0xff] %v3077
  %3142 = vst [vmem:[#allocation2 + $0x30] sm:$0xff] %v3078
  %3143 = vst [vmem:[#allocation2 + $0x38] sm:$0xff] %v3079
  %3144 = vst [vmem:[#allocation2 + $0x40] sm:$0xff] %v3080
  %3145 = vst [vmem:[#allocation2 + $0x48] sm:$0xff] %v3081
  %3146 = vst [vmem:[#allocation2 + $0x50] sm:$0xff] %v3082
  %3147 = vst [vmem:[#allocation2 + $0x58] sm:$0xff] %v3083
  %3148 = vst [vmem:[#allocation2 + $0x60] sm:$0xff] %v3084
  %3149 = vst [vmem:[#allocation2 + $0x68] sm:$0xff] %v3085
  %3150 = vst [vmem:[#allocation2 + $0x70] sm:$0xff] %v3086
  %3151 = vst [vmem:[#allocation2 + $0x78] sm:$0xff] %v3087
  %3152 = vst [vmem:[#allocation2 + $0x80] sm:$0xff] %v3088
  %3153 = vst [vmem:[#allocation2 + $0x88] sm:$0xff] %v3089
  %3154 = vst [vmem:[#allocation2 + $0x90] sm:$0xff] %v3090
  %3155 = vst [vmem:[#allocation2 + $0x98] sm:$0xff] %v3091
  %3156 = vst [vmem:[#allocation2 + $0xa0] sm:$0xff] %v3092
  %3157 = vst [vmem:[#allocation2 + $0xa8] sm:$0xff] %v3093
  %3158 = vst [vmem:[#allocation2 + $0xb0] sm:$0xff] %v3094
  %3159 = vst [vmem:[#allocation2 + $0xb8] sm:$0xff] %v3095
  %3160 = vst [vmem:[#allocation2 + $0xc0] sm:$0xff] %v3096
  %3161 = vst [vmem:[#allocation2 + $0xc8] sm:$0xff] %v3097
  %3162 = vst [vmem:[#allocation2 + $0xd0] sm:$0xff] %v3098
  %3163 = vst [vmem:[#allocation2 + $0xd8] sm:$0xff] %v3099
  %3164 = vst [vmem:[#allocation2 + $0xe0] sm:$0xff] %v3100
  %3165 = vst [vmem:[#allocation2 + $0xe8] sm:$0xff] %v3101
  %3166 = vst [vmem:[#allocation2 + $0xf0] sm:$0xff] %v3102
  %3167 = vst [vmem:[#allocation2 + $0xf8] sm:$0xff] %v3103
  %3168 = vst [vmem:[#allocation2 + $0x100] sm:$0xff] %v3104
  %3169 = vst [vmem:[#allocation2 + $0x108] sm:$0xff] %v3105
  %3170 = vst [vmem:[#allocation2 + $0x110] sm:$0xff] %v3106
  %3171 = vst [vmem:[#allocation2 + $0x118] sm:$0xff] %v3107
  %3172 = vst [vmem:[#allocation2 + $0x120] sm:$0xff] %v3108
  %3173 = vst [vmem:[#allocation2 + $0x128] sm:$0xff] %v3109
  %3174 = vst [vmem:[#allocation2 + $0x130] sm:$0xff] %v3110
  %3175 = vst [vmem:[#allocation2 + $0x138] sm:$0xff] %v3111
  %3176 = vst [vmem:[#allocation2 + $0x140] sm:$0xff] %v3112
  %3177 = vst [vmem:[#allocation2 + $0x148] sm:$0xff] %v3113
  %3178 = vst [vmem:[#allocation2 + $0x150] sm:$0xff] %v3114
  %3179 = vst [vmem:[#allocation2 + $0x158] sm:$0xff] %v3115
  %3180 = vst [vmem:[#allocation2 + $0x160] sm:$0xff] %v3116
  %3181 = vst [vmem:[#allocation2 + $0x168] sm:$0xff] %v3117
  %3182 = vst [vmem:[#allocation2 + $0x170] sm:$0xff] %v3118
  %3183 = vst [vmem:[#allocation2 + $0x178] sm:$0xff] %v3119
  %3184 = vst [vmem:[#allocation2 + $0x180] sm:$0xff] %v3120
  %3185 = vst [vmem:[#allocation2 + $0x188] sm:$0xff] %v3121
  %3186 = vst [vmem:[#allocation2 + $0x190] sm:$0xff] %v3122
  %3187 = vst [vmem:[#allocation2 + $0x198] sm:$0xff] %v3123
  %3188 = vst [vmem:[#allocation2 + $0x1a0] sm:$0xff] %v3124
  %3189 = vst [vmem:[#allocation2 + $0x1a8] sm:$0xff] %v3125
  %3190 = vst [vmem:[#allocation2 + $0x1b0] sm:$0xff] %v3126
  %3191 = vst [vmem:[#allocation2 + $0x1b8] sm:$0xff] %v3127
  %3192 = vst [vmem:[#allocation2 + $0x1c0] sm:$0xff] %v3128
  %3193 = vst [vmem:[#allocation2 + $0x1c8] sm:$0xff] %v3129
  %3194 = vst [vmem:[#allocation2 + $0x1d0] sm:$0xff] %v3130
  %3195 = vst [vmem:[#allocation2 + $0x1d8] sm:$0xff] %v3131
  %3196 = vst [vmem:[#allocation2 + $0x1e0] sm:$0xff] %v3132
  %3197 = vst [vmem:[#allocation2 + $0x1e8] sm:$0xff] %v3133
  %3198 = vst [vmem:[#allocation2 + $0x1f0] sm:$0xff] %v3134
  %3199 = vst [vmem:[#allocation2 + $0x1f8] sm:$0xff] %v3135
  %s3200 = scalar_lea.vmem %s0, 80
  %v3201 = vld [vmem:[%s3200] sm:$0xff]
  %v3202 = vld [vmem:[%s3200 + $0x8] sm:$0xff]
  %v3203 = vld [vmem:[%s3200 + $0x10] sm:$0xff]
  %v3204 = vld [vmem:[%s3200 + $0x18] sm:$0xff]
  %v3205 = vld [vmem:[%s3200 + $0x20] sm:$0xff]
  %v3206 = vld [vmem:[%s3200 + $0x28] sm:$0xff]
  %v3207 = vld [vmem:[%s3200 + $0x30] sm:$0xff]
  %v3208 = vld [vmem:[%s3200 + $0x38] sm:$0xff]
  %v3209 = vld [vmem:[%s3200 + $0x40] sm:$0xff]
  %v3210 = vld [vmem:[%s3200 + $0x48] sm:$0xff]
  %v3211 = vld [vmem:[%s3200 + $0x50] sm:$0xff]
  %v3212 = vld [vmem:[%s3200 + $0x58] sm:$0xff]
  %v3213 = vld [vmem:[%s3200 + $0x60] sm:$0xff]
  %v3214 = vld [vmem:[%s3200 + $0x68] sm:$0xff]
  %v3215 = vld [vmem:[%s3200 + $0x70] sm:$0xff]
  %v3216 = vld [vmem:[%s3200 + $0x78] sm:$0xff]
  %v3217 = vld [vmem:[%s3200 + $0x80] sm:$0xff]
  %v3218 = vld [vmem:[%s3200 + $0x88] sm:$0xff]
  %v3219 = vld [vmem:[%s3200 + $0x90] sm:$0xff]
  %v3220 = vld [vmem:[%s3200 + $0x98] sm:$0xff]
  %v3221 = vld [vmem:[%s3200 + $0xa0] sm:$0xff]
  %v3222 = vld [vmem:[%s3200 + $0xa8] sm:$0xff]
  %v3223 = vld [vmem:[%s3200 + $0xb0] sm:$0xff]
  %v3224 = vld [vmem:[%s3200 + $0xb8] sm:$0xff]
  %v3225 = vld [vmem:[%s3200 + $0xc0] sm:$0xff]
  %v3226 = vld [vmem:[%s3200 + $0xc8] sm:$0xff]
  %v3227 = vld [vmem:[%s3200 + $0xd0] sm:$0xff]
  %v3228 = vld [vmem:[%s3200 + $0xd8] sm:$0xff]
  %v3229 = vld [vmem:[%s3200 + $0xe0] sm:$0xff]
  %v3230 = vld [vmem:[%s3200 + $0xe8] sm:$0xff]
  %v3231 = vld [vmem:[%s3200 + $0xf0] sm:$0xff]
  %v3232 = vld [vmem:[%s3200 + $0xf8] sm:$0xff]
  %v3233 = vld [vmem:[%s3200 + $0x180] sm:$0xff]
  %v3234 = vld [vmem:[%s3200 + $0x188] sm:$0xff]
  %v3235 = vld [vmem:[%s3200 + $0x190] sm:$0xff]
  %v3236 = vld [vmem:[%s3200 + $0x198] sm:$0xff]
  %v3237 = vld [vmem:[%s3200 + $0x1a0] sm:$0xff]
  %v3238 = vld [vmem:[%s3200 + $0x1a8] sm:$0xff]
  %v3239 = vld [vmem:[%s3200 + $0x1b0] sm:$0xff]
  %v3240 = vld [vmem:[%s3200 + $0x1b8] sm:$0xff]
  %v3241 = vld [vmem:[%s3200 + $0x1c0] sm:$0xff]
  %v3242 = vld [vmem:[%s3200 + $0x1c8] sm:$0xff]
  %v3243 = vld [vmem:[%s3200 + $0x1d0] sm:$0xff]
  %v3244 = vld [vmem:[%s3200 + $0x1d8] sm:$0xff]
  %v3245 = vld [vmem:[%s3200 + $0x1e0] sm:$0xff]
  %v3246 = vld [vmem:[%s3200 + $0x1e8] sm:$0xff]
  %v3247 = vld [vmem:[%s3200 + $0x1f0] sm:$0xff]
  %v3248 = vld [vmem:[%s3200 + $0x1f8] sm:$0xff]
  %v3249 = vld [vmem:[%s3200 + $0x200] sm:$0xff]
  %v3250 = vld [vmem:[%s3200 + $0x208] sm:$0xff]
  %v3251 = vld [vmem:[%s3200 + $0x210] sm:$0xff]
  %v3252 = vld [vmem:[%s3200 + $0x218] sm:$0xff]
  %v3253 = vld [vmem:[%s3200 + $0x220] sm:$0xff]
  %v3254 = vld [vmem:[%s3200 + $0x228] sm:$0xff]
  %v3255 = vld [vmem:[%s3200 + $0x230] sm:$0xff]
  %v3256 = vld [vmem:[%s3200 + $0x238] sm:$0xff]
  %v3257 = vld [vmem:[%s3200 + $0x240] sm:$0xff]
  %v3258 = vld [vmem:[%s3200 + $0x248] sm:$0xff]
  %v3259 = vld [vmem:[%s3200 + $0x250] sm:$0xff]
  %v3260 = vld [vmem:[%s3200 + $0x258] sm:$0xff]
  %v3261 = vld [vmem:[%s3200 + $0x260] sm:$0xff]
  %v3262 = vld [vmem:[%s3200 + $0x268] sm:$0xff]
  %v3263 = vld [vmem:[%s3200 + $0x270] sm:$0xff]
  %v3264 = vld [vmem:[%s3200 + $0x278] sm:$0xff]
  %v3265 = vld [vmem:[#allocation2] sm:$0xff]
  %v3266 = vld [vmem:[#allocation2 + $0x8] sm:$0xff]
  %v3267 = vld [vmem:[#allocation2 + $0x10] sm:$0xff]
  %v3268 = vld [vmem:[#allocation2 + $0x18] sm:$0xff]
  %v3269 = vld [vmem:[#allocation2 + $0x20] sm:$0xff]
  %v3270 = vld [vmem:[#allocation2 + $0x28] sm:$0xff]
  %v3271 = vld [vmem:[#allocation2 + $0x30] sm:$0xff]
  %v3272 = vld [vmem:[#allocation2 + $0x38] sm:$0xff]
  %v3273 = vld [vmem:[#allocation2 + $0x40] sm:$0xff]
  %v3274 = vld [vmem:[#allocation2 + $0x48] sm:$0xff]
  %v3275 = vld [vmem:[#allocation2 + $0x50] sm:$0xff]
  %v3276 = vld [vmem:[#allocation2 + $0x58] sm:$0xff]
  %v3277 = vld [vmem:[#allocation2 + $0x60] sm:$0xff]
  %v3278 = vld [vmem:[#allocation2 + $0x68] sm:$0xff]
  %v3279 = vld [vmem:[#allocation2 + $0x70] sm:$0xff]
  %v3280 = vld [vmem:[#allocation2 + $0x78] sm:$0xff]
  %v3281 = vld [vmem:[#allocation2 + $0x80] sm:$0xff]
  %v3282 = vld [vmem:[#allocation2 + $0x88] sm:$0xff]
  %v3283 = vld [vmem:[#allocation2 + $0x90] sm:$0xff]
  %v3284 = vld [vmem:[#allocation2 + $0x98] sm:$0xff]
  %v3285 = vld [vmem:[#allocation2 + $0xa0] sm:$0xff]
  %v3286 = vld [vmem:[#allocation2 + $0xa8] sm:$0xff]
  %v3287 = vld [vmem:[#allocation2 + $0xb0] sm:$0xff]
  %v3288 = vld [vmem:[#allocation2 + $0xb8] sm:$0xff]
  %v3289 = vld [vmem:[#allocation2 + $0xc0] sm:$0xff]
  %v3290 = vld [vmem:[#allocation2 + $0xc8] sm:$0xff]
  %v3291 = vld [vmem:[#allocation2 + $0xd0] sm:$0xff]
  %v3292 = vld [vmem:[#allocation2 + $0xd8] sm:$0xff]
  %v3293 = vld [vmem:[#allocation2 + $0xe0] sm:$0xff]
  %v3294 = vld [vmem:[#allocation2 + $0xe8] sm:$0xff]
  %v3295 = vld [vmem:[#allocation2 + $0xf0] sm:$0xff]
  %v3296 = vld [vmem:[#allocation2 + $0xf8] sm:$0xff]
  %v3297 = vld [vmem:[#allocation2 + $0x100] sm:$0xff]
  %v3298 = vld [vmem:[#allocation2 + $0x108] sm:$0xff]
  %v3299 = vld [vmem:[#allocation2 + $0x110] sm:$0xff]
  %v3300 = vld [vmem:[#allocation2 + $0x118] sm:$0xff]
  %v3301 = vld [vmem:[#allocation2 + $0x120] sm:$0xff]
  %v3302 = vld [vmem:[#allocation2 + $0x128] sm:$0xff]
  %v3303 = vld [vmem:[#allocation2 + $0x130] sm:$0xff]
  %v3304 = vld [vmem:[#allocation2 + $0x138] sm:$0xff]
  %v3305 = vld [vmem:[#allocation2 + $0x140] sm:$0xff]
  %v3306 = vld [vmem:[#allocation2 + $0x148] sm:$0xff]
  %v3307 = vld [vmem:[#allocation2 + $0x150] sm:$0xff]
  %v3308 = vld [vmem:[#allocation2 + $0x158] sm:$0xff]
  %v3309 = vld [vmem:[#allocation2 + $0x160] sm:$0xff]
  %v3310 = vld [vmem:[#allocation2 + $0x168] sm:$0xff]
  %v3311 = vld [vmem:[#allocation2 + $0x170] sm:$0xff]
  %v3312 = vld [vmem:[#allocation2 + $0x178] sm:$0xff]
  %v3313 = vld [vmem:[#allocation2 + $0x180] sm:$0xff]
  %v3314 = vld [vmem:[#allocation2 + $0x188] sm:$0xff]
  %v3315 = vld [vmem:[#allocation2 + $0x190] sm:$0xff]
  %v3316 = vld [vmem:[#allocation2 + $0x198] sm:$0xff]
  %v3317 = vld [vmem:[#allocation2 + $0x1a0] sm:$0xff]
  %v3318 = vld [vmem:[#allocation2 + $0x1a8] sm:$0xff]
  %v3319 = vld [vmem:[#allocation2 + $0x1b0] sm:$0xff]
  %v3320 = vld [vmem:[#allocation2 + $0x1b8] sm:$0xff]
  %v3321 = vld [vmem:[#allocation2 + $0x1c0] sm:$0xff]
  %v3322 = vld [vmem:[#allocation2 + $0x1c8] sm:$0xff]
  %v3323 = vld [vmem:[#allocation2 + $0x1d0] sm:$0xff]
  %v3324 = vld [vmem:[#allocation2 + $0x1d8] sm:$0xff]
  %v3325 = vld [vmem:[#allocation2 + $0x1e0] sm:$0xff]
  %v3326 = vld [vmem:[#allocation2 + $0x1e8] sm:$0xff]
  %v3327 = vld [vmem:[#allocation2 + $0x1f0] sm:$0xff]
  %v3328 = vld [vmem:[#allocation2 + $0x1f8] sm:$0xff]
  %s3329 = scalar_lea.vmem %s1, 20
  %v3330 = vld [vmem:[%s3329] sm:$0xf]
  %v3332 = vsel %vm78, %v3201, 0
  %v3335 = vsel %vm78, %v3202, 0
  %v3338 = vsel %vm78, %v3203, 0
  %v3341 = vsel %vm78, %v3204, 0
  %v3344 = vsel %vm78, %v3205, 0
  %v3347 = vsel %vm78, %v3206, 0
  %v3350 = vsel %vm78, %v3207, 0
  %v3353 = vsel %vm78, %v3208, 0
  %v3356 = vsel %vm78, %v3209, 0
  %v3359 = vsel %vm78, %v3210, 0
  %v3362 = vsel %vm78, %v3211, 0
  %v3365 = vsel %vm78, %v3212, 0
  %v3368 = vsel %vm78, %v3213, 0
  %v3371 = vsel %vm78, %v3214, 0
  %v3374 = vsel %vm78, %v3215, 0
  %v3377 = vsel %vm78, %v3216, 0
  %v3380 = vsel %vm78, %v3217, 0
  %v3383 = vsel %vm78, %v3218, 0
  %v3386 = vsel %vm78, %v3219, 0
  %v3389 = vsel %vm78, %v3220, 0
  %v3392 = vsel %vm78, %v3221, 0
  %v3395 = vsel %vm78, %v3222, 0
  %v3398 = vsel %vm78, %v3223, 0
  %v3401 = vsel %vm78, %v3224, 0
  %v3404 = vsel %vm78, %v3225, 0
  %v3407 = vsel %vm78, %v3226, 0
  %v3410 = vsel %vm78, %v3227, 0
  %v3413 = vsel %vm78, %v3228, 0
  %v3416 = vsel %vm78, %v3229, 0
  %v3419 = vsel %vm78, %v3230, 0
  %v3422 = vsel %vm78, %v3231, 0
  %v3425 = vsel %vm78, %v3232, 0
  %v3428 = vsel %vm78, %v3233, 0
  %v3431 = vsel %vm78, %v3234, 0
  %v3434 = vsel %vm78, %v3235, 0
  %v3437 = vsel %vm78, %v3236, 0
  %v3440 = vsel %vm78, %v3237, 0
  %v3443 = vsel %vm78, %v3238, 0
  %v3446 = vsel %vm78, %v3239, 0
  %v3449 = vsel %vm78, %v3240, 0
  %v3452 = vsel %vm78, %v3241, 0
  %v3455 = vsel %vm78, %v3242, 0
  %v3458 = vsel %vm78, %v3243, 0
  %v3461 = vsel %vm78, %v3244, 0
  %v3464 = vsel %vm78, %v3245, 0
  %v3467 = vsel %vm78, %v3246, 0
  %v3470 = vsel %vm78, %v3247, 0
  %v3473 = vsel %vm78, %v3248, 0
  %v3476 = vsel %vm78, %v3249, 0
  %v3479 = vsel %vm78, %v3250, 0
  %v3482 = vsel %vm78, %v3251, 0
  %v3485 = vsel %vm78, %v3252, 0
  %v3488 = vsel %vm78, %v3253, 0
  %v3491 = vsel %vm78, %v3254, 0
  %v3494 = vsel %vm78, %v3255, 0
  %v3497 = vsel %vm78, %v3256, 0
  %v3500 = vsel %vm78, %v3257, 0
  %v3503 = vsel %vm78, %v3258, 0
  %v3506 = vsel %vm78, %v3259, 0
  %v3509 = vsel %vm78, %v3260, 0
  %v3512 = vsel %vm78, %v3261, 0
  %v3515 = vsel %vm78, %v3262, 0
  %v3518 = vsel %vm78, %v3263, 0
  %v3521 = vsel %vm78, %v3264, 0
  %v3524 = vsel %vm271, %v3330, 0
  %3526 = vmatpush.msra.mxu0 0.0
  %3527 = vmatpush.msra.mxu0 0.0
  %3528 = vmatpush.msra.mxu0 0.0
  %3529 = vmatpush.msra.mxu0 0.0
  %3530 = vmatpush.msra.mxu0 0.0
  %3531 = vmatpush.msra.mxu0 0.0
  %3532 = vmatpush.msra.mxu0 0.0
  %3533 = vmatpush.msra.mxu0 0.0
  %3534 = vmatpush.msra.mxu0 0.0
  %3535 = vmatpush.msra.mxu0 0.0
  %3536 = vmatpush.msra.mxu0 0.0
  %3537 = vmatpush.msra.mxu0 0.0
  %3538 = vmatpush.msra.mxu0 0.0
  %3539 = vmatpush.msra.mxu0 0.0
  %3540 = vmatpush.msra.mxu0 0.0
  %3541 = vmatpush.msra.mxu0 %v3524
  %3542 = vmatmul.f32.gmra.mxu0 %v3332
  %v3543 = vpop.f32.mrf.mxu0
  %v3544 = vadd.f32 0.0, %v3543
  %3545 = vmatmul.f32.gmra.mxu0 %v3335
  %v3546 = vpop.f32.mrf.mxu0
  %v3547 = vadd.f32 0.0, %v3546
  %3548 = vmatmul.f32.gmra.mxu0 %v3338
  %v3549 = vpop.f32.mrf.mxu0
  %v3550 = vadd.f32 0.0, %v3549
  %3551 = vmatmul.f32.gmra.mxu0 %v3341
  %v3552 = vpop.f32.mrf.mxu0
  %v3553 = vadd.f32 0.0, %v3552
  %3554 = vmatmul.f32.gmra.mxu0 %v3344
  %v3555 = vpop.f32.mrf.mxu0
  %v3556 = vadd.f32 0.0, %v3555
  %3557 = vmatmul.f32.gmra.mxu0 %v3347
  %v3558 = vpop.f32.mrf.mxu0
  %v3559 = vadd.f32 0.0, %v3558
  %3560 = vmatmul.f32.gmra.mxu0 %v3350
  %v3561 = vpop.f32.mrf.mxu0
  %v3562 = vadd.f32 0.0, %v3561
  %3563 = vmatmul.f32.gmra.mxu0 %v3353
  %v3564 = vpop.f32.mrf.mxu0
  %v3565 = vadd.f32 0.0, %v3564
  %3566 = vmatmul.f32.gmra.mxu0 %v3356
  %v3567 = vpop.f32.mrf.mxu0
  %v3568 = vadd.f32 0.0, %v3567
  %3569 = vmatmul.f32.gmra.mxu0 %v3359
  %v3570 = vpop.f32.mrf.mxu0
  %v3571 = vadd.f32 0.0, %v3570
  %3572 = vmatmul.f32.gmra.mxu0 %v3362
  %v3573 = vpop.f32.mrf.mxu0
  %v3574 = vadd.f32 0.0, %v3573
  %3575 = vmatmul.f32.gmra.mxu0 %v3365
  %v3576 = vpop.f32.mrf.mxu0
  %v3577 = vadd.f32 0.0, %v3576
  %3578 = vmatmul.f32.gmra.mxu0 %v3368
  %v3579 = vpop.f32.mrf.mxu0
  %v3580 = vadd.f32 0.0, %v3579
  %3581 = vmatmul.f32.gmra.mxu0 %v3371
  %v3582 = vpop.f32.mrf.mxu0
  %v3583 = vadd.f32 0.0, %v3582
  %3584 = vmatmul.f32.gmra.mxu0 %v3374
  %v3585 = vpop.f32.mrf.mxu0
  %v3586 = vadd.f32 0.0, %v3585
  %3587 = vmatmul.f32.gmra.mxu0 %v3377
  %v3588 = vpop.f32.mrf.mxu0
  %v3589 = vadd.f32 0.0, %v3588
  %3590 = vmatmul.f32.gmra.mxu0 %v3380
  %v3591 = vpop.f32.mrf.mxu0
  %v3592 = vadd.f32 0.0, %v3591
  %3593 = vmatmul.f32.gmra.mxu0 %v3383
  %v3594 = vpop.f32.mrf.mxu0
  %v3595 = vadd.f32 0.0, %v3594
  %3596 = vmatmul.f32.gmra.mxu0 %v3386
  %v3597 = vpop.f32.mrf.mxu0
  %v3598 = vadd.f32 0.0, %v3597
  %3599 = vmatmul.f32.gmra.mxu0 %v3389
  %v3600 = vpop.f32.mrf.mxu0
  %v3601 = vadd.f32 0.0, %v3600
  %3602 = vmatmul.f32.gmra.mxu0 %v3392
  %v3603 = vpop.f32.mrf.mxu0
  %v3604 = vadd.f32 0.0, %v3603
  %3605 = vmatmul.f32.gmra.mxu0 %v3395
  %v3606 = vpop.f32.mrf.mxu0
  %v3607 = vadd.f32 0.0, %v3606
  %3608 = vmatmul.f32.gmra.mxu0 %v3398
  %v3609 = vpop.f32.mrf.mxu0
  %v3610 = vadd.f32 0.0, %v3609
  %3611 = vmatmul.f32.gmra.mxu0 %v3401
  %v3612 = vpop.f32.mrf.mxu0
  %v3613 = vadd.f32 0.0, %v3612
  %3614 = vmatmul.f32.gmra.mxu0 %v3404
  %v3615 = vpop.f32.mrf.mxu0
  %v3616 = vadd.f32 0.0, %v3615
  %3617 = vmatmul.f32.gmra.mxu0 %v3407
  %v3618 = vpop.f32.mrf.mxu0
  %v3619 = vadd.f32 0.0, %v3618
  %3620 = vmatmul.f32.gmra.mxu0 %v3410
  %v3621 = vpop.f32.mrf.mxu0
  %v3622 = vadd.f32 0.0, %v3621
  %3623 = vmatmul.f32.gmra.mxu0 %v3413
  %v3624 = vpop.f32.mrf.mxu0
  %v3625 = vadd.f32 0.0, %v3624
  %3626 = vmatmul.f32.gmra.mxu0 %v3416
  %v3627 = vpop.f32.mrf.mxu0
  %v3628 = vadd.f32 0.0, %v3627
  %3629 = vmatmul.f32.gmra.mxu0 %v3419
  %v3630 = vpop.f32.mrf.mxu0
  %v3631 = vadd.f32 0.0, %v3630
  %3632 = vmatmul.f32.gmra.mxu0 %v3422
  %v3633 = vpop.f32.mrf.mxu0
  %v3634 = vadd.f32 0.0, %v3633
  %3635 = vmatmul.f32.gmra.mxu0 %v3425
  %v3636 = vpop.f32.mrf.mxu0
  %v3637 = vadd.f32 0.0, %v3636
  %3638 = vmatmul.f32.gmra.mxu0 %v3428
  %v3639 = vpop.f32.mrf.mxu0
  %v3640 = vadd.f32 0.0, %v3639
  %3641 = vmatmul.f32.gmra.mxu0 %v3431
  %v3642 = vpop.f32.mrf.mxu0
  %v3643 = vadd.f32 0.0, %v3642
  %3644 = vmatmul.f32.gmra.mxu0 %v3434
  %v3645 = vpop.f32.mrf.mxu0
  %v3646 = vadd.f32 0.0, %v3645
  %3647 = vmatmul.f32.gmra.mxu0 %v3437
  %v3648 = vpop.f32.mrf.mxu0
  %v3649 = vadd.f32 0.0, %v3648
  %3650 = vmatmul.f32.gmra.mxu0 %v3440
  %v3651 = vpop.f32.mrf.mxu0
  %v3652 = vadd.f32 0.0, %v3651
  %3653 = vmatmul.f32.gmra.mxu0 %v3443
  %v3654 = vpop.f32.mrf.mxu0
  %v3655 = vadd.f32 0.0, %v3654
  %3656 = vmatmul.f32.gmra.mxu0 %v3446
  %v3657 = vpop.f32.mrf.mxu0
  %v3658 = vadd.f32 0.0, %v3657
  %3659 = vmatmul.f32.gmra.mxu0 %v3449
  %v3660 = vpop.f32.mrf.mxu0
  %v3661 = vadd.f32 0.0, %v3660
  %3662 = vmatmul.f32.gmra.mxu0 %v3452
  %v3663 = vpop.f32.mrf.mxu0
  %v3664 = vadd.f32 0.0, %v3663
  %3665 = vmatmul.f32.gmra.mxu0 %v3455
  %v3666 = vpop.f32.mrf.mxu0
  %v3667 = vadd.f32 0.0, %v3666
  %3668 = vmatmul.f32.gmra.mxu0 %v3458
  %v3669 = vpop.f32.mrf.mxu0
  %v3670 = vadd.f32 0.0, %v3669
  %3671 = vmatmul.f32.gmra.mxu0 %v3461
  %v3672 = vpop.f32.mrf.mxu0
  %v3673 = vadd.f32 0.0, %v3672
  %3674 = vmatmul.f32.gmra.mxu0 %v3464
  %v3675 = vpop.f32.mrf.mxu0
  %v3676 = vadd.f32 0.0, %v3675
  %3677 = vmatmul.f32.gmra.mxu0 %v3467
  %v3678 = vpop.f32.mrf.mxu0
  %v3679 = vadd.f32 0.0, %v3678
  %3680 = vmatmul.f32.gmra.mxu0 %v3470
  %v3681 = vpop.f32.mrf.mxu0
  %v3682 = vadd.f32 0.0, %v3681
  %3683 = vmatmul.f32.gmra.mxu0 %v3473
  %v3684 = vpop.f32.mrf.mxu0
  %v3685 = vadd.f32 0.0, %v3684
  %3686 = vmatmul.f32.gmra.mxu0 %v3476
  %v3687 = vpop.f32.mrf.mxu0
  %v3688 = vadd.f32 0.0, %v3687
  %3689 = vmatmul.f32.gmra.mxu0 %v3479
  %v3690 = vpop.f32.mrf.mxu0
  %v3691 = vadd.f32 0.0, %v3690
  %3692 = vmatmul.f32.gmra.mxu0 %v3482
  %v3693 = vpop.f32.mrf.mxu0
  %v3694 = vadd.f32 0.0, %v3693
  %3695 = vmatmul.f32.gmra.mxu0 %v3485
  %v3696 = vpop.f32.mrf.mxu0
  %v3697 = vadd.f32 0.0, %v3696
  %3698 = vmatmul.f32.gmra.mxu0 %v3488
  %v3699 = vpop.f32.mrf.mxu0
  %v3700 = vadd.f32 0.0, %v3699
  %3701 = vmatmul.f32.gmra.mxu0 %v3491
  %v3702 = vpop.f32.mrf.mxu0
  %v3703 = vadd.f32 0.0, %v3702
  %3704 = vmatmul.f32.gmra.mxu0 %v3494
  %v3705 = vpop.f32.mrf.mxu0
  %v3706 = vadd.f32 0.0, %v3705
  %3707 = vmatmul.f32.gmra.mxu0 %v3497
  %v3708 = vpop.f32.mrf.mxu0
  %v3709 = vadd.f32 0.0, %v3708
  %3710 = vmatmul.f32.gmra.mxu0 %v3500
  %v3711 = vpop.f32.mrf.mxu0
  %v3712 = vadd.f32 0.0, %v3711
  %3713 = vmatmul.f32.gmra.mxu0 %v3503
  %v3714 = vpop.f32.mrf.mxu0
  %v3715 = vadd.f32 0.0, %v3714
  %3716 = vmatmul.f32.gmra.mxu0 %v3506
  %v3717 = vpop.f32.mrf.mxu0
  %v3718 = vadd.f32 0.0, %v3717
  %3719 = vmatmul.f32.gmra.mxu0 %v3509
  %v3720 = vpop.f32.mrf.mxu0
  %v3721 = vadd.f32 0.0, %v3720
  %3722 = vmatmul.f32.gmra.mxu0 %v3512
  %v3723 = vpop.f32.mrf.mxu0
  %v3724 = vadd.f32 0.0, %v3723
  %3725 = vmatmul.f32.gmra.mxu0 %v3515
  %v3726 = vpop.f32.mrf.mxu0
  %v3727 = vadd.f32 0.0, %v3726
  %3728 = vmatmul.f32.gmra.mxu0 %v3518
  %v3729 = vpop.f32.mrf.mxu0
  %v3730 = vadd.f32 0.0, %v3729
  %3731 = vmatmul.f32.gmra.mxu0 %v3521
  %v3732 = vpop.f32.mrf.mxu0
  %v3733 = vadd.f32 0.0, %v3732
  %3734 = vdwg.mxu0
  %v3735 = vadd.f32 %v3265, %v3544
  %v3736 = vadd.f32 %v3266, %v3547
  %v3737 = vadd.f32 %v3267, %v3550
  %v3738 = vadd.f32 %v3268, %v3553
  %v3739 = vadd.f32 %v3269, %v3556
  %v3740 = vadd.f32 %v3270, %v3559
  %v3741 = vadd.f32 %v3271, %v3562
  %v3742 = vadd.f32 %v3272, %v3565
  %v3743 = vadd.f32 %v3273, %v3568
  %v3744 = vadd.f32 %v3274, %v3571
  %v3745 = vadd.f32 %v3275, %v3574
  %v3746 = vadd.f32 %v3276, %v3577
  %v3747 = vadd.f32 %v3277, %v3580
  %v3748 = vadd.f32 %v3278, %v3583
  %v3749 = vadd.f32 %v3279, %v3586
  %v3750 = vadd.f32 %v3280, %v3589
  %v3751 = vadd.f32 %v3281, %v3592
  %v3752 = vadd.f32 %v3282, %v3595
  %v3753 = vadd.f32 %v3283, %v3598
  %v3754 = vadd.f32 %v3284, %v3601
  %v3755 = vadd.f32 %v3285, %v3604
  %v3756 = vadd.f32 %v3286, %v3607
  %v3757 = vadd.f32 %v3287, %v3610
  %v3758 = vadd.f32 %v3288, %v3613
  %v3759 = vadd.f32 %v3289, %v3616
  %v3760 = vadd.f32 %v3290, %v3619
  %v3761 = vadd.f32 %v3291, %v3622
  %v3762 = vadd.f32 %v3292, %v3625
  %v3763 = vadd.f32 %v3293, %v3628
  %v3764 = vadd.f32 %v3294, %v3631
  %v3765 = vadd.f32 %v3295, %v3634
  %v3766 = vadd.f32 %v3296, %v3637
  %v3767 = vadd.f32 %v3297, %v3640
  %v3768 = vadd.f32 %v3298, %v3643
  %v3769 = vadd.f32 %v3299, %v3646
  %v3770 = vadd.f32 %v3300, %v3649
  %v3771 = vadd.f32 %v3301, %v3652
  %v3772 = vadd.f32 %v3302, %v3655
  %v3773 = vadd.f32 %v3303, %v3658
  %v3774 = vadd.f32 %v3304, %v3661
  %v3775 = vadd.f32 %v3305, %v3664
  %v3776 = vadd.f32 %v3306, %v3667
  %v3777 = vadd.f32 %v3307, %v3670
  %v3778 = vadd.f32 %v3308, %v3673
  %v3779 = vadd.f32 %v3309, %v3676
  %v3780 = vadd.f32 %v3310, %v3679
  %v3781 = vadd.f32 %v3311, %v3682
  %v3782 = vadd.f32 %v3312, %v3685
  %v3783 = vadd.f32 %v3313, %v3688
  %v3784 = vadd.f32 %v3314, %v3691
  %v3785 = vadd.f32 %v3315, %v3694
  %v3786 = vadd.f32 %v3316, %v3697
  %v3787 = vadd.f32 %v3317, %v3700
  %v3788 = vadd.f32 %v3318, %v3703
  %v3789 = vadd.f32 %v3319, %v3706
  %v3790 = vadd.f32 %v3320, %v3709
  %v3791 = vadd.f32 %v3321, %v3712
  %v3792 = vadd.f32 %v3322, %v3715
  %v3793 = vadd.f32 %v3323, %v3718
  %v3794 = vadd.f32 %v3324, %v3721
  %v3795 = vadd.f32 %v3325, %v3724
  %v3796 = vadd.f32 %v3326, %v3727
  %v3797 = vadd.f32 %v3327, %v3730
  %v3798 = vadd.f32 %v3328, %v3733
  %3799 = vst [vmem:[#allocation2] sm:$0xff] %v3735
  %3800 = vst [vmem:[#allocation2 + $0x8] sm:$0xff] %v3736
  %3801 = vst [vmem:[#allocation2 + $0x10] sm:$0xff] %v3737
  %3802 = vst [vmem:[#allocation2 + $0x18] sm:$0xff] %v3738
  %3803 = vst [vmem:[#allocation2 + $0x20] sm:$0xff] %v3739
  %3804 = vst [vmem:[#allocation2 + $0x28] sm:$0xff] %v3740
  %3805 = vst [vmem:[#allocation2 + $0x30] sm:$0xff] %v3741
  %3806 = vst [vmem:[#allocation2 + $0x38] sm:$0xff] %v3742
  %3807 = vst [vmem:[#allocation2 + $0x40] sm:$0xff] %v3743
  %3808 = vst [vmem:[#allocation2 + $0x48] sm:$0xff] %v3744
  %3809 = vst [vmem:[#allocation2 + $0x50] sm:$0xff] %v3745
  %3810 = vst [vmem:[#allocation2 + $0x58] sm:$0xff] %v3746
  %3811 = vst [vmem:[#allocation2 + $0x60] sm:$0xff] %v3747
  %3812 = vst [vmem:[#allocation2 + $0x68] sm:$0xff] %v3748
  %3813 = vst [vmem:[#allocation2 + $0x70] sm:$0xff] %v3749
  %3814 = vst [vmem:[#allocation2 + $0x78] sm:$0xff] %v3750
  %3815 = vst [vmem:[#allocation2 + $0x80] sm:$0xff] %v3751
  %3816 = vst [vmem:[#allocation2 + $0x88] sm:$0xff] %v3752
  %3817 = vst [vmem:[#allocation2 + $0x90] sm:$0xff] %v3753
  %3818 = vst [vmem:[#allocation2 + $0x98] sm:$0xff] %v3754
  %3819 = vst [vmem:[#allocation2 + $0xa0] sm:$0xff] %v3755
  %3820 = vst [vmem:[#allocation2 + $0xa8] sm:$0xff] %v3756
  %3821 = vst [vmem:[#allocation2 + $0xb0] sm:$0xff] %v3757
  %3822 = vst [vmem:[#allocation2 + $0xb8] sm:$0xff] %v3758
  %3823 = vst [vmem:[#allocation2 + $0xc0] sm:$0xff] %v3759
  %3824 = vst [vmem:[#allocation2 + $0xc8] sm:$0xff] %v3760
  %3825 = vst [vmem:[#allocation2 + $0xd0] sm:$0xff] %v3761
  %3826 = vst [vmem:[#allocation2 + $0xd8] sm:$0xff] %v3762
  %3827 = vst [vmem:[#allocation2 + $0xe0] sm:$0xff] %v3763
  %3828 = vst [vmem:[#allocation2 + $0xe8] sm:$0xff] %v3764
  %3829 = vst [vmem:[#allocation2 + $0xf0] sm:$0xff] %v3765
  %3830 = vst [vmem:[#allocation2 + $0xf8] sm:$0xff] %v3766
  %3831 = vst [vmem:[#allocation2 + $0x100] sm:$0xff] %v3767
  %3832 = vst [vmem:[#allocation2 + $0x108] sm:$0xff] %v3768
  %3833 = vst [vmem:[#allocation2 + $0x110] sm:$0xff] %v3769
  %3834 = vst [vmem:[#allocation2 + $0x118] sm:$0xff] %v3770
  %3835 = vst [vmem:[#allocation2 + $0x120] sm:$0xff] %v3771
  %3836 = vst [vmem:[#allocation2 + $0x128] sm:$0xff] %v3772
  %3837 = vst [vmem:[#allocation2 + $0x130] sm:$0xff] %v3773
  %3838 = vst [vmem:[#allocation2 + $0x138] sm:$0xff] %v3774
  %3839 = vst [vmem:[#allocation2 + $0x140] sm:$0xff] %v3775
  %3840 = vst [vmem:[#allocation2 + $0x148] sm:$0xff] %v3776
  %3841 = vst [vmem:[#allocation2 + $0x150] sm:$0xff] %v3777
  %3842 = vst [vmem:[#allocation2 + $0x158] sm:$0xff] %v3778
  %3843 = vst [vmem:[#allocation2 + $0x160] sm:$0xff] %v3779
  %3844 = vst [vmem:[#allocation2 + $0x168] sm:$0xff] %v3780
  %3845 = vst [vmem:[#allocation2 + $0x170] sm:$0xff] %v3781
  %3846 = vst [vmem:[#allocation2 + $0x178] sm:$0xff] %v3782
  %3847 = vst [vmem:[#allocation2 + $0x180] sm:$0xff] %v3783
  %3848 = vst [vmem:[#allocation2 + $0x188] sm:$0xff] %v3784
  %3849 = vst [vmem:[#allocation2 + $0x190] sm:$0xff] %v3785
  %3850 = vst [vmem:[#allocation2 + $0x198] sm:$0xff] %v3786
  %3851 = vst [vmem:[#allocation2 + $0x1a0] sm:$0xff] %v3787
  %3852 = vst [vmem:[#allocation2 + $0x1a8] sm:$0xff] %v3788
  %3853 = vst [vmem:[#allocation2 + $0x1b0] sm:$0xff] %v3789
  %3854 = vst [vmem:[#allocation2 + $0x1b8] sm:$0xff] %v3790
  %3855 = vst [vmem:[#allocation2 + $0x1c0] sm:$0xff] %v3791
  %3856 = vst [vmem:[#allocation2 + $0x1c8] sm:$0xff] %v3792
  %3857 = vst [vmem:[#allocation2 + $0x1d0] sm:$0xff] %v3793
  %3858 = vst [vmem:[#allocation2 + $0x1d8] sm:$0xff] %v3794
  %3859 = vst [vmem:[#allocation2 + $0x1e0] sm:$0xff] %v3795
  %3860 = vst [vmem:[#allocation2 + $0x1e8] sm:$0xff] %v3796
  %3861 = vst [vmem:[#allocation2 + $0x1f0] sm:$0xff] %v3797
  %3862 = vst [vmem:[#allocation2 + $0x1f8] sm:$0xff] %v3798
  %s3863 = scalar_lea.vmem %s0, 96
  %v3864 = vld [vmem:[%s3863] sm:$0xff]
  %v3865 = vld [vmem:[%s3863 + $0x8] sm:$0xff]
  %v3866 = vld [vmem:[%s3863 + $0x10] sm:$0xff]
  %v3867 = vld [vmem:[%s3863 + $0x18] sm:$0xff]
  %v3868 = vld [vmem:[%s3863 + $0x20] sm:$0xff]
  %v3869 = vld [vmem:[%s3863 + $0x28] sm:$0xff]
  %v3870 = vld [vmem:[%s3863 + $0x30] sm:$0xff]
  %v3871 = vld [vmem:[%s3863 + $0x38] sm:$0xff]
  %v3872 = vld [vmem:[%s3863 + $0x40] sm:$0xff]
  %v3873 = vld [vmem:[%s3863 + $0x48] sm:$0xff]
  %v3874 = vld [vmem:[%s3863 + $0x50] sm:$0xff]
  %v3875 = vld [vmem:[%s3863 + $0x58] sm:$0xff]
  %v3876 = vld [vmem:[%s3863 + $0x60] sm:$0xff]
  %v3877 = vld [vmem:[%s3863 + $0x68] sm:$0xff]
  %v3878 = vld [vmem:[%s3863 + $0x70] sm:$0xff]
  %v3879 = vld [vmem:[%s3863 + $0x78] sm:$0xff]
  %v3880 = vld [vmem:[%s3863 + $0x80] sm:$0xff]
  %v3881 = vld [vmem:[%s3863 + $0x88] sm:$0xff]
  %v3882 = vld [vmem:[%s3863 + $0x90] sm:$0xff]
  %v3883 = vld [vmem:[%s3863 + $0x98] sm:$0xff]
  %v3884 = vld [vmem:[%s3863 + $0xa0] sm:$0xff]
  %v3885 = vld [vmem:[%s3863 + $0xa8] sm:$0xff]
  %v3886 = vld [vmem:[%s3863 + $0xb0] sm:$0xff]
  %v3887 = vld [vmem:[%s3863 + $0xb8] sm:$0xff]
  %v3888 = vld [vmem:[%s3863 + $0xc0] sm:$0xff]
  %v3889 = vld [vmem:[%s3863 + $0xc8] sm:$0xff]
  %v3890 = vld [vmem:[%s3863 + $0xd0] sm:$0xff]
  %v3891 = vld [vmem:[%s3863 + $0xd8] sm:$0xff]
  %v3892 = vld [vmem:[%s3863 + $0xe0] sm:$0xff]
  %v3893 = vld [vmem:[%s3863 + $0xe8] sm:$0xff]
  %v3894 = vld [vmem:[%s3863 + $0xf0] sm:$0xff]
  %v3895 = vld [vmem:[%s3863 + $0xf8] sm:$0xff]
  %v3896 = vld [vmem:[%s3863 + $0x180] sm:$0xff]
  %v3897 = vld [vmem:[%s3863 + $0x188] sm:$0xff]
  %v3898 = vld [vmem:[%s3863 + $0x190] sm:$0xff]
  %v3899 = vld [vmem:[%s3863 + $0x198] sm:$0xff]
  %v3900 = vld [vmem:[%s3863 + $0x1a0] sm:$0xff]
  %v3901 = vld [vmem:[%s3863 + $0x1a8] sm:$0xff]
  %v3902 = vld [vmem:[%s3863 + $0x1b0] sm:$0xff]
  %v3903 = vld [vmem:[%s3863 + $0x1b8] sm:$0xff]
  %v3904 = vld [vmem:[%s3863 + $0x1c0] sm:$0xff]
  %v3905 = vld [vmem:[%s3863 + $0x1c8] sm:$0xff]
  %v3906 = vld [vmem:[%s3863 + $0x1d0] sm:$0xff]
  %v3907 = vld [vmem:[%s3863 + $0x1d8] sm:$0xff]
  %v3908 = vld [vmem:[%s3863 + $0x1e0] sm:$0xff]
  %v3909 = vld [vmem:[%s3863 + $0x1e8] sm:$0xff]
  %v3910 = vld [vmem:[%s3863 + $0x1f0] sm:$0xff]
  %v3911 = vld [vmem:[%s3863 + $0x1f8] sm:$0xff]
  %v3912 = vld [vmem:[%s3863 + $0x200] sm:$0xff]
  %v3913 = vld [vmem:[%s3863 + $0x208] sm:$0xff]
  %v3914 = vld [vmem:[%s3863 + $0x210] sm:$0xff]
  %v3915 = vld [vmem:[%s3863 + $0x218] sm:$0xff]
  %v3916 = vld [vmem:[%s3863 + $0x220] sm:$0xff]
  %v3917 = vld [vmem:[%s3863 + $0x228] sm:$0xff]
  %v3918 = vld [vmem:[%s3863 + $0x230] sm:$0xff]
  %v3919 = vld [vmem:[%s3863 + $0x238] sm:$0xff]
  %v3920 = vld [vmem:[%s3863 + $0x240] sm:$0xff]
  %v3921 = vld [vmem:[%s3863 + $0x248] sm:$0xff]
  %v3922 = vld [vmem:[%s3863 + $0x250] sm:$0xff]
  %v3923 = vld [vmem:[%s3863 + $0x258] sm:$0xff]
  %v3924 = vld [vmem:[%s3863 + $0x260] sm:$0xff]
  %v3925 = vld [vmem:[%s3863 + $0x268] sm:$0xff]
  %v3926 = vld [vmem:[%s3863 + $0x270] sm:$0xff]
  %v3927 = vld [vmem:[%s3863 + $0x278] sm:$0xff]
  %v3928 = vld [vmem:[#allocation2] sm:$0xff]
  %v3929 = vld [vmem:[#allocation2 + $0x8] sm:$0xff]
  %v3930 = vld [vmem:[#allocation2 + $0x10] sm:$0xff]
  %v3931 = vld [vmem:[#allocation2 + $0x18] sm:$0xff]
  %v3932 = vld [vmem:[#allocation2 + $0x20] sm:$0xff]
  %v3933 = vld [vmem:[#allocation2 + $0x28] sm:$0xff]
  %v3934 = vld [vmem:[#allocation2 + $0x30] sm:$0xff]
  %v3935 = vld [vmem:[#allocation2 + $0x38] sm:$0xff]
  %v3936 = vld [vmem:[#allocation2 + $0x40] sm:$0xff]
  %v3937 = vld [vmem:[#allocation2 + $0x48] sm:$0xff]
  %v3938 = vld [vmem:[#allocation2 + $0x50] sm:$0xff]
  %v3939 = vld [vmem:[#allocation2 + $0x58] sm:$0xff]
  %v3940 = vld [vmem:[#allocation2 + $0x60] sm:$0xff]
  %v3941 = vld [vmem:[#allocation2 + $0x68] sm:$0xff]
  %v3942 = vld [vmem:[#allocation2 + $0x70] sm:$0xff]
  %v3943 = vld [vmem:[#allocation2 + $0x78] sm:$0xff]
  %v3944 = vld [vmem:[#allocation2 + $0x80] sm:$0xff]
  %v3945 = vld [vmem:[#allocation2 + $0x88] sm:$0xff]
  %v3946 = vld [vmem:[#allocation2 + $0x90] sm:$0xff]
  %v3947 = vld [vmem:[#allocation2 + $0x98] sm:$0xff]
  %v3948 = vld [vmem:[#allocation2 + $0xa0] sm:$0xff]
  %v3949 = vld [vmem:[#allocation2 + $0xa8] sm:$0xff]
  %v3950 = vld [vmem:[#allocation2 + $0xb0] sm:$0xff]
  %v3951 = vld [vmem:[#allocation2 + $0xb8] sm:$0xff]
  %v3952 = vld [vmem:[#allocation2 + $0xc0] sm:$0xff]
  %v3953 = vld [vmem:[#allocation2 + $0xc8] sm:$0xff]
  %v3954 = vld [vmem:[#allocation2 + $0xd0] sm:$0xff]
  %v3955 = vld [vmem:[#allocation2 + $0xd8] sm:$0xff]
  %v3956 = vld [vmem:[#allocation2 + $0xe0] sm:$0xff]
  %v3957 = vld [vmem:[#allocation2 + $0xe8] sm:$0xff]
  %v3958 = vld [vmem:[#allocation2 + $0xf0] sm:$0xff]
  %v3959 = vld [vmem:[#allocation2 + $0xf8] sm:$0xff]
  %v3960 = vld [vmem:[#allocation2 + $0x100] sm:$0xff]
  %v3961 = vld [vmem:[#allocation2 + $0x108] sm:$0xff]
  %v3962 = vld [vmem:[#allocation2 + $0x110] sm:$0xff]
  %v3963 = vld [vmem:[#allocation2 + $0x118] sm:$0xff]
  %v3964 = vld [vmem:[#allocation2 + $0x120] sm:$0xff]
  %v3965 = vld [vmem:[#allocation2 + $0x128] sm:$0xff]
  %v3966 = vld [vmem:[#allocation2 + $0x130] sm:$0xff]
  %v3967 = vld [vmem:[#allocation2 + $0x138] sm:$0xff]
  %v3968 = vld [vmem:[#allocation2 + $0x140] sm:$0xff]
  %v3969 = vld [vmem:[#allocation2 + $0x148] sm:$0xff]
  %v3970 = vld [vmem:[#allocation2 + $0x150] sm:$0xff]
  %v3971 = vld [vmem:[#allocation2 + $0x158] sm:$0xff]
  %v3972 = vld [vmem:[#allocation2 + $0x160] sm:$0xff]
  %v3973 = vld [vmem:[#allocation2 + $0x168] sm:$0xff]
  %v3974 = vld [vmem:[#allocation2 + $0x170] sm:$0xff]
  %v3975 = vld [vmem:[#allocation2 + $0x178] sm:$0xff]
  %v3976 = vld [vmem:[#allocation2 + $0x180] sm:$0xff]
  %v3977 = vld [vmem:[#allocation2 + $0x188] sm:$0xff]
  %v3978 = vld [vmem:[#allocation2 + $0x190] sm:$0xff]
  %v3979 = vld [vmem:[#allocation2 + $0x198] sm:$0xff]
  %v3980 = vld [vmem:[#allocation2 + $0x1a0] sm:$0xff]
  %v3981 = vld [vmem:[#allocation2 + $0x1a8] sm:$0xff]
  %v3982 = vld [vmem:[#allocation2 + $0x1b0] sm:$0xff]
  %v3983 = vld [vmem:[#allocation2 + $0x1b8] sm:$0xff]
  %v3984 = vld [vmem:[#allocation2 + $0x1c0] sm:$0xff]
  %v3985 = vld [vmem:[#allocation2 + $0x1c8] sm:$0xff]
  %v3986 = vld [vmem:[#allocation2 + $0x1d0] sm:$0xff]
  %v3987 = vld [vmem:[#allocation2 + $0x1d8] sm:$0xff]
  %v3988 = vld [vmem:[#allocation2 + $0x1e0] sm:$0xff]
  %v3989 = vld [vmem:[#allocation2 + $0x1e8] sm:$0xff]
  %v3990 = vld [vmem:[#allocation2 + $0x1f0] sm:$0xff]
  %v3991 = vld [vmem:[#allocation2 + $0x1f8] sm:$0xff]
  %s3992 = scalar_lea.vmem %s1, 24
  %v3993 = vld [vmem:[%s3992] sm:$0xf]
  %v3995 = vsel %vm78, %v3864, 0
  %v3998 = vsel %vm78, %v3865, 0
  %v4001 = vsel %vm78, %v3866, 0
  %v4004 = vsel %vm78, %v3867, 0
  %v4007 = vsel %vm78, %v3868, 0
  %v4010 = vsel %vm78, %v3869, 0
  %v4013 = vsel %vm78, %v3870, 0
  %v4016 = vsel %vm78, %v3871, 0
  %v4019 = vsel %vm78, %v3872, 0
  %v4022 = vsel %vm78, %v3873, 0
  %v4025 = vsel %vm78, %v3874, 0
  %v4028 = vsel %vm78, %v3875, 0
  %v4031 = vsel %vm78, %v3876, 0
  %v4034 = vsel %vm78, %v3877, 0
  %v4037 = vsel %vm78, %v3878, 0
  %v4040 = vsel %vm78, %v3879, 0
  %v4043 = vsel %vm78, %v3880, 0
  %v4046 = vsel %vm78, %v3881, 0
  %v4049 = vsel %vm78, %v3882, 0
  %v4052 = vsel %vm78, %v3883, 0
  %v4055 = vsel %vm78, %v3884, 0
  %v4058 = vsel %vm78, %v3885, 0
  %v4061 = vsel %vm78, %v3886, 0
  %v4064 = vsel %vm78, %v3887, 0
  %v4067 = vsel %vm78, %v3888, 0
  %v4070 = vsel %vm78, %v3889, 0
  %v4073 = vsel %vm78, %v3890, 0
  %v4076 = vsel %vm78, %v3891, 0
  %v4079 = vsel %vm78, %v3892, 0
  %v4082 = vsel %vm78, %v3893, 0
  %v4085 = vsel %vm78, %v3894, 0
  %v4088 = vsel %vm78, %v3895, 0
  %v4091 = vsel %vm78, %v3896, 0
  %v4094 = vsel %vm78, %v3897, 0
  %v4097 = vsel %vm78, %v3898, 0
  %v4100 = vsel %vm78, %v3899, 0
  %v4103 = vsel %vm78, %v3900, 0
  %v4106 = vsel %vm78, %v3901, 0
  %v4109 = vsel %vm78, %v3902, 0
  %v4112 = vsel %vm78, %v3903, 0
  %v4115 = vsel %vm78, %v3904, 0
  %v4118 = vsel %vm78, %v3905, 0
  %v4121 = vsel %vm78, %v3906, 0
  %v4124 = vsel %vm78, %v3907, 0
  %v4127 = vsel %vm78, %v3908, 0
  %v4130 = vsel %vm78, %v3909, 0
  %v4133 = vsel %vm78, %v3910, 0
  %v4136 = vsel %vm78, %v3911, 0
  %v4139 = vsel %vm78, %v3912, 0
  %v4142 = vsel %vm78, %v3913, 0
  %v4145 = vsel %vm78, %v3914, 0
  %v4148 = vsel %vm78, %v3915, 0
  %v4151 = vsel %vm78, %v3916, 0
  %v4154 = vsel %vm78, %v3917, 0
  %v4157 = vsel %vm78, %v3918, 0
  %v4160 = vsel %vm78, %v3919, 0
  %v4163 = vsel %vm78, %v3920, 0
  %v4166 = vsel %vm78, %v3921, 0
  %v4169 = vsel %vm78, %v3922, 0
  %v4172 = vsel %vm78, %v3923, 0
  %v4175 = vsel %vm78, %v3924, 0
  %v4178 = vsel %vm78, %v3925, 0
  %v4181 = vsel %vm78, %v3926, 0
  %v4184 = vsel %vm78, %v3927, 0
  %v4187 = vsel %vm271, %v3993, 0
  %4189 = vmatpush.msra.mxu0 0.0
  %4190 = vmatpush.msra.mxu0 0.0
  %4191 = vmatpush.msra.mxu0 0.0
  %4192 = vmatpush.msra.mxu0 0.0
  %4193 = vmatpush.msra.mxu0 0.0
  %4194 = vmatpush.msra.mxu0 0.0
  %4195 = vmatpush.msra.mxu0 0.0
  %4196 = vmatpush.msra.mxu0 0.0
  %4197 = vmatpush.msra.mxu0 0.0
  %4198 = vmatpush.msra.mxu0 0.0
  %4199 = vmatpush.msra.mxu0 0.0
  %4200 = vmatpush.msra.mxu0 0.0
  %4201 = vmatpush.msra.mxu0 0.0
  %4202 = vmatpush.msra.mxu0 0.0
  %4203 = vmatpush.msra.mxu0 0.0
  %4204 = vmatpush.msra.mxu0 %v4187
  %4205 = vmatmul.f32.gmra.mxu0 %v3995
  %v4206 = vpop.f32.mrf.mxu0
  %v4207 = vadd.f32 0.0, %v4206
  %4208 = vmatmul.f32.gmra.mxu0 %v3998
  %v4209 = vpop.f32.mrf.mxu0
  %v4210 = vadd.f32 0.0, %v4209
  %4211 = vmatmul.f32.gmra.mxu0 %v4001
  %v4212 = vpop.f32.mrf.mxu0
  %v4213 = vadd.f32 0.0, %v4212
  %4214 = vmatmul.f32.gmra.mxu0 %v4004
  %v4215 = vpop.f32.mrf.mxu0
  %v4216 = vadd.f32 0.0, %v4215
  %4217 = vmatmul.f32.gmra.mxu0 %v4007
  %v4218 = vpop.f32.mrf.mxu0
  %v4219 = vadd.f32 0.0, %v4218
  %4220 = vmatmul.f32.gmra.mxu0 %v4010
  %v4221 = vpop.f32.mrf.mxu0
  %v4222 = vadd.f32 0.0, %v4221
  %4223 = vmatmul.f32.gmra.mxu0 %v4013
  %v4224 = vpop.f32.mrf.mxu0
  %v4225 = vadd.f32 0.0, %v4224
  %4226 = vmatmul.f32.gmra.mxu0 %v4016
  %v4227 = vpop.f32.mrf.mxu0
  %v4228 = vadd.f32 0.0, %v4227
  %4229 = vmatmul.f32.gmra.mxu0 %v4019
  %v4230 = vpop.f32.mrf.mxu0
  %v4231 = vadd.f32 0.0, %v4230
  %4232 = vmatmul.f32.gmra.mxu0 %v4022
  %v4233 = vpop.f32.mrf.mxu0
  %v4234 = vadd.f32 0.0, %v4233
  %4235 = vmatmul.f32.gmra.mxu0 %v4025
  %v4236 = vpop.f32.mrf.mxu0
  %v4237 = vadd.f32 0.0, %v4236
  %4238 = vmatmul.f32.gmra.mxu0 %v4028
  %v4239 = vpop.f32.mrf.mxu0
  %v4240 = vadd.f32 0.0, %v4239
  %4241 = vmatmul.f32.gmra.mxu0 %v4031
  %v4242 = vpop.f32.mrf.mxu0
  %v4243 = vadd.f32 0.0, %v4242
  %4244 = vmatmul.f32.gmra.mxu0 %v4034
  %v4245 = vpop.f32.mrf.mxu0
  %v4246 = vadd.f32 0.0, %v4245
  %4247 = vmatmul.f32.gmra.mxu0 %v4037
  %v4248 = vpop.f32.mrf.mxu0
  %v4249 = vadd.f32 0.0, %v4248
  %4250 = vmatmul.f32.gmra.mxu0 %v4040
  %v4251 = vpop.f32.mrf.mxu0
  %v4252 = vadd.f32 0.0, %v4251
  %4253 = vmatmul.f32.gmra.mxu0 %v4043
  %v4254 = vpop.f32.mrf.mxu0
  %v4255 = vadd.f32 0.0, %v4254
  %4256 = vmatmul.f32.gmra.mxu0 %v4046
  %v4257 = vpop.f32.mrf.mxu0
  %v4258 = vadd.f32 0.0, %v4257
  %4259 = vmatmul.f32.gmra.mxu0 %v4049
  %v4260 = vpop.f32.mrf.mxu0
  %v4261 = vadd.f32 0.0, %v4260
  %4262 = vmatmul.f32.gmra.mxu0 %v4052
  %v4263 = vpop.f32.mrf.mxu0
  %v4264 = vadd.f32 0.0, %v4263
  %4265 = vmatmul.f32.gmra.mxu0 %v4055
  %v4266 = vpop.f32.mrf.mxu0
  %v4267 = vadd.f32 0.0, %v4266
  %4268 = vmatmul.f32.gmra.mxu0 %v4058
  %v4269 = vpop.f32.mrf.mxu0
  %v4270 = vadd.f32 0.0, %v4269
  %4271 = vmatmul.f32.gmra.mxu0 %v4061
  %v4272 = vpop.f32.mrf.mxu0
  %v4273 = vadd.f32 0.0, %v4272
  %4274 = vmatmul.f32.gmra.mxu0 %v4064
  %v4275 = vpop.f32.mrf.mxu0
  %v4276 = vadd.f32 0.0, %v4275
  %4277 = vmatmul.f32.gmra.mxu0 %v4067
  %v4278 = vpop.f32.mrf.mxu0
  %v4279 = vadd.f32 0.0, %v4278
  %4280 = vmatmul.f32.gmra.mxu0 %v4070
  %v4281 = vpop.f32.mrf.mxu0
  %v4282 = vadd.f32 0.0, %v4281
  %4283 = vmatmul.f32.gmra.mxu0 %v4073
  %v4284 = vpop.f32.mrf.mxu0
  %v4285 = vadd.f32 0.0, %v4284
  %4286 = vmatmul.f32.gmra.mxu0 %v4076
  %v4287 = vpop.f32.mrf.mxu0
  %v4288 = vadd.f32 0.0, %v4287
  %4289 = vmatmul.f32.gmra.mxu0 %v4079
  %v4290 = vpop.f32.mrf.mxu0
  %v4291 = vadd.f32 0.0, %v4290
  %4292 = vmatmul.f32.gmra.mxu0 %v4082
  %v4293 = vpop.f32.mrf.mxu0
  %v4294 = vadd.f32 0.0, %v4293
  %4295 = vmatmul.f32.gmra.mxu0 %v4085
  %v4296 = vpop.f32.mrf.mxu0
  %v4297 = vadd.f32 0.0, %v4296
  %4298 = vmatmul.f32.gmra.mxu0 %v4088
  %v4299 = vpop.f32.mrf.mxu0
  %v4300 = vadd.f32 0.0, %v4299
  %4301 = vmatmul.f32.gmra.mxu0 %v4091
  %v4302 = vpop.f32.mrf.mxu0
  %v4303 = vadd.f32 0.0, %v4302
  %4304 = vmatmul.f32.gmra.mxu0 %v4094
  %v4305 = vpop.f32.mrf.mxu0
  %v4306 = vadd.f32 0.0, %v4305
  %4307 = vmatmul.f32.gmra.mxu0 %v4097
  %v4308 = vpop.f32.mrf.mxu0
  %v4309 = vadd.f32 0.0, %v4308
  %4310 = vmatmul.f32.gmra.mxu0 %v4100
  %v4311 = vpop.f32.mrf.mxu0
  %v4312 = vadd.f32 0.0, %v4311
  %4313 = vmatmul.f32.gmra.mxu0 %v4103
  %v4314 = vpop.f32.mrf.mxu0
  %v4315 = vadd.f32 0.0, %v4314
  %4316 = vmatmul.f32.gmra.mxu0 %v4106
  %v4317 = vpop.f32.mrf.mxu0
  %v4318 = vadd.f32 0.0, %v4317
  %4319 = vmatmul.f32.gmra.mxu0 %v4109
  %v4320 = vpop.f32.mrf.mxu0
  %v4321 = vadd.f32 0.0, %v4320
  %4322 = vmatmul.f32.gmra.mxu0 %v4112
  %v4323 = vpop.f32.mrf.mxu0
  %v4324 = vadd.f32 0.0, %v4323
  %4325 = vmatmul.f32.gmra.mxu0 %v4115
  %v4326 = vpop.f32.mrf.mxu0
  %v4327 = vadd.f32 0.0, %v4326
  %4328 = vmatmul.f32.gmra.mxu0 %v4118
  %v4329 = vpop.f32.mrf.mxu0
  %v4330 = vadd.f32 0.0, %v4329
  %4331 = vmatmul.f32.gmra.mxu0 %v4121
  %v4332 = vpop.f32.mrf.mxu0
  %v4333 = vadd.f32 0.0, %v4332
  %4334 = vmatmul.f32.gmra.mxu0 %v4124
  %v4335 = vpop.f32.mrf.mxu0
  %v4336 = vadd.f32 0.0, %v4335
  %4337 = vmatmul.f32.gmra.mxu0 %v4127
  %v4338 = vpop.f32.mrf.mxu0
  %v4339 = vadd.f32 0.0, %v4338
  %4340 = vmatmul.f32.gmra.mxu0 %v4130
  %v4341 = vpop.f32.mrf.mxu0
  %v4342 = vadd.f32 0.0, %v4341
  %4343 = vmatmul.f32.gmra.mxu0 %v4133
  %v4344 = vpop.f32.mrf.mxu0
  %v4345 = vadd.f32 0.0, %v4344
  %4346 = vmatmul.f32.gmra.mxu0 %v4136
  %v4347 = vpop.f32.mrf.mxu0
  %v4348 = vadd.f32 0.0, %v4347
  %4349 = vmatmul.f32.gmra.mxu0 %v4139
  %v4350 = vpop.f32.mrf.mxu0
  %v4351 = vadd.f32 0.0, %v4350
  %4352 = vmatmul.f32.gmra.mxu0 %v4142
  %v4353 = vpop.f32.mrf.mxu0
  %v4354 = vadd.f32 0.0, %v4353
  %4355 = vmatmul.f32.gmra.mxu0 %v4145
  %v4356 = vpop.f32.mrf.mxu0
  %v4357 = vadd.f32 0.0, %v4356
  %4358 = vmatmul.f32.gmra.mxu0 %v4148
  %v4359 = vpop.f32.mrf.mxu0
  %v4360 = vadd.f32 0.0, %v4359
  %4361 = vmatmul.f32.gmra.mxu0 %v4151
  %v4362 = vpop.f32.mrf.mxu0
  %v4363 = vadd.f32 0.0, %v4362
  %4364 = vmatmul.f32.gmra.mxu0 %v4154
  %v4365 = vpop.f32.mrf.mxu0
  %v4366 = vadd.f32 0.0, %v4365
  %4367 = vmatmul.f32.gmra.mxu0 %v4157
  %v4368 = vpop.f32.mrf.mxu0
  %v4369 = vadd.f32 0.0, %v4368
  %4370 = vmatmul.f32.gmra.mxu0 %v4160
  %v4371 = vpop.f32.mrf.mxu0
  %v4372 = vadd.f32 0.0, %v4371
  %4373 = vmatmul.f32.gmra.mxu0 %v4163
  %v4374 = vpop.f32.mrf.mxu0
  %v4375 = vadd.f32 0.0, %v4374
  %4376 = vmatmul.f32.gmra.mxu0 %v4166
  %v4377 = vpop.f32.mrf.mxu0
  %v4378 = vadd.f32 0.0, %v4377
  %4379 = vmatmul.f32.gmra.mxu0 %v4169
  %v4380 = vpop.f32.mrf.mxu0
  %v4381 = vadd.f32 0.0, %v4380
  %4382 = vmatmul.f32.gmra.mxu0 %v4172
  %v4383 = vpop.f32.mrf.mxu0
  %v4384 = vadd.f32 0.0, %v4383
  %4385 = vmatmul.f32.gmra.mxu0 %v4175
  %v4386 = vpop.f32.mrf.mxu0
  %v4387 = vadd.f32 0.0, %v4386
  %4388 = vmatmul.f32.gmra.mxu0 %v4178
  %v4389 = vpop.f32.mrf.mxu0
  %v4390 = vadd.f32 0.0, %v4389
  %4391 = vmatmul.f32.gmra.mxu0 %v4181
  %v4392 = vpop.f32.mrf.mxu0
  %v4393 = vadd.f32 0.0, %v4392
  %4394 = vmatmul.f32.gmra.mxu0 %v4184
  %v4395 = vpop.f32.mrf.mxu0
  %v4396 = vadd.f32 0.0, %v4395
  %4397 = vdwg.mxu0
  %v4398 = vadd.f32 %v3928, %v4207
  %v4399 = vadd.f32 %v3929, %v4210
  %v4400 = vadd.f32 %v3930, %v4213
  %v4401 = vadd.f32 %v3931, %v4216
  %v4402 = vadd.f32 %v3932, %v4219
  %v4403 = vadd.f32 %v3933, %v4222
  %v4404 = vadd.f32 %v3934, %v4225
  %v4405 = vadd.f32 %v3935, %v4228
  %v4406 = vadd.f32 %v3936, %v4231
  %v4407 = vadd.f32 %v3937, %v4234
  %v4408 = vadd.f32 %v3938, %v4237
  %v4409 = vadd.f32 %v3939, %v4240
  %v4410 = vadd.f32 %v3940, %v4243
  %v4411 = vadd.f32 %v3941, %v4246
  %v4412 = vadd.f32 %v3942, %v4249
  %v4413 = vadd.f32 %v3943, %v4252
  %v4414 = vadd.f32 %v3944, %v4255
  %v4415 = vadd.f32 %v3945, %v4258
  %v4416 = vadd.f32 %v3946, %v4261
  %v4417 = vadd.f32 %v3947, %v4264
  %v4418 = vadd.f32 %v3948, %v4267
  %v4419 = vadd.f32 %v3949, %v4270
  %v4420 = vadd.f32 %v3950, %v4273
  %v4421 = vadd.f32 %v3951, %v4276
  %v4422 = vadd.f32 %v3952, %v4279
  %v4423 = vadd.f32 %v3953, %v4282
  %v4424 = vadd.f32 %v3954, %v4285
  %v4425 = vadd.f32 %v3955, %v4288
  %v4426 = vadd.f32 %v3956, %v4291
  %v4427 = vadd.f32 %v3957, %v4294
  %v4428 = vadd.f32 %v3958, %v4297
  %v4429 = vadd.f32 %v3959, %v4300
  %v4430 = vadd.f32 %v3960, %v4303
  %v4431 = vadd.f32 %v3961, %v4306
  %v4432 = vadd.f32 %v3962, %v4309
  %v4433 = vadd.f32 %v3963, %v4312
  %v4434 = vadd.f32 %v3964, %v4315
  %v4435 = vadd.f32 %v3965, %v4318
  %v4436 = vadd.f32 %v3966, %v4321
  %v4437 = vadd.f32 %v3967, %v4324
  %v4438 = vadd.f32 %v3968, %v4327
  %v4439 = vadd.f32 %v3969, %v4330
  %v4440 = vadd.f32 %v3970, %v4333
  %v4441 = vadd.f32 %v3971, %v4336
  %v4442 = vadd.f32 %v3972, %v4339
  %v4443 = vadd.f32 %v3973, %v4342
  %v4444 = vadd.f32 %v3974, %v4345
  %v4445 = vadd.f32 %v3975, %v4348
  %v4446 = vadd.f32 %v3976, %v4351
  %v4447 = vadd.f32 %v3977, %v4354
  %v4448 = vadd.f32 %v3978, %v4357
  %v4449 = vadd.f32 %v3979, %v4360
  %v4450 = vadd.f32 %v3980, %v4363
  %v4451 = vadd.f32 %v3981, %v4366
  %v4452 = vadd.f32 %v3982, %v4369
  %v4453 = vadd.f32 %v3983, %v4372
  %v4454 = vadd.f32 %v3984, %v4375
  %v4455 = vadd.f32 %v3985, %v4378
  %v4456 = vadd.f32 %v3986, %v4381
  %v4457 = vadd.f32 %v3987, %v4384
  %v4458 = vadd.f32 %v3988, %v4387
  %v4459 = vadd.f32 %v3989, %v4390
  %v4460 = vadd.f32 %v3990, %v4393
  %v4461 = vadd.f32 %v3991, %v4396
  %4462 = vst [vmem:[#allocation2] sm:$0xff] %v4398
  %4463 = vst [vmem:[#allocation2 + $0x8] sm:$0xff] %v4399
  %4464 = vst [vmem:[#allocation2 + $0x10] sm:$0xff] %v4400
  %4465 = vst [vmem:[#allocation2 + $0x18] sm:$0xff] %v4401
  %4466 = vst [vmem:[#allocation2 + $0x20] sm:$0xff] %v4402
  %4467 = vst [vmem:[#allocation2 + $0x28] sm:$0xff] %v4403
  %4468 = vst [vmem:[#allocation2 + $0x30] sm:$0xff] %v4404
  %4469 = vst [vmem:[#allocation2 + $0x38] sm:$0xff] %v4405
  %4470 = vst [vmem:[#allocation2 + $0x40] sm:$0xff] %v4406
  %4471 = vst [vmem:[#allocation2 + $0x48] sm:$0xff] %v4407
  %4472 = vst [vmem:[#allocation2 + $0x50] sm:$0xff] %v4408
  %4473 = vst [vmem:[#allocation2 + $0x58] sm:$0xff] %v4409
  %4474 = vst [vmem:[#allocation2 + $0x60] sm:$0xff] %v4410
  %4475 = vst [vmem:[#allocation2 + $0x68] sm:$0xff] %v4411
  %4476 = vst [vmem:[#allocation2 + $0x70] sm:$0xff] %v4412
  %4477 = vst [vmem:[#allocation2 + $0x78] sm:$0xff] %v4413
  %4478 = vst [vmem:[#allocation2 + $0x80] sm:$0xff] %v4414
  %4479 = vst [vmem:[#allocation2 + $0x88] sm:$0xff] %v4415
  %4480 = vst [vmem:[#allocation2 + $0x90] sm:$0xff] %v4416
  %4481 = vst [vmem:[#allocation2 + $0x98] sm:$0xff] %v4417
  %4482 = vst [vmem:[#allocation2 + $0xa0] sm:$0xff] %v4418
  %4483 = vst [vmem:[#allocation2 + $0xa8] sm:$0xff] %v4419
  %4484 = vst [vmem:[#allocation2 + $0xb0] sm:$0xff] %v4420
  %4485 = vst [vmem:[#allocation2 + $0xb8] sm:$0xff] %v4421
  %4486 = vst [vmem:[#allocation2 + $0xc0] sm:$0xff] %v4422
  %4487 = vst [vmem:[#allocation2 + $0xc8] sm:$0xff] %v4423
  %4488 = vst [vmem:[#allocation2 + $0xd0] sm:$0xff] %v4424
  %4489 = vst [vmem:[#allocation2 + $0xd8] sm:$0xff] %v4425
  %4490 = vst [vmem:[#allocation2 + $0xe0] sm:$0xff] %v4426
  %4491 = vst [vmem:[#allocation2 + $0xe8] sm:$0xff] %v4427
  %4492 = vst [vmem:[#allocation2 + $0xf0] sm:$0xff] %v4428
  %4493 = vst [vmem:[#allocation2 + $0xf8] sm:$0xff] %v4429
  %4494 = vst [vmem:[#allocation2 + $0x100] sm:$0xff] %v4430
  %4495 = vst [vmem:[#allocation2 + $0x108] sm:$0xff] %v4431
  %4496 = vst [vmem:[#allocation2 + $0x110] sm:$0xff] %v4432
  %4497 = vst [vmem:[#allocation2 + $0x118] sm:$0xff] %v4433
  %4498 = vst [vmem:[#allocation2 + $0x120] sm:$0xff] %v4434
  %4499 = vst [vmem:[#allocation2 + $0x128] sm:$0xff] %v4435
  %4500 = vst [vmem:[#allocation2 + $0x130] sm:$0xff] %v4436
  %4501 = vst [vmem:[#allocation2 + $0x138] sm:$0xff] %v4437
  %4502 = vst [vmem:[#allocation2 + $0x140] sm:$0xff] %v4438
  %4503 = vst [vmem:[#allocation2 + $0x148] sm:$0xff] %v4439
  %4504 = vst [vmem:[#allocation2 + $0x150] sm:$0xff] %v4440
  %4505 = vst [vmem:[#allocation2 + $0x158] sm:$0xff] %v4441
  %4506 = vst [vmem:[#allocation2 + $0x160] sm:$0xff] %v4442
  %4507 = vst [vmem:[#allocation2 + $0x168] sm:$0xff] %v4443
  %4508 = vst [vmem:[#allocation2 + $0x170] sm:$0xff] %v4444
  %4509 = vst [vmem:[#allocation2 + $0x178] sm:$0xff] %v4445
  %4510 = vst [vmem:[#allocation2 + $0x180] sm:$0xff] %v4446
  %4511 = vst [vmem:[#allocation2 + $0x188] sm:$0xff] %v4447
  %4512 = vst [vmem:[#allocation2 + $0x190] sm:$0xff] %v4448
  %4513 = vst [vmem:[#allocation2 + $0x198] sm:$0xff] %v4449
  %4514 = vst [vmem:[#allocation2 + $0x1a0] sm:$0xff] %v4450
  %4515 = vst [vmem:[#allocation2 + $0x1a8] sm:$0xff] %v4451
  %4516 = vst [vmem:[#allocation2 + $0x1b0] sm:$0xff] %v4452
  %4517 = vst [vmem:[#allocation2 + $0x1b8] sm:$0xff] %v4453
  %4518 = vst [vmem:[#allocation2 + $0x1c0] sm:$0xff] %v4454
  %4519 = vst [vmem:[#allocation2 + $0x1c8] sm:$0xff] %v4455
  %4520 = vst [vmem:[#allocation2 + $0x1d0] sm:$0xff] %v4456
  %4521 = vst [vmem:[#allocation2 + $0x1d8] sm:$0xff] %v4457
  %4522 = vst [vmem:[#allocation2 + $0x1e0] sm:$0xff] %v4458
  %4523 = vst [vmem:[#allocation2 + $0x1e8] sm:$0xff] %v4459
  %4524 = vst [vmem:[#allocation2 + $0x1f0] sm:$0xff] %v4460
  %4525 = vst [vmem:[#allocation2 + $0x1f8] sm:$0xff] %v4461
  %s4526 = scalar_lea.vmem %s0, 112
  %v4527 = vld [vmem:[%s4526] sm:$0xff]
  %v4528 = vld [vmem:[%s4526 + $0x8] sm:$0xff]
  %v4529 = vld [vmem:[%s4526 + $0x10] sm:$0xff]
  %v4530 = vld [vmem:[%s4526 + $0x18] sm:$0xff]
  %v4531 = vld [vmem:[%s4526 + $0x20] sm:$0xff]
  %v4532 = vld [vmem:[%s4526 + $0x28] sm:$0xff]
  %v4533 = vld [vmem:[%s4526 + $0x30] sm:$0xff]
  %v4534 = vld [vmem:[%s4526 + $0x38] sm:$0xff]
  %v4535 = vld [vmem:[%s4526 + $0x40] sm:$0xff]
  %v4536 = vld [vmem:[%s4526 + $0x48] sm:$0xff]
  %v4537 = vld [vmem:[%s4526 + $0x50] sm:$0xff]
  %v4538 = vld [vmem:[%s4526 + $0x58] sm:$0xff]
  %v4539 = vld [vmem:[%s4526 + $0x60] sm:$0xff]
  %v4540 = vld [vmem:[%s4526 + $0x68] sm:$0xff]
  %v4541 = vld [vmem:[%s4526 + $0x70] sm:$0xff]
  %v4542 = vld [vmem:[%s4526 + $0x78] sm:$0xff]
  %v4543 = vld [vmem:[%s4526 + $0x80] sm:$0xff]
  %v4544 = vld [vmem:[%s4526 + $0x88] sm:$0xff]
  %v4545 = vld [vmem:[%s4526 + $0x90] sm:$0xff]
  %v4546 = vld [vmem:[%s4526 + $0x98] sm:$0xff]
  %v4547 = vld [vmem:[%s4526 + $0xa0] sm:$0xff]
  %v4548 = vld [vmem:[%s4526 + $0xa8] sm:$0xff]
  %v4549 = vld [vmem:[%s4526 + $0xb0] sm:$0xff]
  %v4550 = vld [vmem:[%s4526 + $0xb8] sm:$0xff]
  %v4551 = vld [vmem:[%s4526 + $0xc0] sm:$0xff]
  %v4552 = vld [vmem:[%s4526 + $0xc8] sm:$0xff]
  %v4553 = vld [vmem:[%s4526 + $0xd0] sm:$0xff]
  %v4554 = vld [vmem:[%s4526 + $0xd8] sm:$0xff]
  %v4555 = vld [vmem:[%s4526 + $0xe0] sm:$0xff]
  %v4556 = vld [vmem:[%s4526 + $0xe8] sm:$0xff]
  %v4557 = vld [vmem:[%s4526 + $0xf0] sm:$0xff]
  %v4558 = vld [vmem:[%s4526 + $0xf8] sm:$0xff]
  %v4559 = vld [vmem:[%s4526 + $0x180] sm:$0xff]
  %v4560 = vld [vmem:[%s4526 + $0x188] sm:$0xff]
  %v4561 = vld [vmem:[%s4526 + $0x190] sm:$0xff]
  %v4562 = vld [vmem:[%s4526 + $0x198] sm:$0xff]
  %v4563 = vld [vmem:[%s4526 + $0x1a0] sm:$0xff]
  %v4564 = vld [vmem:[%s4526 + $0x1a8] sm:$0xff]
  %v4565 = vld [vmem:[%s4526 + $0x1b0] sm:$0xff]
  %v4566 = vld [vmem:[%s4526 + $0x1b8] sm:$0xff]
  %v4567 = vld [vmem:[%s4526 + $0x1c0] sm:$0xff]
  %v4568 = vld [vmem:[%s4526 + $0x1c8] sm:$0xff]
  %v4569 = vld [vmem:[%s4526 + $0x1d0] sm:$0xff]
  %v4570 = vld [vmem:[%s4526 + $0x1d8] sm:$0xff]
  %v4571 = vld [vmem:[%s4526 + $0x1e0] sm:$0xff]
  %v4572 = vld [vmem:[%s4526 + $0x1e8] sm:$0xff]
  %v4573 = vld [vmem:[%s4526 + $0x1f0] sm:$0xff]
  %v4574 = vld [vmem:[%s4526 + $0x1f8] sm:$0xff]
  %v4575 = vld [vmem:[%s4526 + $0x200] sm:$0xff]
  %v4576 = vld [vmem:[%s4526 + $0x208] sm:$0xff]
  %v4577 = vld [vmem:[%s4526 + $0x210] sm:$0xff]
  %v4578 = vld [vmem:[%s4526 + $0x218] sm:$0xff]
  %v4579 = vld [vmem:[%s4526 + $0x220] sm:$0xff]
  %v4580 = vld [vmem:[%s4526 + $0x228] sm:$0xff]
  %v4581 = vld [vmem:[%s4526 + $0x230] sm:$0xff]
  %v4582 = vld [vmem:[%s4526 + $0x238] sm:$0xff]
  %v4583 = vld [vmem:[%s4526 + $0x240] sm:$0xff]
  %v4584 = vld [vmem:[%s4526 + $0x248] sm:$0xff]
  %v4585 = vld [vmem:[%s4526 + $0x250] sm:$0xff]
  %v4586 = vld [vmem:[%s4526 + $0x258] sm:$0xff]
  %v4587 = vld [vmem:[%s4526 + $0x260] sm:$0xff]
  %v4588 = vld [vmem:[%s4526 + $0x268] sm:$0xff]
  %v4589 = vld [vmem:[%s4526 + $0x270] sm:$0xff]
  %v4590 = vld [vmem:[%s4526 + $0x278] sm:$0xff]
  %v4591 = vld [vmem:[#allocation2] sm:$0xff]
  %v4592 = vld [vmem:[#allocation2 + $0x8] sm:$0xff]
  %v4593 = vld [vmem:[#allocation2 + $0x10] sm:$0xff]
  %v4594 = vld [vmem:[#allocation2 + $0x18] sm:$0xff]
  %v4595 = vld [vmem:[#allocation2 + $0x20] sm:$0xff]
  %v4596 = vld [vmem:[#allocation2 + $0x28] sm:$0xff]
  %v4597 = vld [vmem:[#allocation2 + $0x30] sm:$0xff]
  %v4598 = vld [vmem:[#allocation2 + $0x38] sm:$0xff]
  %v4599 = vld [vmem:[#allocation2 + $0x40] sm:$0xff]
  %v4600 = vld [vmem:[#allocation2 + $0x48] sm:$0xff]
  %v4601 = vld [vmem:[#allocation2 + $0x50] sm:$0xff]
  %v4602 = vld [vmem:[#allocation2 + $0x58] sm:$0xff]
  %v4603 = vld [vmem:[#allocation2 + $0x60] sm:$0xff]
  %v4604 = vld [vmem:[#allocation2 + $0x68] sm:$0xff]
  %v4605 = vld [vmem:[#allocation2 + $0x70] sm:$0xff]
  %v4606 = vld [vmem:[#allocation2 + $0x78] sm:$0xff]
  %v4607 = vld [vmem:[#allocation2 + $0x80] sm:$0xff]
  %v4608 = vld [vmem:[#allocation2 + $0x88] sm:$0xff]
  %v4609 = vld [vmem:[#allocation2 + $0x90] sm:$0xff]
  %v4610 = vld [vmem:[#allocation2 + $0x98] sm:$0xff]
  %v4611 = vld [vmem:[#allocation2 + $0xa0] sm:$0xff]
  %v4612 = vld [vmem:[#allocation2 + $0xa8] sm:$0xff]
  %v4613 = vld [vmem:[#allocation2 + $0xb0] sm:$0xff]
  %v4614 = vld [vmem:[#allocation2 + $0xb8] sm:$0xff]
  %v4615 = vld [vmem:[#allocation2 + $0xc0] sm:$0xff]
  %v4616 = vld [vmem:[#allocation2 + $0xc8] sm:$0xff]
  %v4617 = vld [vmem:[#allocation2 + $0xd0] sm:$0xff]
  %v4618 = vld [vmem:[#allocation2 + $0xd8] sm:$0xff]
  %v4619 = vld [vmem:[#allocation2 + $0xe0] sm:$0xff]
  %v4620 = vld [vmem:[#allocation2 + $0xe8] sm:$0xff]
  %v4621 = vld [vmem:[#allocation2 + $0xf0] sm:$0xff]
  %v4622 = vld [vmem:[#allocation2 + $0xf8] sm:$0xff]
  %v4623 = vld [vmem:[#allocation2 + $0x100] sm:$0xff]
  %v4624 = vld [vmem:[#allocation2 + $0x108] sm:$0xff]
  %v4625 = vld [vmem:[#allocation2 + $0x110] sm:$0xff]
  %v4626 = vld [vmem:[#allocation2 + $0x118] sm:$0xff]
  %v4627 = vld [vmem:[#allocation2 + $0x120] sm:$0xff]
  %v4628 = vld [vmem:[#allocation2 + $0x128] sm:$0xff]
  %v4629 = vld [vmem:[#allocation2 + $0x130] sm:$0xff]
  %v4630 = vld [vmem:[#allocation2 + $0x138] sm:$0xff]
  %v4631 = vld [vmem:[#allocation2 + $0x140] sm:$0xff]
  %v4632 = vld [vmem:[#allocation2 + $0x148] sm:$0xff]
  %v4633 = vld [vmem:[#allocation2 + $0x150] sm:$0xff]
  %v4634 = vld [vmem:[#allocation2 + $0x158] sm:$0xff]
  %v4635 = vld [vmem:[#allocation2 + $0x160] sm:$0xff]
  %v4636 = vld [vmem:[#allocation2 + $0x168] sm:$0xff]
  %v4637 = vld [vmem:[#allocation2 + $0x170] sm:$0xff]
  %v4638 = vld [vmem:[#allocation2 + $0x178] sm:$0xff]
  %v4639 = vld [vmem:[#allocation2 + $0x180] sm:$0xff]
  %v4640 = vld [vmem:[#allocation2 + $0x188] sm:$0xff]
  %v4641 = vld [vmem:[#allocation2 + $0x190] sm:$0xff]
  %v4642 = vld [vmem:[#allocation2 + $0x198] sm:$0xff]
  %v4643 = vld [vmem:[#allocation2 + $0x1a0] sm:$0xff]
  %v4644 = vld [vmem:[#allocation2 + $0x1a8] sm:$0xff]
  %v4645 = vld [vmem:[#allocation2 + $0x1b0] sm:$0xff]
  %v4646 = vld [vmem:[#allocation2 + $0x1b8] sm:$0xff]
  %v4647 = vld [vmem:[#allocation2 + $0x1c0] sm:$0xff]
  %v4648 = vld [vmem:[#allocation2 + $0x1c8] sm:$0xff]
  %v4649 = vld [vmem:[#allocation2 + $0x1d0] sm:$0xff]
  %v4650 = vld [vmem:[#allocation2 + $0x1d8] sm:$0xff]
  %v4651 = vld [vmem:[#allocation2 + $0x1e0] sm:$0xff]
  %v4652 = vld [vmem:[#allocation2 + $0x1e8] sm:$0xff]
  %v4653 = vld [vmem:[#allocation2 + $0x1f0] sm:$0xff]
  %v4654 = vld [vmem:[#allocation2 + $0x1f8] sm:$0xff]
  %s4655 = scalar_lea.vmem %s1, 28
  %v4656 = vld [vmem:[%s4655] sm:$0xf]
  %v4658 = vsel %vm78, %v4527, 0
  %v4661 = vsel %vm78, %v4528, 0
  %v4664 = vsel %vm78, %v4529, 0
  %v4667 = vsel %vm78, %v4530, 0
  %v4670 = vsel %vm78, %v4531, 0
  %v4673 = vsel %vm78, %v4532, 0
  %v4676 = vsel %vm78, %v4533, 0
  %v4679 = vsel %vm78, %v4534, 0
  %v4682 = vsel %vm78, %v4535, 0
  %v4685 = vsel %vm78, %v4536, 0
  %v4688 = vsel %vm78, %v4537, 0
  %v4691 = vsel %vm78, %v4538, 0
  %v4694 = vsel %vm78, %v4539, 0
  %v4697 = vsel %vm78, %v4540, 0
  %v4700 = vsel %vm78, %v4541, 0
  %v4703 = vsel %vm78, %v4542, 0
  %v4706 = vsel %vm78, %v4543, 0
  %v4709 = vsel %vm78, %v4544, 0
  %v4712 = vsel %vm78, %v4545, 0
  %v4715 = vsel %vm78, %v4546, 0
  %v4718 = vsel %vm78, %v4547, 0
  %v4721 = vsel %vm78, %v4548, 0
  %v4724 = vsel %vm78, %v4549, 0
  %v4727 = vsel %vm78, %v4550, 0
  %v4730 = vsel %vm78, %v4551, 0
  %v4733 = vsel %vm78, %v4552, 0
  %v4736 = vsel %vm78, %v4553, 0
  %v4739 = vsel %vm78, %v4554, 0
  %v4742 = vsel %vm78, %v4555, 0
  %v4745 = vsel %vm78, %v4556, 0
  %v4748 = vsel %vm78, %v4557, 0
  %v4751 = vsel %vm78, %v4558, 0
  %v4754 = vsel %vm78, %v4559, 0
  %v4757 = vsel %vm78, %v4560, 0
  %v4760 = vsel %vm78, %v4561, 0
  %v4763 = vsel %vm78, %v4562, 0
  %v4766 = vsel %vm78, %v4563, 0
  %v4769 = vsel %vm78, %v4564, 0
  %v4772 = vsel %vm78, %v4565, 0
  %v4775 = vsel %vm78, %v4566, 0
  %v4778 = vsel %vm78, %v4567, 0
  %v4781 = vsel %vm78, %v4568, 0
  %v4784 = vsel %vm78, %v4569, 0
  %v4787 = vsel %vm78, %v4570, 0
  %v4790 = vsel %vm78, %v4571, 0
  %v4793 = vsel %vm78, %v4572, 0
  %v4796 = vsel %vm78, %v4573, 0
  %v4799 = vsel %vm78, %v4574, 0
  %v4802 = vsel %vm78, %v4575, 0
  %v4805 = vsel %vm78, %v4576, 0
  %v4808 = vsel %vm78, %v4577, 0
  %v4811 = vsel %vm78, %v4578, 0
  %v4814 = vsel %vm78, %v4579, 0
  %v4817 = vsel %vm78, %v4580, 0
  %v4820 = vsel %vm78, %v4581, 0
  %v4823 = vsel %vm78, %v4582, 0
  %v4826 = vsel %vm78, %v4583, 0
  %v4829 = vsel %vm78, %v4584, 0
  %v4832 = vsel %vm78, %v4585, 0
  %v4835 = vsel %vm78, %v4586, 0
  %v4838 = vsel %vm78, %v4587, 0
  %v4841 = vsel %vm78, %v4588, 0
  %v4844 = vsel %vm78, %v4589, 0
  %v4847 = vsel %vm78, %v4590, 0
  %v4850 = vsel %vm271, %v4656, 0
  %4852 = vmatpush.msra.mxu0 0.0
  %4853 = vmatpush.msra.mxu0 0.0
  %4854 = vmatpush.msra.mxu0 0.0
  %4855 = vmatpush.msra.mxu0 0.0
  %4856 = vmatpush.msra.mxu0 0.0
  %4857 = vmatpush.msra.mxu0 0.0
  %4858 = vmatpush.msra.mxu0 0.0
  %4859 = vmatpush.msra.mxu0 0.0
  %4860 = vmatpush.msra.mxu0 0.0
  %4861 = vmatpush.msra.mxu0 0.0
  %4862 = vmatpush.msra.mxu0 0.0
  %4863 = vmatpush.msra.mxu0 0.0
  %4864 = vmatpush.msra.mxu0 0.0
  %4865 = vmatpush.msra.mxu0 0.0
  %4866 = vmatpush.msra.mxu0 0.0
  %4867 = vmatpush.msra.mxu0 %v4850
  %4868 = vmatmul.f32.gmra.mxu0 %v4658
  %v4869 = vpop.f32.mrf.mxu0
  %v4870 = vadd.f32 0.0, %v4869
  %4871 = vmatmul.f32.gmra.mxu0 %v4661
  %v4872 = vpop.f32.mrf.mxu0
  %v4873 = vadd.f32 0.0, %v4872
  %4874 = vmatmul.f32.gmra.mxu0 %v4664
  %v4875 = vpop.f32.mrf.mxu0
  %v4876 = vadd.f32 0.0, %v4875
  %4877 = vmatmul.f32.gmra.mxu0 %v4667
  %v4878 = vpop.f32.mrf.mxu0
  %v4879 = vadd.f32 0.0, %v4878
  %4880 = vmatmul.f32.gmra.mxu0 %v4670
  %v4881 = vpop.f32.mrf.mxu0
  %v4882 = vadd.f32 0.0, %v4881
  %4883 = vmatmul.f32.gmra.mxu0 %v4673
  %v4884 = vpop.f32.mrf.mxu0
  %v4885 = vadd.f32 0.0, %v4884
  %4886 = vmatmul.f32.gmra.mxu0 %v4676
  %v4887 = vpop.f32.mrf.mxu0
  %v4888 = vadd.f32 0.0, %v4887
  %4889 = vmatmul.f32.gmra.mxu0 %v4679
  %v4890 = vpop.f32.mrf.mxu0
  %v4891 = vadd.f32 0.0, %v4890
  %4892 = vmatmul.f32.gmra.mxu0 %v4682
  %v4893 = vpop.f32.mrf.mxu0
  %v4894 = vadd.f32 0.0, %v4893
  %4895 = vmatmul.f32.gmra.mxu0 %v4685
  %v4896 = vpop.f32.mrf.mxu0
  %v4897 = vadd.f32 0.0, %v4896
  %4898 = vmatmul.f32.gmra.mxu0 %v4688
  %v4899 = vpop.f32.mrf.mxu0
  %v4900 = vadd.f32 0.0, %v4899
  %4901 = vmatmul.f32.gmra.mxu0 %v4691
  %v4902 = vpop.f32.mrf.mxu0
  %v4903 = vadd.f32 0.0, %v4902
  %4904 = vmatmul.f32.gmra.mxu0 %v4694
  %v4905 = vpop.f32.mrf.mxu0
  %v4906 = vadd.f32 0.0, %v4905
  %4907 = vmatmul.f32.gmra.mxu0 %v4697
  %v4908 = vpop.f32.mrf.mxu0
  %v4909 = vadd.f32 0.0, %v4908
  %4910 = vmatmul.f32.gmra.mxu0 %v4700
  %v4911 = vpop.f32.mrf.mxu0
  %v4912 = vadd.f32 0.0, %v4911
  %4913 = vmatmul.f32.gmra.mxu0 %v4703
  %v4914 = vpop.f32.mrf.mxu0
  %v4915 = vadd.f32 0.0, %v4914
  %4916 = vmatmul.f32.gmra.mxu0 %v4706
  %v4917 = vpop.f32.mrf.mxu0
  %v4918 = vadd.f32 0.0, %v4917
  %4919 = vmatmul.f32.gmra.mxu0 %v4709
  %v4920 = vpop.f32.mrf.mxu0
  %v4921 = vadd.f32 0.0, %v4920
  %4922 = vmatmul.f32.gmra.mxu0 %v4712
  %v4923 = vpop.f32.mrf.mxu0
  %v4924 = vadd.f32 0.0, %v4923
  %4925 = vmatmul.f32.gmra.mxu0 %v4715
  %v4926 = vpop.f32.mrf.mxu0
  %v4927 = vadd.f32 0.0, %v4926
  %4928 = vmatmul.f32.gmra.mxu0 %v4718
  %v4929 = vpop.f32.mrf.mxu0
  %v4930 = vadd.f32 0.0, %v4929
  %4931 = vmatmul.f32.gmra.mxu0 %v4721
  %v4932 = vpop.f32.mrf.mxu0
  %v4933 = vadd.f32 0.0, %v4932
  %4934 = vmatmul.f32.gmra.mxu0 %v4724
  %v4935 = vpop.f32.mrf.mxu0
  %v4936 = vadd.f32 0.0, %v4935
  %4937 = vmatmul.f32.gmra.mxu0 %v4727
  %v4938 = vpop.f32.mrf.mxu0
  %v4939 = vadd.f32 0.0, %v4938
  %4940 = vmatmul.f32.gmra.mxu0 %v4730
  %v4941 = vpop.f32.mrf.mxu0
  %v4942 = vadd.f32 0.0, %v4941
  %4943 = vmatmul.f32.gmra.mxu0 %v4733
  %v4944 = vpop.f32.mrf.mxu0
  %v4945 = vadd.f32 0.0, %v4944
  %4946 = vmatmul.f32.gmra.mxu0 %v4736
  %v4947 = vpop.f32.mrf.mxu0
  %v4948 = vadd.f32 0.0, %v4947
  %4949 = vmatmul.f32.gmra.mxu0 %v4739
  %v4950 = vpop.f32.mrf.mxu0
  %v4951 = vadd.f32 0.0, %v4950
  %4952 = vmatmul.f32.gmra.mxu0 %v4742
  %v4953 = vpop.f32.mrf.mxu0
  %v4954 = vadd.f32 0.0, %v4953
  %4955 = vmatmul.f32.gmra.mxu0 %v4745
  %v4956 = vpop.f32.mrf.mxu0
  %v4957 = vadd.f32 0.0, %v4956
  %4958 = vmatmul.f32.gmra.mxu0 %v4748
  %v4959 = vpop.f32.mrf.mxu0
  %v4960 = vadd.f32 0.0, %v4959
  %4961 = vmatmul.f32.gmra.mxu0 %v4751
  %v4962 = vpop.f32.mrf.mxu0
  %v4963 = vadd.f32 0.0, %v4962
  %4964 = vmatmul.f32.gmra.mxu0 %v4754
  %v4965 = vpop.f32.mrf.mxu0
  %v4966 = vadd.f32 0.0, %v4965
  %4967 = vmatmul.f32.gmra.mxu0 %v4757
  %v4968 = vpop.f32.mrf.mxu0
  %v4969 = vadd.f32 0.0, %v4968
  %4970 = vmatmul.f32.gmra.mxu0 %v4760
  %v4971 = vpop.f32.mrf.mxu0
  %v4972 = vadd.f32 0.0, %v4971
  %4973 = vmatmul.f32.gmra.mxu0 %v4763
  %v4974 = vpop.f32.mrf.mxu0
  %v4975 = vadd.f32 0.0, %v4974
  %4976 = vmatmul.f32.gmra.mxu0 %v4766
  %v4977 = vpop.f32.mrf.mxu0
  %v4978 = vadd.f32 0.0, %v4977
  %4979 = vmatmul.f32.gmra.mxu0 %v4769
  %v4980 = vpop.f32.mrf.mxu0
  %v4981 = vadd.f32 0.0, %v4980
  %4982 = vmatmul.f32.gmra.mxu0 %v4772
  %v4983 = vpop.f32.mrf.mxu0
  %v4984 = vadd.f32 0.0, %v4983
  %4985 = vmatmul.f32.gmra.mxu0 %v4775
  %v4986 = vpop.f32.mrf.mxu0
  %v4987 = vadd.f32 0.0, %v4986
  %4988 = vmatmul.f32.gmra.mxu0 %v4778
  %v4989 = vpop.f32.mrf.mxu0
  %v4990 = vadd.f32 0.0, %v4989
  %4991 = vmatmul.f32.gmra.mxu0 %v4781
  %v4992 = vpop.f32.mrf.mxu0
  %v4993 = vadd.f32 0.0, %v4992
  %4994 = vmatmul.f32.gmra.mxu0 %v4784
  %v4995 = vpop.f32.mrf.mxu0
  %v4996 = vadd.f32 0.0, %v4995
  %4997 = vmatmul.f32.gmra.mxu0 %v4787
  %v4998 = vpop.f32.mrf.mxu0
  %v4999 = vadd.f32 0.0, %v4998
  %5000 = vmatmul.f32.gmra.mxu0 %v4790
  %v5001 = vpop.f32.mrf.mxu0
  %v5002 = vadd.f32 0.0, %v5001
  %5003 = vmatmul.f32.gmra.mxu0 %v4793
  %v5004 = vpop.f32.mrf.mxu0
  %v5005 = vadd.f32 0.0, %v5004
  %5006 = vmatmul.f32.gmra.mxu0 %v4796
  %v5007 = vpop.f32.mrf.mxu0
  %v5008 = vadd.f32 0.0, %v5007
  %5009 = vmatmul.f32.gmra.mxu0 %v4799
  %v5010 = vpop.f32.mrf.mxu0
  %v5011 = vadd.f32 0.0, %v5010
  %5012 = vmatmul.f32.gmra.mxu0 %v4802
  %v5013 = vpop.f32.mrf.mxu0
  %v5014 = vadd.f32 0.0, %v5013
  %5015 = vmatmul.f32.gmra.mxu0 %v4805
  %v5016 = vpop.f32.mrf.mxu0
  %v5017 = vadd.f32 0.0, %v5016
  %5018 = vmatmul.f32.gmra.mxu0 %v4808
  %v5019 = vpop.f32.mrf.mxu0
  %v5020 = vadd.f32 0.0, %v5019
  %5021 = vmatmul.f32.gmra.mxu0 %v4811
  %v5022 = vpop.f32.mrf.mxu0
  %v5023 = vadd.f32 0.0, %v5022
  %5024 = vmatmul.f32.gmra.mxu0 %v4814
  %v5025 = vpop.f32.mrf.mxu0
  %v5026 = vadd.f32 0.0, %v5025
  %5027 = vmatmul.f32.gmra.mxu0 %v4817
  %v5028 = vpop.f32.mrf.mxu0
  %v5029 = vadd.f32 0.0, %v5028
  %5030 = vmatmul.f32.gmra.mxu0 %v4820
  %v5031 = vpop.f32.mrf.mxu0
  %v5032 = vadd.f32 0.0, %v5031
  %5033 = vmatmul.f32.gmra.mxu0 %v4823
  %v5034 = vpop.f32.mrf.mxu0
  %v5035 = vadd.f32 0.0, %v5034
  %5036 = vmatmul.f32.gmra.mxu0 %v4826
  %v5037 = vpop.f32.mrf.mxu0
  %v5038 = vadd.f32 0.0, %v5037
  %5039 = vmatmul.f32.gmra.mxu0 %v4829
  %v5040 = vpop.f32.mrf.mxu0
  %v5041 = vadd.f32 0.0, %v5040
  %5042 = vmatmul.f32.gmra.mxu0 %v4832
  %v5043 = vpop.f32.mrf.mxu0
  %v5044 = vadd.f32 0.0, %v5043
  %5045 = vmatmul.f32.gmra.mxu0 %v4835
  %v5046 = vpop.f32.mrf.mxu0
  %v5047 = vadd.f32 0.0, %v5046
  %5048 = vmatmul.f32.gmra.mxu0 %v4838
  %v5049 = vpop.f32.mrf.mxu0
  %v5050 = vadd.f32 0.0, %v5049
  %5051 = vmatmul.f32.gmra.mxu0 %v4841
  %v5052 = vpop.f32.mrf.mxu0
  %v5053 = vadd.f32 0.0, %v5052
  %5054 = vmatmul.f32.gmra.mxu0 %v4844
  %v5055 = vpop.f32.mrf.mxu0
  %v5056 = vadd.f32 0.0, %v5055
  %5057 = vmatmul.f32.gmra.mxu0 %v4847
  %v5058 = vpop.f32.mrf.mxu0
  %v5059 = vadd.f32 0.0, %v5058
  %5060 = vdwg.mxu0
  %v5061 = vadd.f32 %v4591, %v4870
  %v5062 = vadd.f32 %v4592, %v4873
  %v5063 = vadd.f32 %v4593, %v4876
  %v5064 = vadd.f32 %v4594, %v4879
  %v5065 = vadd.f32 %v4595, %v4882
  %v5066 = vadd.f32 %v4596, %v4885
  %v5067 = vadd.f32 %v4597, %v4888
  %v5068 = vadd.f32 %v4598, %v4891
  %v5069 = vadd.f32 %v4599, %v4894
  %v5070 = vadd.f32 %v4600, %v4897
  %v5071 = vadd.f32 %v4601, %v4900
  %v5072 = vadd.f32 %v4602, %v4903
  %v5073 = vadd.f32 %v4603, %v4906
  %v5074 = vadd.f32 %v4604, %v4909
  %v5075 = vadd.f32 %v4605, %v4912
  %v5076 = vadd.f32 %v4606, %v4915
  %v5077 = vadd.f32 %v4607, %v4918
  %v5078 = vadd.f32 %v4608, %v4921
  %v5079 = vadd.f32 %v4609, %v4924
  %v5080 = vadd.f32 %v4610, %v4927
  %v5081 = vadd.f32 %v4611, %v4930
  %v5082 = vadd.f32 %v4612, %v4933
  %v5083 = vadd.f32 %v4613, %v4936
  %v5084 = vadd.f32 %v4614, %v4939
  %v5085 = vadd.f32 %v4615, %v4942
  %v5086 = vadd.f32 %v4616, %v4945
  %v5087 = vadd.f32 %v4617, %v4948
  %v5088 = vadd.f32 %v4618, %v4951
  %v5089 = vadd.f32 %v4619, %v4954
  %v5090 = vadd.f32 %v4620, %v4957
  %v5091 = vadd.f32 %v4621, %v4960
  %v5092 = vadd.f32 %v4622, %v4963
  %v5093 = vadd.f32 %v4623, %v4966
  %v5094 = vadd.f32 %v4624, %v4969
  %v5095 = vadd.f32 %v4625, %v4972
  %v5096 = vadd.f32 %v4626, %v4975
  %v5097 = vadd.f32 %v4627, %v4978
  %v5098 = vadd.f32 %v4628, %v4981
  %v5099 = vadd.f32 %v4629, %v4984
  %v5100 = vadd.f32 %v4630, %v4987
  %v5101 = vadd.f32 %v4631, %v4990
  %v5102 = vadd.f32 %v4632, %v4993
  %v5103 = vadd.f32 %v4633, %v4996
  %v5104 = vadd.f32 %v4634, %v4999
  %v5105 = vadd.f32 %v4635, %v5002
  %v5106 = vadd.f32 %v4636, %v5005
  %v5107 = vadd.f32 %v4637, %v5008
  %v5108 = vadd.f32 %v4638, %v5011
  %v5109 = vadd.f32 %v4639, %v5014
  %v5110 = vadd.f32 %v4640, %v5017
  %v5111 = vadd.f32 %v4641, %v5020
  %v5112 = vadd.f32 %v4642, %v5023
  %v5113 = vadd.f32 %v4643, %v5026
  %v5114 = vadd.f32 %v4644, %v5029
  %v5115 = vadd.f32 %v4645, %v5032
  %v5116 = vadd.f32 %v4646, %v5035
  %v5117 = vadd.f32 %v4647, %v5038
  %v5118 = vadd.f32 %v4648, %v5041
  %v5119 = vadd.f32 %v4649, %v5044
  %v5120 = vadd.f32 %v4650, %v5047
  %v5121 = vadd.f32 %v4651, %v5050
  %v5122 = vadd.f32 %v4652, %v5053
  %v5123 = vadd.f32 %v4653, %v5056
  %v5124 = vadd.f32 %v4654, %v5059
  %5125 = vst [vmem:[#allocation2] sm:$0xff] %v5061
  %5126 = vst [vmem:[#allocation2 + $0x8] sm:$0xff] %v5062
  %5127 = vst [vmem:[#allocation2 + $0x10] sm:$0xff] %v5063
  %5128 = vst [vmem:[#allocation2 + $0x18] sm:$0xff] %v5064
  %5129 = vst [vmem:[#allocation2 + $0x20] sm:$0xff] %v5065
  %5130 = vst [vmem:[#allocation2 + $0x28] sm:$0xff] %v5066
  %5131 = vst [vmem:[#allocation2 + $0x30] sm:$0xff] %v5067
  %5132 = vst [vmem:[#allocation2 + $0x38] sm:$0xff] %v5068
  %5133 = vst [vmem:[#allocation2 + $0x40] sm:$0xff] %v5069
  %5134 = vst [vmem:[#allocation2 + $0x48] sm:$0xff] %v5070
  %5135 = vst [vmem:[#allocation2 + $0x50] sm:$0xff] %v5071
  %5136 = vst [vmem:[#allocation2 + $0x58] sm:$0xff] %v5072
  %5137 = vst [vmem:[#allocation2 + $0x60] sm:$0xff] %v5073
  %5138 = vst [vmem:[#allocation2 + $0x68] sm:$0xff] %v5074
  %5139 = vst [vmem:[#allocation2 + $0x70] sm:$0xff] %v5075
  %5140 = vst [vmem:[#allocation2 + $0x78] sm:$0xff] %v5076
  %5141 = vst [vmem:[#allocation2 + $0x80] sm:$0xff] %v5077
  %5142 = vst [vmem:[#allocation2 + $0x88] sm:$0xff] %v5078
  %5143 = vst [vmem:[#allocation2 + $0x90] sm:$0xff] %v5079
  %5144 = vst [vmem:[#allocation2 + $0x98] sm:$0xff] %v5080
  %5145 = vst [vmem:[#allocation2 + $0xa0] sm:$0xff] %v5081
  %5146 = vst [vmem:[#allocation2 + $0xa8] sm:$0xff] %v5082
  %5147 = vst [vmem:[#allocation2 + $0xb0] sm:$0xff] %v5083
  %5148 = vst [vmem:[#allocation2 + $0xb8] sm:$0xff] %v5084
  %5149 = vst [vmem:[#allocation2 + $0xc0] sm:$0xff] %v5085
  %5150 = vst [vmem:[#allocation2 + $0xc8] sm:$0xff] %v5086
  %5151 = vst [vmem:[#allocation2 + $0xd0] sm:$0xff] %v5087
  %5152 = vst [vmem:[#allocation2 + $0xd8] sm:$0xff] %v5088
  %5153 = vst [vmem:[#allocation2 + $0xe0] sm:$0xff] %v5089
  %5154 = vst [vmem:[#allocation2 + $0xe8] sm:$0xff] %v5090
  %5155 = vst [vmem:[#allocation2 + $0xf0] sm:$0xff] %v5091
  %5156 = vst [vmem:[#allocation2 + $0xf8] sm:$0xff] %v5092
  %5157 = vst [vmem:[#allocation2 + $0x100] sm:$0xff] %v5093
  %5158 = vst [vmem:[#allocation2 + $0x108] sm:$0xff] %v5094
  %5159 = vst [vmem:[#allocation2 + $0x110] sm:$0xff] %v5095
  %5160 = vst [vmem:[#allocation2 + $0x118] sm:$0xff] %v5096
  %5161 = vst [vmem:[#allocation2 + $0x120] sm:$0xff] %v5097
  %5162 = vst [vmem:[#allocation2 + $0x128] sm:$0xff] %v5098
  %5163 = vst [vmem:[#allocation2 + $0x130] sm:$0xff] %v5099
  %5164 = vst [vmem:[#allocation2 + $0x138] sm:$0xff] %v5100
  %5165 = vst [vmem:[#allocation2 + $0x140] sm:$0xff] %v5101
  %5166 = vst [vmem:[#allocation2 + $0x148] sm:$0xff] %v5102
  %5167 = vst [vmem:[#allocation2 + $0x150] sm:$0xff] %v5103
  %5168 = vst [vmem:[#allocation2 + $0x158] sm:$0xff] %v5104
  %5169 = vst [vmem:[#allocation2 + $0x160] sm:$0xff] %v5105
  %5170 = vst [vmem:[#allocation2 + $0x168] sm:$0xff] %v5106
  %5171 = vst [vmem:[#allocation2 + $0x170] sm:$0xff] %v5107
  %5172 = vst [vmem:[#allocation2 + $0x178] sm:$0xff] %v5108
  %5173 = vst [vmem:[#allocation2 + $0x180] sm:$0xff] %v5109
  %5174 = vst [vmem:[#allocation2 + $0x188] sm:$0xff] %v5110
  %5175 = vst [vmem:[#allocation2 + $0x190] sm:$0xff] %v5111
  %5176 = vst [vmem:[#allocation2 + $0x198] sm:$0xff] %v5112
  %5177 = vst [vmem:[#allocation2 + $0x1a0] sm:$0xff] %v5113
  %5178 = vst [vmem:[#allocation2 + $0x1a8] sm:$0xff] %v5114
  %5179 = vst [vmem:[#allocation2 + $0x1b0] sm:$0xff] %v5115
  %5180 = vst [vmem:[#allocation2 + $0x1b8] sm:$0xff] %v5116
  %5181 = vst [vmem:[#allocation2 + $0x1c0] sm:$0xff] %v5117
  %5182 = vst [vmem:[#allocation2 + $0x1c8] sm:$0xff] %v5118
  %5183 = vst [vmem:[#allocation2 + $0x1d0] sm:$0xff] %v5119
  %5184 = vst [vmem:[#allocation2 + $0x1d8] sm:$0xff] %v5120
  %5185 = vst [vmem:[#allocation2 + $0x1e0] sm:$0xff] %v5121
  %5186 = vst [vmem:[#allocation2 + $0x1e8] sm:$0xff] %v5122
  %5187 = vst [vmem:[#allocation2 + $0x1f0] sm:$0xff] %v5123
  %5188 = vst [vmem:[#allocation2 + $0x1f8] sm:$0xff] %v5124
  %s5189 = scalar_lea.vmem %s0, 128
  %v5190 = vld [vmem:[%s5189] sm:$0xff]
  %v5191 = vld [vmem:[%s5189 + $0x8] sm:$0xff]
  %v5192 = vld [vmem:[%s5189 + $0x10] sm:$0xff]
  %v5193 = vld [vmem:[%s5189 + $0x18] sm:$0xff]
  %v5194 = vld [vmem:[%s5189 + $0x20] sm:$0xff]
  %v5195 = vld [vmem:[%s5189 + $0x28] sm:$0xff]
  %v5196 = vld [vmem:[%s5189 + $0x30] sm:$0xff]
  %v5197 = vld [vmem:[%s5189 + $0x38] sm:$0xff]
  %v5198 = vld [vmem:[%s5189 + $0x40] sm:$0xff]
  %v5199 = vld [vmem:[%s5189 + $0x48] sm:$0xff]
  %v5200 = vld [vmem:[%s5189 + $0x50] sm:$0xff]
  %v5201 = vld [vmem:[%s5189 + $0x58] sm:$0xff]
  %v5202 = vld [vmem:[%s5189 + $0x60] sm:$0xff]
  %v5203 = vld [vmem:[%s5189 + $0x68] sm:$0xff]
  %v5204 = vld [vmem:[%s5189 + $0x70] sm:$0xff]
  %v5205 = vld [vmem:[%s5189 + $0x78] sm:$0xff]
  %v5206 = vld [vmem:[%s5189 + $0x80] sm:$0xff]
  %v5207 = vld [vmem:[%s5189 + $0x88] sm:$0xff]
  %v5208 = vld [vmem:[%s5189 + $0x90] sm:$0xff]
  %v5209 = vld [vmem:[%s5189 + $0x98] sm:$0xff]
  %v5210 = vld [vmem:[%s5189 + $0xa0] sm:$0xff]
  %v5211 = vld [vmem:[%s5189 + $0xa8] sm:$0xff]
  %v5212 = vld [vmem:[%s5189 + $0xb0] sm:$0xff]
  %v5213 = vld [vmem:[%s5189 + $0xb8] sm:$0xff]
  %v5214 = vld [vmem:[%s5189 + $0xc0] sm:$0xff]
  %v5215 = vld [vmem:[%s5189 + $0xc8] sm:$0xff]
  %v5216 = vld [vmem:[%s5189 + $0xd0] sm:$0xff]
  %v5217 = vld [vmem:[%s5189 + $0xd8] sm:$0xff]
  %v5218 = vld [vmem:[%s5189 + $0xe0] sm:$0xff]
  %v5219 = vld [vmem:[%s5189 + $0xe8] sm:$0xff]
  %v5220 = vld [vmem:[%s5189 + $0xf0] sm:$0xff]
  %v5221 = vld [vmem:[%s5189 + $0xf8] sm:$0xff]
  %v5222 = vld [vmem:[%s5189 + $0x180] sm:$0xff]
  %v5223 = vld [vmem:[%s5189 + $0x188] sm:$0xff]
  %v5224 = vld [vmem:[%s5189 + $0x190] sm:$0xff]
  %v5225 = vld [vmem:[%s5189 + $0x198] sm:$0xff]
  %v5226 = vld [vmem:[%s5189 + $0x1a0] sm:$0xff]
  %v5227 = vld [vmem:[%s5189 + $0x1a8] sm:$0xff]
  %v5228 = vld [vmem:[%s5189 + $0x1b0] sm:$0xff]
  %v5229 = vld [vmem:[%s5189 + $0x1b8] sm:$0xff]
  %v5230 = vld [vmem:[%s5189 + $0x1c0] sm:$0xff]
  %v5231 = vld [vmem:[%s5189 + $0x1c8] sm:$0xff]
  %v5232 = vld [vmem:[%s5189 + $0x1d0] sm:$0xff]
  %v5233 = vld [vmem:[%s5189 + $0x1d8] sm:$0xff]
  %v5234 = vld [vmem:[%s5189 + $0x1e0] sm:$0xff]
  %v5235 = vld [vmem:[%s5189 + $0x1e8] sm:$0xff]
  %v5236 = vld [vmem:[%s5189 + $0x1f0] sm:$0xff]
  %v5237 = vld [vmem:[%s5189 + $0x1f8] sm:$0xff]
  %v5238 = vld [vmem:[%s5189 + $0x200] sm:$0xff]
  %v5239 = vld [vmem:[%s5189 + $0x208] sm:$0xff]
  %v5240 = vld [vmem:[%s5189 + $0x210] sm:$0xff]
  %v5241 = vld [vmem:[%s5189 + $0x218] sm:$0xff]
  %v5242 = vld [vmem:[%s5189 + $0x220] sm:$0xff]
  %v5243 = vld [vmem:[%s5189 + $0x228] sm:$0xff]
  %v5244 = vld [vmem:[%s5189 + $0x230] sm:$0xff]
  %v5245 = vld [vmem:[%s5189 + $0x238] sm:$0xff]
  %v5246 = vld [vmem:[%s5189 + $0x240] sm:$0xff]
  %v5247 = vld [vmem:[%s5189 + $0x248] sm:$0xff]
  %v5248 = vld [vmem:[%s5189 + $0x250] sm:$0xff]
  %v5249 = vld [vmem:[%s5189 + $0x258] sm:$0xff]
  %v5250 = vld [vmem:[%s5189 + $0x260] sm:$0xff]
  %v5251 = vld [vmem:[%s5189 + $0x268] sm:$0xff]
  %v5252 = vld [vmem:[%s5189 + $0x270] sm:$0xff]
  %v5253 = vld [vmem:[%s5189 + $0x278] sm:$0xff]
  %v5254 = vld [vmem:[#allocation2] sm:$0xff]
  %v5255 = vld [vmem:[#allocation2 + $0x8] sm:$0xff]
  %v5256 = vld [vmem:[#allocation2 + $0x10] sm:$0xff]
  %v5257 = vld [vmem:[#allocation2 + $0x18] sm:$0xff]
  %v5258 = vld [vmem:[#allocation2 + $0x20] sm:$0xff]
  %v5259 = vld [vmem:[#allocation2 + $0x28] sm:$0xff]
  %v5260 = vld [vmem:[#allocation2 + $0x30] sm:$0xff]
  %v5261 = vld [vmem:[#allocation2 + $0x38] sm:$0xff]
  %v5262 = vld [vmem:[#allocation2 + $0x40] sm:$0xff]
  %v5263 = vld [vmem:[#allocation2 + $0x48] sm:$0xff]
  %v5264 = vld [vmem:[#allocation2 + $0x50] sm:$0xff]
  %v5265 = vld [vmem:[#allocation2 + $0x58] sm:$0xff]
  %v5266 = vld [vmem:[#allocation2 + $0x60] sm:$0xff]
  %v5267 = vld [vmem:[#allocation2 + $0x68] sm:$0xff]
  %v5268 = vld [vmem:[#allocation2 + $0x70] sm:$0xff]
  %v5269 = vld [vmem:[#allocation2 + $0x78] sm:$0xff]
  %v5270 = vld [vmem:[#allocation2 + $0x80] sm:$0xff]
  %v5271 = vld [vmem:[#allocation2 + $0x88] sm:$0xff]
  %v5272 = vld [vmem:[#allocation2 + $0x90] sm:$0xff]
  %v5273 = vld [vmem:[#allocation2 + $0x98] sm:$0xff]
  %v5274 = vld [vmem:[#allocation2 + $0xa0] sm:$0xff]
  %v5275 = vld [vmem:[#allocation2 + $0xa8] sm:$0xff]
  %v5276 = vld [vmem:[#allocation2 + $0xb0] sm:$0xff]
  %v5277 = vld [vmem:[#allocation2 + $0xb8] sm:$0xff]
  %v5278 = vld [vmem:[#allocation2 + $0xc0] sm:$0xff]
  %v5279 = vld [vmem:[#allocation2 + $0xc8] sm:$0xff]
  %v5280 = vld [vmem:[#allocation2 + $0xd0] sm:$0xff]
  %v5281 = vld [vmem:[#allocation2 + $0xd8] sm:$0xff]
  %v5282 = vld [vmem:[#allocation2 + $0xe0] sm:$0xff]
  %v5283 = vld [vmem:[#allocation2 + $0xe8] sm:$0xff]
  %v5284 = vld [vmem:[#allocation2 + $0xf0] sm:$0xff]
  %v5285 = vld [vmem:[#allocation2 + $0xf8] sm:$0xff]
  %v5286 = vld [vmem:[#allocation2 + $0x100] sm:$0xff]
  %v5287 = vld [vmem:[#allocation2 + $0x108] sm:$0xff]
  %v5288 = vld [vmem:[#allocation2 + $0x110] sm:$0xff]
  %v5289 = vld [vmem:[#allocation2 + $0x118] sm:$0xff]
  %v5290 = vld [vmem:[#allocation2 + $0x120] sm:$0xff]
  %v5291 = vld [vmem:[#allocation2 + $0x128] sm:$0xff]
  %v5292 = vld [vmem:[#allocation2 + $0x130] sm:$0xff]
  %v5293 = vld [vmem:[#allocation2 + $0x138] sm:$0xff]
  %v5294 = vld [vmem:[#allocation2 + $0x140] sm:$0xff]
  %v5295 = vld [vmem:[#allocation2 + $0x148] sm:$0xff]
  %v5296 = vld [vmem:[#allocation2 + $0x150] sm:$0xff]
  %v5297 = vld [vmem:[#allocation2 + $0x158] sm:$0xff]
  %v5298 = vld [vmem:[#allocation2 + $0x160] sm:$0xff]
  %v5299 = vld [vmem:[#allocation2 + $0x168] sm:$0xff]
  %v5300 = vld [vmem:[#allocation2 + $0x170] sm:$0xff]
  %v5301 = vld [vmem:[#allocation2 + $0x178] sm:$0xff]
  %v5302 = vld [vmem:[#allocation2 + $0x180] sm:$0xff]
  %v5303 = vld [vmem:[#allocation2 + $0x188] sm:$0xff]
  %v5304 = vld [vmem:[#allocation2 + $0x190] sm:$0xff]
  %v5305 = vld [vmem:[#allocation2 + $0x198] sm:$0xff]
  %v5306 = vld [vmem:[#allocation2 + $0x1a0] sm:$0xff]
  %v5307 = vld [vmem:[#allocation2 + $0x1a8] sm:$0xff]
  %v5308 = vld [vmem:[#allocation2 + $0x1b0] sm:$0xff]
  %v5309 = vld [vmem:[#allocation2 + $0x1b8] sm:$0xff]
  %v5310 = vld [vmem:[#allocation2 + $0x1c0] sm:$0xff]
  %v5311 = vld [vmem:[#allocation2 + $0x1c8] sm:$0xff]
  %v5312 = vld [vmem:[#allocation2 + $0x1d0] sm:$0xff]
  %v5313 = vld [vmem:[#allocation2 + $0x1d8] sm:$0xff]
  %v5314 = vld [vmem:[#allocation2 + $0x1e0] sm:$0xff]
  %v5315 = vld [vmem:[#allocation2 + $0x1e8] sm:$0xff]
  %v5316 = vld [vmem:[#allocation2 + $0x1f0] sm:$0xff]
  %v5317 = vld [vmem:[#allocation2 + $0x1f8] sm:$0xff]
  %s5318 = scalar_lea.vmem %s1, 32
  %v5319 = vld [vmem:[%s5318] sm:$0xf]
  %v5321 = vsel %vm78, %v5190, 0
  %v5324 = vsel %vm78, %v5191, 0
  %v5327 = vsel %vm78, %v5192, 0
  %v5330 = vsel %vm78, %v5193, 0
  %v5333 = vsel %vm78, %v5194, 0
  %v5336 = vsel %vm78, %v5195, 0
  %v5339 = vsel %vm78, %v5196, 0
  %v5342 = vsel %vm78, %v5197, 0
  %v5345 = vsel %vm78, %v5198, 0
  %v5348 = vsel %vm78, %v5199, 0
  %v5351 = vsel %vm78, %v5200, 0
  %v5354 = vsel %vm78, %v5201, 0
  %v5357 = vsel %vm78, %v5202, 0
  %v5360 = vsel %vm78, %v5203, 0
  %v5363 = vsel %vm78, %v5204, 0
  %v5366 = vsel %vm78, %v5205, 0
  %v5369 = vsel %vm78, %v5206, 0
  %v5372 = vsel %vm78, %v5207, 0
  %v5375 = vsel %vm78, %v5208, 0
  %v5378 = vsel %vm78, %v5209, 0
  %v5381 = vsel %vm78, %v5210, 0
  %v5384 = vsel %vm78, %v5211, 0
  %v5387 = vsel %vm78, %v5212, 0
  %v5390 = vsel %vm78, %v5213, 0
  %v5393 = vsel %vm78, %v5214, 0
  %v5396 = vsel %vm78, %v5215, 0
  %v5399 = vsel %vm78, %v5216, 0
  %v5402 = vsel %vm78, %v5217, 0
  %v5405 = vsel %vm78, %v5218, 0
  %v5408 = vsel %vm78, %v5219, 0
  %v5411 = vsel %vm78, %v5220, 0
  %v5414 = vsel %vm78, %v5221, 0
  %v5417 = vsel %vm78, %v5222, 0
  %v5420 = vsel %vm78, %v5223, 0
  %v5423 = vsel %vm78, %v5224, 0
  %v5426 = vsel %vm78, %v5225, 0
  %v5429 = vsel %vm78, %v5226, 0
  %v5432 = vsel %vm78, %v5227, 0
  %v5435 = vsel %vm78, %v5228, 0
  %v5438 = vsel %vm78, %v5229, 0
  %v5441 = vsel %vm78, %v5230, 0
  %v5444 = vsel %vm78, %v5231, 0
  %v5447 = vsel %vm78, %v5232, 0
  %v5450 = vsel %vm78, %v5233, 0
  %v5453 = vsel %vm78, %v5234, 0
  %v5456 = vsel %vm78, %v5235, 0
  %v5459 = vsel %vm78, %v5236, 0
  %v5462 = vsel %vm78, %v5237, 0
  %v5465 = vsel %vm78, %v5238, 0
  %v5468 = vsel %vm78, %v5239, 0
  %v5471 = vsel %vm78, %v5240, 0
  %v5474 = vsel %vm78, %v5241, 0
  %v5477 = vsel %vm78, %v5242, 0
  %v5480 = vsel %vm78, %v5243, 0
  %v5483 = vsel %vm78, %v5244, 0
  %v5486 = vsel %vm78, %v5245, 0
  %v5489 = vsel %vm78, %v5246, 0
  %v5492 = vsel %vm78, %v5247, 0
  %v5495 = vsel %vm78, %v5248, 0
  %v5498 = vsel %vm78, %v5249, 0
  %v5501 = vsel %vm78, %v5250, 0
  %v5504 = vsel %vm78, %v5251, 0
  %v5507 = vsel %vm78, %v5252, 0
  %v5510 = vsel %vm78, %v5253, 0
  %v5513 = vsel %vm271, %v5319, 0
  %5515 = vmatpush.msra.mxu0 0.0
  %5516 = vmatpush.msra.mxu0 0.0
  %5517 = vmatpush.msra.mxu0 0.0
  %5518 = vmatpush.msra.mxu0 0.0
  %5519 = vmatpush.msra.mxu0 0.0
  %5520 = vmatpush.msra.mxu0 0.0
  %5521 = vmatpush.msra.mxu0 0.0
  %5522 = vmatpush.msra.mxu0 0.0
  %5523 = vmatpush.msra.mxu0 0.0
  %5524 = vmatpush.msra.mxu0 0.0
  %5525 = vmatpush.msra.mxu0 0.0
  %5526 = vmatpush.msra.mxu0 0.0
  %5527 = vmatpush.msra.mxu0 0.0
  %5528 = vmatpush.msra.mxu0 0.0
  %5529 = vmatpush.msra.mxu0 0.0
  %5530 = vmatpush.msra.mxu0 %v5513
  %5531 = vmatmul.f32.gmra.mxu0 %v5321
  %v5532 = vpop.f32.mrf.mxu0
  %v5533 = vadd.f32 0.0, %v5532
  %5534 = vmatmul.f32.gmra.mxu0 %v5324
  %v5535 = vpop.f32.mrf.mxu0
  %v5536 = vadd.f32 0.0, %v5535
  %5537 = vmatmul.f32.gmra.mxu0 %v5327
  %v5538 = vpop.f32.mrf.mxu0
  %v5539 = vadd.f32 0.0, %v5538
  %5540 = vmatmul.f32.gmra.mxu0 %v5330
  %v5541 = vpop.f32.mrf.mxu0
  %v5542 = vadd.f32 0.0, %v5541
  %5543 = vmatmul.f32.gmra.mxu0 %v5333
  %v5544 = vpop.f32.mrf.mxu0
  %v5545 = vadd.f32 0.0, %v5544
  %5546 = vmatmul.f32.gmra.mxu0 %v5336
  %v5547 = vpop.f32.mrf.mxu0
  %v5548 = vadd.f32 0.0, %v5547
  %5549 = vmatmul.f32.gmra.mxu0 %v5339
  %v5550 = vpop.f32.mrf.mxu0
  %v5551 = vadd.f32 0.0, %v5550
  %5552 = vmatmul.f32.gmra.mxu0 %v5342
  %v5553 = vpop.f32.mrf.mxu0
  %v5554 = vadd.f32 0.0, %v5553
  %5555 = vmatmul.f32.gmra.mxu0 %v5345
  %v5556 = vpop.f32.mrf.mxu0
  %v5557 = vadd.f32 0.0, %v5556
  %5558 = vmatmul.f32.gmra.mxu0 %v5348
  %v5559 = vpop.f32.mrf.mxu0
  %v5560 = vadd.f32 0.0, %v5559
  %5561 = vmatmul.f32.gmra.mxu0 %v5351
  %v5562 = vpop.f32.mrf.mxu0
  %v5563 = vadd.f32 0.0, %v5562
  %5564 = vmatmul.f32.gmra.mxu0 %v5354
  %v5565 = vpop.f32.mrf.mxu0
  %v5566 = vadd.f32 0.0, %v5565
  %5567 = vmatmul.f32.gmra.mxu0 %v5357
  %v5568 = vpop.f32.mrf.mxu0
  %v5569 = vadd.f32 0.0, %v5568
  %5570 = vmatmul.f32.gmra.mxu0 %v5360
  %v5571 = vpop.f32.mrf.mxu0
  %v5572 = vadd.f32 0.0, %v5571
  %5573 = vmatmul.f32.gmra.mxu0 %v5363
  %v5574 = vpop.f32.mrf.mxu0
  %v5575 = vadd.f32 0.0, %v5574
  %5576 = vmatmul.f32.gmra.mxu0 %v5366
  %v5577 = vpop.f32.mrf.mxu0
  %v5578 = vadd.f32 0.0, %v5577
  %5579 = vmatmul.f32.gmra.mxu0 %v5369
  %v5580 = vpop.f32.mrf.mxu0
  %v5581 = vadd.f32 0.0, %v5580
  %5582 = vmatmul.f32.gmra.mxu0 %v5372
  %v5583 = vpop.f32.mrf.mxu0
  %v5584 = vadd.f32 0.0, %v5583
  %5585 = vmatmul.f32.gmra.mxu0 %v5375
  %v5586 = vpop.f32.mrf.mxu0
  %v5587 = vadd.f32 0.0, %v5586
  %5588 = vmatmul.f32.gmra.mxu0 %v5378
  %v5589 = vpop.f32.mrf.mxu0
  %v5590 = vadd.f32 0.0, %v5589
  %5591 = vmatmul.f32.gmra.mxu0 %v5381
  %v5592 = vpop.f32.mrf.mxu0
  %v5593 = vadd.f32 0.0, %v5592
  %5594 = vmatmul.f32.gmra.mxu0 %v5384
  %v5595 = vpop.f32.mrf.mxu0
  %v5596 = vadd.f32 0.0, %v5595
  %5597 = vmatmul.f32.gmra.mxu0 %v5387
  %v5598 = vpop.f32.mrf.mxu0
  %v5599 = vadd.f32 0.0, %v5598
  %5600 = vmatmul.f32.gmra.mxu0 %v5390
  %v5601 = vpop.f32.mrf.mxu0
  %v5602 = vadd.f32 0.0, %v5601
  %5603 = vmatmul.f32.gmra.mxu0 %v5393
  %v5604 = vpop.f32.mrf.mxu0
  %v5605 = vadd.f32 0.0, %v5604
  %5606 = vmatmul.f32.gmra.mxu0 %v5396
  %v5607 = vpop.f32.mrf.mxu0
  %v5608 = vadd.f32 0.0, %v5607
  %5609 = vmatmul.f32.gmra.mxu0 %v5399
  %v5610 = vpop.f32.mrf.mxu0
  %v5611 = vadd.f32 0.0, %v5610
  %5612 = vmatmul.f32.gmra.mxu0 %v5402
  %v5613 = vpop.f32.mrf.mxu0
  %v5614 = vadd.f32 0.0, %v5613
  %5615 = vmatmul.f32.gmra.mxu0 %v5405
  %v5616 = vpop.f32.mrf.mxu0
  %v5617 = vadd.f32 0.0, %v5616
  %5618 = vmatmul.f32.gmra.mxu0 %v5408
  %v5619 = vpop.f32.mrf.mxu0
  %v5620 = vadd.f32 0.0, %v5619
  %5621 = vmatmul.f32.gmra.mxu0 %v5411
  %v5622 = vpop.f32.mrf.mxu0
  %v5623 = vadd.f32 0.0, %v5622
  %5624 = vmatmul.f32.gmra.mxu0 %v5414
  %v5625 = vpop.f32.mrf.mxu0
  %v5626 = vadd.f32 0.0, %v5625
  %5627 = vmatmul.f32.gmra.mxu0 %v5417
  %v5628 = vpop.f32.mrf.mxu0
  %v5629 = vadd.f32 0.0, %v5628
  %5630 = vmatmul.f32.gmra.mxu0 %v5420
  %v5631 = vpop.f32.mrf.mxu0
  %v5632 = vadd.f32 0.0, %v5631
  %5633 = vmatmul.f32.gmra.mxu0 %v5423
  %v5634 = vpop.f32.mrf.mxu0
  %v5635 = vadd.f32 0.0, %v5634
  %5636 = vmatmul.f32.gmra.mxu0 %v5426
  %v5637 = vpop.f32.mrf.mxu0
  %v5638 = vadd.f32 0.0, %v5637
  %5639 = vmatmul.f32.gmra.mxu0 %v5429
  %v5640 = vpop.f32.mrf.mxu0
  %v5641 = vadd.f32 0.0, %v5640
  %5642 = vmatmul.f32.gmra.mxu0 %v5432
  %v5643 = vpop.f32.mrf.mxu0
  %v5644 = vadd.f32 0.0, %v5643
  %5645 = vmatmul.f32.gmra.mxu0 %v5435
  %v5646 = vpop.f32.mrf.mxu0
  %v5647 = vadd.f32 0.0, %v5646
  %5648 = vmatmul.f32.gmra.mxu0 %v5438
  %v5649 = vpop.f32.mrf.mxu0
  %v5650 = vadd.f32 0.0, %v5649
  %5651 = vmatmul.f32.gmra.mxu0 %v5441
  %v5652 = vpop.f32.mrf.mxu0
  %v5653 = vadd.f32 0.0, %v5652
  %5654 = vmatmul.f32.gmra.mxu0 %v5444
  %v5655 = vpop.f32.mrf.mxu0
  %v5656 = vadd.f32 0.0, %v5655
  %5657 = vmatmul.f32.gmra.mxu0 %v5447
  %v5658 = vpop.f32.mrf.mxu0
  %v5659 = vadd.f32 0.0, %v5658
  %5660 = vmatmul.f32.gmra.mxu0 %v5450
  %v5661 = vpop.f32.mrf.mxu0
  %v5662 = vadd.f32 0.0, %v5661
  %5663 = vmatmul.f32.gmra.mxu0 %v5453
  %v5664 = vpop.f32.mrf.mxu0
  %v5665 = vadd.f32 0.0, %v5664
  %5666 = vmatmul.f32.gmra.mxu0 %v5456
  %v5667 = vpop.f32.mrf.mxu0
  %v5668 = vadd.f32 0.0, %v5667
  %5669 = vmatmul.f32.gmra.mxu0 %v5459
  %v5670 = vpop.f32.mrf.mxu0
  %v5671 = vadd.f32 0.0, %v5670
  %5672 = vmatmul.f32.gmra.mxu0 %v5462
  %v5673 = vpop.f32.mrf.mxu0
  %v5674 = vadd.f32 0.0, %v5673
  %5675 = vmatmul.f32.gmra.mxu0 %v5465
  %v5676 = vpop.f32.mrf.mxu0
  %v5677 = vadd.f32 0.0, %v5676
  %5678 = vmatmul.f32.gmra.mxu0 %v5468
  %v5679 = vpop.f32.mrf.mxu0
  %v5680 = vadd.f32 0.0, %v5679
  %5681 = vmatmul.f32.gmra.mxu0 %v5471
  %v5682 = vpop.f32.mrf.mxu0
  %v5683 = vadd.f32 0.0, %v5682
  %5684 = vmatmul.f32.gmra.mxu0 %v5474
  %v5685 = vpop.f32.mrf.mxu0
  %v5686 = vadd.f32 0.0, %v5685
  %5687 = vmatmul.f32.gmra.mxu0 %v5477
  %v5688 = vpop.f32.mrf.mxu0
  %v5689 = vadd.f32 0.0, %v5688
  %5690 = vmatmul.f32.gmra.mxu0 %v5480
  %v5691 = vpop.f32.mrf.mxu0
  %v5692 = vadd.f32 0.0, %v5691
  %5693 = vmatmul.f32.gmra.mxu0 %v5483
  %v5694 = vpop.f32.mrf.mxu0
  %v5695 = vadd.f32 0.0, %v5694
  %5696 = vmatmul.f32.gmra.mxu0 %v5486
  %v5697 = vpop.f32.mrf.mxu0
  %v5698 = vadd.f32 0.0, %v5697
  %5699 = vmatmul.f32.gmra.mxu0 %v5489
  %v5700 = vpop.f32.mrf.mxu0
  %v5701 = vadd.f32 0.0, %v5700
  %5702 = vmatmul.f32.gmra.mxu0 %v5492
  %v5703 = vpop.f32.mrf.mxu0
  %v5704 = vadd.f32 0.0, %v5703
  %5705 = vmatmul.f32.gmra.mxu0 %v5495
  %v5706 = vpop.f32.mrf.mxu0
  %v5707 = vadd.f32 0.0, %v5706
  %5708 = vmatmul.f32.gmra.mxu0 %v5498
  %v5709 = vpop.f32.mrf.mxu0
  %v5710 = vadd.f32 0.0, %v5709
  %5711 = vmatmul.f32.gmra.mxu0 %v5501
  %v5712 = vpop.f32.mrf.mxu0
  %v5713 = vadd.f32 0.0, %v5712
  %5714 = vmatmul.f32.gmra.mxu0 %v5504
  %v5715 = vpop.f32.mrf.mxu0
  %v5716 = vadd.f32 0.0, %v5715
  %5717 = vmatmul.f32.gmra.mxu0 %v5507
  %v5718 = vpop.f32.mrf.mxu0
  %v5719 = vadd.f32 0.0, %v5718
  %5720 = vmatmul.f32.gmra.mxu0 %v5510
  %v5721 = vpop.f32.mrf.mxu0
  %v5722 = vadd.f32 0.0, %v5721
  %5723 = vdwg.mxu0
  %v5724 = vadd.f32 %v5254, %v5533
  %v5725 = vadd.f32 %v5255, %v5536
  %v5726 = vadd.f32 %v5256, %v5539
  %v5727 = vadd.f32 %v5257, %v5542
  %v5728 = vadd.f32 %v5258, %v5545
  %v5729 = vadd.f32 %v5259, %v5548
  %v5730 = vadd.f32 %v5260, %v5551
  %v5731 = vadd.f32 %v5261, %v5554
  %v5732 = vadd.f32 %v5262, %v5557
  %v5733 = vadd.f32 %v5263, %v5560
  %v5734 = vadd.f32 %v5264, %v5563
  %v5735 = vadd.f32 %v5265, %v5566
  %v5736 = vadd.f32 %v5266, %v5569
  %v5737 = vadd.f32 %v5267, %v5572
  %v5738 = vadd.f32 %v5268, %v5575
  %v5739 = vadd.f32 %v5269, %v5578
  %v5740 = vadd.f32 %v5270, %v5581
  %v5741 = vadd.f32 %v5271, %v5584
  %v5742 = vadd.f32 %v5272, %v5587
  %v5743 = vadd.f32 %v5273, %v5590
  %v5744 = vadd.f32 %v5274, %v5593
  %v5745 = vadd.f32 %v5275, %v5596
  %v5746 = vadd.f32 %v5276, %v5599
  %v5747 = vadd.f32 %v5277, %v5602
  %v5748 = vadd.f32 %v5278, %v5605
  %v5749 = vadd.f32 %v5279, %v5608
  %v5750 = vadd.f32 %v5280, %v5611
  %v5751 = vadd.f32 %v5281, %v5614
  %v5752 = vadd.f32 %v5282, %v5617
  %v5753 = vadd.f32 %v5283, %v5620
  %v5754 = vadd.f32 %v5284, %v5623
  %v5755 = vadd.f32 %v5285, %v5626
  %v5756 = vadd.f32 %v5286, %v5629
  %v5757 = vadd.f32 %v5287, %v5632
  %v5758 = vadd.f32 %v5288, %v5635
  %v5759 = vadd.f32 %v5289, %v5638
  %v5760 = vadd.f32 %v5290, %v5641
  %v5761 = vadd.f32 %v5291, %v5644
  %v5762 = vadd.f32 %v5292, %v5647
  %v5763 = vadd.f32 %v5293, %v5650
  %v5764 = vadd.f32 %v5294, %v5653
  %v5765 = vadd.f32 %v5295, %v5656
  %v5766 = vadd.f32 %v5296, %v5659
  %v5767 = vadd.f32 %v5297, %v5662
  %v5768 = vadd.f32 %v5298, %v5665
  %v5769 = vadd.f32 %v5299, %v5668
  %v5770 = vadd.f32 %v5300, %v5671
  %v5771 = vadd.f32 %v5301, %v5674
  %v5772 = vadd.f32 %v5302, %v5677
  %v5773 = vadd.f32 %v5303, %v5680
  %v5774 = vadd.f32 %v5304, %v5683
  %v5775 = vadd.f32 %v5305, %v5686
  %v5776 = vadd.f32 %v5306, %v5689
  %v5777 = vadd.f32 %v5307, %v5692
  %v5778 = vadd.f32 %v5308, %v5695
  %v5779 = vadd.f32 %v5309, %v5698
  %v5780 = vadd.f32 %v5310, %v5701
  %v5781 = vadd.f32 %v5311, %v5704
  %v5782 = vadd.f32 %v5312, %v5707
  %v5783 = vadd.f32 %v5313, %v5710
  %v5784 = vadd.f32 %v5314, %v5713
  %v5785 = vadd.f32 %v5315, %v5716
  %v5786 = vadd.f32 %v5316, %v5719
  %v5787 = vadd.f32 %v5317, %v5722
  %5788 = vst [vmem:[#allocation2] sm:$0xff] %v5724
  %5789 = vst [vmem:[#allocation2 + $0x8] sm:$0xff] %v5725
  %5790 = vst [vmem:[#allocation2 + $0x10] sm:$0xff] %v5726
  %5791 = vst [vmem:[#allocation2 + $0x18] sm:$0xff] %v5727
  %5792 = vst [vmem:[#allocation2 + $0x20] sm:$0xff] %v5728
  %5793 = vst [vmem:[#allocation2 + $0x28] sm:$0xff] %v5729
  %5794 = vst [vmem:[#allocation2 + $0x30] sm:$0xff] %v5730
  %5795 = vst [vmem:[#allocation2 + $0x38] sm:$0xff] %v5731
  %5796 = vst [vmem:[#allocation2 + $0x40] sm:$0xff] %v5732
  %5797 = vst [vmem:[#allocation2 + $0x48] sm:$0xff] %v5733
  %5798 = vst [vmem:[#allocation2 + $0x50] sm:$0xff] %v5734
  %5799 = vst [vmem:[#allocation2 + $0x58] sm:$0xff] %v5735
  %5800 = vst [vmem:[#allocation2 + $0x60] sm:$0xff] %v5736
  %5801 = vst [vmem:[#allocation2 + $0x68] sm:$0xff] %v5737
  %5802 = vst [vmem:[#allocation2 + $0x70] sm:$0xff] %v5738
  %5803 = vst [vmem:[#allocation2 + $0x78] sm:$0xff] %v5739
  %5804 = vst [vmem:[#allocation2 + $0x80] sm:$0xff] %v5740
  %5805 = vst [vmem:[#allocation2 + $0x88] sm:$0xff] %v5741
  %5806 = vst [vmem:[#allocation2 + $0x90] sm:$0xff] %v5742
  %5807 = vst [vmem:[#allocation2 + $0x98] sm:$0xff] %v5743
  %5808 = vst [vmem:[#allocation2 + $0xa0] sm:$0xff] %v5744
  %5809 = vst [vmem:[#allocation2 + $0xa8] sm:$0xff] %v5745
  %5810 = vst [vmem:[#allocation2 + $0xb0] sm:$0xff] %v5746
  %5811 = vst [vmem:[#allocation2 + $0xb8] sm:$0xff] %v5747
  %5812 = vst [vmem:[#allocation2 + $0xc0] sm:$0xff] %v5748
  %5813 = vst [vmem:[#allocation2 + $0xc8] sm:$0xff] %v5749
  %5814 = vst [vmem:[#allocation2 + $0xd0] sm:$0xff] %v5750
  %5815 = vst [vmem:[#allocation2 + $0xd8] sm:$0xff] %v5751
  %5816 = vst [vmem:[#allocation2 + $0xe0] sm:$0xff] %v5752
  %5817 = vst [vmem:[#allocation2 + $0xe8] sm:$0xff] %v5753
  %5818 = vst [vmem:[#allocation2 + $0xf0] sm:$0xff] %v5754
  %5819 = vst [vmem:[#allocation2 + $0xf8] sm:$0xff] %v5755
  %5820 = vst [vmem:[#allocation2 + $0x100] sm:$0xff] %v5756
  %5821 = vst [vmem:[#allocation2 + $0x108] sm:$0xff] %v5757
  %5822 = vst [vmem:[#allocation2 + $0x110] sm:$0xff] %v5758
  %5823 = vst [vmem:[#allocation2 + $0x118] sm:$0xff] %v5759
  %5824 = vst [vmem:[#allocation2 + $0x120] sm:$0xff] %v5760
  %5825 = vst [vmem:[#allocation2 + $0x128] sm:$0xff] %v5761
  %5826 = vst [vmem:[#allocation2 + $0x130] sm:$0xff] %v5762
  %5827 = vst [vmem:[#allocation2 + $0x138] sm:$0xff] %v5763
  %5828 = vst [vmem:[#allocation2 + $0x140] sm:$0xff] %v5764
  %5829 = vst [vmem:[#allocation2 + $0x148] sm:$0xff] %v5765
  %5830 = vst [vmem:[#allocation2 + $0x150] sm:$0xff] %v5766
  %5831 = vst [vmem:[#allocation2 + $0x158] sm:$0xff] %v5767
  %5832 = vst [vmem:[#allocation2 + $0x160] sm:$0xff] %v5768
  %5833 = vst [vmem:[#allocation2 + $0x168] sm:$0xff] %v5769
  %5834 = vst [vmem:[#allocation2 + $0x170] sm:$0xff] %v5770
  %5835 = vst [vmem:[#allocation2 + $0x178] sm:$0xff] %v5771
  %5836 = vst [vmem:[#allocation2 + $0x180] sm:$0xff] %v5772
  %5837 = vst [vmem:[#allocation2 + $0x188] sm:$0xff] %v5773
  %5838 = vst [vmem:[#allocation2 + $0x190] sm:$0xff] %v5774
  %5839 = vst [vmem:[#allocation2 + $0x198] sm:$0xff] %v5775
  %5840 = vst [vmem:[#allocation2 + $0x1a0] sm:$0xff] %v5776
  %5841 = vst [vmem:[#allocation2 + $0x1a8] sm:$0xff] %v5777
  %5842 = vst [vmem:[#allocation2 + $0x1b0] sm:$0xff] %v5778
  %5843 = vst [vmem:[#allocation2 + $0x1b8] sm:$0xff] %v5779
  %5844 = vst [vmem:[#allocation2 + $0x1c0] sm:$0xff] %v5780
  %5845 = vst [vmem:[#allocation2 + $0x1c8] sm:$0xff] %v5781
  %5846 = vst [vmem:[#allocation2 + $0x1d0] sm:$0xff] %v5782
  %5847 = vst [vmem:[#allocation2 + $0x1d8] sm:$0xff] %v5783
  %5848 = vst [vmem:[#allocation2 + $0x1e0] sm:$0xff] %v5784
  %5849 = vst [vmem:[#allocation2 + $0x1e8] sm:$0xff] %v5785
  %5850 = vst [vmem:[#allocation2 + $0x1f0] sm:$0xff] %v5786
  %5851 = vst [vmem:[#allocation2 + $0x1f8] sm:$0xff] %v5787
  %v5852 = vld [vmem:[#allocation2] sm:$0xff]
  %v5853 = vld [vmem:[#allocation2 + $0x8] sm:$0xff]
  %v5854 = vld [vmem:[#allocation2 + $0x10] sm:$0xff]
  %v5855 = vld [vmem:[#allocation2 + $0x18] sm:$0xff]
  %v5856 = vld [vmem:[#allocation2 + $0x20] sm:$0xff]
  %v5857 = vld [vmem:[#allocation2 + $0x28] sm:$0xff]
  %v5858 = vld [vmem:[#allocation2 + $0x30] sm:$0xff]
  %v5859 = vld [vmem:[#allocation2 + $0x38] sm:$0xff]
  %v5860 = vld [vmem:[#allocation2 + $0x40] sm:$0xff]
  %v5861 = vld [vmem:[#allocation2 + $0x48] sm:$0xff]
  %v5862 = vld [vmem:[#allocation2 + $0x50] sm:$0xff]
  %v5863 = vld [vmem:[#allocation2 + $0x58] sm:$0xff]
  %v5864 = vld [vmem:[#allocation2 + $0x60] sm:$0xff]
  %v5865 = vld [vmem:[#allocation2 + $0x68] sm:$0xff]
  %v5866 = vld [vmem:[#allocation2 + $0x70] sm:$0xff]
  %v5867 = vld [vmem:[#allocation2 + $0x78] sm:$0xff]
  %v5868 = vld [vmem:[#allocation2 + $0x80] sm:$0xff]
  %v5869 = vld [vmem:[#allocation2 + $0x88] sm:$0xff]
  %v5870 = vld [vmem:[#allocation2 + $0x90] sm:$0xff]
  %v5871 = vld [vmem:[#allocation2 + $0x98] sm:$0xff]
  %v5872 = vld [vmem:[#allocation2 + $0xa0] sm:$0xff]
  %v5873 = vld [vmem:[#allocation2 + $0xa8] sm:$0xff]
  %v5874 = vld [vmem:[#allocation2 + $0xb0] sm:$0xff]
  %v5875 = vld [vmem:[#allocation2 + $0xb8] sm:$0xff]
  %v5876 = vld [vmem:[#allocation2 + $0xc0] sm:$0xff]
  %v5877 = vld [vmem:[#allocation2 + $0xc8] sm:$0xff]
  %v5878 = vld [vmem:[#allocation2 + $0xd0] sm:$0xff]
  %v5879 = vld [vmem:[#allocation2 + $0xd8] sm:$0xff]
  %v5880 = vld [vmem:[#allocation2 + $0xe0] sm:$0xff]
  %v5881 = vld [vmem:[#allocation2 + $0xe8] sm:$0xff]
  %v5882 = vld [vmem:[#allocation2 + $0xf0] sm:$0xff]
  %v5883 = vld [vmem:[#allocation2 + $0xf8] sm:$0xff]
  %v5884 = vld [vmem:[#allocation2 + $0x100] sm:$0xff]
  %v5885 = vld [vmem:[#allocation2 + $0x108] sm:$0xff]
  %v5886 = vld [vmem:[#allocation2 + $0x110] sm:$0xff]
  %v5887 = vld [vmem:[#allocation2 + $0x118] sm:$0xff]
  %v5888 = vld [vmem:[#allocation2 + $0x120] sm:$0xff]
  %v5889 = vld [vmem:[#allocation2 + $0x128] sm:$0xff]
  %v5890 = vld [vmem:[#allocation2 + $0x130] sm:$0xff]
  %v5891 = vld [vmem:[#allocation2 + $0x138] sm:$0xff]
  %v5892 = vld [vmem:[#allocation2 + $0x140] sm:$0xff]
  %v5893 = vld [vmem:[#allocation2 + $0x148] sm:$0xff]
  %v5894 = vld [vmem:[#allocation2 + $0x150] sm:$0xff]
  %v5895 = vld [vmem:[#allocation2 + $0x158] sm:$0xff]
  %v5896 = vld [vmem:[#allocation2 + $0x160] sm:$0xff]
  %v5897 = vld [vmem:[#allocation2 + $0x168] sm:$0xff]
  %v5898 = vld [vmem:[#allocation2 + $0x170] sm:$0xff]
  %v5899 = vld [vmem:[#allocation2 + $0x178] sm:$0xff]
  %v5900 = vld [vmem:[#allocation2 + $0x180] sm:$0xff]
  %v5901 = vld [vmem:[#allocation2 + $0x188] sm:$0xff]
  %v5902 = vld [vmem:[#allocation2 + $0x190] sm:$0xff]
  %v5903 = vld [vmem:[#allocation2 + $0x198] sm:$0xff]
  %v5904 = vld [vmem:[#allocation2 + $0x1a0] sm:$0xff]
  %v5905 = vld [vmem:[#allocation2 + $0x1a8] sm:$0xff]
  %v5906 = vld [vmem:[#allocation2 + $0x1b0] sm:$0xff]
  %v5907 = vld [vmem:[#allocation2 + $0x1b8] sm:$0xff]
  %v5908 = vld [vmem:[#allocation2 + $0x1c0] sm:$0xff]
  %v5909 = vld [vmem:[#allocation2 + $0x1c8] sm:$0xff]
  %v5910 = vld [vmem:[#allocation2 + $0x1d0] sm:$0xff]
  %v5911 = vld [vmem:[#allocation2 + $0x1d8] sm:$0xff]
  %v5912 = vld [vmem:[#allocation2 + $0x1e0] sm:$0xff]
  %v5913 = vld [vmem:[#allocation2 + $0x1e8] sm:$0xff]
  %v5914 = vld [vmem:[#allocation2 + $0x1f0] sm:$0xff]
  %v5915 = vld [vmem:[#allocation2 + $0x1f8] sm:$0xff]
  %v5916 = vadd.f32 %v5852, %v5853
  %v5917 = vadd.f32 %v5916, %v5854
  %v5918 = vadd.f32 %v5917, %v5855
  %v5919 = vadd.f32 %v5918, %v5856
  %v5920 = vadd.f32 %v5919, %v5857
  %v5921 = vadd.f32 %v5920, %v5858
  %v5922 = vadd.f32 %v5921, %v5859
  %v5923 = vadd.f32 %v5922, %v5860
  %v5924 = vadd.f32 %v5923, %v5861
  %v5925 = vadd.f32 %v5924, %v5862
  %v5926 = vadd.f32 %v5925, %v5863
  %v5927 = vadd.f32 %v5926, %v5864
  %v5928 = vadd.f32 %v5927, %v5865
  %v5929 = vadd.f32 %v5928, %v5866
  %v5930 = vadd.f32 %v5929, %v5867
  %v5931 = vadd.f32 %v5930, %v5868
  %v5932 = vadd.f32 %v5931, %v5869
  %v5933 = vadd.f32 %v5932, %v5870
  %v5934 = vadd.f32 %v5933, %v5871
  %v5935 = vadd.f32 %v5934, %v5872
  %v5936 = vadd.f32 %v5935, %v5873
  %v5937 = vadd.f32 %v5936, %v5874
  %v5938 = vadd.f32 %v5937, %v5875
  %v5939 = vadd.f32 %v5938, %v5876
  %v5940 = vadd.f32 %v5939, %v5877
  %v5941 = vadd.f32 %v5940, %v5878
  %v5942 = vadd.f32 %v5941, %v5879
  %v5943 = vadd.f32 %v5942, %v5880
  %v5944 = vadd.f32 %v5943, %v5881
  %v5945 = vadd.f32 %v5944, %v5882
  %v5946 = vadd.f32 %v5945, %v5883
  %v5947 = vadd.f32 %v5946, %v5884
  %v5948 = vadd.f32 %v5947, %v5885
  %v5949 = vadd.f32 %v5948, %v5886
  %v5950 = vadd.f32 %v5949, %v5887
  %v5951 = vadd.f32 %v5950, %v5888
  %v5952 = vadd.f32 %v5951, %v5889
  %v5953 = vadd.f32 %v5952, %v5890
  %v5954 = vadd.f32 %v5953, %v5891
  %v5955 = vadd.f32 %v5954, %v5892
  %v5956 = vadd.f32 %v5955, %v5893
  %v5957 = vadd.f32 %v5956, %v5894
  %v5958 = vadd.f32 %v5957, %v5895
  %v5959 = vadd.f32 %v5958, %v5896
  %v5960 = vadd.f32 %v5959, %v5897
  %v5961 = vadd.f32 %v5960, %v5898
  %v5962 = vadd.f32 %v5961, %v5899
  %v5963 = vadd.f32 %v5962, %v5900
  %v5964 = vadd.f32 %v5963, %v5901
  %v5965 = vadd.f32 %v5964, %v5902
  %v5966 = vadd.f32 %v5965, %v5903
  %v5967 = vadd.f32 %v5966, %v5904
  %v5968 = vadd.f32 %v5967, %v5905
  %v5969 = vadd.f32 %v5968, %v5906
  %v5970 = vadd.f32 %v5969, %v5907
  %v5971 = vadd.f32 %v5970, %v5908
  %v5972 = vadd.f32 %v5971, %v5909
  %v5973 = vadd.f32 %v5972, %v5910
  %v5974 = vadd.f32 %v5973, %v5911
  %v5975 = vadd.f32 %v5974, %v5912
  %v5976 = vadd.f32 %v5975, %v5913
  %v5977 = vadd.f32 %v5976, %v5914
  %v5978 = vadd.f32 %v5977, %v5915
  %v5979 = vrot.slane %v5978, 4
  %v5980 = vadd.f32 %v5978, %v5979
  %v5981 = vrot.slane %v5980, 2
  %v5982 = vadd.f32 %v5980, %v5981
  %v5983 = vrot.slane %v5982, 1
  %v5984 = vadd.f32 %v5982, %v5983
  %5985 = vst [vmem:[%s2] sm:$0x1] %v5984
  %v5986 = vmul.f32 %v5852, %v5852
  %v5987 = vmul.f32 %v5853, %v5853
  %v5988 = vmul.f32 %v5854, %v5854
  %v5989 = vmul.f32 %v5855, %v5855
  %v5990 = vmul.f32 %v5856, %v5856
  %v5991 = vmul.f32 %v5857, %v5857
  %v5992 = vmul.f32 %v5858, %v5858
  %v5993 = vmul.f32 %v5859, %v5859
  %v5994 = vmul.f32 %v5860, %v5860
  %v5995 = vmul.f32 %v5861, %v5861
  %v5996 = vmul.f32 %v5862, %v5862
  %v5997 = vmul.f32 %v5863, %v5863
  %v5998 = vmul.f32 %v5864, %v5864
  %v5999 = vmul.f32 %v5865, %v5865
  %v6000 = vmul.f32 %v5866, %v5866
  %v6001 = vmul.f32 %v5867, %v5867
  %v6002 = vmul.f32 %v5868, %v5868
  %v6003 = vmul.f32 %v5869, %v5869
  %v6004 = vmul.f32 %v5870, %v5870
  %v6005 = vmul.f32 %v5871, %v5871
  %v6006 = vmul.f32 %v5872, %v5872
  %v6007 = vmul.f32 %v5873, %v5873
  %v6008 = vmul.f32 %v5874, %v5874
  %v6009 = vmul.f32 %v5875, %v5875
  %v6010 = vmul.f32 %v5876, %v5876
  %v6011 = vmul.f32 %v5877, %v5877
  %v6012 = vmul.f32 %v5878, %v5878
  %v6013 = vmul.f32 %v5879, %v5879
  %v6014 = vmul.f32 %v5880, %v5880
  %v6015 = vmul.f32 %v5881, %v5881
  %v6016 = vmul.f32 %v5882, %v5882
  %v6017 = vmul.f32 %v5883, %v5883
  %v6018 = vmul.f32 %v5884, %v5884
  %v6019 = vmul.f32 %v5885, %v5885
  %v6020 = vmul.f32 %v5886, %v5886
  %v6021 = vmul.f32 %v5887, %v5887
  %v6022 = vmul.f32 %v5888, %v5888
  %v6023 = vmul.f32 %v5889, %v5889
  %v6024 = vmul.f32 %v5890, %v5890
  %v6025 = vmul.f32 %v5891, %v5891
  %v6026 = vmul.f32 %v5892, %v5892
  %v6027 = vmul.f32 %v5893, %v5893
  %v6028 = vmul.f32 %v5894, %v5894
  %v6029 = vmul.f32 %v5895, %v5895
  %v6030 = vmul.f32 %v5896, %v5896
  %v6031 = vmul.f32 %v5897, %v5897
  %v6032 = vmul.f32 %v5898, %v5898
  %v6033 = vmul.f32 %v5899, %v5899
  %v6034 = vmul.f32 %v5900, %v5900
  %v6035 = vmul.f32 %v5901, %v5901
  %v6036 = vmul.f32 %v5902, %v5902
  %v6037 = vmul.f32 %v5903, %v5903
  %v6038 = vmul.f32 %v5904, %v5904
  %v6039 = vmul.f32 %v5905, %v5905
  %v6040 = vmul.f32 %v5906, %v5906
  %v6041 = vmul.f32 %v5907, %v5907
  %v6042 = vmul.f32 %v5908, %v5908
  %v6043 = vmul.f32 %v5909, %v5909
  %v6044 = vmul.f32 %v5910, %v5910
  %v6045 = vmul.f32 %v5911, %v5911
  %v6046 = vmul.f32 %v5912, %v5912
  %v6047 = vmul.f32 %v5913, %v5913
  %v6048 = vmul.f32 %v5914, %v5914
  %v6049 = vmul.f32 %v5915, %v5915
  %v6050 = vadd.f32 %v5986, %v5987
  %v6051 = vadd.f32 %v6050, %v5988
  %v6052 = vadd.f32 %v6051, %v5989
  %v6053 = vadd.f32 %v6052, %v5990
  %v6054 = vadd.f32 %v6053, %v5991
  %v6055 = vadd.f32 %v6054, %v5992
  %v6056 = vadd.f32 %v6055, %v5993
  %v6057 = vadd.f32 %v6056, %v5994
  %v6058 = vadd.f32 %v6057, %v5995
  %v6059 = vadd.f32 %v6058, %v5996
  %v6060 = vadd.f32 %v6059, %v5997
  %v6061 = vadd.f32 %v6060, %v5998
  %v6062 = vadd.f32 %v6061, %v5999
  %v6063 = vadd.f32 %v6062, %v6000
  %v6064 = vadd.f32 %v6063, %v6001
  %v6065 = vadd.f32 %v6064, %v6002
  %v6066 = vadd.f32 %v6065, %v6003
  %v6067 = vadd.f32 %v6066, %v6004
  %v6068 = vadd.f32 %v6067, %v6005
  %v6069 = vadd.f32 %v6068, %v6006
  %v6070 = vadd.f32 %v6069, %v6007
  %v6071 = vadd.f32 %v6070, %v6008
  %v6072 = vadd.f32 %v6071, %v6009
  %v6073 = vadd.f32 %v6072, %v6010
  %v6074 = vadd.f32 %v6073, %v6011
  %v6075 = vadd.f32 %v6074, %v6012
  %v6076 = vadd.f32 %v6075, %v6013
  %v6077 = vadd.f32 %v6076, %v6014
  %v6078 = vadd.f32 %v6077, %v6015
  %v6079 = vadd.f32 %v6078, %v6016
  %v6080 = vadd.f32 %v6079, %v6017
  %v6081 = vadd.f32 %v6080, %v6018
  %v6082 = vadd.f32 %v6081, %v6019
  %v6083 = vadd.f32 %v6082, %v6020
  %v6084 = vadd.f32 %v6083, %v6021
  %v6085 = vadd.f32 %v6084, %v6022
  %v6086 = vadd.f32 %v6085, %v6023
  %v6087 = vadd.f32 %v6086, %v6024
  %v6088 = vadd.f32 %v6087, %v6025
  %v6089 = vadd.f32 %v6088, %v6026
  %v6090 = vadd.f32 %v6089, %v6027
  %v6091 = vadd.f32 %v6090, %v6028
  %v6092 = vadd.f32 %v6091, %v6029
  %v6093 = vadd.f32 %v6092, %v6030
  %v6094 = vadd.f32 %v6093, %v6031
  %v6095 = vadd.f32 %v6094, %v6032
  %v6096 = vadd.f32 %v6095, %v6033
  %v6097 = vadd.f32 %v6096, %v6034
  %v6098 = vadd.f32 %v6097, %v6035
  %v6099 = vadd.f32 %v6098, %v6036
  %v6100 = vadd.f32 %v6099, %v6037
  %v6101 = vadd.f32 %v6100, %v6038
  %v6102 = vadd.f32 %v6101, %v6039
  %v6103 = vadd.f32 %v6102, %v6040
  %v6104 = vadd.f32 %v6103, %v6041
  %v6105 = vadd.f32 %v6104, %v6042
  %v6106 = vadd.f32 %v6105, %v6043
  %v6107 = vadd.f32 %v6106, %v6044
  %v6108 = vadd.f32 %v6107, %v6045
  %v6109 = vadd.f32 %v6108, %v6046
  %v6110 = vadd.f32 %v6109, %v6047
  %v6111 = vadd.f32 %v6110, %v6048
  %v6112 = vadd.f32 %v6111, %v6049
  %v6113 = vrot.slane %v6112, 4
  %v6114 = vadd.f32 %v6112, %v6113
  %v6115 = vrot.slane %v6114, 2
  %v6116 = vadd.f32 %v6114, %v6115
  %v6117 = vrot.slane %v6116, 1
  %v6118 = vadd.f32 %v6116, %v6117
  %6119 = vst [vmem:[%s3] sm:$0x1] %v6118
  // Predicated region
  $region10: #{t_lsu_forward.2} parent=0 // pred_check
    _
  $region11: #{t_lsu_forward.2} parent=0 // pred_check_branch
    %6121 = sbr.rel (0) target = $region13
  $region12: #{t_lsu_forward.2} parent=0 // pred_region
    _
  $region13: #{t_lsu_forward.2} parent=0 // pred_fallthru
    _
  // Predicated region
  $region14: #{t_lsu_forward.2} parent=0 // pred_check
    _
  $region15: #{t_lsu_forward.2} parent=0 // pred_check_branch
    %6123 = sbr.rel (0) target = $region17
  $region16: #{t_lsu_forward.2} parent=0 // pred_region
    _
  $region17: #{t_lsu_forward.2} parent=0 // pred_fallthru
    _
  // Predicated region
  $region18: #{t_lsu_forward.2} parent=0 // pred_check
    _
  $region19: #{t_lsu_forward.2} parent=0 // pred_check_branch
    %6125 = sbr.rel (0) target = $region21
  $region20: #{t_lsu_forward.2} parent=0 // pred_region
    _
  $region21: #{t_lsu_forward.2} parent=0 // pred_fallthru
    _
  // Predicated region
  $region22: #{t_lsu_forward.2} parent=0 // pred_check
    _
  $region23: #{t_lsu_forward.2} parent=0 // pred_check_branch
    %6127 = sbr.rel (0) target = $region25
  $region24: #{t_lsu_forward.2} parent=0 // pred_region
    _
  $region25: #{t_lsu_forward.2} parent=0 // pred_fallthru
    _

// kernel: t_lsu_forward.3
$region0: #{t_lsu_forward.3}
  #allocation0 [shape = 'u32[]', space=smem, size = 0x4, offset = 0x4, fixed_abs, tag = 'smem constant byte address 0x4 - core index']
  #allocation1 [shape = 'u32[72,128]{1,0:T(1,128)}', space=vmem, size = 0x9000, scoped, tag = 'internal scratch']
  %s0 = inlined_call_operand.vmem [shape: f32[2,24,16,4], index: 0, kind: input, shape index: {}]
  %s1 = inlined_call_operand.vmem [shape: f32[9,4,128], index: 1, kind: input, shape index: {}]
  %s2 = inlined_call_operand.vmem [shape: f32[1,128], index: 2, kind: input, shape index: {}]
  %s3 = inlined_call_operand.vmem [shape: f32[512,128], index: 3, kind: output, shape index: {}]
  %s4 = sld [smem:[#allocation0]]
  $region22: #{t_lsu_forward.3} parent=0
    _
  %s6 = ssub.s32 1, %s4
  %s7 = scalar_select 0, %s6, %s4
  // Predicated region
  $region2: #{t_lsu_forward.3} parent=0 // pred_check
    _
  $region3: #{t_lsu_forward.3} parent=0 // pred_check_branch
    %9 = sbr.rel (0) target = $region5
  $region4: #{t_lsu_forward.3} parent=0 // pred_region
    _
  $region5: #{t_lsu_forward.3} parent=0 // pred_fallthru
    _
  // Predicated region
  $region6: #{t_lsu_forward.3} parent=0 // pred_check
    _
  $region7: #{t_lsu_forward.3} parent=0 // pred_check_branch
    %11 = sbr.rel (0) target = $region9
  $region8: #{t_lsu_forward.3} parent=0 // pred_region
    _
  $region9: #{t_lsu_forward.3} parent=0 // pred_fallthru
    _
  // Predicated region
  $region10: #{t_lsu_forward.3} parent=0 // pred_check
    _
  $region11: #{t_lsu_forward.3} parent=0 // pred_check_branch
    %13 = sbr.rel (0) target = $region13
  $region12: #{t_lsu_forward.3} parent=0 // pred_region
    _
  $region13: #{t_lsu_forward.3} parent=0 // pred_fallthru
    _
  %v14 = vld [vmem:[%s0] sm:$0xff]
  %v15 = vld [vmem:[%s0 + $0x8] sm:$0xff]
  %v16 = vld [vmem:[%s0 + $0x10] sm:$0xff]
  %v17 = vld [vmem:[%s0 + $0x18] sm:$0xff]
  %v18 = vld [vmem:[%s0 + $0x20] sm:$0xff]
  %v19 = vld [vmem:[%s0 + $0x28] sm:$0xff]
  %v20 = vld [vmem:[%s0 + $0x30] sm:$0xff]
  %v21 = vld [vmem:[%s0 + $0x38] sm:$0xff]
  %v22 = vld [vmem:[%s0 + $0x40] sm:$0xff]
  %v23 = vld [vmem:[%s0 + $0x48] sm:$0xff]
  %v24 = vld [vmem:[%s0 + $0x50] sm:$0xff]
  %v25 = vld [vmem:[%s0 + $0x58] sm:$0xff]
  %v26 = vld [vmem:[%s0 + $0x60] sm:$0xff]
  %v27 = vld [vmem:[%s0 + $0x68] sm:$0xff]
  %v28 = vld [vmem:[%s0 + $0x70] sm:$0xff]
  %v29 = vld [vmem:[%s0 + $0x78] sm:$0xff]
  %v30 = vld [vmem:[%s0 + $0x80] sm:$0xff]
  %v31 = vld [vmem:[%s0 + $0x88] sm:$0xff]
  %v32 = vld [vmem:[%s0 + $0x90] sm:$0xff]
  %v33 = vld [vmem:[%s0 + $0x98] sm:$0xff]
  %v34 = vld [vmem:[%s0 + $0xa0] sm:$0xff]
  %v35 = vld [vmem:[%s0 + $0xa8] sm:$0xff]
  %v36 = vld [vmem:[%s0 + $0xb0] sm:$0xff]
  %v37 = vld [vmem:[%s0 + $0xb8] sm:$0xff]
  %v38 = vld [vmem:[%s0 + $0xc0] sm:$0xff]
  %v39 = vld [vmem:[%s0 + $0xc8] sm:$0xff]
  %v40 = vld [vmem:[%s0 + $0xd0] sm:$0xff]
  %v41 = vld [vmem:[%s0 + $0xd8] sm:$0xff]
  %v42 = vld [vmem:[%s0 + $0xe0] sm:$0xff]
  %v43 = vld [vmem:[%s0 + $0xe8] sm:$0xff]
  %v44 = vld [vmem:[%s0 + $0xf0] sm:$0xff]
  %v45 = vld [vmem:[%s0 + $0xf8] sm:$0xff]
  %v46 = vld [vmem:[%s0 + $0x180] sm:$0xff]
  %v47 = vld [vmem:[%s0 + $0x188] sm:$0xff]
  %v48 = vld [vmem:[%s0 + $0x190] sm:$0xff]
  %v49 = vld [vmem:[%s0 + $0x198] sm:$0xff]
  %v50 = vld [vmem:[%s0 + $0x1a0] sm:$0xff]
  %v51 = vld [vmem:[%s0 + $0x1a8] sm:$0xff]
  %v52 = vld [vmem:[%s0 + $0x1b0] sm:$0xff]
  %v53 = vld [vmem:[%s0 + $0x1b8] sm:$0xff]
  %v54 = vld [vmem:[%s0 + $0x1c0] sm:$0xff]
  %v55 = vld [vmem:[%s0 + $0x1c8] sm:$0xff]
  %v56 = vld [vmem:[%s0 + $0x1d0] sm:$0xff]
  %v57 = vld [vmem:[%s0 + $0x1d8] sm:$0xff]
  %v58 = vld [vmem:[%s0 + $0x1e0] sm:$0xff]
  %v59 = vld [vmem:[%s0 + $0x1e8] sm:$0xff]
  %v60 = vld [vmem:[%s0 + $0x1f0] sm:$0xff]
  %v61 = vld [vmem:[%s0 + $0x1f8] sm:$0xff]
  %v62 = vld [vmem:[%s0 + $0x200] sm:$0xff]
  %v63 = vld [vmem:[%s0 + $0x208] sm:$0xff]
  %v64 = vld [vmem:[%s0 + $0x210] sm:$0xff]
  %v65 = vld [vmem:[%s0 + $0x218] sm:$0xff]
  %v66 = vld [vmem:[%s0 + $0x220] sm:$0xff]
  %v67 = vld [vmem:[%s0 + $0x228] sm:$0xff]
  %v68 = vld [vmem:[%s0 + $0x230] sm:$0xff]
  %v69 = vld [vmem:[%s0 + $0x238] sm:$0xff]
  %v70 = vld [vmem:[%s0 + $0x240] sm:$0xff]
  %v71 = vld [vmem:[%s0 + $0x248] sm:$0xff]
  %v72 = vld [vmem:[%s0 + $0x250] sm:$0xff]
  %v73 = vld [vmem:[%s0 + $0x258] sm:$0xff]
  %v74 = vld [vmem:[%s0 + $0x260] sm:$0xff]
  %v75 = vld [vmem:[%s0 + $0x268] sm:$0xff]
  %v76 = vld [vmem:[%s0 + $0x270] sm:$0xff]
  %v77 = vld [vmem:[%s0 + $0x278] sm:$0xff]
  %v78 = vld [vmem:[%s2] sm:$0x1]
  %v80 = vperm.slane %v78, 0
  %v82 = vld [vmem:[%s1] sm:$0xf]
  %vm83 = vcmask 31744
  %v85 = vsel %vm83, %v14, 0
  %v88 = vsel %vm83, %v15, 0
  %v91 = vsel %vm83, %v16, 0
  %v94 = vsel %vm83, %v17, 0
  %v97 = vsel %vm83, %v18, 0
  %v100 = vsel %vm83, %v19, 0
  %v103 = vsel %vm83, %v20, 0
  %v106 = vsel %vm83, %v21, 0
  %v109 = vsel %vm83, %v22, 0
  %v112 = vsel %vm83, %v23, 0
  %v115 = vsel %vm83, %v24, 0
  %v118 = vsel %vm83, %v25, 0
  %v121 = vsel %vm83, %v26, 0
  %v124 = vsel %vm83, %v27, 0
  %v127 = vsel %vm83, %v28, 0
  %v130 = vsel %vm83, %v29, 0
  %v133 = vsel %vm83, %v30, 0
  %v136 = vsel %vm83, %v31, 0
  %v139 = vsel %vm83, %v32, 0
  %v142 = vsel %vm83, %v33, 0
  %v145 = vsel %vm83, %v34, 0
  %v148 = vsel %vm83, %v35, 0
  %v151 = vsel %vm83, %v36, 0
  %v154 = vsel %vm83, %v37, 0
  %v157 = vsel %vm83, %v38, 0
  %v160 = vsel %vm83, %v39, 0
  %v163 = vsel %vm83, %v40, 0
  %v166 = vsel %vm83, %v41, 0
  %v169 = vsel %vm83, %v42, 0
  %v172 = vsel %vm83, %v43, 0
  %v175 = vsel %vm83, %v44, 0
  %v178 = vsel %vm83, %v45, 0
  %v181 = vsel %vm83, %v46, 0
  %v184 = vsel %vm83, %v47, 0
  %v187 = vsel %vm83, %v48, 0
  %v190 = vsel %vm83, %v49, 0
  %v193 = vsel %vm83, %v50, 0
  %v196 = vsel %vm83, %v51, 0
  %v199 = vsel %vm83, %v52, 0
  %v202 = vsel %vm83, %v53, 0
  %v205 = vsel %vm83, %v54, 0
  %v208 = vsel %vm83, %v55, 0
  %v211 = vsel %vm83, %v56, 0
  %v214 = vsel %vm83, %v57, 0
  %v217 = vsel %vm83, %v58, 0
  %v220 = vsel %vm83, %v59, 0
  %v223 = vsel %vm83, %v60, 0
  %v226 = vsel %vm83, %v61, 0
  %v229 = vsel %vm83, %v62, 0
  %v232 = vsel %vm83, %v63, 0
  %v235 = vsel %vm83, %v64, 0
  %v238 = vsel %vm83, %v65, 0
  %v241 = vsel %vm83, %v66, 0
  %v244 = vsel %vm83, %v67, 0
  %v247 = vsel %vm83, %v68, 0
  %v250 = vsel %vm83, %v69, 0
  %v253 = vsel %vm83, %v70, 0
  %v256 = vsel %vm83, %v71, 0
  %v259 = vsel %vm83, %v72, 0
  %v262 = vsel %vm83, %v73, 0
  %v265 = vsel %vm83, %v74, 0
  %v268 = vsel %vm83, %v75, 0
  %v271 = vsel %vm83, %v76, 0
  %v274 = vsel %vm83, %v77, 0
  %vm276 = vcmask 1043456
  %v278 = vsel %vm276, %v82, 0
  %280 = vmatpush.msra.mxu0 0.0
  %281 = vmatpush.msra.mxu0 0.0
  %282 = vmatpush.msra.mxu0 0.0
  %283 = vmatpush.msra.mxu0 0.0
  %284 = vmatpush.msra.mxu0 0.0
  %285 = vmatpush.msra.mxu0 0.0
  %286 = vmatpush.msra.mxu0 0.0
  %287 = vmatpush.msra.mxu0 0.0
  %288 = vmatpush.msra.mxu0 0.0
  %289 = vmatpush.msra.mxu0 0.0
  %290 = vmatpush.msra.mxu0 0.0
  %291 = vmatpush.msra.mxu0 0.0
  %292 = vmatpush.msra.mxu0 0.0
  %293 = vmatpush.msra.mxu0 0.0
  %294 = vmatpush.msra.mxu0 0.0
  %295 = vmatpush.msra.mxu0 %v278
  %296 = vmatmul.f32.gmra.mxu0 %v85
  %v297 = vpop.f32.mrf.mxu0
  %v298 = vadd.f32 0.0, %v297
  %299 = vmatmul.f32.gmra.mxu0 %v88
  %v300 = vpop.f32.mrf.mxu0
  %v301 = vadd.f32 0.0, %v300
  %302 = vmatmul.f32.gmra.mxu0 %v91
  %v303 = vpop.f32.mrf.mxu0
  %v304 = vadd.f32 0.0, %v303
  %305 = vmatmul.f32.gmra.mxu0 %v94
  %v306 = vpop.f32.mrf.mxu0
  %v307 = vadd.f32 0.0, %v306
  %308 = vmatmul.f32.gmra.mxu0 %v97
  %v309 = vpop.f32.mrf.mxu0
  %v310 = vadd.f32 0.0, %v309
  %311 = vmatmul.f32.gmra.mxu0 %v100
  %v312 = vpop.f32.mrf.mxu0
  %v313 = vadd.f32 0.0, %v312
  %314 = vmatmul.f32.gmra.mxu0 %v103
  %v315 = vpop.f32.mrf.mxu0
  %v316 = vadd.f32 0.0, %v315
  %317 = vmatmul.f32.gmra.mxu0 %v106
  %v318 = vpop.f32.mrf.mxu0
  %v319 = vadd.f32 0.0, %v318
  %320 = vmatmul.f32.gmra.mxu0 %v109
  %v321 = vpop.f32.mrf.mxu0
  %v322 = vadd.f32 0.0, %v321
  %323 = vmatmul.f32.gmra.mxu0 %v112
  %v324 = vpop.f32.mrf.mxu0
  %v325 = vadd.f32 0.0, %v324
  %326 = vmatmul.f32.gmra.mxu0 %v115
  %v327 = vpop.f32.mrf.mxu0
  %v328 = vadd.f32 0.0, %v327
  %329 = vmatmul.f32.gmra.mxu0 %v118
  %v330 = vpop.f32.mrf.mxu0
  %v331 = vadd.f32 0.0, %v330
  %332 = vmatmul.f32.gmra.mxu0 %v121
  %v333 = vpop.f32.mrf.mxu0
  %v334 = vadd.f32 0.0, %v333
  %335 = vmatmul.f32.gmra.mxu0 %v124
  %v336 = vpop.f32.mrf.mxu0
  %v337 = vadd.f32 0.0, %v336
  %338 = vmatmul.f32.gmra.mxu0 %v127
  %v339 = vpop.f32.mrf.mxu0
  %v340 = vadd.f32 0.0, %v339
  %341 = vmatmul.f32.gmra.mxu0 %v130
  %v342 = vpop.f32.mrf.mxu0
  %v343 = vadd.f32 0.0, %v342
  %344 = vmatmul.f32.gmra.mxu0 %v133
  %v345 = vpop.f32.mrf.mxu0
  %v346 = vadd.f32 0.0, %v345
  %347 = vmatmul.f32.gmra.mxu0 %v136
  %v348 = vpop.f32.mrf.mxu0
  %v349 = vadd.f32 0.0, %v348
  %350 = vmatmul.f32.gmra.mxu0 %v139
  %v351 = vpop.f32.mrf.mxu0
  %v352 = vadd.f32 0.0, %v351
  %353 = vmatmul.f32.gmra.mxu0 %v142
  %v354 = vpop.f32.mrf.mxu0
  %v355 = vadd.f32 0.0, %v354
  %356 = vmatmul.f32.gmra.mxu0 %v145
  %v357 = vpop.f32.mrf.mxu0
  %v358 = vadd.f32 0.0, %v357
  %359 = vmatmul.f32.gmra.mxu0 %v148
  %v360 = vpop.f32.mrf.mxu0
  %v361 = vadd.f32 0.0, %v360
  %362 = vmatmul.f32.gmra.mxu0 %v151
  %v363 = vpop.f32.mrf.mxu0
  %v364 = vadd.f32 0.0, %v363
  %365 = vmatmul.f32.gmra.mxu0 %v154
  %v366 = vpop.f32.mrf.mxu0
  %v367 = vadd.f32 0.0, %v366
  %368 = vmatmul.f32.gmra.mxu0 %v157
  %v369 = vpop.f32.mrf.mxu0
  %v370 = vadd.f32 0.0, %v369
  %371 = vmatmul.f32.gmra.mxu0 %v160
  %v372 = vpop.f32.mrf.mxu0
  %v373 = vadd.f32 0.0, %v372
  %374 = vmatmul.f32.gmra.mxu0 %v163
  %v375 = vpop.f32.mrf.mxu0
  %v376 = vadd.f32 0.0, %v375
  %377 = vmatmul.f32.gmra.mxu0 %v166
  %v378 = vpop.f32.mrf.mxu0
  %v379 = vadd.f32 0.0, %v378
  %380 = vmatmul.f32.gmra.mxu0 %v169
  %v381 = vpop.f32.mrf.mxu0
  %v382 = vadd.f32 0.0, %v381
  %383 = vmatmul.f32.gmra.mxu0 %v172
  %v384 = vpop.f32.mrf.mxu0
  %v385 = vadd.f32 0.0, %v384
  %386 = vmatmul.f32.gmra.mxu0 %v175
  %v387 = vpop.f32.mrf.mxu0
  %v388 = vadd.f32 0.0, %v387
  %389 = vmatmul.f32.gmra.mxu0 %v178
  %v390 = vpop.f32.mrf.mxu0
  %v391 = vadd.f32 0.0, %v390
  %392 = vmatmul.f32.gmra.mxu0 %v181
  %v393 = vpop.f32.mrf.mxu0
  %v394 = vadd.f32 0.0, %v393
  %395 = vmatmul.f32.gmra.mxu0 %v184
  %v396 = vpop.f32.mrf.mxu0
  %v397 = vadd.f32 0.0, %v396
  %398 = vmatmul.f32.gmra.mxu0 %v187
  %v399 = vpop.f32.mrf.mxu0
  %v400 = vadd.f32 0.0, %v399
  %401 = vmatmul.f32.gmra.mxu0 %v190
  %v402 = vpop.f32.mrf.mxu0
  %v403 = vadd.f32 0.0, %v402
  %404 = vmatmul.f32.gmra.mxu0 %v193
  %v405 = vpop.f32.mrf.mxu0
  %v406 = vadd.f32 0.0, %v405
  %407 = vmatmul.f32.gmra.mxu0 %v196
  %v408 = vpop.f32.mrf.mxu0
  %v409 = vadd.f32 0.0, %v408
  %410 = vmatmul.f32.gmra.mxu0 %v199
  %v411 = vpop.f32.mrf.mxu0
  %v412 = vadd.f32 0.0, %v411
  %413 = vmatmul.f32.gmra.mxu0 %v202
  %v414 = vpop.f32.mrf.mxu0
  %v415 = vadd.f32 0.0, %v414
  %416 = vmatmul.f32.gmra.mxu0 %v205
  %v417 = vpop.f32.mrf.mxu0
  %v418 = vadd.f32 0.0, %v417
  %419 = vmatmul.f32.gmra.mxu0 %v208
  %v420 = vpop.f32.mrf.mxu0
  %v421 = vadd.f32 0.0, %v420
  %422 = vmatmul.f32.gmra.mxu0 %v211
  %v423 = vpop.f32.mrf.mxu0
  %v424 = vadd.f32 0.0, %v423
  %425 = vmatmul.f32.gmra.mxu0 %v214
  %v426 = vpop.f32.mrf.mxu0
  %v427 = vadd.f32 0.0, %v426
  %428 = vmatmul.f32.gmra.mxu0 %v217
  %v429 = vpop.f32.mrf.mxu0
  %v430 = vadd.f32 0.0, %v429
  %431 = vmatmul.f32.gmra.mxu0 %v220
  %v432 = vpop.f32.mrf.mxu0
  %v433 = vadd.f32 0.0, %v432
  %434 = vmatmul.f32.gmra.mxu0 %v223
  %v435 = vpop.f32.mrf.mxu0
  %v436 = vadd.f32 0.0, %v435
  %437 = vmatmul.f32.gmra.mxu0 %v226
  %v438 = vpop.f32.mrf.mxu0
  %v439 = vadd.f32 0.0, %v438
  %440 = vmatmul.f32.gmra.mxu0 %v229
  %v441 = vpop.f32.mrf.mxu0
  %v442 = vadd.f32 0.0, %v441
  %443 = vmatmul.f32.gmra.mxu0 %v232
  %v444 = vpop.f32.mrf.mxu0
  %v445 = vadd.f32 0.0, %v444
  %446 = vmatmul.f32.gmra.mxu0 %v235
  %v447 = vpop.f32.mrf.mxu0
  %v448 = vadd.f32 0.0, %v447
  %449 = vmatmul.f32.gmra.mxu0 %v238
  %v450 = vpop.f32.mrf.mxu0
  %v451 = vadd.f32 0.0, %v450
  %452 = vmatmul.f32.gmra.mxu0 %v241
  %v453 = vpop.f32.mrf.mxu0
  %v454 = vadd.f32 0.0, %v453
  %455 = vmatmul.f32.gmra.mxu0 %v244
  %v456 = vpop.f32.mrf.mxu0
  %v457 = vadd.f32 0.0, %v456
  %458 = vmatmul.f32.gmra.mxu0 %v247
  %v459 = vpop.f32.mrf.mxu0
  %v460 = vadd.f32 0.0, %v459
  %461 = vmatmul.f32.gmra.mxu0 %v250
  %v462 = vpop.f32.mrf.mxu0
  %v463 = vadd.f32 0.0, %v462
  %464 = vmatmul.f32.gmra.mxu0 %v253
  %v465 = vpop.f32.mrf.mxu0
  %v466 = vadd.f32 0.0, %v465
  %467 = vmatmul.f32.gmra.mxu0 %v256
  %v468 = vpop.f32.mrf.mxu0
  %v469 = vadd.f32 0.0, %v468
  %470 = vmatmul.f32.gmra.mxu0 %v259
  %v471 = vpop.f32.mrf.mxu0
  %v472 = vadd.f32 0.0, %v471
  %473 = vmatmul.f32.gmra.mxu0 %v262
  %v474 = vpop.f32.mrf.mxu0
  %v475 = vadd.f32 0.0, %v474
  %476 = vmatmul.f32.gmra.mxu0 %v265
  %v477 = vpop.f32.mrf.mxu0
  %v478 = vadd.f32 0.0, %v477
  %479 = vmatmul.f32.gmra.mxu0 %v268
  %v480 = vpop.f32.mrf.mxu0
  %v481 = vadd.f32 0.0, %v480
  %482 = vmatmul.f32.gmra.mxu0 %v271
  %v483 = vpop.f32.mrf.mxu0
  %v484 = vadd.f32 0.0, %v483
  %485 = vmatmul.f32.gmra.mxu0 %v274
  %v486 = vpop.f32.mrf.mxu0
  %v487 = vadd.f32 0.0, %v486
  %488 = vdwg.mxu0
  %v489 = vadd.f32 %v80, %v298
  %v490 = vadd.f32 %v80, %v301
  %v491 = vadd.f32 %v80, %v304
  %v492 = vadd.f32 %v80, %v307
  %v493 = vadd.f32 %v80, %v310
  %v494 = vadd.f32 %v80, %v313
  %v495 = vadd.f32 %v80, %v316
  %v496 = vadd.f32 %v80, %v319
  %v497 = vadd.f32 %v80, %v322
  %v498 = vadd.f32 %v80, %v325
  %v499 = vadd.f32 %v80, %v328
  %v500 = vadd.f32 %v80, %v331
  %v501 = vadd.f32 %v80, %v334
  %v502 = vadd.f32 %v80, %v337
  %v503 = vadd.f32 %v80, %v340
  %v504 = vadd.f32 %v80, %v343
  %v505 = vadd.f32 %v80, %v346
  %v506 = vadd.f32 %v80, %v349
  %v507 = vadd.f32 %v80, %v352
  %v508 = vadd.f32 %v80, %v355
  %v509 = vadd.f32 %v80, %v358
  %v510 = vadd.f32 %v80, %v361
  %v511 = vadd.f32 %v80, %v364
  %v512 = vadd.f32 %v80, %v367
  %v513 = vadd.f32 %v80, %v370
  %v514 = vadd.f32 %v80, %v373
  %v515 = vadd.f32 %v80, %v376
  %v516 = vadd.f32 %v80, %v379
  %v517 = vadd.f32 %v80, %v382
  %v518 = vadd.f32 %v80, %v385
  %v519 = vadd.f32 %v80, %v388
  %v520 = vadd.f32 %v80, %v391
  %v521 = vadd.f32 %v80, %v394
  %v522 = vadd.f32 %v80, %v397
  %v523 = vadd.f32 %v80, %v400
  %v524 = vadd.f32 %v80, %v403
  %v525 = vadd.f32 %v80, %v406
  %v526 = vadd.f32 %v80, %v409
  %v527 = vadd.f32 %v80, %v412
  %v528 = vadd.f32 %v80, %v415
  %v529 = vadd.f32 %v80, %v418
  %v530 = vadd.f32 %v80, %v421
  %v531 = vadd.f32 %v80, %v424
  %v532 = vadd.f32 %v80, %v427
  %v533 = vadd.f32 %v80, %v430
  %v534 = vadd.f32 %v80, %v433
  %v535 = vadd.f32 %v80, %v436
  %v536 = vadd.f32 %v80, %v439
  %v537 = vadd.f32 %v80, %v442
  %v538 = vadd.f32 %v80, %v445
  %v539 = vadd.f32 %v80, %v448
  %v540 = vadd.f32 %v80, %v451
  %v541 = vadd.f32 %v80, %v454
  %v542 = vadd.f32 %v80, %v457
  %v543 = vadd.f32 %v80, %v460
  %v544 = vadd.f32 %v80, %v463
  %v545 = vadd.f32 %v80, %v466
  %v546 = vadd.f32 %v80, %v469
  %v547 = vadd.f32 %v80, %v472
  %v548 = vadd.f32 %v80, %v475
  %v549 = vadd.f32 %v80, %v478
  %v550 = vadd.f32 %v80, %v481
  %v551 = vadd.f32 %v80, %v484
  %v552 = vadd.f32 %v80, %v487
  %553 = vst [vmem:[%s3] sm:$0xff] %v489
  %554 = vst [vmem:[%s3 + $0x8] sm:$0xff] %v490
  %555 = vst [vmem:[%s3 + $0x10] sm:$0xff] %v491
  %556 = vst [vmem:[%s3 + $0x18] sm:$0xff] %v492
  %557 = vst [vmem:[%s3 + $0x20] sm:$0xff] %v493
  %558 = vst [vmem:[%s3 + $0x28] sm:$0xff] %v494
  %559 = vst [vmem:[%s3 + $0x30] sm:$0xff] %v495
  %560 = vst [vmem:[%s3 + $0x38] sm:$0xff] %v496
  %561 = vst [vmem:[%s3 + $0x40] sm:$0xff] %v497
  %562 = vst [vmem:[%s3 + $0x48] sm:$0xff] %v498
  %563 = vst [vmem:[%s3 + $0x50] sm:$0xff] %v499
  %564 = vst [vmem:[%s3 + $0x58] sm:$0xff] %v500
  %565 = vst [vmem:[%s3 + $0x60] sm:$0xff] %v501
  %566 = vst [vmem:[%s3 + $0x68] sm:$0xff] %v502
  %567 = vst [vmem:[%s3 + $0x70] sm:$0xff] %v503
  %568 = vst [vmem:[%s3 + $0x78] sm:$0xff] %v504
  %569 = vst [vmem:[%s3 + $0x80] sm:$0xff] %v505
  %570 = vst [vmem:[%s3 + $0x88] sm:$0xff] %v506
  %571 = vst [vmem:[%s3 + $0x90] sm:$0xff] %v507
  %572 = vst [vmem:[%s3 + $0x98] sm:$0xff] %v508
  %573 = vst [vmem:[%s3 + $0xa0] sm:$0xff] %v509
  %574 = vst [vmem:[%s3 + $0xa8] sm:$0xff] %v510
  %575 = vst [vmem:[%s3 + $0xb0] sm:$0xff] %v511
  %576 = vst [vmem:[%s3 + $0xb8] sm:$0xff] %v512
  %577 = vst [vmem:[%s3 + $0xc0] sm:$0xff] %v513
  %578 = vst [vmem:[%s3 + $0xc8] sm:$0xff] %v514
  %579 = vst [vmem:[%s3 + $0xd0] sm:$0xff] %v515
  %580 = vst [vmem:[%s3 + $0xd8] sm:$0xff] %v516
  %581 = vst [vmem:[%s3 + $0xe0] sm:$0xff] %v517
  %582 = vst [vmem:[%s3 + $0xe8] sm:$0xff] %v518
  %583 = vst [vmem:[%s3 + $0xf0] sm:$0xff] %v519
  %584 = vst [vmem:[%s3 + $0xf8] sm:$0xff] %v520
  %585 = vst [vmem:[%s3 + $0x100] sm:$0xff] %v521
  %586 = vst [vmem:[%s3 + $0x108] sm:$0xff] %v522
  %587 = vst [vmem:[%s3 + $0x110] sm:$0xff] %v523
  %588 = vst [vmem:[%s3 + $0x118] sm:$0xff] %v524
  %589 = vst [vmem:[%s3 + $0x120] sm:$0xff] %v525
  %590 = vst [vmem:[%s3 + $0x128] sm:$0xff] %v526
  %591 = vst [vmem:[%s3 + $0x130] sm:$0xff] %v527
  %592 = vst [vmem:[%s3 + $0x138] sm:$0xff] %v528
  %593 = vst [vmem:[%s3 + $0x140] sm:$0xff] %v529
  %594 = vst [vmem:[%s3 + $0x148] sm:$0xff] %v530
  %595 = vst [vmem:[%s3 + $0x150] sm:$0xff] %v531
  %596 = vst [vmem:[%s3 + $0x158] sm:$0xff] %v532
  %597 = vst [vmem:[%s3 + $0x160] sm:$0xff] %v533
  %598 = vst [vmem:[%s3 + $0x168] sm:$0xff] %v534
  %599 = vst [vmem:[%s3 + $0x170] sm:$0xff] %v535
  %600 = vst [vmem:[%s3 + $0x178] sm:$0xff] %v536
  %601 = vst [vmem:[%s3 + $0x180] sm:$0xff] %v537
  %602 = vst [vmem:[%s3 + $0x188] sm:$0xff] %v538
  %603 = vst [vmem:[%s3 + $0x190] sm:$0xff] %v539
  %604 = vst [vmem:[%s3 + $0x198] sm:$0xff] %v540
  %605 = vst [vmem:[%s3 + $0x1a0] sm:$0xff] %v541
  %606 = vst [vmem:[%s3 + $0x1a8] sm:$0xff] %v542
  %607 = vst [vmem:[%s3 + $0x1b0] sm:$0xff] %v543
  %608 = vst [vmem:[%s3 + $0x1b8] sm:$0xff] %v544
  %609 = vst [vmem:[%s3 + $0x1c0] sm:$0xff] %v545
  %610 = vst [vmem:[%s3 + $0x1c8] sm:$0xff] %v546
  %611 = vst [vmem:[%s3 + $0x1d0] sm:$0xff] %v547
  %612 = vst [vmem:[%s3 + $0x1d8] sm:$0xff] %v548
  %613 = vst [vmem:[%s3 + $0x1e0] sm:$0xff] %v549
  %614 = vst [vmem:[%s3 + $0x1e8] sm:$0xff] %v550
  %615 = vst [vmem:[%s3 + $0x1f0] sm:$0xff] %v551
  %616 = vst [vmem:[%s3 + $0x1f8] sm:$0xff] %v552
  %s617 = scalar_lea.vmem %s0, 16
  %v618 = vld [vmem:[%s617] sm:$0xff]
  %v619 = vld [vmem:[%s617 + $0x8] sm:$0xff]
  %v620 = vld [vmem:[%s617 + $0x10] sm:$0xff]
  %v621 = vld [vmem:[%s617 + $0x18] sm:$0xff]
  %v622 = vld [vmem:[%s617 + $0x20] sm:$0xff]
  %v623 = vld [vmem:[%s617 + $0x28] sm:$0xff]
  %v624 = vld [vmem:[%s617 + $0x30] sm:$0xff]
  %v625 = vld [vmem:[%s617 + $0x38] sm:$0xff]
  %v626 = vld [vmem:[%s617 + $0x40] sm:$0xff]
  %v627 = vld [vmem:[%s617 + $0x48] sm:$0xff]
  %v628 = vld [vmem:[%s617 + $0x50] sm:$0xff]
  %v629 = vld [vmem:[%s617 + $0x58] sm:$0xff]
  %v630 = vld [vmem:[%s617 + $0x60] sm:$0xff]
  %v631 = vld [vmem:[%s617 + $0x68] sm:$0xff]
  %v632 = vld [vmem:[%s617 + $0x70] sm:$0xff]
  %v633 = vld [vmem:[%s617 + $0x78] sm:$0xff]
  %v634 = vld [vmem:[%s617 + $0x80] sm:$0xff]
  %v635 = vld [vmem:[%s617 + $0x88] sm:$0xff]
  %v636 = vld [vmem:[%s617 + $0x90] sm:$0xff]
  %v637 = vld [vmem:[%s617 + $0x98] sm:$0xff]
  %v638 = vld [vmem:[%s617 + $0xa0] sm:$0xff]
  %v639 = vld [vmem:[%s617 + $0xa8] sm:$0xff]
  %v640 = vld [vmem:[%s617 + $0xb0] sm:$0xff]
  %v641 = vld [vmem:[%s617 + $0xb8] sm:$0xff]
  %v642 = vld [vmem:[%s617 + $0xc0] sm:$0xff]
  %v643 = vld [vmem:[%s617 + $0xc8] sm:$0xff]
  %v644 = vld [vmem:[%s617 + $0xd0] sm:$0xff]
  %v645 = vld [vmem:[%s617 + $0xd8] sm:$0xff]
  %v646 = vld [vmem:[%s617 + $0xe0] sm:$0xff]
  %v647 = vld [vmem:[%s617 + $0xe8] sm:$0xff]
  %v648 = vld [vmem:[%s617 + $0xf0] sm:$0xff]
  %v649 = vld [vmem:[%s617 + $0xf8] sm:$0xff]
  %v650 = vld [vmem:[%s617 + $0x180] sm:$0xff]
  %v651 = vld [vmem:[%s617 + $0x188] sm:$0xff]
  %v652 = vld [vmem:[%s617 + $0x190] sm:$0xff]
  %v653 = vld [vmem:[%s617 + $0x198] sm:$0xff]
  %v654 = vld [vmem:[%s617 + $0x1a0] sm:$0xff]
  %v655 = vld [vmem:[%s617 + $0x1a8] sm:$0xff]
  %v656 = vld [vmem:[%s617 + $0x1b0] sm:$0xff]
  %v657 = vld [vmem:[%s617 + $0x1b8] sm:$0xff]
  %v658 = vld [vmem:[%s617 + $0x1c0] sm:$0xff]
  %v659 = vld [vmem:[%s617 + $0x1c8] sm:$0xff]
  %v660 = vld [vmem:[%s617 + $0x1d0] sm:$0xff]
  %v661 = vld [vmem:[%s617 + $0x1d8] sm:$0xff]
  %v662 = vld [vmem:[%s617 + $0x1e0] sm:$0xff]
  %v663 = vld [vmem:[%s617 + $0x1e8] sm:$0xff]
  %v664 = vld [vmem:[%s617 + $0x1f0] sm:$0xff]
  %v665 = vld [vmem:[%s617 + $0x1f8] sm:$0xff]
  %v666 = vld [vmem:[%s617 + $0x200] sm:$0xff]
  %v667 = vld [vmem:[%s617 + $0x208] sm:$0xff]
  %v668 = vld [vmem:[%s617 + $0x210] sm:$0xff]
  %v669 = vld [vmem:[%s617 + $0x218] sm:$0xff]
  %v670 = vld [vmem:[%s617 + $0x220] sm:$0xff]
  %v671 = vld [vmem:[%s617 + $0x228] sm:$0xff]
  %v672 = vld [vmem:[%s617 + $0x230] sm:$0xff]
  %v673 = vld [vmem:[%s617 + $0x238] sm:$0xff]
  %v674 = vld [vmem:[%s617 + $0x240] sm:$0xff]
  %v675 = vld [vmem:[%s617 + $0x248] sm:$0xff]
  %v676 = vld [vmem:[%s617 + $0x250] sm:$0xff]
  %v677 = vld [vmem:[%s617 + $0x258] sm:$0xff]
  %v678 = vld [vmem:[%s617 + $0x260] sm:$0xff]
  %v679 = vld [vmem:[%s617 + $0x268] sm:$0xff]
  %v680 = vld [vmem:[%s617 + $0x270] sm:$0xff]
  %v681 = vld [vmem:[%s617 + $0x278] sm:$0xff]
  %v682 = vld [vmem:[%s3] sm:$0xff]
  %v683 = vld [vmem:[%s3 + $0x8] sm:$0xff]
  %v684 = vld [vmem:[%s3 + $0x10] sm:$0xff]
  %v685 = vld [vmem:[%s3 + $0x18] sm:$0xff]
  %v686 = vld [vmem:[%s3 + $0x20] sm:$0xff]
  %v687 = vld [vmem:[%s3 + $0x28] sm:$0xff]
  %v688 = vld [vmem:[%s3 + $0x30] sm:$0xff]
  %v689 = vld [vmem:[%s3 + $0x38] sm:$0xff]
  %v690 = vld [vmem:[%s3 + $0x40] sm:$0xff]
  %v691 = vld [vmem:[%s3 + $0x48] sm:$0xff]
  %v692 = vld [vmem:[%s3 + $0x50] sm:$0xff]
  %v693 = vld [vmem:[%s3 + $0x58] sm:$0xff]
  %v694 = vld [vmem:[%s3 + $0x60] sm:$0xff]
  %v695 = vld [vmem:[%s3 + $0x68] sm:$0xff]
  %v696 = vld [vmem:[%s3 + $0x70] sm:$0xff]
  %v697 = vld [vmem:[%s3 + $0x78] sm:$0xff]
  %v698 = vld [vmem:[%s3 + $0x80] sm:$0xff]
  %v699 = vld [vmem:[%s3 + $0x88] sm:$0xff]
  %v700 = vld [vmem:[%s3 + $0x90] sm:$0xff]
  %v701 = vld [vmem:[%s3 + $0x98] sm:$0xff]
  %v702 = vld [vmem:[%s3 + $0xa0] sm:$0xff]
  %v703 = vld [vmem:[%s3 + $0xa8] sm:$0xff]
  %v704 = vld [vmem:[%s3 + $0xb0] sm:$0xff]
  %v705 = vld [vmem:[%s3 + $0xb8] sm:$0xff]
  %v706 = vld [vmem:[%s3 + $0xc0] sm:$0xff]
  %v707 = vld [vmem:[%s3 + $0xc8] sm:$0xff]
  %v708 = vld [vmem:[%s3 + $0xd0] sm:$0xff]
  %v709 = vld [vmem:[%s3 + $0xd8] sm:$0xff]
  %v710 = vld [vmem:[%s3 + $0xe0] sm:$0xff]
  %v711 = vld [vmem:[%s3 + $0xe8] sm:$0xff]
  %v712 = vld [vmem:[%s3 + $0xf0] sm:$0xff]
  %v713 = vld [vmem:[%s3 + $0xf8] sm:$0xff]
  %v714 = vld [vmem:[%s3 + $0x100] sm:$0xff]
  %v715 = vld [vmem:[%s3 + $0x108] sm:$0xff]
  %v716 = vld [vmem:[%s3 + $0x110] sm:$0xff]
  %v717 = vld [vmem:[%s3 + $0x118] sm:$0xff]
  %v718 = vld [vmem:[%s3 + $0x120] sm:$0xff]
  %v719 = vld [vmem:[%s3 + $0x128] sm:$0xff]
  %v720 = vld [vmem:[%s3 + $0x130] sm:$0xff]
  %v721 = vld [vmem:[%s3 + $0x138] sm:$0xff]
  %v722 = vld [vmem:[%s3 + $0x140] sm:$0xff]
  %v723 = vld [vmem:[%s3 + $0x148] sm:$0xff]
  %v724 = vld [vmem:[%s3 + $0x150] sm:$0xff]
  %v725 = vld [vmem:[%s3 + $0x158] sm:$0xff]
  %v726 = vld [vmem:[%s3 + $0x160] sm:$0xff]
  %v727 = vld [vmem:[%s3 + $0x168] sm:$0xff]
  %v728 = vld [vmem:[%s3 + $0x170] sm:$0xff]
  %v729 = vld [vmem:[%s3 + $0x178] sm:$0xff]
  %v730 = vld [vmem:[%s3 + $0x180] sm:$0xff]
  %v731 = vld [vmem:[%s3 + $0x188] sm:$0xff]
  %v732 = vld [vmem:[%s3 + $0x190] sm:$0xff]
  %v733 = vld [vmem:[%s3 + $0x198] sm:$0xff]
  %v734 = vld [vmem:[%s3 + $0x1a0] sm:$0xff]
  %v735 = vld [vmem:[%s3 + $0x1a8] sm:$0xff]
  %v736 = vld [vmem:[%s3 + $0x1b0] sm:$0xff]
  %v737 = vld [vmem:[%s3 + $0x1b8] sm:$0xff]
  %v738 = vld [vmem:[%s3 + $0x1c0] sm:$0xff]
  %v739 = vld [vmem:[%s3 + $0x1c8] sm:$0xff]
  %v740 = vld [vmem:[%s3 + $0x1d0] sm:$0xff]
  %v741 = vld [vmem:[%s3 + $0x1d8] sm:$0xff]
  %v742 = vld [vmem:[%s3 + $0x1e0] sm:$0xff]
  %v743 = vld [vmem:[%s3 + $0x1e8] sm:$0xff]
  %v744 = vld [vmem:[%s3 + $0x1f0] sm:$0xff]
  %v745 = vld [vmem:[%s3 + $0x1f8] sm:$0xff]
  %s746 = scalar_lea.vmem %s1, 4
  %v747 = vld [vmem:[%s746] sm:$0xf]
  %v749 = vsel %vm83, %v618, 0
  %v752 = vsel %vm83, %v619, 0
  %v755 = vsel %vm83, %v620, 0
  %v758 = vsel %vm83, %v621, 0
  %v761 = vsel %vm83, %v622, 0
  %v764 = vsel %vm83, %v623, 0
  %v767 = vsel %vm83, %v624, 0
  %v770 = vsel %vm83, %v625, 0
  %v773 = vsel %vm83, %v626, 0
  %v776 = vsel %vm83, %v627, 0
  %v779 = vsel %vm83, %v628, 0
  %v782 = vsel %vm83, %v629, 0
  %v785 = vsel %vm83, %v630, 0
  %v788 = vsel %vm83, %v631, 0
  %v791 = vsel %vm83, %v632, 0
  %v794 = vsel %vm83, %v633, 0
  %v797 = vsel %vm83, %v634, 0
  %v800 = vsel %vm83, %v635, 0
  %v803 = vsel %vm83, %v636, 0
  %v806 = vsel %vm83, %v637, 0
  %v809 = vsel %vm83, %v638, 0
  %v812 = vsel %vm83, %v639, 0
  %v815 = vsel %vm83, %v640, 0
  %v818 = vsel %vm83, %v641, 0
  %v821 = vsel %vm83, %v642, 0
  %v824 = vsel %vm83, %v643, 0
  %v827 = vsel %vm83, %v644, 0
  %v830 = vsel %vm83, %v645, 0
  %v833 = vsel %vm83, %v646, 0
  %v836 = vsel %vm83, %v647, 0
  %v839 = vsel %vm83, %v648, 0
  %v842 = vsel %vm83, %v649, 0
  %v845 = vsel %vm83, %v650, 0
  %v848 = vsel %vm83, %v651, 0
  %v851 = vsel %vm83, %v652, 0
  %v854 = vsel %vm83, %v653, 0
  %v857 = vsel %vm83, %v654, 0
  %v860 = vsel %vm83, %v655, 0
  %v863 = vsel %vm83, %v656, 0
  %v866 = vsel %vm83, %v657, 0
  %v869 = vsel %vm83, %v658, 0
  %v872 = vsel %vm83, %v659, 0
  %v875 = vsel %vm83, %v660, 0
  %v878 = vsel %vm83, %v661, 0
  %v881 = vsel %vm83, %v662, 0
  %v884 = vsel %vm83, %v663, 0
  %v887 = vsel %vm83, %v664, 0
  %v890 = vsel %vm83, %v665, 0
  %v893 = vsel %vm83, %v666, 0
  %v896 = vsel %vm83, %v667, 0
  %v899 = vsel %vm83, %v668, 0
  %v902 = vsel %vm83, %v669, 0
  %v905 = vsel %vm83, %v670, 0
  %v908 = vsel %vm83, %v671, 0
  %v911 = vsel %vm83, %v672, 0
  %v914 = vsel %vm83, %v673, 0
  %v917 = vsel %vm83, %v674, 0
  %v920 = vsel %vm83, %v675, 0
  %v923 = vsel %vm83, %v676, 0
  %v926 = vsel %vm83, %v677, 0
  %v929 = vsel %vm83, %v678, 0
  %v932 = vsel %vm83, %v679, 0
  %v935 = vsel %vm83, %v680, 0
  %v938 = vsel %vm83, %v681, 0
  %v941 = vsel %vm276, %v747, 0
  %943 = vmatpush.msra.mxu0 0.0
  %944 = vmatpush.msra.mxu0 0.0
  %945 = vmatpush.msra.mxu0 0.0
  %946 = vmatpush.msra.mxu0 0.0
  %947 = vmatpush.msra.mxu0 0.0
  %948 = vmatpush.msra.mxu0 0.0
  %949 = vmatpush.msra.mxu0 0.0
  %950 = vmatpush.msra.mxu0 0.0
  %951 = vmatpush.msra.mxu0 0.0
  %952 = vmatpush.msra.mxu0 0.0
  %953 = vmatpush.msra.mxu0 0.0
  %954 = vmatpush.msra.mxu0 0.0
  %955 = vmatpush.msra.mxu0 0.0
  %956 = vmatpush.msra.mxu0 0.0
  %957 = vmatpush.msra.mxu0 0.0
  %958 = vmatpush.msra.mxu0 %v941
  %959 = vmatmul.f32.gmra.mxu0 %v749
  %v960 = vpop.f32.mrf.mxu0
  %v961 = vadd.f32 0.0, %v960
  %962 = vmatmul.f32.gmra.mxu0 %v752
  %v963 = vpop.f32.mrf.mxu0
  %v964 = vadd.f32 0.0, %v963
  %965 = vmatmul.f32.gmra.mxu0 %v755
  %v966 = vpop.f32.mrf.mxu0
  %v967 = vadd.f32 0.0, %v966
  %968 = vmatmul.f32.gmra.mxu0 %v758
  %v969 = vpop.f32.mrf.mxu0
  %v970 = vadd.f32 0.0, %v969
  %971 = vmatmul.f32.gmra.mxu0 %v761
  %v972 = vpop.f32.mrf.mxu0
  %v973 = vadd.f32 0.0, %v972
  %974 = vmatmul.f32.gmra.mxu0 %v764
  %v975 = vpop.f32.mrf.mxu0
  %v976 = vadd.f32 0.0, %v975
  %977 = vmatmul.f32.gmra.mxu0 %v767
  %v978 = vpop.f32.mrf.mxu0
  %v979 = vadd.f32 0.0, %v978
  %980 = vmatmul.f32.gmra.mxu0 %v770
  %v981 = vpop.f32.mrf.mxu0
  %v982 = vadd.f32 0.0, %v981
  %983 = vmatmul.f32.gmra.mxu0 %v773
  %v984 = vpop.f32.mrf.mxu0
  %v985 = vadd.f32 0.0, %v984
  %986 = vmatmul.f32.gmra.mxu0 %v776
  %v987 = vpop.f32.mrf.mxu0
  %v988 = vadd.f32 0.0, %v987
  %989 = vmatmul.f32.gmra.mxu0 %v779
  %v990 = vpop.f32.mrf.mxu0
  %v991 = vadd.f32 0.0, %v990
  %992 = vmatmul.f32.gmra.mxu0 %v782
  %v993 = vpop.f32.mrf.mxu0
  %v994 = vadd.f32 0.0, %v993
  %995 = vmatmul.f32.gmra.mxu0 %v785
  %v996 = vpop.f32.mrf.mxu0
  %v997 = vadd.f32 0.0, %v996
  %998 = vmatmul.f32.gmra.mxu0 %v788
  %v999 = vpop.f32.mrf.mxu0
  %v1000 = vadd.f32 0.0, %v999
  %1001 = vmatmul.f32.gmra.mxu0 %v791
  %v1002 = vpop.f32.mrf.mxu0
  %v1003 = vadd.f32 0.0, %v1002
  %1004 = vmatmul.f32.gmra.mxu0 %v794
  %v1005 = vpop.f32.mrf.mxu0
  %v1006 = vadd.f32 0.0, %v1005
  %1007 = vmatmul.f32.gmra.mxu0 %v797
  %v1008 = vpop.f32.mrf.mxu0
  %v1009 = vadd.f32 0.0, %v1008
  %1010 = vmatmul.f32.gmra.mxu0 %v800
  %v1011 = vpop.f32.mrf.mxu0
  %v1012 = vadd.f32 0.0, %v1011
  %1013 = vmatmul.f32.gmra.mxu0 %v803
  %v1014 = vpop.f32.mrf.mxu0
  %v1015 = vadd.f32 0.0, %v1014
  %1016 = vmatmul.f32.gmra.mxu0 %v806
  %v1017 = vpop.f32.mrf.mxu0
  %v1018 = vadd.f32 0.0, %v1017
  %1019 = vmatmul.f32.gmra.mxu0 %v809
  %v1020 = vpop.f32.mrf.mxu0
  %v1021 = vadd.f32 0.0, %v1020
  %1022 = vmatmul.f32.gmra.mxu0 %v812
  %v1023 = vpop.f32.mrf.mxu0
  %v1024 = vadd.f32 0.0, %v1023
  %1025 = vmatmul.f32.gmra.mxu0 %v815
  %v1026 = vpop.f32.mrf.mxu0
  %v1027 = vadd.f32 0.0, %v1026
  %1028 = vmatmul.f32.gmra.mxu0 %v818
  %v1029 = vpop.f32.mrf.mxu0
  %v1030 = vadd.f32 0.0, %v1029
  %1031 = vmatmul.f32.gmra.mxu0 %v821
  %v1032 = vpop.f32.mrf.mxu0
  %v1033 = vadd.f32 0.0, %v1032
  %1034 = vmatmul.f32.gmra.mxu0 %v824
  %v1035 = vpop.f32.mrf.mxu0
  %v1036 = vadd.f32 0.0, %v1035
  %1037 = vmatmul.f32.gmra.mxu0 %v827
  %v1038 = vpop.f32.mrf.mxu0
  %v1039 = vadd.f32 0.0, %v1038
  %1040 = vmatmul.f32.gmra.mxu0 %v830
  %v1041 = vpop.f32.mrf.mxu0
  %v1042 = vadd.f32 0.0, %v1041
  %1043 = vmatmul.f32.gmra.mxu0 %v833
  %v1044 = vpop.f32.mrf.mxu0
  %v1045 = vadd.f32 0.0, %v1044
  %1046 = vmatmul.f32.gmra.mxu0 %v836
  %v1047 = vpop.f32.mrf.mxu0
  %v1048 = vadd.f32 0.0, %v1047
  %1049 = vmatmul.f32.gmra.mxu0 %v839
  %v1050 = vpop.f32.mrf.mxu0
  %v1051 = vadd.f32 0.0, %v1050
  %1052 = vmatmul.f32.gmra.mxu0 %v842
  %v1053 = vpop.f32.mrf.mxu0
  %v1054 = vadd.f32 0.0, %v1053
  %1055 = vmatmul.f32.gmra.mxu0 %v845
  %v1056 = vpop.f32.mrf.mxu0
  %v1057 = vadd.f32 0.0, %v1056
  %1058 = vmatmul.f32.gmra.mxu0 %v848
  %v1059 = vpop.f32.mrf.mxu0
  %v1060 = vadd.f32 0.0, %v1059
  %1061 = vmatmul.f32.gmra.mxu0 %v851
  %v1062 = vpop.f32.mrf.mxu0
  %v1063 = vadd.f32 0.0, %v1062
  %1064 = vmatmul.f32.gmra.mxu0 %v854
  %v1065 = vpop.f32.mrf.mxu0
  %v1066 = vadd.f32 0.0, %v1065
  %1067 = vmatmul.f32.gmra.mxu0 %v857
  %v1068 = vpop.f32.mrf.mxu0
  %v1069 = vadd.f32 0.0, %v1068
  %1070 = vmatmul.f32.gmra.mxu0 %v860
  %v1071 = vpop.f32.mrf.mxu0
  %v1072 = vadd.f32 0.0, %v1071
  %1073 = vmatmul.f32.gmra.mxu0 %v863
  %v1074 = vpop.f32.mrf.mxu0
  %v1075 = vadd.f32 0.0, %v1074
  %1076 = vmatmul.f32.gmra.mxu0 %v866
  %v1077 = vpop.f32.mrf.mxu0
  %v1078 = vadd.f32 0.0, %v1077
  %1079 = vmatmul.f32.gmra.mxu0 %v869
  %v1080 = vpop.f32.mrf.mxu0
  %v1081 = vadd.f32 0.0, %v1080
  %1082 = vmatmul.f32.gmra.mxu0 %v872
  %v1083 = vpop.f32.mrf.mxu0
  %v1084 = vadd.f32 0.0, %v1083
  %1085 = vmatmul.f32.gmra.mxu0 %v875
  %v1086 = vpop.f32.mrf.mxu0
  %v1087 = vadd.f32 0.0, %v1086
  %1088 = vmatmul.f32.gmra.mxu0 %v878
  %v1089 = vpop.f32.mrf.mxu0
  %v1090 = vadd.f32 0.0, %v1089
  %1091 = vmatmul.f32.gmra.mxu0 %v881
  %v1092 = vpop.f32.mrf.mxu0
  %v1093 = vadd.f32 0.0, %v1092
  %1094 = vmatmul.f32.gmra.mxu0 %v884
  %v1095 = vpop.f32.mrf.mxu0
  %v1096 = vadd.f32 0.0, %v1095
  %1097 = vmatmul.f32.gmra.mxu0 %v887
  %v1098 = vpop.f32.mrf.mxu0
  %v1099 = vadd.f32 0.0, %v1098
  %1100 = vmatmul.f32.gmra.mxu0 %v890
  %v1101 = vpop.f32.mrf.mxu0
  %v1102 = vadd.f32 0.0, %v1101
  %1103 = vmatmul.f32.gmra.mxu0 %v893
  %v1104 = vpop.f32.mrf.mxu0
  %v1105 = vadd.f32 0.0, %v1104
  %1106 = vmatmul.f32.gmra.mxu0 %v896
  %v1107 = vpop.f32.mrf.mxu0
  %v1108 = vadd.f32 0.0, %v1107
  %1109 = vmatmul.f32.gmra.mxu0 %v899
  %v1110 = vpop.f32.mrf.mxu0
  %v1111 = vadd.f32 0.0, %v1110
  %1112 = vmatmul.f32.gmra.mxu0 %v902
  %v1113 = vpop.f32.mrf.mxu0
  %v1114 = vadd.f32 0.0, %v1113
  %1115 = vmatmul.f32.gmra.mxu0 %v905
  %v1116 = vpop.f32.mrf.mxu0
  %v1117 = vadd.f32 0.0, %v1116
  %1118 = vmatmul.f32.gmra.mxu0 %v908
  %v1119 = vpop.f32.mrf.mxu0
  %v1120 = vadd.f32 0.0, %v1119
  %1121 = vmatmul.f32.gmra.mxu0 %v911
  %v1122 = vpop.f32.mrf.mxu0
  %v1123 = vadd.f32 0.0, %v1122
  %1124 = vmatmul.f32.gmra.mxu0 %v914
  %v1125 = vpop.f32.mrf.mxu0
  %v1126 = vadd.f32 0.0, %v1125
  %1127 = vmatmul.f32.gmra.mxu0 %v917
  %v1128 = vpop.f32.mrf.mxu0
  %v1129 = vadd.f32 0.0, %v1128
  %1130 = vmatmul.f32.gmra.mxu0 %v920
  %v1131 = vpop.f32.mrf.mxu0
  %v1132 = vadd.f32 0.0, %v1131
  %1133 = vmatmul.f32.gmra.mxu0 %v923
  %v1134 = vpop.f32.mrf.mxu0
  %v1135 = vadd.f32 0.0, %v1134
  %1136 = vmatmul.f32.gmra.mxu0 %v926
  %v1137 = vpop.f32.mrf.mxu0
  %v1138 = vadd.f32 0.0, %v1137
  %1139 = vmatmul.f32.gmra.mxu0 %v929
  %v1140 = vpop.f32.mrf.mxu0
  %v1141 = vadd.f32 0.0, %v1140
  %1142 = vmatmul.f32.gmra.mxu0 %v932
  %v1143 = vpop.f32.mrf.mxu0
  %v1144 = vadd.f32 0.0, %v1143
  %1145 = vmatmul.f32.gmra.mxu0 %v935
  %v1146 = vpop.f32.mrf.mxu0
  %v1147 = vadd.f32 0.0, %v1146
  %1148 = vmatmul.f32.gmra.mxu0 %v938
  %v1149 = vpop.f32.mrf.mxu0
  %v1150 = vadd.f32 0.0, %v1149
  %1151 = vdwg.mxu0
  %v1152 = vadd.f32 %v682, %v961
  %v1153 = vadd.f32 %v683, %v964
  %v1154 = vadd.f32 %v684, %v967
  %v1155 = vadd.f32 %v685, %v970
  %v1156 = vadd.f32 %v686, %v973
  %v1157 = vadd.f32 %v687, %v976
  %v1158 = vadd.f32 %v688, %v979
  %v1159 = vadd.f32 %v689, %v982
  %v1160 = vadd.f32 %v690, %v985
  %v1161 = vadd.f32 %v691, %v988
  %v1162 = vadd.f32 %v692, %v991
  %v1163 = vadd.f32 %v693, %v994
  %v1164 = vadd.f32 %v694, %v997
  %v1165 = vadd.f32 %v695, %v1000
  %v1166 = vadd.f32 %v696, %v1003
  %v1167 = vadd.f32 %v697, %v1006
  %v1168 = vadd.f32 %v698, %v1009
  %v1169 = vadd.f32 %v699, %v1012
  %v1170 = vadd.f32 %v700, %v1015
  %v1171 = vadd.f32 %v701, %v1018
  %v1172 = vadd.f32 %v702, %v1021
  %v1173 = vadd.f32 %v703, %v1024
  %v1174 = vadd.f32 %v704, %v1027
  %v1175 = vadd.f32 %v705, %v1030
  %v1176 = vadd.f32 %v706, %v1033
  %v1177 = vadd.f32 %v707, %v1036
  %v1178 = vadd.f32 %v708, %v1039
  %v1179 = vadd.f32 %v709, %v1042
  %v1180 = vadd.f32 %v710, %v1045
  %v1181 = vadd.f32 %v711, %v1048
  %v1182 = vadd.f32 %v712, %v1051
  %v1183 = vadd.f32 %v713, %v1054
  %v1184 = vadd.f32 %v714, %v1057
  %v1185 = vadd.f32 %v715, %v1060
  %v1186 = vadd.f32 %v716, %v1063
  %v1187 = vadd.f32 %v717, %v1066
  %v1188 = vadd.f32 %v718, %v1069
  %v1189 = vadd.f32 %v719, %v1072
  %v1190 = vadd.f32 %v720, %v1075
  %v1191 = vadd.f32 %v721, %v1078
  %v1192 = vadd.f32 %v722, %v1081
  %v1193 = vadd.f32 %v723, %v1084
  %v1194 = vadd.f32 %v724, %v1087
  %v1195 = vadd.f32 %v725, %v1090
  %v1196 = vadd.f32 %v726, %v1093
  %v1197 = vadd.f32 %v727, %v1096
  %v1198 = vadd.f32 %v728, %v1099
  %v1199 = vadd.f32 %v729, %v1102
  %v1200 = vadd.f32 %v730, %v1105
  %v1201 = vadd.f32 %v731, %v1108
  %v1202 = vadd.f32 %v732, %v1111
  %v1203 = vadd.f32 %v733, %v1114
  %v1204 = vadd.f32 %v734, %v1117
  %v1205 = vadd.f32 %v735, %v1120
  %v1206 = vadd.f32 %v736, %v1123
  %v1207 = vadd.f32 %v737, %v1126
  %v1208 = vadd.f32 %v738, %v1129
  %v1209 = vadd.f32 %v739, %v1132
  %v1210 = vadd.f32 %v740, %v1135
  %v1211 = vadd.f32 %v741, %v1138
  %v1212 = vadd.f32 %v742, %v1141
  %v1213 = vadd.f32 %v743, %v1144
  %v1214 = vadd.f32 %v744, %v1147
  %v1215 = vadd.f32 %v745, %v1150
  %1216 = vst [vmem:[%s3] sm:$0xff] %v1152
  %1217 = vst [vmem:[%s3 + $0x8] sm:$0xff] %v1153
  %1218 = vst [vmem:[%s3 + $0x10] sm:$0xff] %v1154
  %1219 = vst [vmem:[%s3 + $0x18] sm:$0xff] %v1155
  %1220 = vst [vmem:[%s3 + $0x20] sm:$0xff] %v1156
  %1221 = vst [vmem:[%s3 + $0x28] sm:$0xff] %v1157
  %1222 = vst [vmem:[%s3 + $0x30] sm:$0xff] %v1158
  %1223 = vst [vmem:[%s3 + $0x38] sm:$0xff] %v1159
  %1224 = vst [vmem:[%s3 + $0x40] sm:$0xff] %v1160
  %1225 = vst [vmem:[%s3 + $0x48] sm:$0xff] %v1161
  %1226 = vst [vmem:[%s3 + $0x50] sm:$0xff] %v1162
  %1227 = vst [vmem:[%s3 + $0x58] sm:$0xff] %v1163
  %1228 = vst [vmem:[%s3 + $0x60] sm:$0xff] %v1164
  %1229 = vst [vmem:[%s3 + $0x68] sm:$0xff] %v1165
  %1230 = vst [vmem:[%s3 + $0x70] sm:$0xff] %v1166
  %1231 = vst [vmem:[%s3 + $0x78] sm:$0xff] %v1167
  %1232 = vst [vmem:[%s3 + $0x80] sm:$0xff] %v1168
  %1233 = vst [vmem:[%s3 + $0x88] sm:$0xff] %v1169
  %1234 = vst [vmem:[%s3 + $0x90] sm:$0xff] %v1170
  %1235 = vst [vmem:[%s3 + $0x98] sm:$0xff] %v1171
  %1236 = vst [vmem:[%s3 + $0xa0] sm:$0xff] %v1172
  %1237 = vst [vmem:[%s3 + $0xa8] sm:$0xff] %v1173
  %1238 = vst [vmem:[%s3 + $0xb0] sm:$0xff] %v1174
  %1239 = vst [vmem:[%s3 + $0xb8] sm:$0xff] %v1175
  %1240 = vst [vmem:[%s3 + $0xc0] sm:$0xff] %v1176
  %1241 = vst [vmem:[%s3 + $0xc8] sm:$0xff] %v1177
  %1242 = vst [vmem:[%s3 + $0xd0] sm:$0xff] %v1178
  %1243 = vst [vmem:[%s3 + $0xd8] sm:$0xff] %v1179
  %1244 = vst [vmem:[%s3 + $0xe0] sm:$0xff] %v1180
  %1245 = vst [vmem:[%s3 + $0xe8] sm:$0xff] %v1181
  %1246 = vst [vmem:[%s3 + $0xf0] sm:$0xff] %v1182
  %1247 = vst [vmem:[%s3 + $0xf8] sm:$0xff] %v1183
  %1248 = vst [vmem:[%s3 + $0x100] sm:$0xff] %v1184
  %1249 = vst [vmem:[%s3 + $0x108] sm:$0xff] %v1185
  %1250 = vst [vmem:[%s3 + $0x110] sm:$0xff] %v1186
  %1251 = vst [vmem:[%s3 + $0x118] sm:$0xff] %v1187
  %1252 = vst [vmem:[%s3 + $0x120] sm:$0xff] %v1188
  %1253 = vst [vmem:[%s3 + $0x128] sm:$0xff] %v1189
  %1254 = vst [vmem:[%s3 + $0x130] sm:$0xff] %v1190
  %1255 = vst [vmem:[%s3 + $0x138] sm:$0xff] %v1191
  %1256 = vst [vmem:[%s3 + $0x140] sm:$0xff] %v1192
  %1257 = vst [vmem:[%s3 + $0x148] sm:$0xff] %v1193
  %1258 = vst [vmem:[%s3 + $0x150] sm:$0xff] %v1194
  %1259 = vst [vmem:[%s3 + $0x158] sm:$0xff] %v1195
  %1260 = vst [vmem:[%s3 + $0x160] sm:$0xff] %v1196
  %1261 = vst [vmem:[%s3 + $0x168] sm:$0xff] %v1197
  %1262 = vst [vmem:[%s3 + $0x170] sm:$0xff] %v1198
  %1263 = vst [vmem:[%s3 + $0x178] sm:$0xff] %v1199
  %1264 = vst [vmem:[%s3 + $0x180] sm:$0xff] %v1200
  %1265 = vst [vmem:[%s3 + $0x188] sm:$0xff] %v1201
  %1266 = vst [vmem:[%s3 + $0x190] sm:$0xff] %v1202
  %1267 = vst [vmem:[%s3 + $0x198] sm:$0xff] %v1203
  %1268 = vst [vmem:[%s3 + $0x1a0] sm:$0xff] %v1204
  %1269 = vst [vmem:[%s3 + $0x1a8] sm:$0xff] %v1205
  %1270 = vst [vmem:[%s3 + $0x1b0] sm:$0xff] %v1206
  %1271 = vst [vmem:[%s3 + $0x1b8] sm:$0xff] %v1207
  %1272 = vst [vmem:[%s3 + $0x1c0] sm:$0xff] %v1208
  %1273 = vst [vmem:[%s3 + $0x1c8] sm:$0xff] %v1209
  %1274 = vst [vmem:[%s3 + $0x1d0] sm:$0xff] %v1210
  %1275 = vst [vmem:[%s3 + $0x1d8] sm:$0xff] %v1211
  %1276 = vst [vmem:[%s3 + $0x1e0] sm:$0xff] %v1212
  %1277 = vst [vmem:[%s3 + $0x1e8] sm:$0xff] %v1213
  %1278 = vst [vmem:[%s3 + $0x1f0] sm:$0xff] %v1214
  %1279 = vst [vmem:[%s3 + $0x1f8] sm:$0xff] %v1215
  %s1280 = scalar_lea.vmem %s0, 32
  %v1281 = vld [vmem:[%s1280] sm:$0xff]
  %v1282 = vld [vmem:[%s1280 + $0x8] sm:$0xff]
  %v1283 = vld [vmem:[%s1280 + $0x10] sm:$0xff]
  %v1284 = vld [vmem:[%s1280 + $0x18] sm:$0xff]
  %v1285 = vld [vmem:[%s1280 + $0x20] sm:$0xff]
  %v1286 = vld [vmem:[%s1280 + $0x28] sm:$0xff]
  %v1287 = vld [vmem:[%s1280 + $0x30] sm:$0xff]
  %v1288 = vld [vmem:[%s1280 + $0x38] sm:$0xff]
  %v1289 = vld [vmem:[%s1280 + $0x40] sm:$0xff]
  %v1290 = vld [vmem:[%s1280 + $0x48] sm:$0xff]
  %v1291 = vld [vmem:[%s1280 + $0x50] sm:$0xff]
  %v1292 = vld [vmem:[%s1280 + $0x58] sm:$0xff]
  %v1293 = vld [vmem:[%s1280 + $0x60] sm:$0xff]
  %v1294 = vld [vmem:[%s1280 + $0x68] sm:$0xff]
  %v1295 = vld [vmem:[%s1280 + $0x70] sm:$0xff]
  %v1296 = vld [vmem:[%s1280 + $0x78] sm:$0xff]
  %v1297 = vld [vmem:[%s1280 + $0x80] sm:$0xff]
  %v1298 = vld [vmem:[%s1280 + $0x88] sm:$0xff]
  %v1299 = vld [vmem:[%s1280 + $0x90] sm:$0xff]
  %v1300 = vld [vmem:[%s1280 + $0x98] sm:$0xff]
  %v1301 = vld [vmem:[%s1280 + $0xa0] sm:$0xff]
  %v1302 = vld [vmem:[%s1280 + $0xa8] sm:$0xff]
  %v1303 = vld [vmem:[%s1280 + $0xb0] sm:$0xff]
  %v1304 = vld [vmem:[%s1280 + $0xb8] sm:$0xff]
  %v1305 = vld [vmem:[%s1280 + $0xc0] sm:$0xff]
  %v1306 = vld [vmem:[%s1280 + $0xc8] sm:$0xff]
  %v1307 = vld [vmem:[%s1280 + $0xd0] sm:$0xff]
  %v1308 = vld [vmem:[%s1280 + $0xd8] sm:$0xff]
  %v1309 = vld [vmem:[%s1280 + $0xe0] sm:$0xff]
  %v1310 = vld [vmem:[%s1280 + $0xe8] sm:$0xff]
  %v1311 = vld [vmem:[%s1280 + $0xf0] sm:$0xff]
  %v1312 = vld [vmem:[%s1280 + $0xf8] sm:$0xff]
  %v1313 = vld [vmem:[%s1280 + $0x180] sm:$0xff]
  %v1314 = vld [vmem:[%s1280 + $0x188] sm:$0xff]
  %v1315 = vld [vmem:[%s1280 + $0x190] sm:$0xff]
  %v1316 = vld [vmem:[%s1280 + $0x198] sm:$0xff]
  %v1317 = vld [vmem:[%s1280 + $0x1a0] sm:$0xff]
  %v1318 = vld [vmem:[%s1280 + $0x1a8] sm:$0xff]
  %v1319 = vld [vmem:[%s1280 + $0x1b0] sm:$0xff]
  %v1320 = vld [vmem:[%s1280 + $0x1b8] sm:$0xff]
  %v1321 = vld [vmem:[%s1280 + $0x1c0] sm:$0xff]
  %v1322 = vld [vmem:[%s1280 + $0x1c8] sm:$0xff]
  %v1323 = vld [vmem:[%s1280 + $0x1d0] sm:$0xff]
  %v1324 = vld [vmem:[%s1280 + $0x1d8] sm:$0xff]
  %v1325 = vld [vmem:[%s1280 + $0x1e0] sm:$0xff]
  %v1326 = vld [vmem:[%s1280 + $0x1e8] sm:$0xff]
  %v1327 = vld [vmem:[%s1280 + $0x1f0] sm:$0xff]
  %v1328 = vld [vmem:[%s1280 + $0x1f8] sm:$0xff]
  %v1329 = vld [vmem:[%s1280 + $0x200] sm:$0xff]
  %v1330 = vld [vmem:[%s1280 + $0x208] sm:$0xff]
  %v1331 = vld [vmem:[%s1280 + $0x210] sm:$0xff]
  %v1332 = vld [vmem:[%s1280 + $0x218] sm:$0xff]
  %v1333 = vld [vmem:[%s1280 + $0x220] sm:$0xff]
  %v1334 = vld [vmem:[%s1280 + $0x228] sm:$0xff]
  %v1335 = vld [vmem:[%s1280 + $0x230] sm:$0xff]
  %v1336 = vld [vmem:[%s1280 + $0x238] sm:$0xff]
  %v1337 = vld [vmem:[%s1280 + $0x240] sm:$0xff]
  %v1338 = vld [vmem:[%s1280 + $0x248] sm:$0xff]
  %v1339 = vld [vmem:[%s1280 + $0x250] sm:$0xff]
  %v1340 = vld [vmem:[%s1280 + $0x258] sm:$0xff]
  %v1341 = vld [vmem:[%s1280 + $0x260] sm:$0xff]
  %v1342 = vld [vmem:[%s1280 + $0x268] sm:$0xff]
  %v1343 = vld [vmem:[%s1280 + $0x270] sm:$0xff]
  %v1344 = vld [vmem:[%s1280 + $0x278] sm:$0xff]
  %v1345 = vld [vmem:[%s3] sm:$0xff]
  %v1346 = vld [vmem:[%s3 + $0x8] sm:$0xff]
  %v1347 = vld [vmem:[%s3 + $0x10] sm:$0xff]
  %v1348 = vld [vmem:[%s3 + $0x18] sm:$0xff]
  %v1349 = vld [vmem:[%s3 + $0x20] sm:$0xff]
  %v1350 = vld [vmem:[%s3 + $0x28] sm:$0xff]
  %v1351 = vld [vmem:[%s3 + $0x30] sm:$0xff]
  %v1352 = vld [vmem:[%s3 + $0x38] sm:$0xff]
  %v1353 = vld [vmem:[%s3 + $0x40] sm:$0xff]
  %v1354 = vld [vmem:[%s3 + $0x48] sm:$0xff]
  %v1355 = vld [vmem:[%s3 + $0x50] sm:$0xff]
  %v1356 = vld [vmem:[%s3 + $0x58] sm:$0xff]
  %v1357 = vld [vmem:[%s3 + $0x60] sm:$0xff]
  %v1358 = vld [vmem:[%s3 + $0x68] sm:$0xff]
  %v1359 = vld [vmem:[%s3 + $0x70] sm:$0xff]
  %v1360 = vld [vmem:[%s3 + $0x78] sm:$0xff]
  %v1361 = vld [vmem:[%s3 + $0x80] sm:$0xff]
  %v1362 = vld [vmem:[%s3 + $0x88] sm:$0xff]
  %v1363 = vld [vmem:[%s3 + $0x90] sm:$0xff]
  %v1364 = vld [vmem:[%s3 + $0x98] sm:$0xff]
  %v1365 = vld [vmem:[%s3 + $0xa0] sm:$0xff]
  %v1366 = vld [vmem:[%s3 + $0xa8] sm:$0xff]
  %v1367 = vld [vmem:[%s3 + $0xb0] sm:$0xff]
  %v1368 = vld [vmem:[%s3 + $0xb8] sm:$0xff]
  %v1369 = vld [vmem:[%s3 + $0xc0] sm:$0xff]
  %v1370 = vld [vmem:[%s3 + $0xc8] sm:$0xff]
  %v1371 = vld [vmem:[%s3 + $0xd0] sm:$0xff]
  %v1372 = vld [vmem:[%s3 + $0xd8] sm:$0xff]
  %v1373 = vld [vmem:[%s3 + $0xe0] sm:$0xff]
  %v1374 = vld [vmem:[%s3 + $0xe8] sm:$0xff]
  %v1375 = vld [vmem:[%s3 + $0xf0] sm:$0xff]
  %v1376 = vld [vmem:[%s3 + $0xf8] sm:$0xff]
  %v1377 = vld [vmem:[%s3 + $0x100] sm:$0xff]
  %v1378 = vld [vmem:[%s3 + $0x108] sm:$0xff]
  %v1379 = vld [vmem:[%s3 + $0x110] sm:$0xff]
  %v1380 = vld [vmem:[%s3 + $0x118] sm:$0xff]
  %v1381 = vld [vmem:[%s3 + $0x120] sm:$0xff]
  %v1382 = vld [vmem:[%s3 + $0x128] sm:$0xff]
  %v1383 = vld [vmem:[%s3 + $0x130] sm:$0xff]
  %v1384 = vld [vmem:[%s3 + $0x138] sm:$0xff]
  %v1385 = vld [vmem:[%s3 + $0x140] sm:$0xff]
  %v1386 = vld [vmem:[%s3 + $0x148] sm:$0xff]
  %v1387 = vld [vmem:[%s3 + $0x150] sm:$0xff]
  %v1388 = vld [vmem:[%s3 + $0x158] sm:$0xff]
  %v1389 = vld [vmem:[%s3 + $0x160] sm:$0xff]
  %v1390 = vld [vmem:[%s3 + $0x168] sm:$0xff]
  %v1391 = vld [vmem:[%s3 + $0x170] sm:$0xff]
  %v1392 = vld [vmem:[%s3 + $0x178] sm:$0xff]
  %v1393 = vld [vmem:[%s3 + $0x180] sm:$0xff]
  %v1394 = vld [vmem:[%s3 + $0x188] sm:$0xff]
  %v1395 = vld [vmem:[%s3 + $0x190] sm:$0xff]
  %v1396 = vld [vmem:[%s3 + $0x198] sm:$0xff]
  %v1397 = vld [vmem:[%s3 + $0x1a0] sm:$0xff]
  %v1398 = vld [vmem:[%s3 + $0x1a8] sm:$0xff]
  %v1399 = vld [vmem:[%s3 + $0x1b0] sm:$0xff]
  %v1400 = vld [vmem:[%s3 + $0x1b8] sm:$0xff]
  %v1401 = vld [vmem:[%s3 + $0x1c0] sm:$0xff]
  %v1402 = vld [vmem:[%s3 + $0x1c8] sm:$0xff]
  %v1403 = vld [vmem:[%s3 + $0x1d0] sm:$0xff]
  %v1404 = vld [vmem:[%s3 + $0x1d8] sm:$0xff]
  %v1405 = vld [vmem:[%s3 + $0x1e0] sm:$0xff]
  %v1406 = vld [vmem:[%s3 + $0x1e8] sm:$0xff]
  %v1407 = vld [vmem:[%s3 + $0x1f0] sm:$0xff]
  %v1408 = vld [vmem:[%s3 + $0x1f8] sm:$0xff]
  %s1409 = scalar_lea.vmem %s1, 8
  %v1410 = vld [vmem:[%s1409] sm:$0xf]
  %v1412 = vsel %vm83, %v1281, 0
  %v1415 = vsel %vm83, %v1282, 0
  %v1418 = vsel %vm83, %v1283, 0
  %v1421 = vsel %vm83, %v1284, 0
  %v1424 = vsel %vm83, %v1285, 0
  %v1427 = vsel %vm83, %v1286, 0
  %v1430 = vsel %vm83, %v1287, 0
  %v1433 = vsel %vm83, %v1288, 0
  %v1436 = vsel %vm83, %v1289, 0
  %v1439 = vsel %vm83, %v1290, 0
  %v1442 = vsel %vm83, %v1291, 0
  %v1445 = vsel %vm83, %v1292, 0
  %v1448 = vsel %vm83, %v1293, 0
  %v1451 = vsel %vm83, %v1294, 0
  %v1454 = vsel %vm83, %v1295, 0
  %v1457 = vsel %vm83, %v1296, 0
  %v1460 = vsel %vm83, %v1297, 0
  %v1463 = vsel %vm83, %v1298, 0
  %v1466 = vsel %vm83, %v1299, 0
  %v1469 = vsel %vm83, %v1300, 0
  %v1472 = vsel %vm83, %v1301, 0
  %v1475 = vsel %vm83, %v1302, 0
  %v1478 = vsel %vm83, %v1303, 0
  %v1481 = vsel %vm83, %v1304, 0
  %v1484 = vsel %vm83, %v1305, 0
  %v1487 = vsel %vm83, %v1306, 0
  %v1490 = vsel %vm83, %v1307, 0
  %v1493 = vsel %vm83, %v1308, 0
  %v1496 = vsel %vm83, %v1309, 0
  %v1499 = vsel %vm83, %v1310, 0
  %v1502 = vsel %vm83, %v1311, 0
  %v1505 = vsel %vm83, %v1312, 0
  %v1508 = vsel %vm83, %v1313, 0
  %v1511 = vsel %vm83, %v1314, 0
  %v1514 = vsel %vm83, %v1315, 0
  %v1517 = vsel %vm83, %v1316, 0
  %v1520 = vsel %vm83, %v1317, 0
  %v1523 = vsel %vm83, %v1318, 0
  %v1526 = vsel %vm83, %v1319, 0
  %v1529 = vsel %vm83, %v1320, 0
  %v1532 = vsel %vm83, %v1321, 0
  %v1535 = vsel %vm83, %v1322, 0
  %v1538 = vsel %vm83, %v1323, 0
  %v1541 = vsel %vm83, %v1324, 0
  %v1544 = vsel %vm83, %v1325, 0
  %v1547 = vsel %vm83, %v1326, 0
  %v1550 = vsel %vm83, %v1327, 0
  %v1553 = vsel %vm83, %v1328, 0
  %v1556 = vsel %vm83, %v1329, 0
  %v1559 = vsel %vm83, %v1330, 0
  %v1562 = vsel %vm83, %v1331, 0
  %v1565 = vsel %vm83, %v1332, 0
  %v1568 = vsel %vm83, %v1333, 0
  %v1571 = vsel %vm83, %v1334, 0
  %v1574 = vsel %vm83, %v1335, 0
  %v1577 = vsel %vm83, %v1336, 0
  %v1580 = vsel %vm83, %v1337, 0
  %v1583 = vsel %vm83, %v1338, 0
  %v1586 = vsel %vm83, %v1339, 0
  %v1589 = vsel %vm83, %v1340, 0
  %v1592 = vsel %vm83, %v1341, 0
  %v1595 = vsel %vm83, %v1342, 0
  %v1598 = vsel %vm83, %v1343, 0
  %v1601 = vsel %vm83, %v1344, 0
  %v1604 = vsel %vm276, %v1410, 0
  %1606 = vmatpush.msra.mxu0 0.0
  %1607 = vmatpush.msra.mxu0 0.0
  %1608 = vmatpush.msra.mxu0 0.0
  %1609 = vmatpush.msra.mxu0 0.0
  %1610 = vmatpush.msra.mxu0 0.0
  %1611 = vmatpush.msra.mxu0 0.0
  %1612 = vmatpush.msra.mxu0 0.0
  %1613 = vmatpush.msra.mxu0 0.0
  %1614 = vmatpush.msra.mxu0 0.0
  %1615 = vmatpush.msra.mxu0 0.0
  %1616 = vmatpush.msra.mxu0 0.0
  %1617 = vmatpush.msra.mxu0 0.0
  %1618 = vmatpush.msra.mxu0 0.0
  %1619 = vmatpush.msra.mxu0 0.0
  %1620 = vmatpush.msra.mxu0 0.0
  %1621 = vmatpush.msra.mxu0 %v1604
  %1622 = vmatmul.f32.gmra.mxu0 %v1412
  %v1623 = vpop.f32.mrf.mxu0
  %v1624 = vadd.f32 0.0, %v1623
  %1625 = vmatmul.f32.gmra.mxu0 %v1415
  %v1626 = vpop.f32.mrf.mxu0
  %v1627 = vadd.f32 0.0, %v1626
  %1628 = vmatmul.f32.gmra.mxu0 %v1418
  %v1629 = vpop.f32.mrf.mxu0
  %v1630 = vadd.f32 0.0, %v1629
  %1631 = vmatmul.f32.gmra.mxu0 %v1421
  %v1632 = vpop.f32.mrf.mxu0
  %v1633 = vadd.f32 0.0, %v1632
  %1634 = vmatmul.f32.gmra.mxu0 %v1424
  %v1635 = vpop.f32.mrf.mxu0
  %v1636 = vadd.f32 0.0, %v1635
  %1637 = vmatmul.f32.gmra.mxu0 %v1427
  %v1638 = vpop.f32.mrf.mxu0
  %v1639 = vadd.f32 0.0, %v1638
  %1640 = vmatmul.f32.gmra.mxu0 %v1430
  %v1641 = vpop.f32.mrf.mxu0
  %v1642 = vadd.f32 0.0, %v1641
  %1643 = vmatmul.f32.gmra.mxu0 %v1433
  %v1644 = vpop.f32.mrf.mxu0
  %v1645 = vadd.f32 0.0, %v1644
  %1646 = vmatmul.f32.gmra.mxu0 %v1436
  %v1647 = vpop.f32.mrf.mxu0
  %v1648 = vadd.f32 0.0, %v1647
  %1649 = vmatmul.f32.gmra.mxu0 %v1439
  %v1650 = vpop.f32.mrf.mxu0
  %v1651 = vadd.f32 0.0, %v1650
  %1652 = vmatmul.f32.gmra.mxu0 %v1442
  %v1653 = vpop.f32.mrf.mxu0
  %v1654 = vadd.f32 0.0, %v1653
  %1655 = vmatmul.f32.gmra.mxu0 %v1445
  %v1656 = vpop.f32.mrf.mxu0
  %v1657 = vadd.f32 0.0, %v1656
  %1658 = vmatmul.f32.gmra.mxu0 %v1448
  %v1659 = vpop.f32.mrf.mxu0
  %v1660 = vadd.f32 0.0, %v1659
  %1661 = vmatmul.f32.gmra.mxu0 %v1451
  %v1662 = vpop.f32.mrf.mxu0
  %v1663 = vadd.f32 0.0, %v1662
  %1664 = vmatmul.f32.gmra.mxu0 %v1454
  %v1665 = vpop.f32.mrf.mxu0
  %v1666 = vadd.f32 0.0, %v1665
  %1667 = vmatmul.f32.gmra.mxu0 %v1457
  %v1668 = vpop.f32.mrf.mxu0
  %v1669 = vadd.f32 0.0, %v1668
  %1670 = vmatmul.f32.gmra.mxu0 %v1460
  %v1671 = vpop.f32.mrf.mxu0
  %v1672 = vadd.f32 0.0, %v1671
  %1673 = vmatmul.f32.gmra.mxu0 %v1463
  %v1674 = vpop.f32.mrf.mxu0
  %v1675 = vadd.f32 0.0, %v1674
  %1676 = vmatmul.f32.gmra.mxu0 %v1466
  %v1677 = vpop.f32.mrf.mxu0
  %v1678 = vadd.f32 0.0, %v1677
  %1679 = vmatmul.f32.gmra.mxu0 %v1469
  %v1680 = vpop.f32.mrf.mxu0
  %v1681 = vadd.f32 0.0, %v1680
  %1682 = vmatmul.f32.gmra.mxu0 %v1472
  %v1683 = vpop.f32.mrf.mxu0
  %v1684 = vadd.f32 0.0, %v1683
  %1685 = vmatmul.f32.gmra.mxu0 %v1475
  %v1686 = vpop.f32.mrf.mxu0
  %v1687 = vadd.f32 0.0, %v1686
  %1688 = vmatmul.f32.gmra.mxu0 %v1478
  %v1689 = vpop.f32.mrf.mxu0
  %v1690 = vadd.f32 0.0, %v1689
  %1691 = vmatmul.f32.gmra.mxu0 %v1481
  %v1692 = vpop.f32.mrf.mxu0
  %v1693 = vadd.f32 0.0, %v1692
  %1694 = vmatmul.f32.gmra.mxu0 %v1484
  %v1695 = vpop.f32.mrf.mxu0
  %v1696 = vadd.f32 0.0, %v1695
  %1697 = vmatmul.f32.gmra.mxu0 %v1487
  %v1698 = vpop.f32.mrf.mxu0
  %v1699 = vadd.f32 0.0, %v1698
  %1700 = vmatmul.f32.gmra.mxu0 %v1490
  %v1701 = vpop.f32.mrf.mxu0
  %v1702 = vadd.f32 0.0, %v1701
  %1703 = vmatmul.f32.gmra.mxu0 %v1493
  %v1704 = vpop.f32.mrf.mxu0
  %v1705 = vadd.f32 0.0, %v1704
  %1706 = vmatmul.f32.gmra.mxu0 %v1496
  %v1707 = vpop.f32.mrf.mxu0
  %v1708 = vadd.f32 0.0, %v1707
  %1709 = vmatmul.f32.gmra.mxu0 %v1499
  %v1710 = vpop.f32.mrf.mxu0
  %v1711 = vadd.f32 0.0, %v1710
  %1712 = vmatmul.f32.gmra.mxu0 %v1502
  %v1713 = vpop.f32.mrf.mxu0
  %v1714 = vadd.f32 0.0, %v1713
  %1715 = vmatmul.f32.gmra.mxu0 %v1505
  %v1716 = vpop.f32.mrf.mxu0
  %v1717 = vadd.f32 0.0, %v1716
  %1718 = vmatmul.f32.gmra.mxu0 %v1508
  %v1719 = vpop.f32.mrf.mxu0
  %v1720 = vadd.f32 0.0, %v1719
  %1721 = vmatmul.f32.gmra.mxu0 %v1511
  %v1722 = vpop.f32.mrf.mxu0
  %v1723 = vadd.f32 0.0, %v1722
  %1724 = vmatmul.f32.gmra.mxu0 %v1514
  %v1725 = vpop.f32.mrf.mxu0
  %v1726 = vadd.f32 0.0, %v1725
  %1727 = vmatmul.f32.gmra.mxu0 %v1517
  %v1728 = vpop.f32.mrf.mxu0
  %v1729 = vadd.f32 0.0, %v1728
  %1730 = vmatmul.f32.gmra.mxu0 %v1520
  %v1731 = vpop.f32.mrf.mxu0
  %v1732 = vadd.f32 0.0, %v1731
  %1733 = vmatmul.f32.gmra.mxu0 %v1523
  %v1734 = vpop.f32.mrf.mxu0
  %v1735 = vadd.f32 0.0, %v1734
  %1736 = vmatmul.f32.gmra.mxu0 %v1526
  %v1737 = vpop.f32.mrf.mxu0
  %v1738 = vadd.f32 0.0, %v1737
  %1739 = vmatmul.f32.gmra.mxu0 %v1529
  %v1740 = vpop.f32.mrf.mxu0
  %v1741 = vadd.f32 0.0, %v1740
  %1742 = vmatmul.f32.gmra.mxu0 %v1532
  %v1743 = vpop.f32.mrf.mxu0
  %v1744 = vadd.f32 0.0, %v1743
  %1745 = vmatmul.f32.gmra.mxu0 %v1535
  %v1746 = vpop.f32.mrf.mxu0
  %v1747 = vadd.f32 0.0, %v1746
  %1748 = vmatmul.f32.gmra.mxu0 %v1538
  %v1749 = vpop.f32.mrf.mxu0
  %v1750 = vadd.f32 0.0, %v1749
  %1751 = vmatmul.f32.gmra.mxu0 %v1541
  %v1752 = vpop.f32.mrf.mxu0
  %v1753 = vadd.f32 0.0, %v1752
  %1754 = vmatmul.f32.gmra.mxu0 %v1544
  %v1755 = vpop.f32.mrf.mxu0
  %v1756 = vadd.f32 0.0, %v1755
  %1757 = vmatmul.f32.gmra.mxu0 %v1547
  %v1758 = vpop.f32.mrf.mxu0
  %v1759 = vadd.f32 0.0, %v1758
  %1760 = vmatmul.f32.gmra.mxu0 %v1550
  %v1761 = vpop.f32.mrf.mxu0
  %v1762 = vadd.f32 0.0, %v1761
  %1763 = vmatmul.f32.gmra.mxu0 %v1553
  %v1764 = vpop.f32.mrf.mxu0
  %v1765 = vadd.f32 0.0, %v1764
  %1766 = vmatmul.f32.gmra.mxu0 %v1556
  %v1767 = vpop.f32.mrf.mxu0
  %v1768 = vadd.f32 0.0, %v1767
  %1769 = vmatmul.f32.gmra.mxu0 %v1559
  %v1770 = vpop.f32.mrf.mxu0
  %v1771 = vadd.f32 0.0, %v1770
  %1772 = vmatmul.f32.gmra.mxu0 %v1562
  %v1773 = vpop.f32.mrf.mxu0
  %v1774 = vadd.f32 0.0, %v1773
  %1775 = vmatmul.f32.gmra.mxu0 %v1565
  %v1776 = vpop.f32.mrf.mxu0
  %v1777 = vadd.f32 0.0, %v1776
  %1778 = vmatmul.f32.gmra.mxu0 %v1568
  %v1779 = vpop.f32.mrf.mxu0
  %v1780 = vadd.f32 0.0, %v1779
  %1781 = vmatmul.f32.gmra.mxu0 %v1571
  %v1782 = vpop.f32.mrf.mxu0
  %v1783 = vadd.f32 0.0, %v1782
  %1784 = vmatmul.f32.gmra.mxu0 %v1574
  %v1785 = vpop.f32.mrf.mxu0
  %v1786 = vadd.f32 0.0, %v1785
  %1787 = vmatmul.f32.gmra.mxu0 %v1577
  %v1788 = vpop.f32.mrf.mxu0
  %v1789 = vadd.f32 0.0, %v1788
  %1790 = vmatmul.f32.gmra.mxu0 %v1580
  %v1791 = vpop.f32.mrf.mxu0
  %v1792 = vadd.f32 0.0, %v1791
  %1793 = vmatmul.f32.gmra.mxu0 %v1583
  %v1794 = vpop.f32.mrf.mxu0
  %v1795 = vadd.f32 0.0, %v1794
  %1796 = vmatmul.f32.gmra.mxu0 %v1586
  %v1797 = vpop.f32.mrf.mxu0
  %v1798 = vadd.f32 0.0, %v1797
  %1799 = vmatmul.f32.gmra.mxu0 %v1589
  %v1800 = vpop.f32.mrf.mxu0
  %v1801 = vadd.f32 0.0, %v1800
  %1802 = vmatmul.f32.gmra.mxu0 %v1592
  %v1803 = vpop.f32.mrf.mxu0
  %v1804 = vadd.f32 0.0, %v1803
  %1805 = vmatmul.f32.gmra.mxu0 %v1595
  %v1806 = vpop.f32.mrf.mxu0
  %v1807 = vadd.f32 0.0, %v1806
  %1808 = vmatmul.f32.gmra.mxu0 %v1598
  %v1809 = vpop.f32.mrf.mxu0
  %v1810 = vadd.f32 0.0, %v1809
  %1811 = vmatmul.f32.gmra.mxu0 %v1601
  %v1812 = vpop.f32.mrf.mxu0
  %v1813 = vadd.f32 0.0, %v1812
  %1814 = vdwg.mxu0
  %v1815 = vadd.f32 %v1345, %v1624
  %v1816 = vadd.f32 %v1346, %v1627
  %v1817 = vadd.f32 %v1347, %v1630
  %v1818 = vadd.f32 %v1348, %v1633
  %v1819 = vadd.f32 %v1349, %v1636
  %v1820 = vadd.f32 %v1350, %v1639
  %v1821 = vadd.f32 %v1351, %v1642
  %v1822 = vadd.f32 %v1352, %v1645
  %v1823 = vadd.f32 %v1353, %v1648
  %v1824 = vadd.f32 %v1354, %v1651
  %v1825 = vadd.f32 %v1355, %v1654
  %v1826 = vadd.f32 %v1356, %v1657
  %v1827 = vadd.f32 %v1357, %v1660
  %v1828 = vadd.f32 %v1358, %v1663
  %v1829 = vadd.f32 %v1359, %v1666
  %v1830 = vadd.f32 %v1360, %v1669
  %v1831 = vadd.f32 %v1361, %v1672
  %v1832 = vadd.f32 %v1362, %v1675
  %v1833 = vadd.f32 %v1363, %v1678
  %v1834 = vadd.f32 %v1364, %v1681
  %v1835 = vadd.f32 %v1365, %v1684
  %v1836 = vadd.f32 %v1366, %v1687
  %v1837 = vadd.f32 %v1367, %v1690
  %v1838 = vadd.f32 %v1368, %v1693
  %v1839 = vadd.f32 %v1369, %v1696
  %v1840 = vadd.f32 %v1370, %v1699
  %v1841 = vadd.f32 %v1371, %v1702
  %v1842 = vadd.f32 %v1372, %v1705
  %v1843 = vadd.f32 %v1373, %v1708
  %v1844 = vadd.f32 %v1374, %v1711
  %v1845 = vadd.f32 %v1375, %v1714
  %v1846 = vadd.f32 %v1376, %v1717
  %v1847 = vadd.f32 %v1377, %v1720
  %v1848 = vadd.f32 %v1378, %v1723
  %v1849 = vadd.f32 %v1379, %v1726
  %v1850 = vadd.f32 %v1380, %v1729
  %v1851 = vadd.f32 %v1381, %v1732
  %v1852 = vadd.f32 %v1382, %v1735
  %v1853 = vadd.f32 %v1383, %v1738
  %v1854 = vadd.f32 %v1384, %v1741
  %v1855 = vadd.f32 %v1385, %v1744
  %v1856 = vadd.f32 %v1386, %v1747
  %v1857 = vadd.f32 %v1387, %v1750
  %v1858 = vadd.f32 %v1388, %v1753
  %v1859 = vadd.f32 %v1389, %v1756
  %v1860 = vadd.f32 %v1390, %v1759
  %v1861 = vadd.f32 %v1391, %v1762
  %v1862 = vadd.f32 %v1392, %v1765
  %v1863 = vadd.f32 %v1393, %v1768
  %v1864 = vadd.f32 %v1394, %v1771
  %v1865 = vadd.f32 %v1395, %v1774
  %v1866 = vadd.f32 %v1396, %v1777
  %v1867 = vadd.f32 %v1397, %v1780
  %v1868 = vadd.f32 %v1398, %v1783
  %v1869 = vadd.f32 %v1399, %v1786
  %v1870 = vadd.f32 %v1400, %v1789
  %v1871 = vadd.f32 %v1401, %v1792
  %v1872 = vadd.f32 %v1402, %v1795
  %v1873 = vadd.f32 %v1403, %v1798
  %v1874 = vadd.f32 %v1404, %v1801
  %v1875 = vadd.f32 %v1405, %v1804
  %v1876 = vadd.f32 %v1406, %v1807
  %v1877 = vadd.f32 %v1407, %v1810
  %v1878 = vadd.f32 %v1408, %v1813
  %1879 = vst [vmem:[%s3] sm:$0xff] %v1815
  %1880 = vst [vmem:[%s3 + $0x8] sm:$0xff] %v1816
  %1881 = vst [vmem:[%s3 + $0x10] sm:$0xff] %v1817
  %1882 = vst [vmem:[%s3 + $0x18] sm:$0xff] %v1818
  %1883 = vst [vmem:[%s3 + $0x20] sm:$0xff] %v1819
  %1884 = vst [vmem:[%s3 + $0x28] sm:$0xff] %v1820
  %1885 = vst [vmem:[%s3 + $0x30] sm:$0xff] %v1821
  %1886 = vst [vmem:[%s3 + $0x38] sm:$0xff] %v1822
  %1887 = vst [vmem:[%s3 + $0x40] sm:$0xff] %v1823
  %1888 = vst [vmem:[%s3 + $0x48] sm:$0xff] %v1824
  %1889 = vst [vmem:[%s3 + $0x50] sm:$0xff] %v1825
  %1890 = vst [vmem:[%s3 + $0x58] sm:$0xff] %v1826
  %1891 = vst [vmem:[%s3 + $0x60] sm:$0xff] %v1827
  %1892 = vst [vmem:[%s3 + $0x68] sm:$0xff] %v1828
  %1893 = vst [vmem:[%s3 + $0x70] sm:$0xff] %v1829
  %1894 = vst [vmem:[%s3 + $0x78] sm:$0xff] %v1830
  %1895 = vst [vmem:[%s3 + $0x80] sm:$0xff] %v1831
  %1896 = vst [vmem:[%s3 + $0x88] sm:$0xff] %v1832
  %1897 = vst [vmem:[%s3 + $0x90] sm:$0xff] %v1833
  %1898 = vst [vmem:[%s3 + $0x98] sm:$0xff] %v1834
  %1899 = vst [vmem:[%s3 + $0xa0] sm:$0xff] %v1835
  %1900 = vst [vmem:[%s3 + $0xa8] sm:$0xff] %v1836
  %1901 = vst [vmem:[%s3 + $0xb0] sm:$0xff] %v1837
  %1902 = vst [vmem:[%s3 + $0xb8] sm:$0xff] %v1838
  %1903 = vst [vmem:[%s3 + $0xc0] sm:$0xff] %v1839
  %1904 = vst [vmem:[%s3 + $0xc8] sm:$0xff] %v1840
  %1905 = vst [vmem:[%s3 + $0xd0] sm:$0xff] %v1841
  %1906 = vst [vmem:[%s3 + $0xd8] sm:$0xff] %v1842
  %1907 = vst [vmem:[%s3 + $0xe0] sm:$0xff] %v1843
  %1908 = vst [vmem:[%s3 + $0xe8] sm:$0xff] %v1844
  %1909 = vst [vmem:[%s3 + $0xf0] sm:$0xff] %v1845
  %1910 = vst [vmem:[%s3 + $0xf8] sm:$0xff] %v1846
  %1911 = vst [vmem:[%s3 + $0x100] sm:$0xff] %v1847
  %1912 = vst [vmem:[%s3 + $0x108] sm:$0xff] %v1848
  %1913 = vst [vmem:[%s3 + $0x110] sm:$0xff] %v1849
  %1914 = vst [vmem:[%s3 + $0x118] sm:$0xff] %v1850
  %1915 = vst [vmem:[%s3 + $0x120] sm:$0xff] %v1851
  %1916 = vst [vmem:[%s3 + $0x128] sm:$0xff] %v1852
  %1917 = vst [vmem:[%s3 + $0x130] sm:$0xff] %v1853
  %1918 = vst [vmem:[%s3 + $0x138] sm:$0xff] %v1854
  %1919 = vst [vmem:[%s3 + $0x140] sm:$0xff] %v1855
  %1920 = vst [vmem:[%s3 + $0x148] sm:$0xff] %v1856
  %1921 = vst [vmem:[%s3 + $0x150] sm:$0xff] %v1857
  %1922 = vst [vmem:[%s3 + $0x158] sm:$0xff] %v1858
  %1923 = vst [vmem:[%s3 + $0x160] sm:$0xff] %v1859
  %1924 = vst [vmem:[%s3 + $0x168] sm:$0xff] %v1860
  %1925 = vst [vmem:[%s3 + $0x170] sm:$0xff] %v1861
  %1926 = vst [vmem:[%s3 + $0x178] sm:$0xff] %v1862
  %1927 = vst [vmem:[%s3 + $0x180] sm:$0xff] %v1863
  %1928 = vst [vmem:[%s3 + $0x188] sm:$0xff] %v1864
  %1929 = vst [vmem:[%s3 + $0x190] sm:$0xff] %v1865
  %1930 = vst [vmem:[%s3 + $0x198] sm:$0xff] %v1866
  %1931 = vst [vmem:[%s3 + $0x1a0] sm:$0xff] %v1867
  %1932 = vst [vmem:[%s3 + $0x1a8] sm:$0xff] %v1868
  %1933 = vst [vmem:[%s3 + $0x1b0] sm:$0xff] %v1869
  %1934 = vst [vmem:[%s3 + $0x1b8] sm:$0xff] %v1870
  %1935 = vst [vmem:[%s3 + $0x1c0] sm:$0xff] %v1871
  %1936 = vst [vmem:[%s3 + $0x1c8] sm:$0xff] %v1872
  %1937 = vst [vmem:[%s3 + $0x1d0] sm:$0xff] %v1873
  %1938 = vst [vmem:[%s3 + $0x1d8] sm:$0xff] %v1874
  %1939 = vst [vmem:[%s3 + $0x1e0] sm:$0xff] %v1875
  %1940 = vst [vmem:[%s3 + $0x1e8] sm:$0xff] %v1876
  %1941 = vst [vmem:[%s3 + $0x1f0] sm:$0xff] %v1877
  %1942 = vst [vmem:[%s3 + $0x1f8] sm:$0xff] %v1878
  %s1943 = scalar_lea.vmem %s0, 48
  %v1944 = vld [vmem:[%s1943] sm:$0xff]
  %v1945 = vld [vmem:[%s1943 + $0x8] sm:$0xff]
  %v1946 = vld [vmem:[%s1943 + $0x10] sm:$0xff]
  %v1947 = vld [vmem:[%s1943 + $0x18] sm:$0xff]
  %v1948 = vld [vmem:[%s1943 + $0x20] sm:$0xff]
  %v1949 = vld [vmem:[%s1943 + $0x28] sm:$0xff]
  %v1950 = vld [vmem:[%s1943 + $0x30] sm:$0xff]
  %v1951 = vld [vmem:[%s1943 + $0x38] sm:$0xff]
  %v1952 = vld [vmem:[%s1943 + $0x40] sm:$0xff]
  %v1953 = vld [vmem:[%s1943 + $0x48] sm:$0xff]
  %v1954 = vld [vmem:[%s1943 + $0x50] sm:$0xff]
  %v1955 = vld [vmem:[%s1943 + $0x58] sm:$0xff]
  %v1956 = vld [vmem:[%s1943 + $0x60] sm:$0xff]
  %v1957 = vld [vmem:[%s1943 + $0x68] sm:$0xff]
  %v1958 = vld [vmem:[%s1943 + $0x70] sm:$0xff]
  %v1959 = vld [vmem:[%s1943 + $0x78] sm:$0xff]
  %v1960 = vld [vmem:[%s1943 + $0x80] sm:$0xff]
  %v1961 = vld [vmem:[%s1943 + $0x88] sm:$0xff]
  %v1962 = vld [vmem:[%s1943 + $0x90] sm:$0xff]
  %v1963 = vld [vmem:[%s1943 + $0x98] sm:$0xff]
  %v1964 = vld [vmem:[%s1943 + $0xa0] sm:$0xff]
  %v1965 = vld [vmem:[%s1943 + $0xa8] sm:$0xff]
  %v1966 = vld [vmem:[%s1943 + $0xb0] sm:$0xff]
  %v1967 = vld [vmem:[%s1943 + $0xb8] sm:$0xff]
  %v1968 = vld [vmem:[%s1943 + $0xc0] sm:$0xff]
  %v1969 = vld [vmem:[%s1943 + $0xc8] sm:$0xff]
  %v1970 = vld [vmem:[%s1943 + $0xd0] sm:$0xff]
  %v1971 = vld [vmem:[%s1943 + $0xd8] sm:$0xff]
  %v1972 = vld [vmem:[%s1943 + $0xe0] sm:$0xff]
  %v1973 = vld [vmem:[%s1943 + $0xe8] sm:$0xff]
  %v1974 = vld [vmem:[%s1943 + $0xf0] sm:$0xff]
  %v1975 = vld [vmem:[%s1943 + $0xf8] sm:$0xff]
  %v1976 = vld [vmem:[%s1943 + $0x180] sm:$0xff]
  %v1977 = vld [vmem:[%s1943 + $0x188] sm:$0xff]
  %v1978 = vld [vmem:[%s1943 + $0x190] sm:$0xff]
  %v1979 = vld [vmem:[%s1943 + $0x198] sm:$0xff]
  %v1980 = vld [vmem:[%s1943 + $0x1a0] sm:$0xff]
  %v1981 = vld [vmem:[%s1943 + $0x1a8] sm:$0xff]
  %v1982 = vld [vmem:[%s1943 + $0x1b0] sm:$0xff]
  %v1983 = vld [vmem:[%s1943 + $0x1b8] sm:$0xff]
  %v1984 = vld [vmem:[%s1943 + $0x1c0] sm:$0xff]
  %v1985 = vld [vmem:[%s1943 + $0x1c8] sm:$0xff]
  %v1986 = vld [vmem:[%s1943 + $0x1d0] sm:$0xff]
  %v1987 = vld [vmem:[%s1943 + $0x1d8] sm:$0xff]
  %v1988 = vld [vmem:[%s1943 + $0x1e0] sm:$0xff]
  %v1989 = vld [vmem:[%s1943 + $0x1e8] sm:$0xff]
  %v1990 = vld [vmem:[%s1943 + $0x1f0] sm:$0xff]
  %v1991 = vld [vmem:[%s1943 + $0x1f8] sm:$0xff]
  %v1992 = vld [vmem:[%s1943 + $0x200] sm:$0xff]
  %v1993 = vld [vmem:[%s1943 + $0x208] sm:$0xff]
  %v1994 = vld [vmem:[%s1943 + $0x210] sm:$0xff]
  %v1995 = vld [vmem:[%s1943 + $0x218] sm:$0xff]
  %v1996 = vld [vmem:[%s1943 + $0x220] sm:$0xff]
  %v1997 = vld [vmem:[%s1943 + $0x228] sm:$0xff]
  %v1998 = vld [vmem:[%s1943 + $0x230] sm:$0xff]
  %v1999 = vld [vmem:[%s1943 + $0x238] sm:$0xff]
  %v2000 = vld [vmem:[%s1943 + $0x240] sm:$0xff]
  %v2001 = vld [vmem:[%s1943 + $0x248] sm:$0xff]
  %v2002 = vld [vmem:[%s1943 + $0x250] sm:$0xff]
  %v2003 = vld [vmem:[%s1943 + $0x258] sm:$0xff]
  %v2004 = vld [vmem:[%s1943 + $0x260] sm:$0xff]
  %v2005 = vld [vmem:[%s1943 + $0x268] sm:$0xff]
  %v2006 = vld [vmem:[%s1943 + $0x270] sm:$0xff]
  %v2007 = vld [vmem:[%s1943 + $0x278] sm:$0xff]
  %v2008 = vld [vmem:[%s3] sm:$0xff]
  %v2009 = vld [vmem:[%s3 + $0x8] sm:$0xff]
  %v2010 = vld [vmem:[%s3 + $0x10] sm:$0xff]
  %v2011 = vld [vmem:[%s3 + $0x18] sm:$0xff]
  %v2012 = vld [vmem:[%s3 + $0x20] sm:$0xff]
  %v2013 = vld [vmem:[%s3 + $0x28] sm:$0xff]
  %v2014 = vld [vmem:[%s3 + $0x30] sm:$0xff]
  %v2015 = vld [vmem:[%s3 + $0x38] sm:$0xff]
  %v2016 = vld [vmem:[%s3 + $0x40] sm:$0xff]
  %v2017 = vld [vmem:[%s3 + $0x48] sm:$0xff]
  %v2018 = vld [vmem:[%s3 + $0x50] sm:$0xff]
  %v2019 = vld [vmem:[%s3 + $0x58] sm:$0xff]
  %v2020 = vld [vmem:[%s3 + $0x60] sm:$0xff]
  %v2021 = vld [vmem:[%s3 + $0x68] sm:$0xff]
  %v2022 = vld [vmem:[%s3 + $0x70] sm:$0xff]
  %v2023 = vld [vmem:[%s3 + $0x78] sm:$0xff]
  %v2024 = vld [vmem:[%s3 + $0x80] sm:$0xff]
  %v2025 = vld [vmem:[%s3 + $0x88] sm:$0xff]
  %v2026 = vld [vmem:[%s3 + $0x90] sm:$0xff]
  %v2027 = vld [vmem:[%s3 + $0x98] sm:$0xff]
  %v2028 = vld [vmem:[%s3 + $0xa0] sm:$0xff]
  %v2029 = vld [vmem:[%s3 + $0xa8] sm:$0xff]
  %v2030 = vld [vmem:[%s3 + $0xb0] sm:$0xff]
  %v2031 = vld [vmem:[%s3 + $0xb8] sm:$0xff]
  %v2032 = vld [vmem:[%s3 + $0xc0] sm:$0xff]
  %v2033 = vld [vmem:[%s3 + $0xc8] sm:$0xff]
  %v2034 = vld [vmem:[%s3 + $0xd0] sm:$0xff]
  %v2035 = vld [vmem:[%s3 + $0xd8] sm:$0xff]
  %v2036 = vld [vmem:[%s3 + $0xe0] sm:$0xff]
  %v2037 = vld [vmem:[%s3 + $0xe8] sm:$0xff]
  %v2038 = vld [vmem:[%s3 + $0xf0] sm:$0xff]
  %v2039 = vld [vmem:[%s3 + $0xf8] sm:$0xff]
  %v2040 = vld [vmem:[%s3 + $0x100] sm:$0xff]
  %v2041 = vld [vmem:[%s3 + $0x108] sm:$0xff]
  %v2042 = vld [vmem:[%s3 + $0x110] sm:$0xff]
  %v2043 = vld [vmem:[%s3 + $0x118] sm:$0xff]
  %v2044 = vld [vmem:[%s3 + $0x120] sm:$0xff]
  %v2045 = vld [vmem:[%s3 + $0x128] sm:$0xff]
  %v2046 = vld [vmem:[%s3 + $0x130] sm:$0xff]
  %v2047 = vld [vmem:[%s3 + $0x138] sm:$0xff]
  %v2048 = vld [vmem:[%s3 + $0x140] sm:$0xff]
  %v2049 = vld [vmem:[%s3 + $0x148] sm:$0xff]
  %v2050 = vld [vmem:[%s3 + $0x150] sm:$0xff]
  %v2051 = vld [vmem:[%s3 + $0x158] sm:$0xff]
  %v2052 = vld [vmem:[%s3 + $0x160] sm:$0xff]
  %v2053 = vld [vmem:[%s3 + $0x168] sm:$0xff]
  %v2054 = vld [vmem:[%s3 + $0x170] sm:$0xff]
  %v2055 = vld [vmem:[%s3 + $0x178] sm:$0xff]
  %v2056 = vld [vmem:[%s3 + $0x180] sm:$0xff]
  %v2057 = vld [vmem:[%s3 + $0x188] sm:$0xff]
  %v2058 = vld [vmem:[%s3 + $0x190] sm:$0xff]
  %v2059 = vld [vmem:[%s3 + $0x198] sm:$0xff]
  %v2060 = vld [vmem:[%s3 + $0x1a0] sm:$0xff]
  %v2061 = vld [vmem:[%s3 + $0x1a8] sm:$0xff]
  %v2062 = vld [vmem:[%s3 + $0x1b0] sm:$0xff]
  %v2063 = vld [vmem:[%s3 + $0x1b8] sm:$0xff]
  %v2064 = vld [vmem:[%s3 + $0x1c0] sm:$0xff]
  %v2065 = vld [vmem:[%s3 + $0x1c8] sm:$0xff]
  %v2066 = vld [vmem:[%s3 + $0x1d0] sm:$0xff]
  %v2067 = vld [vmem:[%s3 + $0x1d8] sm:$0xff]
  %v2068 = vld [vmem:[%s3 + $0x1e0] sm:$0xff]
  %v2069 = vld [vmem:[%s3 + $0x1e8] sm:$0xff]
  %v2070 = vld [vmem:[%s3 + $0x1f0] sm:$0xff]
  %v2071 = vld [vmem:[%s3 + $0x1f8] sm:$0xff]
  %s2072 = scalar_lea.vmem %s1, 12
  %v2073 = vld [vmem:[%s2072] sm:$0xf]
  %v2075 = vsel %vm83, %v1944, 0
  %v2078 = vsel %vm83, %v1945, 0
  %v2081 = vsel %vm83, %v1946, 0
  %v2084 = vsel %vm83, %v1947, 0
  %v2087 = vsel %vm83, %v1948, 0
  %v2090 = vsel %vm83, %v1949, 0
  %v2093 = vsel %vm83, %v1950, 0
  %v2096 = vsel %vm83, %v1951, 0
  %v2099 = vsel %vm83, %v1952, 0
  %v2102 = vsel %vm83, %v1953, 0
  %v2105 = vsel %vm83, %v1954, 0
  %v2108 = vsel %vm83, %v1955, 0
  %v2111 = vsel %vm83, %v1956, 0
  %v2114 = vsel %vm83, %v1957, 0
  %v2117 = vsel %vm83, %v1958, 0
  %v2120 = vsel %vm83, %v1959, 0
  %v2123 = vsel %vm83, %v1960, 0
  %v2126 = vsel %vm83, %v1961, 0
  %v2129 = vsel %vm83, %v1962, 0
  %v2132 = vsel %vm83, %v1963, 0
  %v2135 = vsel %vm83, %v1964, 0
  %v2138 = vsel %vm83, %v1965, 0
  %v2141 = vsel %vm83, %v1966, 0
  %v2144 = vsel %vm83, %v1967, 0
  %v2147 = vsel %vm83, %v1968, 0
  %v2150 = vsel %vm83, %v1969, 0
  %v2153 = vsel %vm83, %v1970, 0
  %v2156 = vsel %vm83, %v1971, 0
  %v2159 = vsel %vm83, %v1972, 0
  %v2162 = vsel %vm83, %v1973, 0
  %v2165 = vsel %vm83, %v1974, 0
  %v2168 = vsel %vm83, %v1975, 0
  %v2171 = vsel %vm83, %v1976, 0
  %v2174 = vsel %vm83, %v1977, 0
  %v2177 = vsel %vm83, %v1978, 0
  %v2180 = vsel %vm83, %v1979, 0
  %v2183 = vsel %vm83, %v1980, 0
  %v2186 = vsel %vm83, %v1981, 0
  %v2189 = vsel %vm83, %v1982, 0
  %v2192 = vsel %vm83, %v1983, 0
  %v2195 = vsel %vm83, %v1984, 0
  %v2198 = vsel %vm83, %v1985, 0
  %v2201 = vsel %vm83, %v1986, 0
  %v2204 = vsel %vm83, %v1987, 0
  %v2207 = vsel %vm83, %v1988, 0
  %v2210 = vsel %vm83, %v1989, 0
  %v2213 = vsel %vm83, %v1990, 0
  %v2216 = vsel %vm83, %v1991, 0
  %v2219 = vsel %vm83, %v1992, 0
  %v2222 = vsel %vm83, %v1993, 0
  %v2225 = vsel %vm83, %v1994, 0
  %v2228 = vsel %vm83, %v1995, 0
  %v2231 = vsel %vm83, %v1996, 0
  %v2234 = vsel %vm83, %v1997, 0
  %v2237 = vsel %vm83, %v1998, 0
  %v2240 = vsel %vm83, %v1999, 0
  %v2243 = vsel %vm83, %v2000, 0
  %v2246 = vsel %vm83, %v2001, 0
  %v2249 = vsel %vm83, %v2002, 0
  %v2252 = vsel %vm83, %v2003, 0
  %v2255 = vsel %vm83, %v2004, 0
  %v2258 = vsel %vm83, %v2005, 0
  %v2261 = vsel %vm83, %v2006, 0
  %v2264 = vsel %vm83, %v2007, 0
  %v2267 = vsel %vm276, %v2073, 0
  %2269 = vmatpush.msra.mxu0 0.0
  %2270 = vmatpush.msra.mxu0 0.0
  %2271 = vmatpush.msra.mxu0 0.0
  %2272 = vmatpush.msra.mxu0 0.0
  %2273 = vmatpush.msra.mxu0 0.0
  %2274 = vmatpush.msra.mxu0 0.0
  %2275 = vmatpush.msra.mxu0 0.0
  %2276 = vmatpush.msra.mxu0 0.0
  %2277 = vmatpush.msra.mxu0 0.0
  %2278 = vmatpush.msra.mxu0 0.0
  %2279 = vmatpush.msra.mxu0 0.0
  %2280 = vmatpush.msra.mxu0 0.0
  %2281 = vmatpush.msra.mxu0 0.0
  %2282 = vmatpush.msra.mxu0 0.0
  %2283 = vmatpush.msra.mxu0 0.0
  %2284 = vmatpush.msra.mxu0 %v2267
  %2285 = vmatmul.f32.gmra.mxu0 %v2075
  %v2286 = vpop.f32.mrf.mxu0
  %v2287 = vadd.f32 0.0, %v2286
  %2288 = vmatmul.f32.gmra.mxu0 %v2078
  %v2289 = vpop.f32.mrf.mxu0
  %v2290 = vadd.f32 0.0, %v2289
  %2291 = vmatmul.f32.gmra.mxu0 %v2081
  %v2292 = vpop.f32.mrf.mxu0
  %v2293 = vadd.f32 0.0, %v2292
  %2294 = vmatmul.f32.gmra.mxu0 %v2084
  %v2295 = vpop.f32.mrf.mxu0
  %v2296 = vadd.f32 0.0, %v2295
  %2297 = vmatmul.f32.gmra.mxu0 %v2087
  %v2298 = vpop.f32.mrf.mxu0
  %v2299 = vadd.f32 0.0, %v2298
  %2300 = vmatmul.f32.gmra.mxu0 %v2090
  %v2301 = vpop.f32.mrf.mxu0
  %v2302 = vadd.f32 0.0, %v2301
  %2303 = vmatmul.f32.gmra.mxu0 %v2093
  %v2304 = vpop.f32.mrf.mxu0
  %v2305 = vadd.f32 0.0, %v2304
  %2306 = vmatmul.f32.gmra.mxu0 %v2096
  %v2307 = vpop.f32.mrf.mxu0
  %v2308 = vadd.f32 0.0, %v2307
  %2309 = vmatmul.f32.gmra.mxu0 %v2099
  %v2310 = vpop.f32.mrf.mxu0
  %v2311 = vadd.f32 0.0, %v2310
  %2312 = vmatmul.f32.gmra.mxu0 %v2102
  %v2313 = vpop.f32.mrf.mxu0
  %v2314 = vadd.f32 0.0, %v2313
  %2315 = vmatmul.f32.gmra.mxu0 %v2105
  %v2316 = vpop.f32.mrf.mxu0
  %v2317 = vadd.f32 0.0, %v2316
  %2318 = vmatmul.f32.gmra.mxu0 %v2108
  %v2319 = vpop.f32.mrf.mxu0
  %v2320 = vadd.f32 0.0, %v2319
  %2321 = vmatmul.f32.gmra.mxu0 %v2111
  %v2322 = vpop.f32.mrf.mxu0
  %v2323 = vadd.f32 0.0, %v2322
  %2324 = vmatmul.f32.gmra.mxu0 %v2114
  %v2325 = vpop.f32.mrf.mxu0
  %v2326 = vadd.f32 0.0, %v2325
  %2327 = vmatmul.f32.gmra.mxu0 %v2117
  %v2328 = vpop.f32.mrf.mxu0
  %v2329 = vadd.f32 0.0, %v2328
  %2330 = vmatmul.f32.gmra.mxu0 %v2120
  %v2331 = vpop.f32.mrf.mxu0
  %v2332 = vadd.f32 0.0, %v2331
  %2333 = vmatmul.f32.gmra.mxu0 %v2123
  %v2334 = vpop.f32.mrf.mxu0
  %v2335 = vadd.f32 0.0, %v2334
  %2336 = vmatmul.f32.gmra.mxu0 %v2126
  %v2337 = vpop.f32.mrf.mxu0
  %v2338 = vadd.f32 0.0, %v2337
  %2339 = vmatmul.f32.gmra.mxu0 %v2129
  %v2340 = vpop.f32.mrf.mxu0
  %v2341 = vadd.f32 0.0, %v2340
  %2342 = vmatmul.f32.gmra.mxu0 %v2132
  %v2343 = vpop.f32.mrf.mxu0
  %v2344 = vadd.f32 0.0, %v2343
  %2345 = vmatmul.f32.gmra.mxu0 %v2135
  %v2346 = vpop.f32.mrf.mxu0
  %v2347 = vadd.f32 0.0, %v2346
  %2348 = vmatmul.f32.gmra.mxu0 %v2138
  %v2349 = vpop.f32.mrf.mxu0
  %v2350 = vadd.f32 0.0, %v2349
  %2351 = vmatmul.f32.gmra.mxu0 %v2141
  %v2352 = vpop.f32.mrf.mxu0
  %v2353 = vadd.f32 0.0, %v2352
  %2354 = vmatmul.f32.gmra.mxu0 %v2144
  %v2355 = vpop.f32.mrf.mxu0
  %v2356 = vadd.f32 0.0, %v2355
  %2357 = vmatmul.f32.gmra.mxu0 %v2147
  %v2358 = vpop.f32.mrf.mxu0
  %v2359 = vadd.f32 0.0, %v2358
  %2360 = vmatmul.f32.gmra.mxu0 %v2150
  %v2361 = vpop.f32.mrf.mxu0
  %v2362 = vadd.f32 0.0, %v2361
  %2363 = vmatmul.f32.gmra.mxu0 %v2153
  %v2364 = vpop.f32.mrf.mxu0
  %v2365 = vadd.f32 0.0, %v2364
  %2366 = vmatmul.f32.gmra.mxu0 %v2156
  %v2367 = vpop.f32.mrf.mxu0
  %v2368 = vadd.f32 0.0, %v2367
  %2369 = vmatmul.f32.gmra.mxu0 %v2159
  %v2370 = vpop.f32.mrf.mxu0
  %v2371 = vadd.f32 0.0, %v2370
  %2372 = vmatmul.f32.gmra.mxu0 %v2162
  %v2373 = vpop.f32.mrf.mxu0
  %v2374 = vadd.f32 0.0, %v2373
  %2375 = vmatmul.f32.gmra.mxu0 %v2165
  %v2376 = vpop.f32.mrf.mxu0
  %v2377 = vadd.f32 0.0, %v2376
  %2378 = vmatmul.f32.gmra.mxu0 %v2168
  %v2379 = vpop.f32.mrf.mxu0
  %v2380 = vadd.f32 0.0, %v2379
  %2381 = vmatmul.f32.gmra.mxu0 %v2171
  %v2382 = vpop.f32.mrf.mxu0
  %v2383 = vadd.f32 0.0, %v2382
  %2384 = vmatmul.f32.gmra.mxu0 %v2174
  %v2385 = vpop.f32.mrf.mxu0
  %v2386 = vadd.f32 0.0, %v2385
  %2387 = vmatmul.f32.gmra.mxu0 %v2177
  %v2388 = vpop.f32.mrf.mxu0
  %v2389 = vadd.f32 0.0, %v2388
  %2390 = vmatmul.f32.gmra.mxu0 %v2180
  %v2391 = vpop.f32.mrf.mxu0
  %v2392 = vadd.f32 0.0, %v2391
  %2393 = vmatmul.f32.gmra.mxu0 %v2183
  %v2394 = vpop.f32.mrf.mxu0
  %v2395 = vadd.f32 0.0, %v2394
  %2396 = vmatmul.f32.gmra.mxu0 %v2186
  %v2397 = vpop.f32.mrf.mxu0
  %v2398 = vadd.f32 0.0, %v2397
  %2399 = vmatmul.f32.gmra.mxu0 %v2189
  %v2400 = vpop.f32.mrf.mxu0
  %v2401 = vadd.f32 0.0, %v2400
  %2402 = vmatmul.f32.gmra.mxu0 %v2192
  %v2403 = vpop.f32.mrf.mxu0
  %v2404 = vadd.f32 0.0, %v2403
  %2405 = vmatmul.f32.gmra.mxu0 %v2195
  %v2406 = vpop.f32.mrf.mxu0
  %v2407 = vadd.f32 0.0, %v2406
  %2408 = vmatmul.f32.gmra.mxu0 %v2198
  %v2409 = vpop.f32.mrf.mxu0
  %v2410 = vadd.f32 0.0, %v2409
  %2411 = vmatmul.f32.gmra.mxu0 %v2201
  %v2412 = vpop.f32.mrf.mxu0
  %v2413 = vadd.f32 0.0, %v2412
  %2414 = vmatmul.f32.gmra.mxu0 %v2204
  %v2415 = vpop.f32.mrf.mxu0
  %v2416 = vadd.f32 0.0, %v2415
  %2417 = vmatmul.f32.gmra.mxu0 %v2207
  %v2418 = vpop.f32.mrf.mxu0
  %v2419 = vadd.f32 0.0, %v2418
  %2420 = vmatmul.f32.gmra.mxu0 %v2210
  %v2421 = vpop.f32.mrf.mxu0
  %v2422 = vadd.f32 0.0, %v2421
  %2423 = vmatmul.f32.gmra.mxu0 %v2213
  %v2424 = vpop.f32.mrf.mxu0
  %v2425 = vadd.f32 0.0, %v2424
  %2426 = vmatmul.f32.gmra.mxu0 %v2216
  %v2427 = vpop.f32.mrf.mxu0
  %v2428 = vadd.f32 0.0, %v2427
  %2429 = vmatmul.f32.gmra.mxu0 %v2219
  %v2430 = vpop.f32.mrf.mxu0
  %v2431 = vadd.f32 0.0, %v2430
  %2432 = vmatmul.f32.gmra.mxu0 %v2222
  %v2433 = vpop.f32.mrf.mxu0
  %v2434 = vadd.f32 0.0, %v2433
  %2435 = vmatmul.f32.gmra.mxu0 %v2225
  %v2436 = vpop.f32.mrf.mxu0
  %v2437 = vadd.f32 0.0, %v2436
  %2438 = vmatmul.f32.gmra.mxu0 %v2228
  %v2439 = vpop.f32.mrf.mxu0
  %v2440 = vadd.f32 0.0, %v2439
  %2441 = vmatmul.f32.gmra.mxu0 %v2231
  %v2442 = vpop.f32.mrf.mxu0
  %v2443 = vadd.f32 0.0, %v2442
  %2444 = vmatmul.f32.gmra.mxu0 %v2234
  %v2445 = vpop.f32.mrf.mxu0
  %v2446 = vadd.f32 0.0, %v2445
  %2447 = vmatmul.f32.gmra.mxu0 %v2237
  %v2448 = vpop.f32.mrf.mxu0
  %v2449 = vadd.f32 0.0, %v2448
  %2450 = vmatmul.f32.gmra.mxu0 %v2240
  %v2451 = vpop.f32.mrf.mxu0
  %v2452 = vadd.f32 0.0, %v2451
  %2453 = vmatmul.f32.gmra.mxu0 %v2243
  %v2454 = vpop.f32.mrf.mxu0
  %v2455 = vadd.f32 0.0, %v2454
  %2456 = vmatmul.f32.gmra.mxu0 %v2246
  %v2457 = vpop.f32.mrf.mxu0
  %v2458 = vadd.f32 0.0, %v2457
  %2459 = vmatmul.f32.gmra.mxu0 %v2249
  %v2460 = vpop.f32.mrf.mxu0
  %v2461 = vadd.f32 0.0, %v2460
  %2462 = vmatmul.f32.gmra.mxu0 %v2252
  %v2463 = vpop.f32.mrf.mxu0
  %v2464 = vadd.f32 0.0, %v2463
  %2465 = vmatmul.f32.gmra.mxu0 %v2255
  %v2466 = vpop.f32.mrf.mxu0
  %v2467 = vadd.f32 0.0, %v2466
  %2468 = vmatmul.f32.gmra.mxu0 %v2258
  %v2469 = vpop.f32.mrf.mxu0
  %v2470 = vadd.f32 0.0, %v2469
  %2471 = vmatmul.f32.gmra.mxu0 %v2261
  %v2472 = vpop.f32.mrf.mxu0
  %v2473 = vadd.f32 0.0, %v2472
  %2474 = vmatmul.f32.gmra.mxu0 %v2264
  %v2475 = vpop.f32.mrf.mxu0
  %v2476 = vadd.f32 0.0, %v2475
  %2477 = vdwg.mxu0
  %v2478 = vadd.f32 %v2008, %v2287
  %v2479 = vadd.f32 %v2009, %v2290
  %v2480 = vadd.f32 %v2010, %v2293
  %v2481 = vadd.f32 %v2011, %v2296
  %v2482 = vadd.f32 %v2012, %v2299
  %v2483 = vadd.f32 %v2013, %v2302
  %v2484 = vadd.f32 %v2014, %v2305
  %v2485 = vadd.f32 %v2015, %v2308
  %v2486 = vadd.f32 %v2016, %v2311
  %v2487 = vadd.f32 %v2017, %v2314
  %v2488 = vadd.f32 %v2018, %v2317
  %v2489 = vadd.f32 %v2019, %v2320
  %v2490 = vadd.f32 %v2020, %v2323
  %v2491 = vadd.f32 %v2021, %v2326
  %v2492 = vadd.f32 %v2022, %v2329
  %v2493 = vadd.f32 %v2023, %v2332
  %v2494 = vadd.f32 %v2024, %v2335
  %v2495 = vadd.f32 %v2025, %v2338
  %v2496 = vadd.f32 %v2026, %v2341
  %v2497 = vadd.f32 %v2027, %v2344
  %v2498 = vadd.f32 %v2028, %v2347
  %v2499 = vadd.f32 %v2029, %v2350
  %v2500 = vadd.f32 %v2030, %v2353
  %v2501 = vadd.f32 %v2031, %v2356
  %v2502 = vadd.f32 %v2032, %v2359
  %v2503 = vadd.f32 %v2033, %v2362
  %v2504 = vadd.f32 %v2034, %v2365
  %v2505 = vadd.f32 %v2035, %v2368
  %v2506 = vadd.f32 %v2036, %v2371
  %v2507 = vadd.f32 %v2037, %v2374
  %v2508 = vadd.f32 %v2038, %v2377
  %v2509 = vadd.f32 %v2039, %v2380
  %v2510 = vadd.f32 %v2040, %v2383
  %v2511 = vadd.f32 %v2041, %v2386
  %v2512 = vadd.f32 %v2042, %v2389
  %v2513 = vadd.f32 %v2043, %v2392
  %v2514 = vadd.f32 %v2044, %v2395
  %v2515 = vadd.f32 %v2045, %v2398
  %v2516 = vadd.f32 %v2046, %v2401
  %v2517 = vadd.f32 %v2047, %v2404
  %v2518 = vadd.f32 %v2048, %v2407
  %v2519 = vadd.f32 %v2049, %v2410
  %v2520 = vadd.f32 %v2050, %v2413
  %v2521 = vadd.f32 %v2051, %v2416
  %v2522 = vadd.f32 %v2052, %v2419
  %v2523 = vadd.f32 %v2053, %v2422
  %v2524 = vadd.f32 %v2054, %v2425
  %v2525 = vadd.f32 %v2055, %v2428
  %v2526 = vadd.f32 %v2056, %v2431
  %v2527 = vadd.f32 %v2057, %v2434
  %v2528 = vadd.f32 %v2058, %v2437
  %v2529 = vadd.f32 %v2059, %v2440
  %v2530 = vadd.f32 %v2060, %v2443
  %v2531 = vadd.f32 %v2061, %v2446
  %v2532 = vadd.f32 %v2062, %v2449
  %v2533 = vadd.f32 %v2063, %v2452
  %v2534 = vadd.f32 %v2064, %v2455
  %v2535 = vadd.f32 %v2065, %v2458
  %v2536 = vadd.f32 %v2066, %v2461
  %v2537 = vadd.f32 %v2067, %v2464
  %v2538 = vadd.f32 %v2068, %v2467
  %v2539 = vadd.f32 %v2069, %v2470
  %v2540 = vadd.f32 %v2070, %v2473
  %v2541 = vadd.f32 %v2071, %v2476
  %2542 = vst [vmem:[%s3] sm:$0xff] %v2478
  %2543 = vst [vmem:[%s3 + $0x8] sm:$0xff] %v2479
  %2544 = vst [vmem:[%s3 + $0x10] sm:$0xff] %v2480
  %2545 = vst [vmem:[%s3 + $0x18] sm:$0xff] %v2481
  %2546 = vst [vmem:[%s3 + $0x20] sm:$0xff] %v2482
  %2547 = vst [vmem:[%s3 + $0x28] sm:$0xff] %v2483
  %2548 = vst [vmem:[%s3 + $0x30] sm:$0xff] %v2484
  %2549 = vst [vmem:[%s3 + $0x38] sm:$0xff] %v2485
  %2550 = vst [vmem:[%s3 + $0x40] sm:$0xff] %v2486
  %2551 = vst [vmem:[%s3 + $0x48] sm:$0xff] %v2487
  %2552 = vst [vmem:[%s3 + $0x50] sm:$0xff] %v2488
  %2553 = vst [vmem:[%s3 + $0x58] sm:$0xff] %v2489
  %2554 = vst [vmem:[%s3 + $0x60] sm:$0xff] %v2490
  %2555 = vst [vmem:[%s3 + $0x68] sm:$0xff] %v2491
  %2556 = vst [vmem:[%s3 + $0x70] sm:$0xff] %v2492
  %2557 = vst [vmem:[%s3 + $0x78] sm:$0xff] %v2493
  %2558 = vst [vmem:[%s3 + $0x80] sm:$0xff] %v2494
  %2559 = vst [vmem:[%s3 + $0x88] sm:$0xff] %v2495
  %2560 = vst [vmem:[%s3 + $0x90] sm:$0xff] %v2496
  %2561 = vst [vmem:[%s3 + $0x98] sm:$0xff] %v2497
  %2562 = vst [vmem:[%s3 + $0xa0] sm:$0xff] %v2498
  %2563 = vst [vmem:[%s3 + $0xa8] sm:$0xff] %v2499
  %2564 = vst [vmem:[%s3 + $0xb0] sm:$0xff] %v2500
  %2565 = vst [vmem:[%s3 + $0xb8] sm:$0xff] %v2501
  %2566 = vst [vmem:[%s3 + $0xc0] sm:$0xff] %v2502
  %2567 = vst [vmem:[%s3 + $0xc8] sm:$0xff] %v2503
  %2568 = vst [vmem:[%s3 + $0xd0] sm:$0xff] %v2504
  %2569 = vst [vmem:[%s3 + $0xd8] sm:$0xff] %v2505
  %2570 = vst [vmem:[%s3 + $0xe0] sm:$0xff] %v2506
  %2571 = vst [vmem:[%s3 + $0xe8] sm:$0xff] %v2507
  %2572 = vst [vmem:[%s3 + $0xf0] sm:$0xff] %v2508
  %2573 = vst [vmem:[%s3 + $0xf8] sm:$0xff] %v2509
  %2574 = vst [vmem:[%s3 + $0x100] sm:$0xff] %v2510
  %2575 = vst [vmem:[%s3 + $0x108] sm:$0xff] %v2511
  %2576 = vst [vmem:[%s3 + $0x110] sm:$0xff] %v2512
  %2577 = vst [vmem:[%s3 + $0x118] sm:$0xff] %v2513
  %2578 = vst [vmem:[%s3 + $0x120] sm:$0xff] %v2514
  %2579 = vst [vmem:[%s3 + $0x128] sm:$0xff] %v2515
  %2580 = vst [vmem:[%s3 + $0x130] sm:$0xff] %v2516
  %2581 = vst [vmem:[%s3 + $0x138] sm:$0xff] %v2517
  %2582 = vst [vmem:[%s3 + $0x140] sm:$0xff] %v2518
  %2583 = vst [vmem:[%s3 + $0x148] sm:$0xff] %v2519
  %2584 = vst [vmem:[%s3 + $0x150] sm:$0xff] %v2520
  %2585 = vst [vmem:[%s3 + $0x158] sm:$0xff] %v2521
  %2586 = vst [vmem:[%s3 + $0x160] sm:$0xff] %v2522
  %2587 = vst [vmem:[%s3 + $0x168] sm:$0xff] %v2523
  %2588 = vst [vmem:[%s3 + $0x170] sm:$0xff] %v2524
  %2589 = vst [vmem:[%s3 + $0x178] sm:$0xff] %v2525
  %2590 = vst [vmem:[%s3 + $0x180] sm:$0xff] %v2526
  %2591 = vst [vmem:[%s3 + $0x188] sm:$0xff] %v2527
  %2592 = vst [vmem:[%s3 + $0x190] sm:$0xff] %v2528
  %2593 = vst [vmem:[%s3 + $0x198] sm:$0xff] %v2529
  %2594 = vst [vmem:[%s3 + $0x1a0] sm:$0xff] %v2530
  %2595 = vst [vmem:[%s3 + $0x1a8] sm:$0xff] %v2531
  %2596 = vst [vmem:[%s3 + $0x1b0] sm:$0xff] %v2532
  %2597 = vst [vmem:[%s3 + $0x1b8] sm:$0xff] %v2533
  %2598 = vst [vmem:[%s3 + $0x1c0] sm:$0xff] %v2534
  %2599 = vst [vmem:[%s3 + $0x1c8] sm:$0xff] %v2535
  %2600 = vst [vmem:[%s3 + $0x1d0] sm:$0xff] %v2536
  %2601 = vst [vmem:[%s3 + $0x1d8] sm:$0xff] %v2537
  %2602 = vst [vmem:[%s3 + $0x1e0] sm:$0xff] %v2538
  %2603 = vst [vmem:[%s3 + $0x1e8] sm:$0xff] %v2539
  %2604 = vst [vmem:[%s3 + $0x1f0] sm:$0xff] %v2540
  %2605 = vst [vmem:[%s3 + $0x1f8] sm:$0xff] %v2541
  %s2606 = scalar_lea.vmem %s0, 64
  %v2607 = vld [vmem:[%s2606] sm:$0xff]
  %v2608 = vld [vmem:[%s2606 + $0x8] sm:$0xff]
  %v2609 = vld [vmem:[%s2606 + $0x10] sm:$0xff]
  %v2610 = vld [vmem:[%s2606 + $0x18] sm:$0xff]
  %v2611 = vld [vmem:[%s2606 + $0x20] sm:$0xff]
  %v2612 = vld [vmem:[%s2606 + $0x28] sm:$0xff]
  %v2613 = vld [vmem:[%s2606 + $0x30] sm:$0xff]
  %v2614 = vld [vmem:[%s2606 + $0x38] sm:$0xff]
  %v2615 = vld [vmem:[%s2606 + $0x40] sm:$0xff]
  %v2616 = vld [vmem:[%s2606 + $0x48] sm:$0xff]
  %v2617 = vld [vmem:[%s2606 + $0x50] sm:$0xff]
  %v2618 = vld [vmem:[%s2606 + $0x58] sm:$0xff]
  %v2619 = vld [vmem:[%s2606 + $0x60] sm:$0xff]
  %v2620 = vld [vmem:[%s2606 + $0x68] sm:$0xff]
  %v2621 = vld [vmem:[%s2606 + $0x70] sm:$0xff]
  %v2622 = vld [vmem:[%s2606 + $0x78] sm:$0xff]
  %v2623 = vld [vmem:[%s2606 + $0x80] sm:$0xff]
  %v2624 = vld [vmem:[%s2606 + $0x88] sm:$0xff]
  %v2625 = vld [vmem:[%s2606 + $0x90] sm:$0xff]
  %v2626 = vld [vmem:[%s2606 + $0x98] sm:$0xff]
  %v2627 = vld [vmem:[%s2606 + $0xa0] sm:$0xff]
  %v2628 = vld [vmem:[%s2606 + $0xa8] sm:$0xff]
  %v2629 = vld [vmem:[%s2606 + $0xb0] sm:$0xff]
  %v2630 = vld [vmem:[%s2606 + $0xb8] sm:$0xff]
  %v2631 = vld [vmem:[%s2606 + $0xc0] sm:$0xff]
  %v2632 = vld [vmem:[%s2606 + $0xc8] sm:$0xff]
  %v2633 = vld [vmem:[%s2606 + $0xd0] sm:$0xff]
  %v2634 = vld [vmem:[%s2606 + $0xd8] sm:$0xff]
  %v2635 = vld [vmem:[%s2606 + $0xe0] sm:$0xff]
  %v2636 = vld [vmem:[%s2606 + $0xe8] sm:$0xff]
  %v2637 = vld [vmem:[%s2606 + $0xf0] sm:$0xff]
  %v2638 = vld [vmem:[%s2606 + $0xf8] sm:$0xff]
  %v2639 = vld [vmem:[%s2606 + $0x180] sm:$0xff]
  %v2640 = vld [vmem:[%s2606 + $0x188] sm:$0xff]
  %v2641 = vld [vmem:[%s2606 + $0x190] sm:$0xff]
  %v2642 = vld [vmem:[%s2606 + $0x198] sm:$0xff]
  %v2643 = vld [vmem:[%s2606 + $0x1a0] sm:$0xff]
  %v2644 = vld [vmem:[%s2606 + $0x1a8] sm:$0xff]
  %v2645 = vld [vmem:[%s2606 + $0x1b0] sm:$0xff]
  %v2646 = vld [vmem:[%s2606 + $0x1b8] sm:$0xff]
  %v2647 = vld [vmem:[%s2606 + $0x1c0] sm:$0xff]
  %v2648 = vld [vmem:[%s2606 + $0x1c8] sm:$0xff]
  %v2649 = vld [vmem:[%s2606 + $0x1d0] sm:$0xff]
  %v2650 = vld [vmem:[%s2606 + $0x1d8] sm:$0xff]
  %v2651 = vld [vmem:[%s2606 + $0x1e0] sm:$0xff]
  %v2652 = vld [vmem:[%s2606 + $0x1e8] sm:$0xff]
  %v2653 = vld [vmem:[%s2606 + $0x1f0] sm:$0xff]
  %v2654 = vld [vmem:[%s2606 + $0x1f8] sm:$0xff]
  %v2655 = vld [vmem:[%s2606 + $0x200] sm:$0xff]
  %v2656 = vld [vmem:[%s2606 + $0x208] sm:$0xff]
  %v2657 = vld [vmem:[%s2606 + $0x210] sm:$0xff]
  %v2658 = vld [vmem:[%s2606 + $0x218] sm:$0xff]
  %v2659 = vld [vmem:[%s2606 + $0x220] sm:$0xff]
  %v2660 = vld [vmem:[%s2606 + $0x228] sm:$0xff]
  %v2661 = vld [vmem:[%s2606 + $0x230] sm:$0xff]
  %v2662 = vld [vmem:[%s2606 + $0x238] sm:$0xff]
  %v2663 = vld [vmem:[%s2606 + $0x240] sm:$0xff]
  %v2664 = vld [vmem:[%s2606 + $0x248] sm:$0xff]
  %v2665 = vld [vmem:[%s2606 + $0x250] sm:$0xff]
  %v2666 = vld [vmem:[%s2606 + $0x258] sm:$0xff]
  %v2667 = vld [vmem:[%s2606 + $0x260] sm:$0xff]
  %v2668 = vld [vmem:[%s2606 + $0x268] sm:$0xff]
  %v2669 = vld [vmem:[%s2606 + $0x270] sm:$0xff]
  %v2670 = vld [vmem:[%s2606 + $0x278] sm:$0xff]
  %v2671 = vld [vmem:[%s3] sm:$0xff]
  %v2672 = vld [vmem:[%s3 + $0x8] sm:$0xff]
  %v2673 = vld [vmem:[%s3 + $0x10] sm:$0xff]
  %v2674 = vld [vmem:[%s3 + $0x18] sm:$0xff]
  %v2675 = vld [vmem:[%s3 + $0x20] sm:$0xff]
  %v2676 = vld [vmem:[%s3 + $0x28] sm:$0xff]
  %v2677 = vld [vmem:[%s3 + $0x30] sm:$0xff]
  %v2678 = vld [vmem:[%s3 + $0x38] sm:$0xff]
  %v2679 = vld [vmem:[%s3 + $0x40] sm:$0xff]
  %v2680 = vld [vmem:[%s3 + $0x48] sm:$0xff]
  %v2681 = vld [vmem:[%s3 + $0x50] sm:$0xff]
  %v2682 = vld [vmem:[%s3 + $0x58] sm:$0xff]
  %v2683 = vld [vmem:[%s3 + $0x60] sm:$0xff]
  %v2684 = vld [vmem:[%s3 + $0x68] sm:$0xff]
  %v2685 = vld [vmem:[%s3 + $0x70] sm:$0xff]
  %v2686 = vld [vmem:[%s3 + $0x78] sm:$0xff]
  %v2687 = vld [vmem:[%s3 + $0x80] sm:$0xff]
  %v2688 = vld [vmem:[%s3 + $0x88] sm:$0xff]
  %v2689 = vld [vmem:[%s3 + $0x90] sm:$0xff]
  %v2690 = vld [vmem:[%s3 + $0x98] sm:$0xff]
  %v2691 = vld [vmem:[%s3 + $0xa0] sm:$0xff]
  %v2692 = vld [vmem:[%s3 + $0xa8] sm:$0xff]
  %v2693 = vld [vmem:[%s3 + $0xb0] sm:$0xff]
  %v2694 = vld [vmem:[%s3 + $0xb8] sm:$0xff]
  %v2695 = vld [vmem:[%s3 + $0xc0] sm:$0xff]
  %v2696 = vld [vmem:[%s3 + $0xc8] sm:$0xff]
  %v2697 = vld [vmem:[%s3 + $0xd0] sm:$0xff]
  %v2698 = vld [vmem:[%s3 + $0xd8] sm:$0xff]
  %v2699 = vld [vmem:[%s3 + $0xe0] sm:$0xff]
  %v2700 = vld [vmem:[%s3 + $0xe8] sm:$0xff]
  %v2701 = vld [vmem:[%s3 + $0xf0] sm:$0xff]
  %v2702 = vld [vmem:[%s3 + $0xf8] sm:$0xff]
  %v2703 = vld [vmem:[%s3 + $0x100] sm:$0xff]
  %v2704 = vld [vmem:[%s3 + $0x108] sm:$0xff]
  %v2705 = vld [vmem:[%s3 + $0x110] sm:$0xff]
  %v2706 = vld [vmem:[%s3 + $0x118] sm:$0xff]
  %v2707 = vld [vmem:[%s3 + $0x120] sm:$0xff]
  %v2708 = vld [vmem:[%s3 + $0x128] sm:$0xff]
  %v2709 = vld [vmem:[%s3 + $0x130] sm:$0xff]
  %v2710 = vld [vmem:[%s3 + $0x138] sm:$0xff]
  %v2711 = vld [vmem:[%s3 + $0x140] sm:$0xff]
  %v2712 = vld [vmem:[%s3 + $0x148] sm:$0xff]
  %v2713 = vld [vmem:[%s3 + $0x150] sm:$0xff]
  %v2714 = vld [vmem:[%s3 + $0x158] sm:$0xff]
  %v2715 = vld [vmem:[%s3 + $0x160] sm:$0xff]
  %v2716 = vld [vmem:[%s3 + $0x168] sm:$0xff]
  %v2717 = vld [vmem:[%s3 + $0x170] sm:$0xff]
  %v2718 = vld [vmem:[%s3 + $0x178] sm:$0xff]
  %v2719 = vld [vmem:[%s3 + $0x180] sm:$0xff]
  %v2720 = vld [vmem:[%s3 + $0x188] sm:$0xff]
  %v2721 = vld [vmem:[%s3 + $0x190] sm:$0xff]
  %v2722 = vld [vmem:[%s3 + $0x198] sm:$0xff]
  %v2723 = vld [vmem:[%s3 + $0x1a0] sm:$0xff]
  %v2724 = vld [vmem:[%s3 + $0x1a8] sm:$0xff]
  %v2725 = vld [vmem:[%s3 + $0x1b0] sm:$0xff]
  %v2726 = vld [vmem:[%s3 + $0x1b8] sm:$0xff]
  %v2727 = vld [vmem:[%s3 + $0x1c0] sm:$0xff]
  %v2728 = vld [vmem:[%s3 + $0x1c8] sm:$0xff]
  %v2729 = vld [vmem:[%s3 + $0x1d0] sm:$0xff]
  %v2730 = vld [vmem:[%s3 + $0x1d8] sm:$0xff]
  %v2731 = vld [vmem:[%s3 + $0x1e0] sm:$0xff]
  %v2732 = vld [vmem:[%s3 + $0x1e8] sm:$0xff]
  %v2733 = vld [vmem:[%s3 + $0x1f0] sm:$0xff]
  %v2734 = vld [vmem:[%s3 + $0x1f8] sm:$0xff]
  %s2735 = scalar_lea.vmem %s1, 16
  %v2736 = vld [vmem:[%s2735] sm:$0xf]
  %v2738 = vsel %vm83, %v2607, 0
  %v2741 = vsel %vm83, %v2608, 0
  %v2744 = vsel %vm83, %v2609, 0
  %v2747 = vsel %vm83, %v2610, 0
  %v2750 = vsel %vm83, %v2611, 0
  %v2753 = vsel %vm83, %v2612, 0
  %v2756 = vsel %vm83, %v2613, 0
  %v2759 = vsel %vm83, %v2614, 0
  %v2762 = vsel %vm83, %v2615, 0
  %v2765 = vsel %vm83, %v2616, 0
  %v2768 = vsel %vm83, %v2617, 0
  %v2771 = vsel %vm83, %v2618, 0
  %v2774 = vsel %vm83, %v2619, 0
  %v2777 = vsel %vm83, %v2620, 0
  %v2780 = vsel %vm83, %v2621, 0
  %v2783 = vsel %vm83, %v2622, 0
  %v2786 = vsel %vm83, %v2623, 0
  %v2789 = vsel %vm83, %v2624, 0
  %v2792 = vsel %vm83, %v2625, 0
  %v2795 = vsel %vm83, %v2626, 0
  %v2798 = vsel %vm83, %v2627, 0
  %v2801 = vsel %vm83, %v2628, 0
  %v2804 = vsel %vm83, %v2629, 0
  %v2807 = vsel %vm83, %v2630, 0
  %v2810 = vsel %vm83, %v2631, 0
  %v2813 = vsel %vm83, %v2632, 0
  %v2816 = vsel %vm83, %v2633, 0
  %v2819 = vsel %vm83, %v2634, 0
  %v2822 = vsel %vm83, %v2635, 0
  %v2825 = vsel %vm83, %v2636, 0
  %v2828 = vsel %vm83, %v2637, 0
  %v2831 = vsel %vm83, %v2638, 0
  %v2834 = vsel %vm83, %v2639, 0
  %v2837 = vsel %vm83, %v2640, 0
  %v2840 = vsel %vm83, %v2641, 0
  %v2843 = vsel %vm83, %v2642, 0
  %v2846 = vsel %vm83, %v2643, 0
  %v2849 = vsel %vm83, %v2644, 0
  %v2852 = vsel %vm83, %v2645, 0
  %v2855 = vsel %vm83, %v2646, 0
  %v2858 = vsel %vm83, %v2647, 0
  %v2861 = vsel %vm83, %v2648, 0
  %v2864 = vsel %vm83, %v2649, 0
  %v2867 = vsel %vm83, %v2650, 0
  %v2870 = vsel %vm83, %v2651, 0
  %v2873 = vsel %vm83, %v2652, 0
  %v2876 = vsel %vm83, %v2653, 0
  %v2879 = vsel %vm83, %v2654, 0
  %v2882 = vsel %vm83, %v2655, 0
  %v2885 = vsel %vm83, %v2656, 0
  %v2888 = vsel %vm83, %v2657, 0
  %v2891 = vsel %vm83, %v2658, 0
  %v2894 = vsel %vm83, %v2659, 0
  %v2897 = vsel %vm83, %v2660, 0
  %v2900 = vsel %vm83, %v2661, 0
  %v2903 = vsel %vm83, %v2662, 0
  %v2906 = vsel %vm83, %v2663, 0
  %v2909 = vsel %vm83, %v2664, 0
  %v2912 = vsel %vm83, %v2665, 0
  %v2915 = vsel %vm83, %v2666, 0
  %v2918 = vsel %vm83, %v2667, 0
  %v2921 = vsel %vm83, %v2668, 0
  %v2924 = vsel %vm83, %v2669, 0
  %v2927 = vsel %vm83, %v2670, 0
  %v2930 = vsel %vm276, %v2736, 0
  %2932 = vmatpush.msra.mxu0 0.0
  %2933 = vmatpush.msra.mxu0 0.0
  %2934 = vmatpush.msra.mxu0 0.0
  %2935 = vmatpush.msra.mxu0 0.0
  %2936 = vmatpush.msra.mxu0 0.0
  %2937 = vmatpush.msra.mxu0 0.0
  %2938 = vmatpush.msra.mxu0 0.0
  %2939 = vmatpush.msra.mxu0 0.0
  %2940 = vmatpush.msra.mxu0 0.0
  %2941 = vmatpush.msra.mxu0 0.0
  %2942 = vmatpush.msra.mxu0 0.0
  %2943 = vmatpush.msra.mxu0 0.0
  %2944 = vmatpush.msra.mxu0 0.0
  %2945 = vmatpush.msra.mxu0 0.0
  %2946 = vmatpush.msra.mxu0 0.0
  %2947 = vmatpush.msra.mxu0 %v2930
  %2948 = vmatmul.f32.gmra.mxu0 %v2738
  %v2949 = vpop.f32.mrf.mxu0
  %v2950 = vadd.f32 0.0, %v2949
  %2951 = vmatmul.f32.gmra.mxu0 %v2741
  %v2952 = vpop.f32.mrf.mxu0
  %v2953 = vadd.f32 0.0, %v2952
  %2954 = vmatmul.f32.gmra.mxu0 %v2744
  %v2955 = vpop.f32.mrf.mxu0
  %v2956 = vadd.f32 0.0, %v2955
  %2957 = vmatmul.f32.gmra.mxu0 %v2747
  %v2958 = vpop.f32.mrf.mxu0
  %v2959 = vadd.f32 0.0, %v2958
  %2960 = vmatmul.f32.gmra.mxu0 %v2750
  %v2961 = vpop.f32.mrf.mxu0
  %v2962 = vadd.f32 0.0, %v2961
  %2963 = vmatmul.f32.gmra.mxu0 %v2753
  %v2964 = vpop.f32.mrf.mxu0
  %v2965 = vadd.f32 0.0, %v2964
  %2966 = vmatmul.f32.gmra.mxu0 %v2756
  %v2967 = vpop.f32.mrf.mxu0
  %v2968 = vadd.f32 0.0, %v2967
  %2969 = vmatmul.f32.gmra.mxu0 %v2759
  %v2970 = vpop.f32.mrf.mxu0
  %v2971 = vadd.f32 0.0, %v2970
  %2972 = vmatmul.f32.gmra.mxu0 %v2762
  %v2973 = vpop.f32.mrf.mxu0
  %v2974 = vadd.f32 0.0, %v2973
  %2975 = vmatmul.f32.gmra.mxu0 %v2765
  %v2976 = vpop.f32.mrf.mxu0
  %v2977 = vadd.f32 0.0, %v2976
  %2978 = vmatmul.f32.gmra.mxu0 %v2768
  %v2979 = vpop.f32.mrf.mxu0
  %v2980 = vadd.f32 0.0, %v2979
  %2981 = vmatmul.f32.gmra.mxu0 %v2771
  %v2982 = vpop.f32.mrf.mxu0
  %v2983 = vadd.f32 0.0, %v2982
  %2984 = vmatmul.f32.gmra.mxu0 %v2774
  %v2985 = vpop.f32.mrf.mxu0
  %v2986 = vadd.f32 0.0, %v2985
  %2987 = vmatmul.f32.gmra.mxu0 %v2777
  %v2988 = vpop.f32.mrf.mxu0
  %v2989 = vadd.f32 0.0, %v2988
  %2990 = vmatmul.f32.gmra.mxu0 %v2780
  %v2991 = vpop.f32.mrf.mxu0
  %v2992 = vadd.f32 0.0, %v2991
  %2993 = vmatmul.f32.gmra.mxu0 %v2783
  %v2994 = vpop.f32.mrf.mxu0
  %v2995 = vadd.f32 0.0, %v2994
  %2996 = vmatmul.f32.gmra.mxu0 %v2786
  %v2997 = vpop.f32.mrf.mxu0
  %v2998 = vadd.f32 0.0, %v2997
  %2999 = vmatmul.f32.gmra.mxu0 %v2789
  %v3000 = vpop.f32.mrf.mxu0
  %v3001 = vadd.f32 0.0, %v3000
  %3002 = vmatmul.f32.gmra.mxu0 %v2792
  %v3003 = vpop.f32.mrf.mxu0
  %v3004 = vadd.f32 0.0, %v3003
  %3005 = vmatmul.f32.gmra.mxu0 %v2795
  %v3006 = vpop.f32.mrf.mxu0
  %v3007 = vadd.f32 0.0, %v3006
  %3008 = vmatmul.f32.gmra.mxu0 %v2798
  %v3009 = vpop.f32.mrf.mxu0
  %v3010 = vadd.f32 0.0, %v3009
  %3011 = vmatmul.f32.gmra.mxu0 %v2801
  %v3012 = vpop.f32.mrf.mxu0
  %v3013 = vadd.f32 0.0, %v3012
  %3014 = vmatmul.f32.gmra.mxu0 %v2804
  %v3015 = vpop.f32.mrf.mxu0
  %v3016 = vadd.f32 0.0, %v3015
  %3017 = vmatmul.f32.gmra.mxu0 %v2807
  %v3018 = vpop.f32.mrf.mxu0
  %v3019 = vadd.f32 0.0, %v3018
  %3020 = vmatmul.f32.gmra.mxu0 %v2810
  %v3021 = vpop.f32.mrf.mxu0
  %v3022 = vadd.f32 0.0, %v3021
  %3023 = vmatmul.f32.gmra.mxu0 %v2813
  %v3024 = vpop.f32.mrf.mxu0
  %v3025 = vadd.f32 0.0, %v3024
  %3026 = vmatmul.f32.gmra.mxu0 %v2816
  %v3027 = vpop.f32.mrf.mxu0
  %v3028 = vadd.f32 0.0, %v3027
  %3029 = vmatmul.f32.gmra.mxu0 %v2819
  %v3030 = vpop.f32.mrf.mxu0
  %v3031 = vadd.f32 0.0, %v3030
  %3032 = vmatmul.f32.gmra.mxu0 %v2822
  %v3033 = vpop.f32.mrf.mxu0
  %v3034 = vadd.f32 0.0, %v3033
  %3035 = vmatmul.f32.gmra.mxu0 %v2825
  %v3036 = vpop.f32.mrf.mxu0
  %v3037 = vadd.f32 0.0, %v3036
  %3038 = vmatmul.f32.gmra.mxu0 %v2828
  %v3039 = vpop.f32.mrf.mxu0
  %v3040 = vadd.f32 0.0, %v3039
  %3041 = vmatmul.f32.gmra.mxu0 %v2831
  %v3042 = vpop.f32.mrf.mxu0
  %v3043 = vadd.f32 0.0, %v3042
  %3044 = vmatmul.f32.gmra.mxu0 %v2834
  %v3045 = vpop.f32.mrf.mxu0
  %v3046 = vadd.f32 0.0, %v3045
  %3047 = vmatmul.f32.gmra.mxu0 %v2837
  %v3048 = vpop.f32.mrf.mxu0
  %v3049 = vadd.f32 0.0, %v3048
  %3050 = vmatmul.f32.gmra.mxu0 %v2840
  %v3051 = vpop.f32.mrf.mxu0
  %v3052 = vadd.f32 0.0, %v3051
  %3053 = vmatmul.f32.gmra.mxu0 %v2843
  %v3054 = vpop.f32.mrf.mxu0
  %v3055 = vadd.f32 0.0, %v3054
  %3056 = vmatmul.f32.gmra.mxu0 %v2846
  %v3057 = vpop.f32.mrf.mxu0
  %v3058 = vadd.f32 0.0, %v3057
  %3059 = vmatmul.f32.gmra.mxu0 %v2849
  %v3060 = vpop.f32.mrf.mxu0
  %v3061 = vadd.f32 0.0, %v3060
  %3062 = vmatmul.f32.gmra.mxu0 %v2852
  %v3063 = vpop.f32.mrf.mxu0
  %v3064 = vadd.f32 0.0, %v3063
  %3065 = vmatmul.f32.gmra.mxu0 %v2855
  %v3066 = vpop.f32.mrf.mxu0
  %v3067 = vadd.f32 0.0, %v3066
  %3068 = vmatmul.f32.gmra.mxu0 %v2858
  %v3069 = vpop.f32.mrf.mxu0
  %v3070 = vadd.f32 0.0, %v3069
  %3071 = vmatmul.f32.gmra.mxu0 %v2861
  %v3072 = vpop.f32.mrf.mxu0
  %v3073 = vadd.f32 0.0, %v3072
  %3074 = vmatmul.f32.gmra.mxu0 %v2864
  %v3075 = vpop.f32.mrf.mxu0
  %v3076 = vadd.f32 0.0, %v3075
  %3077 = vmatmul.f32.gmra.mxu0 %v2867
  %v3078 = vpop.f32.mrf.mxu0
  %v3079 = vadd.f32 0.0, %v3078
  %3080 = vmatmul.f32.gmra.mxu0 %v2870
  %v3081 = vpop.f32.mrf.mxu0
  %v3082 = vadd.f32 0.0, %v3081
  %3083 = vmatmul.f32.gmra.mxu0 %v2873
  %v3084 = vpop.f32.mrf.mxu0
  %v3085 = vadd.f32 0.0, %v3084
  %3086 = vmatmul.f32.gmra.mxu0 %v2876
  %v3087 = vpop.f32.mrf.mxu0
  %v3088 = vadd.f32 0.0, %v3087
  %3089 = vmatmul.f32.gmra.mxu0 %v2879
  %v3090 = vpop.f32.mrf.mxu0
  %v3091 = vadd.f32 0.0, %v3090
  %3092 = vmatmul.f32.gmra.mxu0 %v2882
  %v3093 = vpop.f32.mrf.mxu0
  %v3094 = vadd.f32 0.0, %v3093
  %3095 = vmatmul.f32.gmra.mxu0 %v2885
  %v3096 = vpop.f32.mrf.mxu0
  %v3097 = vadd.f32 0.0, %v3096
  %3098 = vmatmul.f32.gmra.mxu0 %v2888
  %v3099 = vpop.f32.mrf.mxu0
  %v3100 = vadd.f32 0.0, %v3099
  %3101 = vmatmul.f32.gmra.mxu0 %v2891
  %v3102 = vpop.f32.mrf.mxu0
  %v3103 = vadd.f32 0.0, %v3102
  %3104 = vmatmul.f32.gmra.mxu0 %v2894
  %v3105 = vpop.f32.mrf.mxu0
  %v3106 = vadd.f32 0.0, %v3105
  %3107 = vmatmul.f32.gmra.mxu0 %v2897
  %v3108 = vpop.f32.mrf.mxu0
  %v3109 = vadd.f32 0.0, %v3108
  %3110 = vmatmul.f32.gmra.mxu0 %v2900
  %v3111 = vpop.f32.mrf.mxu0
  %v3112 = vadd.f32 0.0, %v3111
  %3113 = vmatmul.f32.gmra.mxu0 %v2903
  %v3114 = vpop.f32.mrf.mxu0
  %v3115 = vadd.f32 0.0, %v3114
  %3116 = vmatmul.f32.gmra.mxu0 %v2906
  %v3117 = vpop.f32.mrf.mxu0
  %v3118 = vadd.f32 0.0, %v3117
  %3119 = vmatmul.f32.gmra.mxu0 %v2909
  %v3120 = vpop.f32.mrf.mxu0
  %v3121 = vadd.f32 0.0, %v3120
  %3122 = vmatmul.f32.gmra.mxu0 %v2912
  %v3123 = vpop.f32.mrf.mxu0
  %v3124 = vadd.f32 0.0, %v3123
  %3125 = vmatmul.f32.gmra.mxu0 %v2915
  %v3126 = vpop.f32.mrf.mxu0
  %v3127 = vadd.f32 0.0, %v3126
  %3128 = vmatmul.f32.gmra.mxu0 %v2918
  %v3129 = vpop.f32.mrf.mxu0
  %v3130 = vadd.f32 0.0, %v3129
  %3131 = vmatmul.f32.gmra.mxu0 %v2921
  %v3132 = vpop.f32.mrf.mxu0
  %v3133 = vadd.f32 0.0, %v3132
  %3134 = vmatmul.f32.gmra.mxu0 %v2924
  %v3135 = vpop.f32.mrf.mxu0
  %v3136 = vadd.f32 0.0, %v3135
  %3137 = vmatmul.f32.gmra.mxu0 %v2927
  %v3138 = vpop.f32.mrf.mxu0
  %v3139 = vadd.f32 0.0, %v3138
  %3140 = vdwg.mxu0
  %v3141 = vadd.f32 %v2671, %v2950
  %v3142 = vadd.f32 %v2672, %v2953
  %v3143 = vadd.f32 %v2673, %v2956
  %v3144 = vadd.f32 %v2674, %v2959
  %v3145 = vadd.f32 %v2675, %v2962
  %v3146 = vadd.f32 %v2676, %v2965
  %v3147 = vadd.f32 %v2677, %v2968
  %v3148 = vadd.f32 %v2678, %v2971
  %v3149 = vadd.f32 %v2679, %v2974
  %v3150 = vadd.f32 %v2680, %v2977
  %v3151 = vadd.f32 %v2681, %v2980
  %v3152 = vadd.f32 %v2682, %v2983
  %v3153 = vadd.f32 %v2683, %v2986
  %v3154 = vadd.f32 %v2684, %v2989
  %v3155 = vadd.f32 %v2685, %v2992
  %v3156 = vadd.f32 %v2686, %v2995
  %v3157 = vadd.f32 %v2687, %v2998
  %v3158 = vadd.f32 %v2688, %v3001
  %v3159 = vadd.f32 %v2689, %v3004
  %v3160 = vadd.f32 %v2690, %v3007
  %v3161 = vadd.f32 %v2691, %v3010
  %v3162 = vadd.f32 %v2692, %v3013
  %v3163 = vadd.f32 %v2693, %v3016
  %v3164 = vadd.f32 %v2694, %v3019
  %v3165 = vadd.f32 %v2695, %v3022
  %v3166 = vadd.f32 %v2696, %v3025
  %v3167 = vadd.f32 %v2697, %v3028
  %v3168 = vadd.f32 %v2698, %v3031
  %v3169 = vadd.f32 %v2699, %v3034
  %v3170 = vadd.f32 %v2700, %v3037
  %v3171 = vadd.f32 %v2701, %v3040
  %v3172 = vadd.f32 %v2702, %v3043
  %v3173 = vadd.f32 %v2703, %v3046
  %v3174 = vadd.f32 %v2704, %v3049
  %v3175 = vadd.f32 %v2705, %v3052
  %v3176 = vadd.f32 %v2706, %v3055
  %v3177 = vadd.f32 %v2707, %v3058
  %v3178 = vadd.f32 %v2708, %v3061
  %v3179 = vadd.f32 %v2709, %v3064
  %v3180 = vadd.f32 %v2710, %v3067
  %v3181 = vadd.f32 %v2711, %v3070
  %v3182 = vadd.f32 %v2712, %v3073
  %v3183 = vadd.f32 %v2713, %v3076
  %v3184 = vadd.f32 %v2714, %v3079
  %v3185 = vadd.f32 %v2715, %v3082
  %v3186 = vadd.f32 %v2716, %v3085
  %v3187 = vadd.f32 %v2717, %v3088
  %v3188 = vadd.f32 %v2718, %v3091
  %v3189 = vadd.f32 %v2719, %v3094
  %v3190 = vadd.f32 %v2720, %v3097
  %v3191 = vadd.f32 %v2721, %v3100
  %v3192 = vadd.f32 %v2722, %v3103
  %v3193 = vadd.f32 %v2723, %v3106
  %v3194 = vadd.f32 %v2724, %v3109
  %v3195 = vadd.f32 %v2725, %v3112
  %v3196 = vadd.f32 %v2726, %v3115
  %v3197 = vadd.f32 %v2727, %v3118
  %v3198 = vadd.f32 %v2728, %v3121
  %v3199 = vadd.f32 %v2729, %v3124
  %v3200 = vadd.f32 %v2730, %v3127
  %v3201 = vadd.f32 %v2731, %v3130
  %v3202 = vadd.f32 %v2732, %v3133
  %v3203 = vadd.f32 %v2733, %v3136
  %v3204 = vadd.f32 %v2734, %v3139
  %3205 = vst [vmem:[%s3] sm:$0xff] %v3141
  %3206 = vst [vmem:[%s3 + $0x8] sm:$0xff] %v3142
  %3207 = vst [vmem:[%s3 + $0x10] sm:$0xff] %v3143
  %3208 = vst [vmem:[%s3 + $0x18] sm:$0xff] %v3144
  %3209 = vst [vmem:[%s3 + $0x20] sm:$0xff] %v3145
  %3210 = vst [vmem:[%s3 + $0x28] sm:$0xff] %v3146
  %3211 = vst [vmem:[%s3 + $0x30] sm:$0xff] %v3147
  %3212 = vst [vmem:[%s3 + $0x38] sm:$0xff] %v3148
  %3213 = vst [vmem:[%s3 + $0x40] sm:$0xff] %v3149
  %3214 = vst [vmem:[%s3 + $0x48] sm:$0xff] %v3150
  %3215 = vst [vmem:[%s3 + $0x50] sm:$0xff] %v3151
  %3216 = vst [vmem:[%s3 + $0x58] sm:$0xff] %v3152
  %3217 = vst [vmem:[%s3 + $0x60] sm:$0xff] %v3153
  %3218 = vst [vmem:[%s3 + $0x68] sm:$0xff] %v3154
  %3219 = vst [vmem:[%s3 + $0x70] sm:$0xff] %v3155
  %3220 = vst [vmem:[%s3 + $0x78] sm:$0xff] %v3156
  %3221 = vst [vmem:[%s3 + $0x80] sm:$0xff] %v3157
  %3222 = vst [vmem:[%s3 + $0x88] sm:$0xff] %v3158
  %3223 = vst [vmem:[%s3 + $0x90] sm:$0xff] %v3159
  %3224 = vst [vmem:[%s3 + $0x98] sm:$0xff] %v3160
  %3225 = vst [vmem:[%s3 + $0xa0] sm:$0xff] %v3161
  %3226 = vst [vmem:[%s3 + $0xa8] sm:$0xff] %v3162
  %3227 = vst [vmem:[%s3 + $0xb0] sm:$0xff] %v3163
  %3228 = vst [vmem:[%s3 + $0xb8] sm:$0xff] %v3164
  %3229 = vst [vmem:[%s3 + $0xc0] sm:$0xff] %v3165
  %3230 = vst [vmem:[%s3 + $0xc8] sm:$0xff] %v3166
  %3231 = vst [vmem:[%s3 + $0xd0] sm:$0xff] %v3167
  %3232 = vst [vmem:[%s3 + $0xd8] sm:$0xff] %v3168
  %3233 = vst [vmem:[%s3 + $0xe0] sm:$0xff] %v3169
  %3234 = vst [vmem:[%s3 + $0xe8] sm:$0xff] %v3170
  %3235 = vst [vmem:[%s3 + $0xf0] sm:$0xff] %v3171
  %3236 = vst [vmem:[%s3 + $0xf8] sm:$0xff] %v3172
  %3237 = vst [vmem:[%s3 + $0x100] sm:$0xff] %v3173
  %3238 = vst [vmem:[%s3 + $0x108] sm:$0xff] %v3174
  %3239 = vst [vmem:[%s3 + $0x110] sm:$0xff] %v3175
  %3240 = vst [vmem:[%s3 + $0x118] sm:$0xff] %v3176
  %3241 = vst [vmem:[%s3 + $0x120] sm:$0xff] %v3177
  %3242 = vst [vmem:[%s3 + $0x128] sm:$0xff] %v3178
  %3243 = vst [vmem:[%s3 + $0x130] sm:$0xff] %v3179
  %3244 = vst [vmem:[%s3 + $0x138] sm:$0xff] %v3180
  %3245 = vst [vmem:[%s3 + $0x140] sm:$0xff] %v3181
  %3246 = vst [vmem:[%s3 + $0x148] sm:$0xff] %v3182
  %3247 = vst [vmem:[%s3 + $0x150] sm:$0xff] %v3183
  %3248 = vst [vmem:[%s3 + $0x158] sm:$0xff] %v3184
  %3249 = vst [vmem:[%s3 + $0x160] sm:$0xff] %v3185
  %3250 = vst [vmem:[%s3 + $0x168] sm:$0xff] %v3186
  %3251 = vst [vmem:[%s3 + $0x170] sm:$0xff] %v3187
  %3252 = vst [vmem:[%s3 + $0x178] sm:$0xff] %v3188
  %3253 = vst [vmem:[%s3 + $0x180] sm:$0xff] %v3189
  %3254 = vst [vmem:[%s3 + $0x188] sm:$0xff] %v3190
  %3255 = vst [vmem:[%s3 + $0x190] sm:$0xff] %v3191
  %3256 = vst [vmem:[%s3 + $0x198] sm:$0xff] %v3192
  %3257 = vst [vmem:[%s3 + $0x1a0] sm:$0xff] %v3193
  %3258 = vst [vmem:[%s3 + $0x1a8] sm:$0xff] %v3194
  %3259 = vst [vmem:[%s3 + $0x1b0] sm:$0xff] %v3195
  %3260 = vst [vmem:[%s3 + $0x1b8] sm:$0xff] %v3196
  %3261 = vst [vmem:[%s3 + $0x1c0] sm:$0xff] %v3197
  %3262 = vst [vmem:[%s3 + $0x1c8] sm:$0xff] %v3198
  %3263 = vst [vmem:[%s3 + $0x1d0] sm:$0xff] %v3199
  %3264 = vst [vmem:[%s3 + $0x1d8] sm:$0xff] %v3200
  %3265 = vst [vmem:[%s3 + $0x1e0] sm:$0xff] %v3201
  %3266 = vst [vmem:[%s3 + $0x1e8] sm:$0xff] %v3202
  %3267 = vst [vmem:[%s3 + $0x1f0] sm:$0xff] %v3203
  %3268 = vst [vmem:[%s3 + $0x1f8] sm:$0xff] %v3204
  %s3269 = scalar_lea.vmem %s0, 80
  %v3270 = vld [vmem:[%s3269] sm:$0xff]
  %v3271 = vld [vmem:[%s3269 + $0x8] sm:$0xff]
  %v3272 = vld [vmem:[%s3269 + $0x10] sm:$0xff]
  %v3273 = vld [vmem:[%s3269 + $0x18] sm:$0xff]
  %v3274 = vld [vmem:[%s3269 + $0x20] sm:$0xff]
  %v3275 = vld [vmem:[%s3269 + $0x28] sm:$0xff]
  %v3276 = vld [vmem:[%s3269 + $0x30] sm:$0xff]
  %v3277 = vld [vmem:[%s3269 + $0x38] sm:$0xff]
  %v3278 = vld [vmem:[%s3269 + $0x40] sm:$0xff]
  %v3279 = vld [vmem:[%s3269 + $0x48] sm:$0xff]
  %v3280 = vld [vmem:[%s3269 + $0x50] sm:$0xff]
  %v3281 = vld [vmem:[%s3269 + $0x58] sm:$0xff]
  %v3282 = vld [vmem:[%s3269 + $0x60] sm:$0xff]
  %v3283 = vld [vmem:[%s3269 + $0x68] sm:$0xff]
  %v3284 = vld [vmem:[%s3269 + $0x70] sm:$0xff]
  %v3285 = vld [vmem:[%s3269 + $0x78] sm:$0xff]
  %v3286 = vld [vmem:[%s3269 + $0x80] sm:$0xff]
  %v3287 = vld [vmem:[%s3269 + $0x88] sm:$0xff]
  %v3288 = vld [vmem:[%s3269 + $0x90] sm:$0xff]
  %v3289 = vld [vmem:[%s3269 + $0x98] sm:$0xff]
  %v3290 = vld [vmem:[%s3269 + $0xa0] sm:$0xff]
  %v3291 = vld [vmem:[%s3269 + $0xa8] sm:$0xff]
  %v3292 = vld [vmem:[%s3269 + $0xb0] sm:$0xff]
  %v3293 = vld [vmem:[%s3269 + $0xb8] sm:$0xff]
  %v3294 = vld [vmem:[%s3269 + $0xc0] sm:$0xff]
  %v3295 = vld [vmem:[%s3269 + $0xc8] sm:$0xff]
  %v3296 = vld [vmem:[%s3269 + $0xd0] sm:$0xff]
  %v3297 = vld [vmem:[%s3269 + $0xd8] sm:$0xff]
  %v3298 = vld [vmem:[%s3269 + $0xe0] sm:$0xff]
  %v3299 = vld [vmem:[%s3269 + $0xe8] sm:$0xff]
  %v3300 = vld [vmem:[%s3269 + $0xf0] sm:$0xff]
  %v3301 = vld [vmem:[%s3269 + $0xf8] sm:$0xff]
  %v3302 = vld [vmem:[%s3269 + $0x180] sm:$0xff]
  %v3303 = vld [vmem:[%s3269 + $0x188] sm:$0xff]
  %v3304 = vld [vmem:[%s3269 + $0x190] sm:$0xff]
  %v3305 = vld [vmem:[%s3269 + $0x198] sm:$0xff]
  %v3306 = vld [vmem:[%s3269 + $0x1a0] sm:$0xff]
  %v3307 = vld [vmem:[%s3269 + $0x1a8] sm:$0xff]
  %v3308 = vld [vmem:[%s3269 + $0x1b0] sm:$0xff]
  %v3309 = vld [vmem:[%s3269 + $0x1b8] sm:$0xff]
  %v3310 = vld [vmem:[%s3269 + $0x1c0] sm:$0xff]
  %v3311 = vld [vmem:[%s3269 + $0x1c8] sm:$0xff]
  %v3312 = vld [vmem:[%s3269 + $0x1d0] sm:$0xff]
  %v3313 = vld [vmem:[%s3269 + $0x1d8] sm:$0xff]
  %v3314 = vld [vmem:[%s3269 + $0x1e0] sm:$0xff]
  %v3315 = vld [vmem:[%s3269 + $0x1e8] sm:$0xff]
  %v3316 = vld [vmem:[%s3269 + $0x1f0] sm:$0xff]
  %v3317 = vld [vmem:[%s3269 + $0x1f8] sm:$0xff]
  %v3318 = vld [vmem:[%s3269 + $0x200] sm:$0xff]
  %v3319 = vld [vmem:[%s3269 + $0x208] sm:$0xff]
  %v3320 = vld [vmem:[%s3269 + $0x210] sm:$0xff]
  %v3321 = vld [vmem:[%s3269 + $0x218] sm:$0xff]
  %v3322 = vld [vmem:[%s3269 + $0x220] sm:$0xff]
  %v3323 = vld [vmem:[%s3269 + $0x228] sm:$0xff]
  %v3324 = vld [vmem:[%s3269 + $0x230] sm:$0xff]
  %v3325 = vld [vmem:[%s3269 + $0x238] sm:$0xff]
  %v3326 = vld [vmem:[%s3269 + $0x240] sm:$0xff]
  %v3327 = vld [vmem:[%s3269 + $0x248] sm:$0xff]
  %v3328 = vld [vmem:[%s3269 + $0x250] sm:$0xff]
  %v3329 = vld [vmem:[%s3269 + $0x258] sm:$0xff]
  %v3330 = vld [vmem:[%s3269 + $0x260] sm:$0xff]
  %v3331 = vld [vmem:[%s3269 + $0x268] sm:$0xff]
  %v3332 = vld [vmem:[%s3269 + $0x270] sm:$0xff]
  %v3333 = vld [vmem:[%s3269 + $0x278] sm:$0xff]
  %v3334 = vld [vmem:[%s3] sm:$0xff]
  %v3335 = vld [vmem:[%s3 + $0x8] sm:$0xff]
  %v3336 = vld [vmem:[%s3 + $0x10] sm:$0xff]
  %v3337 = vld [vmem:[%s3 + $0x18] sm:$0xff]
  %v3338 = vld [vmem:[%s3 + $0x20] sm:$0xff]
  %v3339 = vld [vmem:[%s3 + $0x28] sm:$0xff]
  %v3340 = vld [vmem:[%s3 + $0x30] sm:$0xff]
  %v3341 = vld [vmem:[%s3 + $0x38] sm:$0xff]
  %v3342 = vld [vmem:[%s3 + $0x40] sm:$0xff]
  %v3343 = vld [vmem:[%s3 + $0x48] sm:$0xff]
  %v3344 = vld [vmem:[%s3 + $0x50] sm:$0xff]
  %v3345 = vld [vmem:[%s3 + $0x58] sm:$0xff]
  %v3346 = vld [vmem:[%s3 + $0x60] sm:$0xff]
  %v3347 = vld [vmem:[%s3 + $0x68] sm:$0xff]
  %v3348 = vld [vmem:[%s3 + $0x70] sm:$0xff]
  %v3349 = vld [vmem:[%s3 + $0x78] sm:$0xff]
  %v3350 = vld [vmem:[%s3 + $0x80] sm:$0xff]
  %v3351 = vld [vmem:[%s3 + $0x88] sm:$0xff]
  %v3352 = vld [vmem:[%s3 + $0x90] sm:$0xff]
  %v3353 = vld [vmem:[%s3 + $0x98] sm:$0xff]
  %v3354 = vld [vmem:[%s3 + $0xa0] sm:$0xff]
  %v3355 = vld [vmem:[%s3 + $0xa8] sm:$0xff]
  %v3356 = vld [vmem:[%s3 + $0xb0] sm:$0xff]
  %v3357 = vld [vmem:[%s3 + $0xb8] sm:$0xff]
  %v3358 = vld [vmem:[%s3 + $0xc0] sm:$0xff]
  %v3359 = vld [vmem:[%s3 + $0xc8] sm:$0xff]
  %v3360 = vld [vmem:[%s3 + $0xd0] sm:$0xff]
  %v3361 = vld [vmem:[%s3 + $0xd8] sm:$0xff]
  %v3362 = vld [vmem:[%s3 + $0xe0] sm:$0xff]
  %v3363 = vld [vmem:[%s3 + $0xe8] sm:$0xff]
  %v3364 = vld [vmem:[%s3 + $0xf0] sm:$0xff]
  %v3365 = vld [vmem:[%s3 + $0xf8] sm:$0xff]
  %v3366 = vld [vmem:[%s3 + $0x100] sm:$0xff]
  %v3367 = vld [vmem:[%s3 + $0x108] sm:$0xff]
  %v3368 = vld [vmem:[%s3 + $0x110] sm:$0xff]
  %v3369 = vld [vmem:[%s3 + $0x118] sm:$0xff]
  %v3370 = vld [vmem:[%s3 + $0x120] sm:$0xff]
  %v3371 = vld [vmem:[%s3 + $0x128] sm:$0xff]
  %v3372 = vld [vmem:[%s3 + $0x130] sm:$0xff]
  %v3373 = vld [vmem:[%s3 + $0x138] sm:$0xff]
  %v3374 = vld [vmem:[%s3 + $0x140] sm:$0xff]
  %v3375 = vld [vmem:[%s3 + $0x148] sm:$0xff]
  %v3376 = vld [vmem:[%s3 + $0x150] sm:$0xff]
  %v3377 = vld [vmem:[%s3 + $0x158] sm:$0xff]
  %v3378 = vld [vmem:[%s3 + $0x160] sm:$0xff]
  %v3379 = vld [vmem:[%s3 + $0x168] sm:$0xff]
  %v3380 = vld [vmem:[%s3 + $0x170] sm:$0xff]
  %v3381 = vld [vmem:[%s3 + $0x178] sm:$0xff]
  %v3382 = vld [vmem:[%s3 + $0x180] sm:$0xff]
  %v3383 = vld [vmem:[%s3 + $0x188] sm:$0xff]
  %v3384 = vld [vmem:[%s3 + $0x190] sm:$0xff]
  %v3385 = vld [vmem:[%s3 + $0x198] sm:$0xff]
  %v3386 = vld [vmem:[%s3 + $0x1a0] sm:$0xff]
  %v3387 = vld [vmem:[%s3 + $0x1a8] sm:$0xff]
  %v3388 = vld [vmem:[%s3 + $0x1b0] sm:$0xff]
  %v3389 = vld [vmem:[%s3 + $0x1b8] sm:$0xff]
  %v3390 = vld [vmem:[%s3 + $0x1c0] sm:$0xff]
  %v3391 = vld [vmem:[%s3 + $0x1c8] sm:$0xff]
  %v3392 = vld [vmem:[%s3 + $0x1d0] sm:$0xff]
  %v3393 = vld [vmem:[%s3 + $0x1d8] sm:$0xff]
  %v3394 = vld [vmem:[%s3 + $0x1e0] sm:$0xff]
  %v3395 = vld [vmem:[%s3 + $0x1e8] sm:$0xff]
  %v3396 = vld [vmem:[%s3 + $0x1f0] sm:$0xff]
  %v3397 = vld [vmem:[%s3 + $0x1f8] sm:$0xff]
  %s3398 = scalar_lea.vmem %s1, 20
  %v3399 = vld [vmem:[%s3398] sm:$0xf]
  %v3401 = vsel %vm83, %v3270, 0
  %v3404 = vsel %vm83, %v3271, 0
  %v3407 = vsel %vm83, %v3272, 0
  %v3410 = vsel %vm83, %v3273, 0
  %v3413 = vsel %vm83, %v3274, 0
  %v3416 = vsel %vm83, %v3275, 0
  %v3419 = vsel %vm83, %v3276, 0
  %v3422 = vsel %vm83, %v3277, 0
  %v3425 = vsel %vm83, %v3278, 0
  %v3428 = vsel %vm83, %v3279, 0
  %v3431 = vsel %vm83, %v3280, 0
  %v3434 = vsel %vm83, %v3281, 0
  %v3437 = vsel %vm83, %v3282, 0
  %v3440 = vsel %vm83, %v3283, 0
  %v3443 = vsel %vm83, %v3284, 0
  %v3446 = vsel %vm83, %v3285, 0
  %v3449 = vsel %vm83, %v3286, 0
  %v3452 = vsel %vm83, %v3287, 0
  %v3455 = vsel %vm83, %v3288, 0
  %v3458 = vsel %vm83, %v3289, 0
  %v3461 = vsel %vm83, %v3290, 0
  %v3464 = vsel %vm83, %v3291, 0
  %v3467 = vsel %vm83, %v3292, 0
  %v3470 = vsel %vm83, %v3293, 0
  %v3473 = vsel %vm83, %v3294, 0
  %v3476 = vsel %vm83, %v3295, 0
  %v3479 = vsel %vm83, %v3296, 0
  %v3482 = vsel %vm83, %v3297, 0
  %v3485 = vsel %vm83, %v3298, 0
  %v3488 = vsel %vm83, %v3299, 0
  %v3491 = vsel %vm83, %v3300, 0
  %v3494 = vsel %vm83, %v3301, 0
  %v3497 = vsel %vm83, %v3302, 0
  %v3500 = vsel %vm83, %v3303, 0
  %v3503 = vsel %vm83, %v3304, 0
  %v3506 = vsel %vm83, %v3305, 0
  %v3509 = vsel %vm83, %v3306, 0
  %v3512 = vsel %vm83, %v3307, 0
  %v3515 = vsel %vm83, %v3308, 0
  %v3518 = vsel %vm83, %v3309, 0
  %v3521 = vsel %vm83, %v3310, 0
  %v3524 = vsel %vm83, %v3311, 0
  %v3527 = vsel %vm83, %v3312, 0
  %v3530 = vsel %vm83, %v3313, 0
  %v3533 = vsel %vm83, %v3314, 0
  %v3536 = vsel %vm83, %v3315, 0
  %v3539 = vsel %vm83, %v3316, 0
  %v3542 = vsel %vm83, %v3317, 0
  %v3545 = vsel %vm83, %v3318, 0
  %v3548 = vsel %vm83, %v3319, 0
  %v3551 = vsel %vm83, %v3320, 0
  %v3554 = vsel %vm83, %v3321, 0
  %v3557 = vsel %vm83, %v3322, 0
  %v3560 = vsel %vm83, %v3323, 0
  %v3563 = vsel %vm83, %v3324, 0
  %v3566 = vsel %vm83, %v3325, 0
  %v3569 = vsel %vm83, %v3326, 0
  %v3572 = vsel %vm83, %v3327, 0
  %v3575 = vsel %vm83, %v3328, 0
  %v3578 = vsel %vm83, %v3329, 0
  %v3581 = vsel %vm83, %v3330, 0
  %v3584 = vsel %vm83, %v3331, 0
  %v3587 = vsel %vm83, %v3332, 0
  %v3590 = vsel %vm83, %v3333, 0
  %v3593 = vsel %vm276, %v3399, 0
  %3595 = vmatpush.msra.mxu0 0.0
  %3596 = vmatpush.msra.mxu0 0.0
  %3597 = vmatpush.msra.mxu0 0.0
  %3598 = vmatpush.msra.mxu0 0.0
  %3599 = vmatpush.msra.mxu0 0.0
  %3600 = vmatpush.msra.mxu0 0.0
  %3601 = vmatpush.msra.mxu0 0.0
  %3602 = vmatpush.msra.mxu0 0.0
  %3603 = vmatpush.msra.mxu0 0.0
  %3604 = vmatpush.msra.mxu0 0.0
  %3605 = vmatpush.msra.mxu0 0.0
  %3606 = vmatpush.msra.mxu0 0.0
  %3607 = vmatpush.msra.mxu0 0.0
  %3608 = vmatpush.msra.mxu0 0.0
  %3609 = vmatpush.msra.mxu0 0.0
  %3610 = vmatpush.msra.mxu0 %v3593
  %3611 = vmatmul.f32.gmra.mxu0 %v3401
  %v3612 = vpop.f32.mrf.mxu0
  %v3613 = vadd.f32 0.0, %v3612
  %3614 = vmatmul.f32.gmra.mxu0 %v3404
  %v3615 = vpop.f32.mrf.mxu0
  %v3616 = vadd.f32 0.0, %v3615
  %3617 = vmatmul.f32.gmra.mxu0 %v3407
  %v3618 = vpop.f32.mrf.mxu0
  %v3619 = vadd.f32 0.0, %v3618
  %3620 = vmatmul.f32.gmra.mxu0 %v3410
  %v3621 = vpop.f32.mrf.mxu0
  %v3622 = vadd.f32 0.0, %v3621
  %3623 = vmatmul.f32.gmra.mxu0 %v3413
  %v3624 = vpop.f32.mrf.mxu0
  %v3625 = vadd.f32 0.0, %v3624
  %3626 = vmatmul.f32.gmra.mxu0 %v3416
  %v3627 = vpop.f32.mrf.mxu0
  %v3628 = vadd.f32 0.0, %v3627
  %3629 = vmatmul.f32.gmra.mxu0 %v3419
  %v3630 = vpop.f32.mrf.mxu0
  %v3631 = vadd.f32 0.0, %v3630
  %3632 = vmatmul.f32.gmra.mxu0 %v3422
  %v3633 = vpop.f32.mrf.mxu0
  %v3634 = vadd.f32 0.0, %v3633
  %3635 = vmatmul.f32.gmra.mxu0 %v3425
  %v3636 = vpop.f32.mrf.mxu0
  %v3637 = vadd.f32 0.0, %v3636
  %3638 = vmatmul.f32.gmra.mxu0 %v3428
  %v3639 = vpop.f32.mrf.mxu0
  %v3640 = vadd.f32 0.0, %v3639
  %3641 = vmatmul.f32.gmra.mxu0 %v3431
  %v3642 = vpop.f32.mrf.mxu0
  %v3643 = vadd.f32 0.0, %v3642
  %3644 = vmatmul.f32.gmra.mxu0 %v3434
  %v3645 = vpop.f32.mrf.mxu0
  %v3646 = vadd.f32 0.0, %v3645
  %3647 = vmatmul.f32.gmra.mxu0 %v3437
  %v3648 = vpop.f32.mrf.mxu0
  %v3649 = vadd.f32 0.0, %v3648
  %3650 = vmatmul.f32.gmra.mxu0 %v3440
  %v3651 = vpop.f32.mrf.mxu0
  %v3652 = vadd.f32 0.0, %v3651
  %3653 = vmatmul.f32.gmra.mxu0 %v3443
  %v3654 = vpop.f32.mrf.mxu0
  %v3655 = vadd.f32 0.0, %v3654
  %3656 = vmatmul.f32.gmra.mxu0 %v3446
  %v3657 = vpop.f32.mrf.mxu0
  %v3658 = vadd.f32 0.0, %v3657
  %3659 = vmatmul.f32.gmra.mxu0 %v3449
  %v3660 = vpop.f32.mrf.mxu0
  %v3661 = vadd.f32 0.0, %v3660
  %3662 = vmatmul.f32.gmra.mxu0 %v3452
  %v3663 = vpop.f32.mrf.mxu0
  %v3664 = vadd.f32 0.0, %v3663
  %3665 = vmatmul.f32.gmra.mxu0 %v3455
  %v3666 = vpop.f32.mrf.mxu0
  %v3667 = vadd.f32 0.0, %v3666
  %3668 = vmatmul.f32.gmra.mxu0 %v3458
  %v3669 = vpop.f32.mrf.mxu0
  %v3670 = vadd.f32 0.0, %v3669
  %3671 = vmatmul.f32.gmra.mxu0 %v3461
  %v3672 = vpop.f32.mrf.mxu0
  %v3673 = vadd.f32 0.0, %v3672
  %3674 = vmatmul.f32.gmra.mxu0 %v3464
  %v3675 = vpop.f32.mrf.mxu0
  %v3676 = vadd.f32 0.0, %v3675
  %3677 = vmatmul.f32.gmra.mxu0 %v3467
  %v3678 = vpop.f32.mrf.mxu0
  %v3679 = vadd.f32 0.0, %v3678
  %3680 = vmatmul.f32.gmra.mxu0 %v3470
  %v3681 = vpop.f32.mrf.mxu0
  %v3682 = vadd.f32 0.0, %v3681
  %3683 = vmatmul.f32.gmra.mxu0 %v3473
  %v3684 = vpop.f32.mrf.mxu0
  %v3685 = vadd.f32 0.0, %v3684
  %3686 = vmatmul.f32.gmra.mxu0 %v3476
  %v3687 = vpop.f32.mrf.mxu0
  %v3688 = vadd.f32 0.0, %v3687
  %3689 = vmatmul.f32.gmra.mxu0 %v3479
  %v3690 = vpop.f32.mrf.mxu0
  %v3691 = vadd.f32 0.0, %v3690
  %3692 = vmatmul.f32.gmra.mxu0 %v3482
  %v3693 = vpop.f32.mrf.mxu0
  %v3694 = vadd.f32 0.0, %v3693
  %3695 = vmatmul.f32.gmra.mxu0 %v3485
  %v3696 = vpop.f32.mrf.mxu0
  %v3697 = vadd.f32 0.0, %v3696
  %3698 = vmatmul.f32.gmra.mxu0 %v3488
  %v3699 = vpop.f32.mrf.mxu0
  %v3700 = vadd.f32 0.0, %v3699
  %3701 = vmatmul.f32.gmra.mxu0 %v3491
  %v3702 = vpop.f32.mrf.mxu0
  %v3703 = vadd.f32 0.0, %v3702
  %3704 = vmatmul.f32.gmra.mxu0 %v3494
  %v3705 = vpop.f32.mrf.mxu0
  %v3706 = vadd.f32 0.0, %v3705
  %3707 = vmatmul.f32.gmra.mxu0 %v3497
  %v3708 = vpop.f32.mrf.mxu0
  %v3709 = vadd.f32 0.0, %v3708
  %3710 = vmatmul.f32.gmra.mxu0 %v3500
  %v3711 = vpop.f32.mrf.mxu0
  %v3712 = vadd.f32 0.0, %v3711
  %3713 = vmatmul.f32.gmra.mxu0 %v3503
  %v3714 = vpop.f32.mrf.mxu0
  %v3715 = vadd.f32 0.0, %v3714
  %3716 = vmatmul.f32.gmra.mxu0 %v3506
  %v3717 = vpop.f32.mrf.mxu0
  %v3718 = vadd.f32 0.0, %v3717
  %3719 = vmatmul.f32.gmra.mxu0 %v3509
  %v3720 = vpop.f32.mrf.mxu0
  %v3721 = vadd.f32 0.0, %v3720
  %3722 = vmatmul.f32.gmra.mxu0 %v3512
  %v3723 = vpop.f32.mrf.mxu0
  %v3724 = vadd.f32 0.0, %v3723
  %3725 = vmatmul.f32.gmra.mxu0 %v3515
  %v3726 = vpop.f32.mrf.mxu0
  %v3727 = vadd.f32 0.0, %v3726
  %3728 = vmatmul.f32.gmra.mxu0 %v3518
  %v3729 = vpop.f32.mrf.mxu0
  %v3730 = vadd.f32 0.0, %v3729
  %3731 = vmatmul.f32.gmra.mxu0 %v3521
  %v3732 = vpop.f32.mrf.mxu0
  %v3733 = vadd.f32 0.0, %v3732
  %3734 = vmatmul.f32.gmra.mxu0 %v3524
  %v3735 = vpop.f32.mrf.mxu0
  %v3736 = vadd.f32 0.0, %v3735
  %3737 = vmatmul.f32.gmra.mxu0 %v3527
  %v3738 = vpop.f32.mrf.mxu0
  %v3739 = vadd.f32 0.0, %v3738
  %3740 = vmatmul.f32.gmra.mxu0 %v3530
  %v3741 = vpop.f32.mrf.mxu0
  %v3742 = vadd.f32 0.0, %v3741
  %3743 = vmatmul.f32.gmra.mxu0 %v3533
  %v3744 = vpop.f32.mrf.mxu0
  %v3745 = vadd.f32 0.0, %v3744
  %3746 = vmatmul.f32.gmra.mxu0 %v3536
  %v3747 = vpop.f32.mrf.mxu0
  %v3748 = vadd.f32 0.0, %v3747
  %3749 = vmatmul.f32.gmra.mxu0 %v3539
  %v3750 = vpop.f32.mrf.mxu0
  %v3751 = vadd.f32 0.0, %v3750
  %3752 = vmatmul.f32.gmra.mxu0 %v3542
  %v3753 = vpop.f32.mrf.mxu0
  %v3754 = vadd.f32 0.0, %v3753
  %3755 = vmatmul.f32.gmra.mxu0 %v3545
  %v3756 = vpop.f32.mrf.mxu0
  %v3757 = vadd.f32 0.0, %v3756
  %3758 = vmatmul.f32.gmra.mxu0 %v3548
  %v3759 = vpop.f32.mrf.mxu0
  %v3760 = vadd.f32 0.0, %v3759
  %3761 = vmatmul.f32.gmra.mxu0 %v3551
  %v3762 = vpop.f32.mrf.mxu0
  %v3763 = vadd.f32 0.0, %v3762
  %3764 = vmatmul.f32.gmra.mxu0 %v3554
  %v3765 = vpop.f32.mrf.mxu0
  %v3766 = vadd.f32 0.0, %v3765
  %3767 = vmatmul.f32.gmra.mxu0 %v3557
  %v3768 = vpop.f32.mrf.mxu0
  %v3769 = vadd.f32 0.0, %v3768
  %3770 = vmatmul.f32.gmra.mxu0 %v3560
  %v3771 = vpop.f32.mrf.mxu0
  %v3772 = vadd.f32 0.0, %v3771
  %3773 = vmatmul.f32.gmra.mxu0 %v3563
  %v3774 = vpop.f32.mrf.mxu0
  %v3775 = vadd.f32 0.0, %v3774
  %3776 = vmatmul.f32.gmra.mxu0 %v3566
  %v3777 = vpop.f32.mrf.mxu0
  %v3778 = vadd.f32 0.0, %v3777
  %3779 = vmatmul.f32.gmra.mxu0 %v3569
  %v3780 = vpop.f32.mrf.mxu0
  %v3781 = vadd.f32 0.0, %v3780
  %3782 = vmatmul.f32.gmra.mxu0 %v3572
  %v3783 = vpop.f32.mrf.mxu0
  %v3784 = vadd.f32 0.0, %v3783
  %3785 = vmatmul.f32.gmra.mxu0 %v3575
  %v3786 = vpop.f32.mrf.mxu0
  %v3787 = vadd.f32 0.0, %v3786
  %3788 = vmatmul.f32.gmra.mxu0 %v3578
  %v3789 = vpop.f32.mrf.mxu0
  %v3790 = vadd.f32 0.0, %v3789
  %3791 = vmatmul.f32.gmra.mxu0 %v3581
  %v3792 = vpop.f32.mrf.mxu0
  %v3793 = vadd.f32 0.0, %v3792
  %3794 = vmatmul.f32.gmra.mxu0 %v3584
  %v3795 = vpop.f32.mrf.mxu0
  %v3796 = vadd.f32 0.0, %v3795
  %3797 = vmatmul.f32.gmra.mxu0 %v3587
  %v3798 = vpop.f32.mrf.mxu0
  %v3799 = vadd.f32 0.0, %v3798
  %3800 = vmatmul.f32.gmra.mxu0 %v3590
  %v3801 = vpop.f32.mrf.mxu0
  %v3802 = vadd.f32 0.0, %v3801
  %3803 = vdwg.mxu0
  %v3804 = vadd.f32 %v3334, %v3613
  %v3805 = vadd.f32 %v3335, %v3616
  %v3806 = vadd.f32 %v3336, %v3619
  %v3807 = vadd.f32 %v3337, %v3622
  %v3808 = vadd.f32 %v3338, %v3625
  %v3809 = vadd.f32 %v3339, %v3628
  %v3810 = vadd.f32 %v3340, %v3631
  %v3811 = vadd.f32 %v3341, %v3634
  %v3812 = vadd.f32 %v3342, %v3637
  %v3813 = vadd.f32 %v3343, %v3640
  %v3814 = vadd.f32 %v3344, %v3643
  %v3815 = vadd.f32 %v3345, %v3646
  %v3816 = vadd.f32 %v3346, %v3649
  %v3817 = vadd.f32 %v3347, %v3652
  %v3818 = vadd.f32 %v3348, %v3655
  %v3819 = vadd.f32 %v3349, %v3658
  %v3820 = vadd.f32 %v3350, %v3661
  %v3821 = vadd.f32 %v3351, %v3664
  %v3822 = vadd.f32 %v3352, %v3667
  %v3823 = vadd.f32 %v3353, %v3670
  %v3824 = vadd.f32 %v3354, %v3673
  %v3825 = vadd.f32 %v3355, %v3676
  %v3826 = vadd.f32 %v3356, %v3679
  %v3827 = vadd.f32 %v3357, %v3682
  %v3828 = vadd.f32 %v3358, %v3685
  %v3829 = vadd.f32 %v3359, %v3688
  %v3830 = vadd.f32 %v3360, %v3691
  %v3831 = vadd.f32 %v3361, %v3694
  %v3832 = vadd.f32 %v3362, %v3697
  %v3833 = vadd.f32 %v3363, %v3700
  %v3834 = vadd.f32 %v3364, %v3703
  %v3835 = vadd.f32 %v3365, %v3706
  %v3836 = vadd.f32 %v3366, %v3709
  %v3837 = vadd.f32 %v3367, %v3712
  %v3838 = vadd.f32 %v3368, %v3715
  %v3839 = vadd.f32 %v3369, %v3718
  %v3840 = vadd.f32 %v3370, %v3721
  %v3841 = vadd.f32 %v3371, %v3724
  %v3842 = vadd.f32 %v3372, %v3727
  %v3843 = vadd.f32 %v3373, %v3730
  %v3844 = vadd.f32 %v3374, %v3733
  %v3845 = vadd.f32 %v3375, %v3736
  %v3846 = vadd.f32 %v3376, %v3739
  %v3847 = vadd.f32 %v3377, %v3742
  %v3848 = vadd.f32 %v3378, %v3745
  %v3849 = vadd.f32 %v3379, %v3748
  %v3850 = vadd.f32 %v3380, %v3751
  %v3851 = vadd.f32 %v3381, %v3754
  %v3852 = vadd.f32 %v3382, %v3757
  %v3853 = vadd.f32 %v3383, %v3760
  %v3854 = vadd.f32 %v3384, %v3763
  %v3855 = vadd.f32 %v3385, %v3766
  %v3856 = vadd.f32 %v3386, %v3769
  %v3857 = vadd.f32 %v3387, %v3772
  %v3858 = vadd.f32 %v3388, %v3775
  %v3859 = vadd.f32 %v3389, %v3778
  %v3860 = vadd.f32 %v3390, %v3781
  %v3861 = vadd.f32 %v3391, %v3784
  %v3862 = vadd.f32 %v3392, %v3787
  %v3863 = vadd.f32 %v3393, %v3790
  %v3864 = vadd.f32 %v3394, %v3793
  %v3865 = vadd.f32 %v3395, %v3796
  %v3866 = vadd.f32 %v3396, %v3799
  %v3867 = vadd.f32 %v3397, %v3802
  %3868 = vst [vmem:[%s3] sm:$0xff] %v3804
  %3869 = vst [vmem:[%s3 + $0x8] sm:$0xff] %v3805
  %3870 = vst [vmem:[%s3 + $0x10] sm:$0xff] %v3806
  %3871 = vst [vmem:[%s3 + $0x18] sm:$0xff] %v3807
  %3872 = vst [vmem:[%s3 + $0x20] sm:$0xff] %v3808
  %3873 = vst [vmem:[%s3 + $0x28] sm:$0xff] %v3809
  %3874 = vst [vmem:[%s3 + $0x30] sm:$0xff] %v3810
  %3875 = vst [vmem:[%s3 + $0x38] sm:$0xff] %v3811
  %3876 = vst [vmem:[%s3 + $0x40] sm:$0xff] %v3812
  %3877 = vst [vmem:[%s3 + $0x48] sm:$0xff] %v3813
  %3878 = vst [vmem:[%s3 + $0x50] sm:$0xff] %v3814
  %3879 = vst [vmem:[%s3 + $0x58] sm:$0xff] %v3815
  %3880 = vst [vmem:[%s3 + $0x60] sm:$0xff] %v3816
  %3881 = vst [vmem:[%s3 + $0x68] sm:$0xff] %v3817
  %3882 = vst [vmem:[%s3 + $0x70] sm:$0xff] %v3818
  %3883 = vst [vmem:[%s3 + $0x78] sm:$0xff] %v3819
  %3884 = vst [vmem:[%s3 + $0x80] sm:$0xff] %v3820
  %3885 = vst [vmem:[%s3 + $0x88] sm:$0xff] %v3821
  %3886 = vst [vmem:[%s3 + $0x90] sm:$0xff] %v3822
  %3887 = vst [vmem:[%s3 + $0x98] sm:$0xff] %v3823
  %3888 = vst [vmem:[%s3 + $0xa0] sm:$0xff] %v3824
  %3889 = vst [vmem:[%s3 + $0xa8] sm:$0xff] %v3825
  %3890 = vst [vmem:[%s3 + $0xb0] sm:$0xff] %v3826
  %3891 = vst [vmem:[%s3 + $0xb8] sm:$0xff] %v3827
  %3892 = vst [vmem:[%s3 + $0xc0] sm:$0xff] %v3828
  %3893 = vst [vmem:[%s3 + $0xc8] sm:$0xff] %v3829
  %3894 = vst [vmem:[%s3 + $0xd0] sm:$0xff] %v3830
  %3895 = vst [vmem:[%s3 + $0xd8] sm:$0xff] %v3831
  %3896 = vst [vmem:[%s3 + $0xe0] sm:$0xff] %v3832
  %3897 = vst [vmem:[%s3 + $0xe8] sm:$0xff] %v3833
  %3898 = vst [vmem:[%s3 + $0xf0] sm:$0xff] %v3834
  %3899 = vst [vmem:[%s3 + $0xf8] sm:$0xff] %v3835
  %3900 = vst [vmem:[%s3 + $0x100] sm:$0xff] %v3836
  %3901 = vst [vmem:[%s3 + $0x108] sm:$0xff] %v3837
  %3902 = vst [vmem:[%s3 + $0x110] sm:$0xff] %v3838
  %3903 = vst [vmem:[%s3 + $0x118] sm:$0xff] %v3839
  %3904 = vst [vmem:[%s3 + $0x120] sm:$0xff] %v3840
  %3905 = vst [vmem:[%s3 + $0x128] sm:$0xff] %v3841
  %3906 = vst [vmem:[%s3 + $0x130] sm:$0xff] %v3842
  %3907 = vst [vmem:[%s3 + $0x138] sm:$0xff] %v3843
  %3908 = vst [vmem:[%s3 + $0x140] sm:$0xff] %v3844
  %3909 = vst [vmem:[%s3 + $0x148] sm:$0xff] %v3845
  %3910 = vst [vmem:[%s3 + $0x150] sm:$0xff] %v3846
  %3911 = vst [vmem:[%s3 + $0x158] sm:$0xff] %v3847
  %3912 = vst [vmem:[%s3 + $0x160] sm:$0xff] %v3848
  %3913 = vst [vmem:[%s3 + $0x168] sm:$0xff] %v3849
  %3914 = vst [vmem:[%s3 + $0x170] sm:$0xff] %v3850
  %3915 = vst [vmem:[%s3 + $0x178] sm:$0xff] %v3851
  %3916 = vst [vmem:[%s3 + $0x180] sm:$0xff] %v3852
  %3917 = vst [vmem:[%s3 + $0x188] sm:$0xff] %v3853
  %3918 = vst [vmem:[%s3 + $0x190] sm:$0xff] %v3854
  %3919 = vst [vmem:[%s3 + $0x198] sm:$0xff] %v3855
  %3920 = vst [vmem:[%s3 + $0x1a0] sm:$0xff] %v3856
  %3921 = vst [vmem:[%s3 + $0x1a8] sm:$0xff] %v3857
  %3922 = vst [vmem:[%s3 + $0x1b0] sm:$0xff] %v3858
  %3923 = vst [vmem:[%s3 + $0x1b8] sm:$0xff] %v3859
  %3924 = vst [vmem:[%s3 + $0x1c0] sm:$0xff] %v3860
  %3925 = vst [vmem:[%s3 + $0x1c8] sm:$0xff] %v3861
  %3926 = vst [vmem:[%s3 + $0x1d0] sm:$0xff] %v3862
  %3927 = vst [vmem:[%s3 + $0x1d8] sm:$0xff] %v3863
  %3928 = vst [vmem:[%s3 + $0x1e0] sm:$0xff] %v3864
  %3929 = vst [vmem:[%s3 + $0x1e8] sm:$0xff] %v3865
  %3930 = vst [vmem:[%s3 + $0x1f0] sm:$0xff] %v3866
  %3931 = vst [vmem:[%s3 + $0x1f8] sm:$0xff] %v3867
  %s3932 = scalar_lea.vmem %s0, 96
  %v3933 = vld [vmem:[%s3932] sm:$0xff]
  %v3934 = vld [vmem:[%s3932 + $0x8] sm:$0xff]
  %v3935 = vld [vmem:[%s3932 + $0x10] sm:$0xff]
  %v3936 = vld [vmem:[%s3932 + $0x18] sm:$0xff]
  %v3937 = vld [vmem:[%s3932 + $0x20] sm:$0xff]
  %v3938 = vld [vmem:[%s3932 + $0x28] sm:$0xff]
  %v3939 = vld [vmem:[%s3932 + $0x30] sm:$0xff]
  %v3940 = vld [vmem:[%s3932 + $0x38] sm:$0xff]
  %v3941 = vld [vmem:[%s3932 + $0x40] sm:$0xff]
  %v3942 = vld [vmem:[%s3932 + $0x48] sm:$0xff]
  %v3943 = vld [vmem:[%s3932 + $0x50] sm:$0xff]
  %v3944 = vld [vmem:[%s3932 + $0x58] sm:$0xff]
  %v3945 = vld [vmem:[%s3932 + $0x60] sm:$0xff]
  %v3946 = vld [vmem:[%s3932 + $0x68] sm:$0xff]
  %v3947 = vld [vmem:[%s3932 + $0x70] sm:$0xff]
  %v3948 = vld [vmem:[%s3932 + $0x78] sm:$0xff]
  %v3949 = vld [vmem:[%s3932 + $0x80] sm:$0xff]
  %v3950 = vld [vmem:[%s3932 + $0x88] sm:$0xff]
  %v3951 = vld [vmem:[%s3932 + $0x90] sm:$0xff]
  %v3952 = vld [vmem:[%s3932 + $0x98] sm:$0xff]
  %v3953 = vld [vmem:[%s3932 + $0xa0] sm:$0xff]
  %v3954 = vld [vmem:[%s3932 + $0xa8] sm:$0xff]
  %v3955 = vld [vmem:[%s3932 + $0xb0] sm:$0xff]
  %v3956 = vld [vmem:[%s3932 + $0xb8] sm:$0xff]
  %v3957 = vld [vmem:[%s3932 + $0xc0] sm:$0xff]
  %v3958 = vld [vmem:[%s3932 + $0xc8] sm:$0xff]
  %v3959 = vld [vmem:[%s3932 + $0xd0] sm:$0xff]
  %v3960 = vld [vmem:[%s3932 + $0xd8] sm:$0xff]
  %v3961 = vld [vmem:[%s3932 + $0xe0] sm:$0xff]
  %v3962 = vld [vmem:[%s3932 + $0xe8] sm:$0xff]
  %v3963 = vld [vmem:[%s3932 + $0xf0] sm:$0xff]
  %v3964 = vld [vmem:[%s3932 + $0xf8] sm:$0xff]
  %v3965 = vld [vmem:[%s3932 + $0x180] sm:$0xff]
  %v3966 = vld [vmem:[%s3932 + $0x188] sm:$0xff]
  %v3967 = vld [vmem:[%s3932 + $0x190] sm:$0xff]
  %v3968 = vld [vmem:[%s3932 + $0x198] sm:$0xff]
  %v3969 = vld [vmem:[%s3932 + $0x1a0] sm:$0xff]
  %v3970 = vld [vmem:[%s3932 + $0x1a8] sm:$0xff]
  %v3971 = vld [vmem:[%s3932 + $0x1b0] sm:$0xff]
  %v3972 = vld [vmem:[%s3932 + $0x1b8] sm:$0xff]
  %v3973 = vld [vmem:[%s3932 + $0x1c0] sm:$0xff]
  %v3974 = vld [vmem:[%s3932 + $0x1c8] sm:$0xff]
  %v3975 = vld [vmem:[%s3932 + $0x1d0] sm:$0xff]
  %v3976 = vld [vmem:[%s3932 + $0x1d8] sm:$0xff]
  %v3977 = vld [vmem:[%s3932 + $0x1e0] sm:$0xff]
  %v3978 = vld [vmem:[%s3932 + $0x1e8] sm:$0xff]
  %v3979 = vld [vmem:[%s3932 + $0x1f0] sm:$0xff]
  %v3980 = vld [vmem:[%s3932 + $0x1f8] sm:$0xff]
  %v3981 = vld [vmem:[%s3932 + $0x200] sm:$0xff]
  %v3982 = vld [vmem:[%s3932 + $0x208] sm:$0xff]
  %v3983 = vld [vmem:[%s3932 + $0x210] sm:$0xff]
  %v3984 = vld [vmem:[%s3932 + $0x218] sm:$0xff]
  %v3985 = vld [vmem:[%s3932 + $0x220] sm:$0xff]
  %v3986 = vld [vmem:[%s3932 + $0x228] sm:$0xff]
  %v3987 = vld [vmem:[%s3932 + $0x230] sm:$0xff]
  %v3988 = vld [vmem:[%s3932 + $0x238] sm:$0xff]
  %v3989 = vld [vmem:[%s3932 + $0x240] sm:$0xff]
  %v3990 = vld [vmem:[%s3932 + $0x248] sm:$0xff]
  %v3991 = vld [vmem:[%s3932 + $0x250] sm:$0xff]
  %v3992 = vld [vmem:[%s3932 + $0x258] sm:$0xff]
  %v3993 = vld [vmem:[%s3932 + $0x260] sm:$0xff]
  %v3994 = vld [vmem:[%s3932 + $0x268] sm:$0xff]
  %v3995 = vld [vmem:[%s3932 + $0x270] sm:$0xff]
  %v3996 = vld [vmem:[%s3932 + $0x278] sm:$0xff]
  %v3997 = vld [vmem:[%s3] sm:$0xff]
  %v3998 = vld [vmem:[%s3 + $0x8] sm:$0xff]
  %v3999 = vld [vmem:[%s3 + $0x10] sm:$0xff]
  %v4000 = vld [vmem:[%s3 + $0x18] sm:$0xff]
  %v4001 = vld [vmem:[%s3 + $0x20] sm:$0xff]
  %v4002 = vld [vmem:[%s3 + $0x28] sm:$0xff]
  %v4003 = vld [vmem:[%s3 + $0x30] sm:$0xff]
  %v4004 = vld [vmem:[%s3 + $0x38] sm:$0xff]
  %v4005 = vld [vmem:[%s3 + $0x40] sm:$0xff]
  %v4006 = vld [vmem:[%s3 + $0x48] sm:$0xff]
  %v4007 = vld [vmem:[%s3 + $0x50] sm:$0xff]
  %v4008 = vld [vmem:[%s3 + $0x58] sm:$0xff]
  %v4009 = vld [vmem:[%s3 + $0x60] sm:$0xff]
  %v4010 = vld [vmem:[%s3 + $0x68] sm:$0xff]
  %v4011 = vld [vmem:[%s3 + $0x70] sm:$0xff]
  %v4012 = vld [vmem:[%s3 + $0x78] sm:$0xff]
  %v4013 = vld [vmem:[%s3 + $0x80] sm:$0xff]
  %v4014 = vld [vmem:[%s3 + $0x88] sm:$0xff]
  %v4015 = vld [vmem:[%s3 + $0x90] sm:$0xff]
  %v4016 = vld [vmem:[%s3 + $0x98] sm:$0xff]
  %v4017 = vld [vmem:[%s3 + $0xa0] sm:$0xff]
  %v4018 = vld [vmem:[%s3 + $0xa8] sm:$0xff]
  %v4019 = vld [vmem:[%s3 + $0xb0] sm:$0xff]
  %v4020 = vld [vmem:[%s3 + $0xb8] sm:$0xff]
  %v4021 = vld [vmem:[%s3 + $0xc0] sm:$0xff]
  %v4022 = vld [vmem:[%s3 + $0xc8] sm:$0xff]
  %v4023 = vld [vmem:[%s3 + $0xd0] sm:$0xff]
  %v4024 = vld [vmem:[%s3 + $0xd8] sm:$0xff]
  %v4025 = vld [vmem:[%s3 + $0xe0] sm:$0xff]
  %v4026 = vld [vmem:[%s3 + $0xe8] sm:$0xff]
  %v4027 = vld [vmem:[%s3 + $0xf0] sm:$0xff]
  %v4028 = vld [vmem:[%s3 + $0xf8] sm:$0xff]
  %v4029 = vld [vmem:[%s3 + $0x100] sm:$0xff]
  %v4030 = vld [vmem:[%s3 + $0x108] sm:$0xff]
  %v4031 = vld [vmem:[%s3 + $0x110] sm:$0xff]
  %v4032 = vld [vmem:[%s3 + $0x118] sm:$0xff]
  %v4033 = vld [vmem:[%s3 + $0x120] sm:$0xff]
  %v4034 = vld [vmem:[%s3 + $0x128] sm:$0xff]
  %v4035 = vld [vmem:[%s3 + $0x130] sm:$0xff]
  %v4036 = vld [vmem:[%s3 + $0x138] sm:$0xff]
  %v4037 = vld [vmem:[%s3 + $0x140] sm:$0xff]
  %v4038 = vld [vmem:[%s3 + $0x148] sm:$0xff]
  %v4039 = vld [vmem:[%s3 + $0x150] sm:$0xff]
  %v4040 = vld [vmem:[%s3 + $0x158] sm:$0xff]
  %v4041 = vld [vmem:[%s3 + $0x160] sm:$0xff]
  %v4042 = vld [vmem:[%s3 + $0x168] sm:$0xff]
  %v4043 = vld [vmem:[%s3 + $0x170] sm:$0xff]
  %v4044 = vld [vmem:[%s3 + $0x178] sm:$0xff]
  %v4045 = vld [vmem:[%s3 + $0x180] sm:$0xff]
  %v4046 = vld [vmem:[%s3 + $0x188] sm:$0xff]
  %v4047 = vld [vmem:[%s3 + $0x190] sm:$0xff]
  %v4048 = vld [vmem:[%s3 + $0x198] sm:$0xff]
  %v4049 = vld [vmem:[%s3 + $0x1a0] sm:$0xff]
  %v4050 = vld [vmem:[%s3 + $0x1a8] sm:$0xff]
  %v4051 = vld [vmem:[%s3 + $0x1b0] sm:$0xff]
  %v4052 = vld [vmem:[%s3 + $0x1b8] sm:$0xff]
  %v4053 = vld [vmem:[%s3 + $0x1c0] sm:$0xff]
  %v4054 = vld [vmem:[%s3 + $0x1c8] sm:$0xff]
  %v4055 = vld [vmem:[%s3 + $0x1d0] sm:$0xff]
  %v4056 = vld [vmem:[%s3 + $0x1d8] sm:$0xff]
  %v4057 = vld [vmem:[%s3 + $0x1e0] sm:$0xff]
  %v4058 = vld [vmem:[%s3 + $0x1e8] sm:$0xff]
  %v4059 = vld [vmem:[%s3 + $0x1f0] sm:$0xff]
  %v4060 = vld [vmem:[%s3 + $0x1f8] sm:$0xff]
  %s4061 = scalar_lea.vmem %s1, 24
  %v4062 = vld [vmem:[%s4061] sm:$0xf]
  %v4064 = vsel %vm83, %v3933, 0
  %v4067 = vsel %vm83, %v3934, 0
  %v4070 = vsel %vm83, %v3935, 0
  %v4073 = vsel %vm83, %v3936, 0
  %v4076 = vsel %vm83, %v3937, 0
  %v4079 = vsel %vm83, %v3938, 0
  %v4082 = vsel %vm83, %v3939, 0
  %v4085 = vsel %vm83, %v3940, 0
  %v4088 = vsel %vm83, %v3941, 0
  %v4091 = vsel %vm83, %v3942, 0
  %v4094 = vsel %vm83, %v3943, 0
  %v4097 = vsel %vm83, %v3944, 0
  %v4100 = vsel %vm83, %v3945, 0
  %v4103 = vsel %vm83, %v3946, 0
  %v4106 = vsel %vm83, %v3947, 0
  %v4109 = vsel %vm83, %v3948, 0
  %v4112 = vsel %vm83, %v3949, 0
  %v4115 = vsel %vm83, %v3950, 0
  %v4118 = vsel %vm83, %v3951, 0
  %v4121 = vsel %vm83, %v3952, 0
  %v4124 = vsel %vm83, %v3953, 0
  %v4127 = vsel %vm83, %v3954, 0
  %v4130 = vsel %vm83, %v3955, 0
  %v4133 = vsel %vm83, %v3956, 0
  %v4136 = vsel %vm83, %v3957, 0
  %v4139 = vsel %vm83, %v3958, 0
  %v4142 = vsel %vm83, %v3959, 0
  %v4145 = vsel %vm83, %v3960, 0
  %v4148 = vsel %vm83, %v3961, 0
  %v4151 = vsel %vm83, %v3962, 0
  %v4154 = vsel %vm83, %v3963, 0
  %v4157 = vsel %vm83, %v3964, 0
  %v4160 = vsel %vm83, %v3965, 0
  %v4163 = vsel %vm83, %v3966, 0
  %v4166 = vsel %vm83, %v3967, 0
  %v4169 = vsel %vm83, %v3968, 0
  %v4172 = vsel %vm83, %v3969, 0
  %v4175 = vsel %vm83, %v3970, 0
  %v4178 = vsel %vm83, %v3971, 0
  %v4181 = vsel %vm83, %v3972, 0
  %v4184 = vsel %vm83, %v3973, 0
  %v4187 = vsel %vm83, %v3974, 0
  %v4190 = vsel %vm83, %v3975, 0
  %v4193 = vsel %vm83, %v3976, 0
  %v4196 = vsel %vm83, %v3977, 0
  %v4199 = vsel %vm83, %v3978, 0
  %v4202 = vsel %vm83, %v3979, 0
  %v4205 = vsel %vm83, %v3980, 0
  %v4208 = vsel %vm83, %v3981, 0
  %v4211 = vsel %vm83, %v3982, 0
  %v4214 = vsel %vm83, %v3983, 0
  %v4217 = vsel %vm83, %v3984, 0
  %v4220 = vsel %vm83, %v3985, 0
  %v4223 = vsel %vm83, %v3986, 0
  %v4226 = vsel %vm83, %v3987, 0
  %v4229 = vsel %vm83, %v3988, 0
  %v4232 = vsel %vm83, %v3989, 0
  %v4235 = vsel %vm83, %v3990, 0
  %v4238 = vsel %vm83, %v3991, 0
  %v4241 = vsel %vm83, %v3992, 0
  %v4244 = vsel %vm83, %v3993, 0
  %v4247 = vsel %vm83, %v3994, 0
  %v4250 = vsel %vm83, %v3995, 0
  %v4253 = vsel %vm83, %v3996, 0
  %v4256 = vsel %vm276, %v4062, 0
  %4258 = vmatpush.msra.mxu0 0.0
  %4259 = vmatpush.msra.mxu0 0.0
  %4260 = vmatpush.msra.mxu0 0.0
  %4261 = vmatpush.msra.mxu0 0.0
  %4262 = vmatpush.msra.mxu0 0.0
  %4263 = vmatpush.msra.mxu0 0.0
  %4264 = vmatpush.msra.mxu0 0.0
  %4265 = vmatpush.msra.mxu0 0.0
  %4266 = vmatpush.msra.mxu0 0.0
  %4267 = vmatpush.msra.mxu0 0.0
  %4268 = vmatpush.msra.mxu0 0.0
  %4269 = vmatpush.msra.mxu0 0.0
  %4270 = vmatpush.msra.mxu0 0.0
  %4271 = vmatpush.msra.mxu0 0.0
  %4272 = vmatpush.msra.mxu0 0.0
  %4273 = vmatpush.msra.mxu0 %v4256
  %4274 = vmatmul.f32.gmra.mxu0 %v4064
  %v4275 = vpop.f32.mrf.mxu0
  %v4276 = vadd.f32 0.0, %v4275
  %4277 = vmatmul.f32.gmra.mxu0 %v4067
  %v4278 = vpop.f32.mrf.mxu0
  %v4279 = vadd.f32 0.0, %v4278
  %4280 = vmatmul.f32.gmra.mxu0 %v4070
  %v4281 = vpop.f32.mrf.mxu0
  %v4282 = vadd.f32 0.0, %v4281
  %4283 = vmatmul.f32.gmra.mxu0 %v4073
  %v4284 = vpop.f32.mrf.mxu0
  %v4285 = vadd.f32 0.0, %v4284
  %4286 = vmatmul.f32.gmra.mxu0 %v4076
  %v4287 = vpop.f32.mrf.mxu0
  %v4288 = vadd.f32 0.0, %v4287
  %4289 = vmatmul.f32.gmra.mxu0 %v4079
  %v4290 = vpop.f32.mrf.mxu0
  %v4291 = vadd.f32 0.0, %v4290
  %4292 = vmatmul.f32.gmra.mxu0 %v4082
  %v4293 = vpop.f32.mrf.mxu0
  %v4294 = vadd.f32 0.0, %v4293
  %4295 = vmatmul.f32.gmra.mxu0 %v4085
  %v4296 = vpop.f32.mrf.mxu0
  %v4297 = vadd.f32 0.0, %v4296
  %4298 = vmatmul.f32.gmra.mxu0 %v4088
  %v4299 = vpop.f32.mrf.mxu0
  %v4300 = vadd.f32 0.0, %v4299
  %4301 = vmatmul.f32.gmra.mxu0 %v4091
  %v4302 = vpop.f32.mrf.mxu0
  %v4303 = vadd.f32 0.0, %v4302
  %4304 = vmatmul.f32.gmra.mxu0 %v4094
  %v4305 = vpop.f32.mrf.mxu0
  %v4306 = vadd.f32 0.0, %v4305
  %4307 = vmatmul.f32.gmra.mxu0 %v4097
  %v4308 = vpop.f32.mrf.mxu0
  %v4309 = vadd.f32 0.0, %v4308
  %4310 = vmatmul.f32.gmra.mxu0 %v4100
  %v4311 = vpop.f32.mrf.mxu0
  %v4312 = vadd.f32 0.0, %v4311
  %4313 = vmatmul.f32.gmra.mxu0 %v4103
  %v4314 = vpop.f32.mrf.mxu0
  %v4315 = vadd.f32 0.0, %v4314
  %4316 = vmatmul.f32.gmra.mxu0 %v4106
  %v4317 = vpop.f32.mrf.mxu0
  %v4318 = vadd.f32 0.0, %v4317
  %4319 = vmatmul.f32.gmra.mxu0 %v4109
  %v4320 = vpop.f32.mrf.mxu0
  %v4321 = vadd.f32 0.0, %v4320
  %4322 = vmatmul.f32.gmra.mxu0 %v4112
  %v4323 = vpop.f32.mrf.mxu0
  %v4324 = vadd.f32 0.0, %v4323
  %4325 = vmatmul.f32.gmra.mxu0 %v4115
  %v4326 = vpop.f32.mrf.mxu0
  %v4327 = vadd.f32 0.0, %v4326
  %4328 = vmatmul.f32.gmra.mxu0 %v4118
  %v4329 = vpop.f32.mrf.mxu0
  %v4330 = vadd.f32 0.0, %v4329
  %4331 = vmatmul.f32.gmra.mxu0 %v4121
  %v4332 = vpop.f32.mrf.mxu0
  %v4333 = vadd.f32 0.0, %v4332
  %4334 = vmatmul.f32.gmra.mxu0 %v4124
  %v4335 = vpop.f32.mrf.mxu0
  %v4336 = vadd.f32 0.0, %v4335
  %4337 = vmatmul.f32.gmra.mxu0 %v4127
  %v4338 = vpop.f32.mrf.mxu0
  %v4339 = vadd.f32 0.0, %v4338
  %4340 = vmatmul.f32.gmra.mxu0 %v4130
  %v4341 = vpop.f32.mrf.mxu0
  %v4342 = vadd.f32 0.0, %v4341
  %4343 = vmatmul.f32.gmra.mxu0 %v4133
  %v4344 = vpop.f32.mrf.mxu0
  %v4345 = vadd.f32 0.0, %v4344
  %4346 = vmatmul.f32.gmra.mxu0 %v4136
  %v4347 = vpop.f32.mrf.mxu0
  %v4348 = vadd.f32 0.0, %v4347
  %4349 = vmatmul.f32.gmra.mxu0 %v4139
  %v4350 = vpop.f32.mrf.mxu0
  %v4351 = vadd.f32 0.0, %v4350
  %4352 = vmatmul.f32.gmra.mxu0 %v4142
  %v4353 = vpop.f32.mrf.mxu0
  %v4354 = vadd.f32 0.0, %v4353
  %4355 = vmatmul.f32.gmra.mxu0 %v4145
  %v4356 = vpop.f32.mrf.mxu0
  %v4357 = vadd.f32 0.0, %v4356
  %4358 = vmatmul.f32.gmra.mxu0 %v4148
  %v4359 = vpop.f32.mrf.mxu0
  %v4360 = vadd.f32 0.0, %v4359
  %4361 = vmatmul.f32.gmra.mxu0 %v4151
  %v4362 = vpop.f32.mrf.mxu0
  %v4363 = vadd.f32 0.0, %v4362
  %4364 = vmatmul.f32.gmra.mxu0 %v4154
  %v4365 = vpop.f32.mrf.mxu0
  %v4366 = vadd.f32 0.0, %v4365
  %4367 = vmatmul.f32.gmra.mxu0 %v4157
  %v4368 = vpop.f32.mrf.mxu0
  %v4369 = vadd.f32 0.0, %v4368
  %4370 = vmatmul.f32.gmra.mxu0 %v4160
  %v4371 = vpop.f32.mrf.mxu0
  %v4372 = vadd.f32 0.0, %v4371
  %4373 = vmatmul.f32.gmra.mxu0 %v4163
  %v4374 = vpop.f32.mrf.mxu0
  %v4375 = vadd.f32 0.0, %v4374
  %4376 = vmatmul.f32.gmra.mxu0 %v4166
  %v4377 = vpop.f32.mrf.mxu0
  %v4378 = vadd.f32 0.0, %v4377
  %4379 = vmatmul.f32.gmra.mxu0 %v4169
  %v4380 = vpop.f32.mrf.mxu0
  %v4381 = vadd.f32 0.0, %v4380
  %4382 = vmatmul.f32.gmra.mxu0 %v4172
  %v4383 = vpop.f32.mrf.mxu0
  %v4384 = vadd.f32 0.0, %v4383
  %4385 = vmatmul.f32.gmra.mxu0 %v4175
  %v4386 = vpop.f32.mrf.mxu0
  %v4387 = vadd.f32 0.0, %v4386
  %4388 = vmatmul.f32.gmra.mxu0 %v4178
  %v4389 = vpop.f32.mrf.mxu0
  %v4390 = vadd.f32 0.0, %v4389
  %4391 = vmatmul.f32.gmra.mxu0 %v4181
  %v4392 = vpop.f32.mrf.mxu0
  %v4393 = vadd.f32 0.0, %v4392
  %4394 = vmatmul.f32.gmra.mxu0 %v4184
  %v4395 = vpop.f32.mrf.mxu0
  %v4396 = vadd.f32 0.0, %v4395
  %4397 = vmatmul.f32.gmra.mxu0 %v4187
  %v4398 = vpop.f32.mrf.mxu0
  %v4399 = vadd.f32 0.0, %v4398
  %4400 = vmatmul.f32.gmra.mxu0 %v4190
  %v4401 = vpop.f32.mrf.mxu0
  %v4402 = vadd.f32 0.0, %v4401
  %4403 = vmatmul.f32.gmra.mxu0 %v4193
  %v4404 = vpop.f32.mrf.mxu0
  %v4405 = vadd.f32 0.0, %v4404
  %4406 = vmatmul.f32.gmra.mxu0 %v4196
  %v4407 = vpop.f32.mrf.mxu0
  %v4408 = vadd.f32 0.0, %v4407
  %4409 = vmatmul.f32.gmra.mxu0 %v4199
  %v4410 = vpop.f32.mrf.mxu0
  %v4411 = vadd.f32 0.0, %v4410
  %4412 = vmatmul.f32.gmra.mxu0 %v4202
  %v4413 = vpop.f32.mrf.mxu0
  %v4414 = vadd.f32 0.0, %v4413
  %4415 = vmatmul.f32.gmra.mxu0 %v4205
  %v4416 = vpop.f32.mrf.mxu0
  %v4417 = vadd.f32 0.0, %v4416
  %4418 = vmatmul.f32.gmra.mxu0 %v4208
  %v4419 = vpop.f32.mrf.mxu0
  %v4420 = vadd.f32 0.0, %v4419
  %4421 = vmatmul.f32.gmra.mxu0 %v4211
  %v4422 = vpop.f32.mrf.mxu0
  %v4423 = vadd.f32 0.0, %v4422
  %4424 = vmatmul.f32.gmra.mxu0 %v4214
  %v4425 = vpop.f32.mrf.mxu0
  %v4426 = vadd.f32 0.0, %v4425
  %4427 = vmatmul.f32.gmra.mxu0 %v4217
  %v4428 = vpop.f32.mrf.mxu0
  %v4429 = vadd.f32 0.0, %v4428
  %4430 = vmatmul.f32.gmra.mxu0 %v4220
  %v4431 = vpop.f32.mrf.mxu0
  %v4432 = vadd.f32 0.0, %v4431
  %4433 = vmatmul.f32.gmra.mxu0 %v4223
  %v4434 = vpop.f32.mrf.mxu0
  %v4435 = vadd.f32 0.0, %v4434
  %4436 = vmatmul.f32.gmra.mxu0 %v4226
  %v4437 = vpop.f32.mrf.mxu0
  %v4438 = vadd.f32 0.0, %v4437
  %4439 = vmatmul.f32.gmra.mxu0 %v4229
  %v4440 = vpop.f32.mrf.mxu0
  %v4441 = vadd.f32 0.0, %v4440
  %4442 = vmatmul.f32.gmra.mxu0 %v4232
  %v4443 = vpop.f32.mrf.mxu0
  %v4444 = vadd.f32 0.0, %v4443
  %4445 = vmatmul.f32.gmra.mxu0 %v4235
  %v4446 = vpop.f32.mrf.mxu0
  %v4447 = vadd.f32 0.0, %v4446
  %4448 = vmatmul.f32.gmra.mxu0 %v4238
  %v4449 = vpop.f32.mrf.mxu0
  %v4450 = vadd.f32 0.0, %v4449
  %4451 = vmatmul.f32.gmra.mxu0 %v4241
  %v4452 = vpop.f32.mrf.mxu0
  %v4453 = vadd.f32 0.0, %v4452
  %4454 = vmatmul.f32.gmra.mxu0 %v4244
  %v4455 = vpop.f32.mrf.mxu0
  %v4456 = vadd.f32 0.0, %v4455
  %4457 = vmatmul.f32.gmra.mxu0 %v4247
  %v4458 = vpop.f32.mrf.mxu0
  %v4459 = vadd.f32 0.0, %v4458
  %4460 = vmatmul.f32.gmra.mxu0 %v4250
  %v4461 = vpop.f32.mrf.mxu0
  %v4462 = vadd.f32 0.0, %v4461
  %4463 = vmatmul.f32.gmra.mxu0 %v4253
  %v4464 = vpop.f32.mrf.mxu0
  %v4465 = vadd.f32 0.0, %v4464
  %4466 = vdwg.mxu0
  %v4467 = vadd.f32 %v3997, %v4276
  %v4468 = vadd.f32 %v3998, %v4279
  %v4469 = vadd.f32 %v3999, %v4282
  %v4470 = vadd.f32 %v4000, %v4285
  %v4471 = vadd.f32 %v4001, %v4288
  %v4472 = vadd.f32 %v4002, %v4291
  %v4473 = vadd.f32 %v4003, %v4294
  %v4474 = vadd.f32 %v4004, %v4297
  %v4475 = vadd.f32 %v4005, %v4300
  %v4476 = vadd.f32 %v4006, %v4303
  %v4477 = vadd.f32 %v4007, %v4306
  %v4478 = vadd.f32 %v4008, %v4309
  %v4479 = vadd.f32 %v4009, %v4312
  %v4480 = vadd.f32 %v4010, %v4315
  %v4481 = vadd.f32 %v4011, %v4318
  %v4482 = vadd.f32 %v4012, %v4321
  %v4483 = vadd.f32 %v4013, %v4324
  %v4484 = vadd.f32 %v4014, %v4327
  %v4485 = vadd.f32 %v4015, %v4330
  %v4486 = vadd.f32 %v4016, %v4333
  %v4487 = vadd.f32 %v4017, %v4336
  %v4488 = vadd.f32 %v4018, %v4339
  %v4489 = vadd.f32 %v4019, %v4342
  %v4490 = vadd.f32 %v4020, %v4345
  %v4491 = vadd.f32 %v4021, %v4348
  %v4492 = vadd.f32 %v4022, %v4351
  %v4493 = vadd.f32 %v4023, %v4354
  %v4494 = vadd.f32 %v4024, %v4357
  %v4495 = vadd.f32 %v4025, %v4360
  %v4496 = vadd.f32 %v4026, %v4363
  %v4497 = vadd.f32 %v4027, %v4366
  %v4498 = vadd.f32 %v4028, %v4369
  %v4499 = vadd.f32 %v4029, %v4372
  %v4500 = vadd.f32 %v4030, %v4375
  %v4501 = vadd.f32 %v4031, %v4378
  %v4502 = vadd.f32 %v4032, %v4381
  %v4503 = vadd.f32 %v4033, %v4384
  %v4504 = vadd.f32 %v4034, %v4387
  %v4505 = vadd.f32 %v4035, %v4390
  %v4506 = vadd.f32 %v4036, %v4393
  %v4507 = vadd.f32 %v4037, %v4396
  %v4508 = vadd.f32 %v4038, %v4399
  %v4509 = vadd.f32 %v4039, %v4402
  %v4510 = vadd.f32 %v4040, %v4405
  %v4511 = vadd.f32 %v4041, %v4408
  %v4512 = vadd.f32 %v4042, %v4411
  %v4513 = vadd.f32 %v4043, %v4414
  %v4514 = vadd.f32 %v4044, %v4417
  %v4515 = vadd.f32 %v4045, %v4420
  %v4516 = vadd.f32 %v4046, %v4423
  %v4517 = vadd.f32 %v4047, %v4426
  %v4518 = vadd.f32 %v4048, %v4429
  %v4519 = vadd.f32 %v4049, %v4432
  %v4520 = vadd.f32 %v4050, %v4435
  %v4521 = vadd.f32 %v4051, %v4438
  %v4522 = vadd.f32 %v4052, %v4441
  %v4523 = vadd.f32 %v4053, %v4444
  %v4524 = vadd.f32 %v4054, %v4447
  %v4525 = vadd.f32 %v4055, %v4450
  %v4526 = vadd.f32 %v4056, %v4453
  %v4527 = vadd.f32 %v4057, %v4456
  %v4528 = vadd.f32 %v4058, %v4459
  %v4529 = vadd.f32 %v4059, %v4462
  %v4530 = vadd.f32 %v4060, %v4465
  %4531 = vst [vmem:[%s3] sm:$0xff] %v4467
  %4532 = vst [vmem:[%s3 + $0x8] sm:$0xff] %v4468
  %4533 = vst [vmem:[%s3 + $0x10] sm:$0xff] %v4469
  %4534 = vst [vmem:[%s3 + $0x18] sm:$0xff] %v4470
  %4535 = vst [vmem:[%s3 + $0x20] sm:$0xff] %v4471
  %4536 = vst [vmem:[%s3 + $0x28] sm:$0xff] %v4472
  %4537 = vst [vmem:[%s3 + $0x30] sm:$0xff] %v4473
  %4538 = vst [vmem:[%s3 + $0x38] sm:$0xff] %v4474
  %4539 = vst [vmem:[%s3 + $0x40] sm:$0xff] %v4475
  %4540 = vst [vmem:[%s3 + $0x48] sm:$0xff] %v4476
  %4541 = vst [vmem:[%s3 + $0x50] sm:$0xff] %v4477
  %4542 = vst [vmem:[%s3 + $0x58] sm:$0xff] %v4478
  %4543 = vst [vmem:[%s3 + $0x60] sm:$0xff] %v4479
  %4544 = vst [vmem:[%s3 + $0x68] sm:$0xff] %v4480
  %4545 = vst [vmem:[%s3 + $0x70] sm:$0xff] %v4481
  %4546 = vst [vmem:[%s3 + $0x78] sm:$0xff] %v4482
  %4547 = vst [vmem:[%s3 + $0x80] sm:$0xff] %v4483
  %4548 = vst [vmem:[%s3 + $0x88] sm:$0xff] %v4484
  %4549 = vst [vmem:[%s3 + $0x90] sm:$0xff] %v4485
  %4550 = vst [vmem:[%s3 + $0x98] sm:$0xff] %v4486
  %4551 = vst [vmem:[%s3 + $0xa0] sm:$0xff] %v4487
  %4552 = vst [vmem:[%s3 + $0xa8] sm:$0xff] %v4488
  %4553 = vst [vmem:[%s3 + $0xb0] sm:$0xff] %v4489
  %4554 = vst [vmem:[%s3 + $0xb8] sm:$0xff] %v4490
  %4555 = vst [vmem:[%s3 + $0xc0] sm:$0xff] %v4491
  %4556 = vst [vmem:[%s3 + $0xc8] sm:$0xff] %v4492
  %4557 = vst [vmem:[%s3 + $0xd0] sm:$0xff] %v4493
  %4558 = vst [vmem:[%s3 + $0xd8] sm:$0xff] %v4494
  %4559 = vst [vmem:[%s3 + $0xe0] sm:$0xff] %v4495
  %4560 = vst [vmem:[%s3 + $0xe8] sm:$0xff] %v4496
  %4561 = vst [vmem:[%s3 + $0xf0] sm:$0xff] %v4497
  %4562 = vst [vmem:[%s3 + $0xf8] sm:$0xff] %v4498
  %4563 = vst [vmem:[%s3 + $0x100] sm:$0xff] %v4499
  %4564 = vst [vmem:[%s3 + $0x108] sm:$0xff] %v4500
  %4565 = vst [vmem:[%s3 + $0x110] sm:$0xff] %v4501
  %4566 = vst [vmem:[%s3 + $0x118] sm:$0xff] %v4502
  %4567 = vst [vmem:[%s3 + $0x120] sm:$0xff] %v4503
  %4568 = vst [vmem:[%s3 + $0x128] sm:$0xff] %v4504
  %4569 = vst [vmem:[%s3 + $0x130] sm:$0xff] %v4505
  %4570 = vst [vmem:[%s3 + $0x138] sm:$0xff] %v4506
  %4571 = vst [vmem:[%s3 + $0x140] sm:$0xff] %v4507
  %4572 = vst [vmem:[%s3 + $0x148] sm:$0xff] %v4508
  %4573 = vst [vmem:[%s3 + $0x150] sm:$0xff] %v4509
  %4574 = vst [vmem:[%s3 + $0x158] sm:$0xff] %v4510
  %4575 = vst [vmem:[%s3 + $0x160] sm:$0xff] %v4511
  %4576 = vst [vmem:[%s3 + $0x168] sm:$0xff] %v4512
  %4577 = vst [vmem:[%s3 + $0x170] sm:$0xff] %v4513
  %4578 = vst [vmem:[%s3 + $0x178] sm:$0xff] %v4514
  %4579 = vst [vmem:[%s3 + $0x180] sm:$0xff] %v4515
  %4580 = vst [vmem:[%s3 + $0x188] sm:$0xff] %v4516
  %4581 = vst [vmem:[%s3 + $0x190] sm:$0xff] %v4517
  %4582 = vst [vmem:[%s3 + $0x198] sm:$0xff] %v4518
  %4583 = vst [vmem:[%s3 + $0x1a0] sm:$0xff] %v4519
  %4584 = vst [vmem:[%s3 + $0x1a8] sm:$0xff] %v4520
  %4585 = vst [vmem:[%s3 + $0x1b0] sm:$0xff] %v4521
  %4586 = vst [vmem:[%s3 + $0x1b8] sm:$0xff] %v4522
  %4587 = vst [vmem:[%s3 + $0x1c0] sm:$0xff] %v4523
  %4588 = vst [vmem:[%s3 + $0x1c8] sm:$0xff] %v4524
  %4589 = vst [vmem:[%s3 + $0x1d0] sm:$0xff] %v4525
  %4590 = vst [vmem:[%s3 + $0x1d8] sm:$0xff] %v4526
  %4591 = vst [vmem:[%s3 + $0x1e0] sm:$0xff] %v4527
  %4592 = vst [vmem:[%s3 + $0x1e8] sm:$0xff] %v4528
  %4593 = vst [vmem:[%s3 + $0x1f0] sm:$0xff] %v4529
  %4594 = vst [vmem:[%s3 + $0x1f8] sm:$0xff] %v4530
  %s4595 = scalar_lea.vmem %s0, 112
  %v4596 = vld [vmem:[%s4595] sm:$0xff]
  %v4597 = vld [vmem:[%s4595 + $0x8] sm:$0xff]
  %v4598 = vld [vmem:[%s4595 + $0x10] sm:$0xff]
  %v4599 = vld [vmem:[%s4595 + $0x18] sm:$0xff]
  %v4600 = vld [vmem:[%s4595 + $0x20] sm:$0xff]
  %v4601 = vld [vmem:[%s4595 + $0x28] sm:$0xff]
  %v4602 = vld [vmem:[%s4595 + $0x30] sm:$0xff]
  %v4603 = vld [vmem:[%s4595 + $0x38] sm:$0xff]
  %v4604 = vld [vmem:[%s4595 + $0x40] sm:$0xff]
  %v4605 = vld [vmem:[%s4595 + $0x48] sm:$0xff]
  %v4606 = vld [vmem:[%s4595 + $0x50] sm:$0xff]
  %v4607 = vld [vmem:[%s4595 + $0x58] sm:$0xff]
  %v4608 = vld [vmem:[%s4595 + $0x60] sm:$0xff]
  %v4609 = vld [vmem:[%s4595 + $0x68] sm:$0xff]
  %v4610 = vld [vmem:[%s4595 + $0x70] sm:$0xff]
  %v4611 = vld [vmem:[%s4595 + $0x78] sm:$0xff]
  %v4612 = vld [vmem:[%s4595 + $0x80] sm:$0xff]
  %v4613 = vld [vmem:[%s4595 + $0x88] sm:$0xff]
  %v4614 = vld [vmem:[%s4595 + $0x90] sm:$0xff]
  %v4615 = vld [vmem:[%s4595 + $0x98] sm:$0xff]
  %v4616 = vld [vmem:[%s4595 + $0xa0] sm:$0xff]
  %v4617 = vld [vmem:[%s4595 + $0xa8] sm:$0xff]
  %v4618 = vld [vmem:[%s4595 + $0xb0] sm:$0xff]
  %v4619 = vld [vmem:[%s4595 + $0xb8] sm:$0xff]
  %v4620 = vld [vmem:[%s4595 + $0xc0] sm:$0xff]
  %v4621 = vld [vmem:[%s4595 + $0xc8] sm:$0xff]
  %v4622 = vld [vmem:[%s4595 + $0xd0] sm:$0xff]
  %v4623 = vld [vmem:[%s4595 + $0xd8] sm:$0xff]
  %v4624 = vld [vmem:[%s4595 + $0xe0] sm:$0xff]
  %v4625 = vld [vmem:[%s4595 + $0xe8] sm:$0xff]
  %v4626 = vld [vmem:[%s4595 + $0xf0] sm:$0xff]
  %v4627 = vld [vmem:[%s4595 + $0xf8] sm:$0xff]
  %v4628 = vld [vmem:[%s4595 + $0x180] sm:$0xff]
  %v4629 = vld [vmem:[%s4595 + $0x188] sm:$0xff]
  %v4630 = vld [vmem:[%s4595 + $0x190] sm:$0xff]
  %v4631 = vld [vmem:[%s4595 + $0x198] sm:$0xff]
  %v4632 = vld [vmem:[%s4595 + $0x1a0] sm:$0xff]
  %v4633 = vld [vmem:[%s4595 + $0x1a8] sm:$0xff]
  %v4634 = vld [vmem:[%s4595 + $0x1b0] sm:$0xff]
  %v4635 = vld [vmem:[%s4595 + $0x1b8] sm:$0xff]
  %v4636 = vld [vmem:[%s4595 + $0x1c0] sm:$0xff]
  %v4637 = vld [vmem:[%s4595 + $0x1c8] sm:$0xff]
  %v4638 = vld [vmem:[%s4595 + $0x1d0] sm:$0xff]
  %v4639 = vld [vmem:[%s4595 + $0x1d8] sm:$0xff]
  %v4640 = vld [vmem:[%s4595 + $0x1e0] sm:$0xff]
  %v4641 = vld [vmem:[%s4595 + $0x1e8] sm:$0xff]
  %v4642 = vld [vmem:[%s4595 + $0x1f0] sm:$0xff]
  %v4643 = vld [vmem:[%s4595 + $0x1f8] sm:$0xff]
  %v4644 = vld [vmem:[%s4595 + $0x200] sm:$0xff]
  %v4645 = vld [vmem:[%s4595 + $0x208] sm:$0xff]
  %v4646 = vld [vmem:[%s4595 + $0x210] sm:$0xff]
  %v4647 = vld [vmem:[%s4595 + $0x218] sm:$0xff]
  %v4648 = vld [vmem:[%s4595 + $0x220] sm:$0xff]
  %v4649 = vld [vmem:[%s4595 + $0x228] sm:$0xff]
  %v4650 = vld [vmem:[%s4595 + $0x230] sm:$0xff]
  %v4651 = vld [vmem:[%s4595 + $0x238] sm:$0xff]
  %v4652 = vld [vmem:[%s4595 + $0x240] sm:$0xff]
  %v4653 = vld [vmem:[%s4595 + $0x248] sm:$0xff]
  %v4654 = vld [vmem:[%s4595 + $0x250] sm:$0xff]
  %v4655 = vld [vmem:[%s4595 + $0x258] sm:$0xff]
  %v4656 = vld [vmem:[%s4595 + $0x260] sm:$0xff]
  %v4657 = vld [vmem:[%s4595 + $0x268] sm:$0xff]
  %v4658 = vld [vmem:[%s4595 + $0x270] sm:$0xff]
  %v4659 = vld [vmem:[%s4595 + $0x278] sm:$0xff]
  %v4660 = vld [vmem:[%s3] sm:$0xff]
  %v4661 = vld [vmem:[%s3 + $0x8] sm:$0xff]
  %v4662 = vld [vmem:[%s3 + $0x10] sm:$0xff]
  %v4663 = vld [vmem:[%s3 + $0x18] sm:$0xff]
  %v4664 = vld [vmem:[%s3 + $0x20] sm:$0xff]
  %v4665 = vld [vmem:[%s3 + $0x28] sm:$0xff]
  %v4666 = vld [vmem:[%s3 + $0x30] sm:$0xff]
  %v4667 = vld [vmem:[%s3 + $0x38] sm:$0xff]
  %v4668 = vld [vmem:[%s3 + $0x40] sm:$0xff]
  %v4669 = vld [vmem:[%s3 + $0x48] sm:$0xff]
  %v4670 = vld [vmem:[%s3 + $0x50] sm:$0xff]
  %v4671 = vld [vmem:[%s3 + $0x58] sm:$0xff]
  %v4672 = vld [vmem:[%s3 + $0x60] sm:$0xff]
  %v4673 = vld [vmem:[%s3 + $0x68] sm:$0xff]
  %v4674 = vld [vmem:[%s3 + $0x70] sm:$0xff]
  %v4675 = vld [vmem:[%s3 + $0x78] sm:$0xff]
  %v4676 = vld [vmem:[%s3 + $0x80] sm:$0xff]
  %v4677 = vld [vmem:[%s3 + $0x88] sm:$0xff]
  %v4678 = vld [vmem:[%s3 + $0x90] sm:$0xff]
  %v4679 = vld [vmem:[%s3 + $0x98] sm:$0xff]
  %v4680 = vld [vmem:[%s3 + $0xa0] sm:$0xff]
  %v4681 = vld [vmem:[%s3 + $0xa8] sm:$0xff]
  %v4682 = vld [vmem:[%s3 + $0xb0] sm:$0xff]
  %v4683 = vld [vmem:[%s3 + $0xb8] sm:$0xff]
  %v4684 = vld [vmem:[%s3 + $0xc0] sm:$0xff]
  %v4685 = vld [vmem:[%s3 + $0xc8] sm:$0xff]
  %v4686 = vld [vmem:[%s3 + $0xd0] sm:$0xff]
  %v4687 = vld [vmem:[%s3 + $0xd8] sm:$0xff]
  %v4688 = vld [vmem:[%s3 + $0xe0] sm:$0xff]
  %v4689 = vld [vmem:[%s3 + $0xe8] sm:$0xff]
  %v4690 = vld [vmem:[%s3 + $0xf0] sm:$0xff]
  %v4691 = vld [vmem:[%s3 + $0xf8] sm:$0xff]
  %v4692 = vld [vmem:[%s3 + $0x100] sm:$0xff]
  %v4693 = vld [vmem:[%s3 + $0x108] sm:$0xff]
  %v4694 = vld [vmem:[%s3 + $0x110] sm:$0xff]
  %v4695 = vld [vmem:[%s3 + $0x118] sm:$0xff]
  %v4696 = vld [vmem:[%s3 + $0x120] sm:$0xff]
  %v4697 = vld [vmem:[%s3 + $0x128] sm:$0xff]
  %v4698 = vld [vmem:[%s3 + $0x130] sm:$0xff]
  %v4699 = vld [vmem:[%s3 + $0x138] sm:$0xff]
  %v4700 = vld [vmem:[%s3 + $0x140] sm:$0xff]
  %v4701 = vld [vmem:[%s3 + $0x148] sm:$0xff]
  %v4702 = vld [vmem:[%s3 + $0x150] sm:$0xff]
  %v4703 = vld [vmem:[%s3 + $0x158] sm:$0xff]
  %v4704 = vld [vmem:[%s3 + $0x160] sm:$0xff]
  %v4705 = vld [vmem:[%s3 + $0x168] sm:$0xff]
  %v4706 = vld [vmem:[%s3 + $0x170] sm:$0xff]
  %v4707 = vld [vmem:[%s3 + $0x178] sm:$0xff]
  %v4708 = vld [vmem:[%s3 + $0x180] sm:$0xff]
  %v4709 = vld [vmem:[%s3 + $0x188] sm:$0xff]
  %v4710 = vld [vmem:[%s3 + $0x190] sm:$0xff]
  %v4711 = vld [vmem:[%s3 + $0x198] sm:$0xff]
  %v4712 = vld [vmem:[%s3 + $0x1a0] sm:$0xff]
  %v4713 = vld [vmem:[%s3 + $0x1a8] sm:$0xff]
  %v4714 = vld [vmem:[%s3 + $0x1b0] sm:$0xff]
  %v4715 = vld [vmem:[%s3 + $0x1b8] sm:$0xff]
  %v4716 = vld [vmem:[%s3 + $0x1c0] sm:$0xff]
  %v4717 = vld [vmem:[%s3 + $0x1c8] sm:$0xff]
  %v4718 = vld [vmem:[%s3 + $0x1d0] sm:$0xff]
  %v4719 = vld [vmem:[%s3 + $0x1d8] sm:$0xff]
  %v4720 = vld [vmem:[%s3 + $0x1e0] sm:$0xff]
  %v4721 = vld [vmem:[%s3 + $0x1e8] sm:$0xff]
  %v4722 = vld [vmem:[%s3 + $0x1f0] sm:$0xff]
  %v4723 = vld [vmem:[%s3 + $0x1f8] sm:$0xff]
  %s4724 = scalar_lea.vmem %s1, 28
  %v4725 = vld [vmem:[%s4724] sm:$0xf]
  %v4727 = vsel %vm83, %v4596, 0
  %v4730 = vsel %vm83, %v4597, 0
  %v4733 = vsel %vm83, %v4598, 0
  %v4736 = vsel %vm83, %v4599, 0
  %v4739 = vsel %vm83, %v4600, 0
  %v4742 = vsel %vm83, %v4601, 0
  %v4745 = vsel %vm83, %v4602, 0
  %v4748 = vsel %vm83, %v4603, 0
  %v4751 = vsel %vm83, %v4604, 0
  %v4754 = vsel %vm83, %v4605, 0
  %v4757 = vsel %vm83, %v4606, 0
  %v4760 = vsel %vm83, %v4607, 0
  %v4763 = vsel %vm83, %v4608, 0
  %v4766 = vsel %vm83, %v4609, 0
  %v4769 = vsel %vm83, %v4610, 0
  %v4772 = vsel %vm83, %v4611, 0
  %v4775 = vsel %vm83, %v4612, 0
  %v4778 = vsel %vm83, %v4613, 0
  %v4781 = vsel %vm83, %v4614, 0
  %v4784 = vsel %vm83, %v4615, 0
  %v4787 = vsel %vm83, %v4616, 0
  %v4790 = vsel %vm83, %v4617, 0
  %v4793 = vsel %vm83, %v4618, 0
  %v4796 = vsel %vm83, %v4619, 0
  %v4799 = vsel %vm83, %v4620, 0
  %v4802 = vsel %vm83, %v4621, 0
  %v4805 = vsel %vm83, %v4622, 0
  %v4808 = vsel %vm83, %v4623, 0
  %v4811 = vsel %vm83, %v4624, 0
  %v4814 = vsel %vm83, %v4625, 0
  %v4817 = vsel %vm83, %v4626, 0
  %v4820 = vsel %vm83, %v4627, 0
  %v4823 = vsel %vm83, %v4628, 0
  %v4826 = vsel %vm83, %v4629, 0
  %v4829 = vsel %vm83, %v4630, 0
  %v4832 = vsel %vm83, %v4631, 0
  %v4835 = vsel %vm83, %v4632, 0
  %v4838 = vsel %vm83, %v4633, 0
  %v4841 = vsel %vm83, %v4634, 0
  %v4844 = vsel %vm83, %v4635, 0
  %v4847 = vsel %vm83, %v4636, 0
  %v4850 = vsel %vm83, %v4637, 0
  %v4853 = vsel %vm83, %v4638, 0
  %v4856 = vsel %vm83, %v4639, 0
  %v4859 = vsel %vm83, %v4640, 0
  %v4862 = vsel %vm83, %v4641, 0
  %v4865 = vsel %vm83, %v4642, 0
  %v4868 = vsel %vm83, %v4643, 0
  %v4871 = vsel %vm83, %v4644, 0
  %v4874 = vsel %vm83, %v4645, 0
  %v4877 = vsel %vm83, %v4646, 0
  %v4880 = vsel %vm83, %v4647, 0
  %v4883 = vsel %vm83, %v4648, 0
  %v4886 = vsel %vm83, %v4649, 0
  %v4889 = vsel %vm83, %v4650, 0
  %v4892 = vsel %vm83, %v4651, 0
  %v4895 = vsel %vm83, %v4652, 0
  %v4898 = vsel %vm83, %v4653, 0
  %v4901 = vsel %vm83, %v4654, 0
  %v4904 = vsel %vm83, %v4655, 0
  %v4907 = vsel %vm83, %v4656, 0
  %v4910 = vsel %vm83, %v4657, 0
  %v4913 = vsel %vm83, %v4658, 0
  %v4916 = vsel %vm83, %v4659, 0
  %v4919 = vsel %vm276, %v4725, 0
  %4921 = vmatpush.msra.mxu0 0.0
  %4922 = vmatpush.msra.mxu0 0.0
  %4923 = vmatpush.msra.mxu0 0.0
  %4924 = vmatpush.msra.mxu0 0.0
  %4925 = vmatpush.msra.mxu0 0.0
  %4926 = vmatpush.msra.mxu0 0.0
  %4927 = vmatpush.msra.mxu0 0.0
  %4928 = vmatpush.msra.mxu0 0.0
  %4929 = vmatpush.msra.mxu0 0.0
  %4930 = vmatpush.msra.mxu0 0.0
  %4931 = vmatpush.msra.mxu0 0.0
  %4932 = vmatpush.msra.mxu0 0.0
  %4933 = vmatpush.msra.mxu0 0.0
  %4934 = vmatpush.msra.mxu0 0.0
  %4935 = vmatpush.msra.mxu0 0.0
  %4936 = vmatpush.msra.mxu0 %v4919
  %4937 = vmatmul.f32.gmra.mxu0 %v4727
  %v4938 = vpop.f32.mrf.mxu0
  %v4939 = vadd.f32 0.0, %v4938
  %4940 = vmatmul.f32.gmra.mxu0 %v4730
  %v4941 = vpop.f32.mrf.mxu0
  %v4942 = vadd.f32 0.0, %v4941
  %4943 = vmatmul.f32.gmra.mxu0 %v4733
  %v4944 = vpop.f32.mrf.mxu0
  %v4945 = vadd.f32 0.0, %v4944
  %4946 = vmatmul.f32.gmra.mxu0 %v4736
  %v4947 = vpop.f32.mrf.mxu0
  %v4948 = vadd.f32 0.0, %v4947
  %4949 = vmatmul.f32.gmra.mxu0 %v4739
  %v4950 = vpop.f32.mrf.mxu0
  %v4951 = vadd.f32 0.0, %v4950
  %4952 = vmatmul.f32.gmra.mxu0 %v4742
  %v4953 = vpop.f32.mrf.mxu0
  %v4954 = vadd.f32 0.0, %v4953
  %4955 = vmatmul.f32.gmra.mxu0 %v4745
  %v4956 = vpop.f32.mrf.mxu0
  %v4957 = vadd.f32 0.0, %v4956
  %4958 = vmatmul.f32.gmra.mxu0 %v4748
  %v4959 = vpop.f32.mrf.mxu0
  %v4960 = vadd.f32 0.0, %v4959
  %4961 = vmatmul.f32.gmra.mxu0 %v4751
  %v4962 = vpop.f32.mrf.mxu0
  %v4963 = vadd.f32 0.0, %v4962
  %4964 = vmatmul.f32.gmra.mxu0 %v4754
  %v4965 = vpop.f32.mrf.mxu0
  %v4966 = vadd.f32 0.0, %v4965
  %4967 = vmatmul.f32.gmra.mxu0 %v4757
  %v4968 = vpop.f32.mrf.mxu0
  %v4969 = vadd.f32 0.0, %v4968
  %4970 = vmatmul.f32.gmra.mxu0 %v4760
  %v4971 = vpop.f32.mrf.mxu0
  %v4972 = vadd.f32 0.0, %v4971
  %4973 = vmatmul.f32.gmra.mxu0 %v4763
  %v4974 = vpop.f32.mrf.mxu0
  %v4975 = vadd.f32 0.0, %v4974
  %4976 = vmatmul.f32.gmra.mxu0 %v4766
  %v4977 = vpop.f32.mrf.mxu0
  %v4978 = vadd.f32 0.0, %v4977
  %4979 = vmatmul.f32.gmra.mxu0 %v4769
  %v4980 = vpop.f32.mrf.mxu0
  %v4981 = vadd.f32 0.0, %v4980
  %4982 = vmatmul.f32.gmra.mxu0 %v4772
  %v4983 = vpop.f32.mrf.mxu0
  %v4984 = vadd.f32 0.0, %v4983
  %4985 = vmatmul.f32.gmra.mxu0 %v4775
  %v4986 = vpop.f32.mrf.mxu0
  %v4987 = vadd.f32 0.0, %v4986
  %4988 = vmatmul.f32.gmra.mxu0 %v4778
  %v4989 = vpop.f32.mrf.mxu0
  %v4990 = vadd.f32 0.0, %v4989
  %4991 = vmatmul.f32.gmra.mxu0 %v4781
  %v4992 = vpop.f32.mrf.mxu0
  %v4993 = vadd.f32 0.0, %v4992
  %4994 = vmatmul.f32.gmra.mxu0 %v4784
  %v4995 = vpop.f32.mrf.mxu0
  %v4996 = vadd.f32 0.0, %v4995
  %4997 = vmatmul.f32.gmra.mxu0 %v4787
  %v4998 = vpop.f32.mrf.mxu0
  %v4999 = vadd.f32 0.0, %v4998
  %5000 = vmatmul.f32.gmra.mxu0 %v4790
  %v5001 = vpop.f32.mrf.mxu0
  %v5002 = vadd.f32 0.0, %v5001
  %5003 = vmatmul.f32.gmra.mxu0 %v4793
  %v5004 = vpop.f32.mrf.mxu0
  %v5005 = vadd.f32 0.0, %v5004
  %5006 = vmatmul.f32.gmra.mxu0 %v4796
  %v5007 = vpop.f32.mrf.mxu0
  %v5008 = vadd.f32 0.0, %v5007
  %5009 = vmatmul.f32.gmra.mxu0 %v4799
  %v5010 = vpop.f32.mrf.mxu0
  %v5011 = vadd.f32 0.0, %v5010
  %5012 = vmatmul.f32.gmra.mxu0 %v4802
  %v5013 = vpop.f32.mrf.mxu0
  %v5014 = vadd.f32 0.0, %v5013
  %5015 = vmatmul.f32.gmra.mxu0 %v4805
  %v5016 = vpop.f32.mrf.mxu0
  %v5017 = vadd.f32 0.0, %v5016
  %5018 = vmatmul.f32.gmra.mxu0 %v4808
  %v5019 = vpop.f32.mrf.mxu0
  %v5020 = vadd.f32 0.0, %v5019
  %5021 = vmatmul.f32.gmra.mxu0 %v4811
  %v5022 = vpop.f32.mrf.mxu0
  %v5023 = vadd.f32 0.0, %v5022
  %5024 = vmatmul.f32.gmra.mxu0 %v4814
  %v5025 = vpop.f32.mrf.mxu0
  %v5026 = vadd.f32 0.0, %v5025
  %5027 = vmatmul.f32.gmra.mxu0 %v4817
  %v5028 = vpop.f32.mrf.mxu0
  %v5029 = vadd.f32 0.0, %v5028
  %5030 = vmatmul.f32.gmra.mxu0 %v4820
  %v5031 = vpop.f32.mrf.mxu0
  %v5032 = vadd.f32 0.0, %v5031
  %5033 = vmatmul.f32.gmra.mxu0 %v4823
  %v5034 = vpop.f32.mrf.mxu0
  %v5035 = vadd.f32 0.0, %v5034
  %5036 = vmatmul.f32.gmra.mxu0 %v4826
  %v5037 = vpop.f32.mrf.mxu0
  %v5038 = vadd.f32 0.0, %v5037
  %5039 = vmatmul.f32.gmra.mxu0 %v4829
  %v5040 = vpop.f32.mrf.mxu0
  %v5041 = vadd.f32 0.0, %v5040
  %5042 = vmatmul.f32.gmra.mxu0 %v4832
  %v5043 = vpop.f32.mrf.mxu0
  %v5044 = vadd.f32 0.0, %v5043
  %5045 = vmatmul.f32.gmra.mxu0 %v4835
  %v5046 = vpop.f32.mrf.mxu0
  %v5047 = vadd.f32 0.0, %v5046
  %5048 = vmatmul.f32.gmra.mxu0 %v4838
  %v5049 = vpop.f32.mrf.mxu0
  %v5050 = vadd.f32 0.0, %v5049
  %5051 = vmatmul.f32.gmra.mxu0 %v4841
  %v5052 = vpop.f32.mrf.mxu0
  %v5053 = vadd.f32 0.0, %v5052
  %5054 = vmatmul.f32.gmra.mxu0 %v4844
  %v5055 = vpop.f32.mrf.mxu0
  %v5056 = vadd.f32 0.0, %v5055
  %5057 = vmatmul.f32.gmra.mxu0 %v4847
  %v5058 = vpop.f32.mrf.mxu0
  %v5059 = vadd.f32 0.0, %v5058
  %5060 = vmatmul.f32.gmra.mxu0 %v4850
  %v5061 = vpop.f32.mrf.mxu0
  %v5062 = vadd.f32 0.0, %v5061
  %5063 = vmatmul.f32.gmra.mxu0 %v4853
  %v5064 = vpop.f32.mrf.mxu0
  %v5065 = vadd.f32 0.0, %v5064
  %5066 = vmatmul.f32.gmra.mxu0 %v4856
  %v5067 = vpop.f32.mrf.mxu0
  %v5068 = vadd.f32 0.0, %v5067
  %5069 = vmatmul.f32.gmra.mxu0 %v4859
  %v5070 = vpop.f32.mrf.mxu0
  %v5071 = vadd.f32 0.0, %v5070
  %5072 = vmatmul.f32.gmra.mxu0 %v4862
  %v5073 = vpop.f32.mrf.mxu0
  %v5074 = vadd.f32 0.0, %v5073
  %5075 = vmatmul.f32.gmra.mxu0 %v4865
  %v5076 = vpop.f32.mrf.mxu0
  %v5077 = vadd.f32 0.0, %v5076
  %5078 = vmatmul.f32.gmra.mxu0 %v4868
  %v5079 = vpop.f32.mrf.mxu0
  %v5080 = vadd.f32 0.0, %v5079
  %5081 = vmatmul.f32.gmra.mxu0 %v4871
  %v5082 = vpop.f32.mrf.mxu0
  %v5083 = vadd.f32 0.0, %v5082
  %5084 = vmatmul.f32.gmra.mxu0 %v4874
  %v5085 = vpop.f32.mrf.mxu0
  %v5086 = vadd.f32 0.0, %v5085
  %5087 = vmatmul.f32.gmra.mxu0 %v4877
  %v5088 = vpop.f32.mrf.mxu0
  %v5089 = vadd.f32 0.0, %v5088
  %5090 = vmatmul.f32.gmra.mxu0 %v4880
  %v5091 = vpop.f32.mrf.mxu0
  %v5092 = vadd.f32 0.0, %v5091
  %5093 = vmatmul.f32.gmra.mxu0 %v4883
  %v5094 = vpop.f32.mrf.mxu0
  %v5095 = vadd.f32 0.0, %v5094
  %5096 = vmatmul.f32.gmra.mxu0 %v4886
  %v5097 = vpop.f32.mrf.mxu0
  %v5098 = vadd.f32 0.0, %v5097
  %5099 = vmatmul.f32.gmra.mxu0 %v4889
  %v5100 = vpop.f32.mrf.mxu0
  %v5101 = vadd.f32 0.0, %v5100
  %5102 = vmatmul.f32.gmra.mxu0 %v4892
  %v5103 = vpop.f32.mrf.mxu0
  %v5104 = vadd.f32 0.0, %v5103
  %5105 = vmatmul.f32.gmra.mxu0 %v4895
  %v5106 = vpop.f32.mrf.mxu0
  %v5107 = vadd.f32 0.0, %v5106
  %5108 = vmatmul.f32.gmra.mxu0 %v4898
  %v5109 = vpop.f32.mrf.mxu0
  %v5110 = vadd.f32 0.0, %v5109
  %5111 = vmatmul.f32.gmra.mxu0 %v4901
  %v5112 = vpop.f32.mrf.mxu0
  %v5113 = vadd.f32 0.0, %v5112
  %5114 = vmatmul.f32.gmra.mxu0 %v4904
  %v5115 = vpop.f32.mrf.mxu0
  %v5116 = vadd.f32 0.0, %v5115
  %5117 = vmatmul.f32.gmra.mxu0 %v4907
  %v5118 = vpop.f32.mrf.mxu0
  %v5119 = vadd.f32 0.0, %v5118
  %5120 = vmatmul.f32.gmra.mxu0 %v4910
  %v5121 = vpop.f32.mrf.mxu0
  %v5122 = vadd.f32 0.0, %v5121
  %5123 = vmatmul.f32.gmra.mxu0 %v4913
  %v5124 = vpop.f32.mrf.mxu0
  %v5125 = vadd.f32 0.0, %v5124
  %5126 = vmatmul.f32.gmra.mxu0 %v4916
  %v5127 = vpop.f32.mrf.mxu0
  %v5128 = vadd.f32 0.0, %v5127
  %5129 = vdwg.mxu0
  %v5130 = vadd.f32 %v4660, %v4939
  %v5131 = vadd.f32 %v4661, %v4942
  %v5132 = vadd.f32 %v4662, %v4945
  %v5133 = vadd.f32 %v4663, %v4948
  %v5134 = vadd.f32 %v4664, %v4951
  %v5135 = vadd.f32 %v4665, %v4954
  %v5136 = vadd.f32 %v4666, %v4957
  %v5137 = vadd.f32 %v4667, %v4960
  %v5138 = vadd.f32 %v4668, %v4963
  %v5139 = vadd.f32 %v4669, %v4966
  %v5140 = vadd.f32 %v4670, %v4969
  %v5141 = vadd.f32 %v4671, %v4972
  %v5142 = vadd.f32 %v4672, %v4975
  %v5143 = vadd.f32 %v4673, %v4978
  %v5144 = vadd.f32 %v4674, %v4981
  %v5145 = vadd.f32 %v4675, %v4984
  %v5146 = vadd.f32 %v4676, %v4987
  %v5147 = vadd.f32 %v4677, %v4990
  %v5148 = vadd.f32 %v4678, %v4993
  %v5149 = vadd.f32 %v4679, %v4996
  %v5150 = vadd.f32 %v4680, %v4999
  %v5151 = vadd.f32 %v4681, %v5002
  %v5152 = vadd.f32 %v4682, %v5005
  %v5153 = vadd.f32 %v4683, %v5008
  %v5154 = vadd.f32 %v4684, %v5011
  %v5155 = vadd.f32 %v4685, %v5014
  %v5156 = vadd.f32 %v4686, %v5017
  %v5157 = vadd.f32 %v4687, %v5020
  %v5158 = vadd.f32 %v4688, %v5023
  %v5159 = vadd.f32 %v4689, %v5026
  %v5160 = vadd.f32 %v4690, %v5029
  %v5161 = vadd.f32 %v4691, %v5032
  %v5162 = vadd.f32 %v4692, %v5035
  %v5163 = vadd.f32 %v4693, %v5038
  %v5164 = vadd.f32 %v4694, %v5041
  %v5165 = vadd.f32 %v4695, %v5044
  %v5166 = vadd.f32 %v4696, %v5047
  %v5167 = vadd.f32 %v4697, %v5050
  %v5168 = vadd.f32 %v4698, %v5053
  %v5169 = vadd.f32 %v4699, %v5056
  %v5170 = vadd.f32 %v4700, %v5059
  %v5171 = vadd.f32 %v4701, %v5062
  %v5172 = vadd.f32 %v4702, %v5065
  %v5173 = vadd.f32 %v4703, %v5068
  %v5174 = vadd.f32 %v4704, %v5071
  %v5175 = vadd.f32 %v4705, %v5074
  %v5176 = vadd.f32 %v4706, %v5077
  %v5177 = vadd.f32 %v4707, %v5080
  %v5178 = vadd.f32 %v4708, %v5083
  %v5179 = vadd.f32 %v4709, %v5086
  %v5180 = vadd.f32 %v4710, %v5089
  %v5181 = vadd.f32 %v4711, %v5092
  %v5182 = vadd.f32 %v4712, %v5095
  %v5183 = vadd.f32 %v4713, %v5098
  %v5184 = vadd.f32 %v4714, %v5101
  %v5185 = vadd.f32 %v4715, %v5104
  %v5186 = vadd.f32 %v4716, %v5107
  %v5187 = vadd.f32 %v4717, %v5110
  %v5188 = vadd.f32 %v4718, %v5113
  %v5189 = vadd.f32 %v4719, %v5116
  %v5190 = vadd.f32 %v4720, %v5119
  %v5191 = vadd.f32 %v4721, %v5122
  %v5192 = vadd.f32 %v4722, %v5125
  %v5193 = vadd.f32 %v4723, %v5128
  %5194 = vst [vmem:[%s3] sm:$0xff] %v5130
  %5195 = vst [vmem:[%s3 + $0x8] sm:$0xff] %v5131
  %5196 = vst [vmem:[%s3 + $0x10] sm:$0xff] %v5132
  %5197 = vst [vmem:[%s3 + $0x18] sm:$0xff] %v5133
  %5198 = vst [vmem:[%s3 + $0x20] sm:$0xff] %v5134
  %5199 = vst [vmem:[%s3 + $0x28] sm:$0xff] %v5135
  %5200 = vst [vmem:[%s3 + $0x30] sm:$0xff] %v5136
  %5201 = vst [vmem:[%s3 + $0x38] sm:$0xff] %v5137
  %5202 = vst [vmem:[%s3 + $0x40] sm:$0xff] %v5138
  %5203 = vst [vmem:[%s3 + $0x48] sm:$0xff] %v5139
  %5204 = vst [vmem:[%s3 + $0x50] sm:$0xff] %v5140
  %5205 = vst [vmem:[%s3 + $0x58] sm:$0xff] %v5141
  %5206 = vst [vmem:[%s3 + $0x60] sm:$0xff] %v5142
  %5207 = vst [vmem:[%s3 + $0x68] sm:$0xff] %v5143
  %5208 = vst [vmem:[%s3 + $0x70] sm:$0xff] %v5144
  %5209 = vst [vmem:[%s3 + $0x78] sm:$0xff] %v5145
  %5210 = vst [vmem:[%s3 + $0x80] sm:$0xff] %v5146
  %5211 = vst [vmem:[%s3 + $0x88] sm:$0xff] %v5147
  %5212 = vst [vmem:[%s3 + $0x90] sm:$0xff] %v5148
  %5213 = vst [vmem:[%s3 + $0x98] sm:$0xff] %v5149
  %5214 = vst [vmem:[%s3 + $0xa0] sm:$0xff] %v5150
  %5215 = vst [vmem:[%s3 + $0xa8] sm:$0xff] %v5151
  %5216 = vst [vmem:[%s3 + $0xb0] sm:$0xff] %v5152
  %5217 = vst [vmem:[%s3 + $0xb8] sm:$0xff] %v5153
  %5218 = vst [vmem:[%s3 + $0xc0] sm:$0xff] %v5154
  %5219 = vst [vmem:[%s3 + $0xc8] sm:$0xff] %v5155
  %5220 = vst [vmem:[%s3 + $0xd0] sm:$0xff] %v5156
  %5221 = vst [vmem:[%s3 + $0xd8] sm:$0xff] %v5157
  %5222 = vst [vmem:[%s3 + $0xe0] sm:$0xff] %v5158
  %5223 = vst [vmem:[%s3 + $0xe8] sm:$0xff] %v5159
  %5224 = vst [vmem:[%s3 + $0xf0] sm:$0xff] %v5160
  %5225 = vst [vmem:[%s3 + $0xf8] sm:$0xff] %v5161
  %5226 = vst [vmem:[%s3 + $0x100] sm:$0xff] %v5162
  %5227 = vst [vmem:[%s3 + $0x108] sm:$0xff] %v5163
  %5228 = vst [vmem:[%s3 + $0x110] sm:$0xff] %v5164
  %5229 = vst [vmem:[%s3 + $0x118] sm:$0xff] %v5165
  %5230 = vst [vmem:[%s3 + $0x120] sm:$0xff] %v5166
  %5231 = vst [vmem:[%s3 + $0x128] sm:$0xff] %v5167
  %5232 = vst [vmem:[%s3 + $0x130] sm:$0xff] %v5168
  %5233 = vst [vmem:[%s3 + $0x138] sm:$0xff] %v5169
  %5234 = vst [vmem:[%s3 + $0x140] sm:$0xff] %v5170
  %5235 = vst [vmem:[%s3 + $0x148] sm:$0xff] %v5171
  %5236 = vst [vmem:[%s3 + $0x150] sm:$0xff] %v5172
  %5237 = vst [vmem:[%s3 + $0x158] sm:$0xff] %v5173
  %5238 = vst [vmem:[%s3 + $0x160] sm:$0xff] %v5174
  %5239 = vst [vmem:[%s3 + $0x168] sm:$0xff] %v5175
  %5240 = vst [vmem:[%s3 + $0x170] sm:$0xff] %v5176
  %5241 = vst [vmem:[%s3 + $0x178] sm:$0xff] %v5177
  %5242 = vst [vmem:[%s3 + $0x180] sm:$0xff] %v5178
  %5243 = vst [vmem:[%s3 + $0x188] sm:$0xff] %v5179
  %5244 = vst [vmem:[%s3 + $0x190] sm:$0xff] %v5180
  %5245 = vst [vmem:[%s3 + $0x198] sm:$0xff] %v5181
  %5246 = vst [vmem:[%s3 + $0x1a0] sm:$0xff] %v5182
  %5247 = vst [vmem:[%s3 + $0x1a8] sm:$0xff] %v5183
  %5248 = vst [vmem:[%s3 + $0x1b0] sm:$0xff] %v5184
  %5249 = vst [vmem:[%s3 + $0x1b8] sm:$0xff] %v5185
  %5250 = vst [vmem:[%s3 + $0x1c0] sm:$0xff] %v5186
  %5251 = vst [vmem:[%s3 + $0x1c8] sm:$0xff] %v5187
  %5252 = vst [vmem:[%s3 + $0x1d0] sm:$0xff] %v5188
  %5253 = vst [vmem:[%s3 + $0x1d8] sm:$0xff] %v5189
  %5254 = vst [vmem:[%s3 + $0x1e0] sm:$0xff] %v5190
  %5255 = vst [vmem:[%s3 + $0x1e8] sm:$0xff] %v5191
  %5256 = vst [vmem:[%s3 + $0x1f0] sm:$0xff] %v5192
  %5257 = vst [vmem:[%s3 + $0x1f8] sm:$0xff] %v5193
  %s5258 = scalar_lea.vmem %s0, 128
  %v5259 = vld [vmem:[%s5258] sm:$0xff]
  %v5260 = vld [vmem:[%s5258 + $0x8] sm:$0xff]
  %v5261 = vld [vmem:[%s5258 + $0x10] sm:$0xff]
  %v5262 = vld [vmem:[%s5258 + $0x18] sm:$0xff]
  %v5263 = vld [vmem:[%s5258 + $0x20] sm:$0xff]
  %v5264 = vld [vmem:[%s5258 + $0x28] sm:$0xff]
  %v5265 = vld [vmem:[%s5258 + $0x30] sm:$0xff]
  %v5266 = vld [vmem:[%s5258 + $0x38] sm:$0xff]
  %v5267 = vld [vmem:[%s5258 + $0x40] sm:$0xff]
  %v5268 = vld [vmem:[%s5258 + $0x48] sm:$0xff]
  %v5269 = vld [vmem:[%s5258 + $0x50] sm:$0xff]
  %v5270 = vld [vmem:[%s5258 + $0x58] sm:$0xff]
  %v5271 = vld [vmem:[%s5258 + $0x60] sm:$0xff]
  %v5272 = vld [vmem:[%s5258 + $0x68] sm:$0xff]
  %v5273 = vld [vmem:[%s5258 + $0x70] sm:$0xff]
  %v5274 = vld [vmem:[%s5258 + $0x78] sm:$0xff]
  %v5275 = vld [vmem:[%s5258 + $0x80] sm:$0xff]
  %v5276 = vld [vmem:[%s5258 + $0x88] sm:$0xff]
  %v5277 = vld [vmem:[%s5258 + $0x90] sm:$0xff]
  %v5278 = vld [vmem:[%s5258 + $0x98] sm:$0xff]
  %v5279 = vld [vmem:[%s5258 + $0xa0] sm:$0xff]
  %v5280 = vld [vmem:[%s5258 + $0xa8] sm:$0xff]
  %v5281 = vld [vmem:[%s5258 + $0xb0] sm:$0xff]
  %v5282 = vld [vmem:[%s5258 + $0xb8] sm:$0xff]
  %v5283 = vld [vmem:[%s5258 + $0xc0] sm:$0xff]
  %v5284 = vld [vmem:[%s5258 + $0xc8] sm:$0xff]
  %v5285 = vld [vmem:[%s5258 + $0xd0] sm:$0xff]
  %v5286 = vld [vmem:[%s5258 + $0xd8] sm:$0xff]
  %v5287 = vld [vmem:[%s5258 + $0xe0] sm:$0xff]
  %v5288 = vld [vmem:[%s5258 + $0xe8] sm:$0xff]
  %v5289 = vld [vmem:[%s5258 + $0xf0] sm:$0xff]
  %v5290 = vld [vmem:[%s5258 + $0xf8] sm:$0xff]
  %v5291 = vld [vmem:[%s5258 + $0x180] sm:$0xff]
  %v5292 = vld [vmem:[%s5258 + $0x188] sm:$0xff]
  %v5293 = vld [vmem:[%s5258 + $0x190] sm:$0xff]
  %v5294 = vld [vmem:[%s5258 + $0x198] sm:$0xff]
  %v5295 = vld [vmem:[%s5258 + $0x1a0] sm:$0xff]
  %v5296 = vld [vmem:[%s5258 + $0x1a8] sm:$0xff]
  %v5297 = vld [vmem:[%s5258 + $0x1b0] sm:$0xff]
  %v5298 = vld [vmem:[%s5258 + $0x1b8] sm:$0xff]
  %v5299 = vld [vmem:[%s5258 + $0x1c0] sm:$0xff]
  %v5300 = vld [vmem:[%s5258 + $0x1c8] sm:$0xff]
  %v5301 = vld [vmem:[%s5258 + $0x1d0] sm:$0xff]
  %v5302 = vld [vmem:[%s5258 + $0x1d8] sm:$0xff]
  %v5303 = vld [vmem:[%s5258 + $0x1e0] sm:$0xff]
  %v5304 = vld [vmem:[%s5258 + $0x1e8] sm:$0xff]
  %v5305 = vld [vmem:[%s5258 + $0x1f0] sm:$0xff]
  %v5306 = vld [vmem:[%s5258 + $0x1f8] sm:$0xff]
  %v5307 = vld [vmem:[%s5258 + $0x200] sm:$0xff]
  %v5308 = vld [vmem:[%s5258 + $0x208] sm:$0xff]
  %v5309 = vld [vmem:[%s5258 + $0x210] sm:$0xff]
  %v5310 = vld [vmem:[%s5258 + $0x218] sm:$0xff]
  %v5311 = vld [vmem:[%s5258 + $0x220] sm:$0xff]
  %v5312 = vld [vmem:[%s5258 + $0x228] sm:$0xff]
  %v5313 = vld [vmem:[%s5258 + $0x230] sm:$0xff]
  %v5314 = vld [vmem:[%s5258 + $0x238] sm:$0xff]
  %v5315 = vld [vmem:[%s5258 + $0x240] sm:$0xff]
  %v5316 = vld [vmem:[%s5258 + $0x248] sm:$0xff]
  %v5317 = vld [vmem:[%s5258 + $0x250] sm:$0xff]
  %v5318 = vld [vmem:[%s5258 + $0x258] sm:$0xff]
  %v5319 = vld [vmem:[%s5258 + $0x260] sm:$0xff]
  %v5320 = vld [vmem:[%s5258 + $0x268] sm:$0xff]
  %v5321 = vld [vmem:[%s5258 + $0x270] sm:$0xff]
  %v5322 = vld [vmem:[%s5258 + $0x278] sm:$0xff]
  %v5323 = vld [vmem:[%s3] sm:$0xff]
  %v5324 = vld [vmem:[%s3 + $0x8] sm:$0xff]
  %v5325 = vld [vmem:[%s3 + $0x10] sm:$0xff]
  %v5326 = vld [vmem:[%s3 + $0x18] sm:$0xff]
  %v5327 = vld [vmem:[%s3 + $0x20] sm:$0xff]
  %v5328 = vld [vmem:[%s3 + $0x28] sm:$0xff]
  %v5329 = vld [vmem:[%s3 + $0x30] sm:$0xff]
  %v5330 = vld [vmem:[%s3 + $0x38] sm:$0xff]
  %v5331 = vld [vmem:[%s3 + $0x40] sm:$0xff]
  %v5332 = vld [vmem:[%s3 + $0x48] sm:$0xff]
  %v5333 = vld [vmem:[%s3 + $0x50] sm:$0xff]
  %v5334 = vld [vmem:[%s3 + $0x58] sm:$0xff]
  %v5335 = vld [vmem:[%s3 + $0x60] sm:$0xff]
  %v5336 = vld [vmem:[%s3 + $0x68] sm:$0xff]
  %v5337 = vld [vmem:[%s3 + $0x70] sm:$0xff]
  %v5338 = vld [vmem:[%s3 + $0x78] sm:$0xff]
  %v5339 = vld [vmem:[%s3 + $0x80] sm:$0xff]
  %v5340 = vld [vmem:[%s3 + $0x88] sm:$0xff]
  %v5341 = vld [vmem:[%s3 + $0x90] sm:$0xff]
  %v5342 = vld [vmem:[%s3 + $0x98] sm:$0xff]
  %v5343 = vld [vmem:[%s3 + $0xa0] sm:$0xff]
  %v5344 = vld [vmem:[%s3 + $0xa8] sm:$0xff]
  %v5345 = vld [vmem:[%s3 + $0xb0] sm:$0xff]
  %v5346 = vld [vmem:[%s3 + $0xb8] sm:$0xff]
  %v5347 = vld [vmem:[%s3 + $0xc0] sm:$0xff]
  %v5348 = vld [vmem:[%s3 + $0xc8] sm:$0xff]
  %v5349 = vld [vmem:[%s3 + $0xd0] sm:$0xff]
  %v5350 = vld [vmem:[%s3 + $0xd8] sm:$0xff]
  %v5351 = vld [vmem:[%s3 + $0xe0] sm:$0xff]
  %v5352 = vld [vmem:[%s3 + $0xe8] sm:$0xff]
  %v5353 = vld [vmem:[%s3 + $0xf0] sm:$0xff]
  %v5354 = vld [vmem:[%s3 + $0xf8] sm:$0xff]
  %v5355 = vld [vmem:[%s3 + $0x100] sm:$0xff]
  %v5356 = vld [vmem:[%s3 + $0x108] sm:$0xff]
  %v5357 = vld [vmem:[%s3 + $0x110] sm:$0xff]
  %v5358 = vld [vmem:[%s3 + $0x118] sm:$0xff]
  %v5359 = vld [vmem:[%s3 + $0x120] sm:$0xff]
  %v5360 = vld [vmem:[%s3 + $0x128] sm:$0xff]
  %v5361 = vld [vmem:[%s3 + $0x130] sm:$0xff]
  %v5362 = vld [vmem:[%s3 + $0x138] sm:$0xff]
  %v5363 = vld [vmem:[%s3 + $0x140] sm:$0xff]
  %v5364 = vld [vmem:[%s3 + $0x148] sm:$0xff]
  %v5365 = vld [vmem:[%s3 + $0x150] sm:$0xff]
  %v5366 = vld [vmem:[%s3 + $0x158] sm:$0xff]
  %v5367 = vld [vmem:[%s3 + $0x160] sm:$0xff]
  %v5368 = vld [vmem:[%s3 + $0x168] sm:$0xff]
  %v5369 = vld [vmem:[%s3 + $0x170] sm:$0xff]
  %v5370 = vld [vmem:[%s3 + $0x178] sm:$0xff]
  %v5371 = vld [vmem:[%s3 + $0x180] sm:$0xff]
  %v5372 = vld [vmem:[%s3 + $0x188] sm:$0xff]
  %v5373 = vld [vmem:[%s3 + $0x190] sm:$0xff]
  %v5374 = vld [vmem:[%s3 + $0x198] sm:$0xff]
  %v5375 = vld [vmem:[%s3 + $0x1a0] sm:$0xff]
  %v5376 = vld [vmem:[%s3 + $0x1a8] sm:$0xff]
  %v5377 = vld [vmem:[%s3 + $0x1b0] sm:$0xff]
  %v5378 = vld [vmem:[%s3 + $0x1b8] sm:$0xff]
  %v5379 = vld [vmem:[%s3 + $0x1c0] sm:$0xff]
  %v5380 = vld [vmem:[%s3 + $0x1c8] sm:$0xff]
  %v5381 = vld [vmem:[%s3 + $0x1d0] sm:$0xff]
  %v5382 = vld [vmem:[%s3 + $0x1d8] sm:$0xff]
  %v5383 = vld [vmem:[%s3 + $0x1e0] sm:$0xff]
  %v5384 = vld [vmem:[%s3 + $0x1e8] sm:$0xff]
  %v5385 = vld [vmem:[%s3 + $0x1f0] sm:$0xff]
  %v5386 = vld [vmem:[%s3 + $0x1f8] sm:$0xff]
  %s5387 = scalar_lea.vmem %s1, 32
  %v5388 = vld [vmem:[%s5387] sm:$0xf]
  %v5390 = vsel %vm83, %v5259, 0
  %v5393 = vsel %vm83, %v5260, 0
  %v5396 = vsel %vm83, %v5261, 0
  %v5399 = vsel %vm83, %v5262, 0
  %v5402 = vsel %vm83, %v5263, 0
  %v5405 = vsel %vm83, %v5264, 0
  %v5408 = vsel %vm83, %v5265, 0
  %v5411 = vsel %vm83, %v5266, 0
  %v5414 = vsel %vm83, %v5267, 0
  %v5417 = vsel %vm83, %v5268, 0
  %v5420 = vsel %vm83, %v5269, 0
  %v5423 = vsel %vm83, %v5270, 0
  %v5426 = vsel %vm83, %v5271, 0
  %v5429 = vsel %vm83, %v5272, 0
  %v5432 = vsel %vm83, %v5273, 0
  %v5435 = vsel %vm83, %v5274, 0
  %v5438 = vsel %vm83, %v5275, 0
  %v5441 = vsel %vm83, %v5276, 0
  %v5444 = vsel %vm83, %v5277, 0
  %v5447 = vsel %vm83, %v5278, 0
  %v5450 = vsel %vm83, %v5279, 0
  %v5453 = vsel %vm83, %v5280, 0
  %v5456 = vsel %vm83, %v5281, 0
  %v5459 = vsel %vm83, %v5282, 0
  %v5462 = vsel %vm83, %v5283, 0
  %v5465 = vsel %vm83, %v5284, 0
  %v5468 = vsel %vm83, %v5285, 0
  %v5471 = vsel %vm83, %v5286, 0
  %v5474 = vsel %vm83, %v5287, 0
  %v5477 = vsel %vm83, %v5288, 0
  %v5480 = vsel %vm83, %v5289, 0
  %v5483 = vsel %vm83, %v5290, 0
  %v5486 = vsel %vm83, %v5291, 0
  %v5489 = vsel %vm83, %v5292, 0
  %v5492 = vsel %vm83, %v5293, 0
  %v5495 = vsel %vm83, %v5294, 0
  %v5498 = vsel %vm83, %v5295, 0
  %v5501 = vsel %vm83, %v5296, 0
  %v5504 = vsel %vm83, %v5297, 0
  %v5507 = vsel %vm83, %v5298, 0
  %v5510 = vsel %vm83, %v5299, 0
  %v5513 = vsel %vm83, %v5300, 0
  %v5516 = vsel %vm83, %v5301, 0
  %v5519 = vsel %vm83, %v5302, 0
  %v5522 = vsel %vm83, %v5303, 0
  %v5525 = vsel %vm83, %v5304, 0
  %v5528 = vsel %vm83, %v5305, 0
  %v5531 = vsel %vm83, %v5306, 0
  %v5534 = vsel %vm83, %v5307, 0
  %v5537 = vsel %vm83, %v5308, 0
  %v5540 = vsel %vm83, %v5309, 0
  %v5543 = vsel %vm83, %v5310, 0
  %v5546 = vsel %vm83, %v5311, 0
  %v5549 = vsel %vm83, %v5312, 0
  %v5552 = vsel %vm83, %v5313, 0
  %v5555 = vsel %vm83, %v5314, 0
  %v5558 = vsel %vm83, %v5315, 0
  %v5561 = vsel %vm83, %v5316, 0
  %v5564 = vsel %vm83, %v5317, 0
  %v5567 = vsel %vm83, %v5318, 0
  %v5570 = vsel %vm83, %v5319, 0
  %v5573 = vsel %vm83, %v5320, 0
  %v5576 = vsel %vm83, %v5321, 0
  %v5579 = vsel %vm83, %v5322, 0
  %v5582 = vsel %vm276, %v5388, 0
  %5584 = vmatpush.msra.mxu0 0.0
  %5585 = vmatpush.msra.mxu0 0.0
  %5586 = vmatpush.msra.mxu0 0.0
  %5587 = vmatpush.msra.mxu0 0.0
  %5588 = vmatpush.msra.mxu0 0.0
  %5589 = vmatpush.msra.mxu0 0.0
  %5590 = vmatpush.msra.mxu0 0.0
  %5591 = vmatpush.msra.mxu0 0.0
  %5592 = vmatpush.msra.mxu0 0.0
  %5593 = vmatpush.msra.mxu0 0.0
  %5594 = vmatpush.msra.mxu0 0.0
  %5595 = vmatpush.msra.mxu0 0.0
  %5596 = vmatpush.msra.mxu0 0.0
  %5597 = vmatpush.msra.mxu0 0.0
  %5598 = vmatpush.msra.mxu0 0.0
  %5599 = vmatpush.msra.mxu0 %v5582
  %5600 = vmatmul.f32.gmra.mxu0 %v5390
  %v5601 = vpop.f32.mrf.mxu0
  %v5602 = vadd.f32 0.0, %v5601
  %5603 = vmatmul.f32.gmra.mxu0 %v5393
  %v5604 = vpop.f32.mrf.mxu0
  %v5605 = vadd.f32 0.0, %v5604
  %5606 = vmatmul.f32.gmra.mxu0 %v5396
  %v5607 = vpop.f32.mrf.mxu0
  %v5608 = vadd.f32 0.0, %v5607
  %5609 = vmatmul.f32.gmra.mxu0 %v5399
  %v5610 = vpop.f32.mrf.mxu0
  %v5611 = vadd.f32 0.0, %v5610
  %5612 = vmatmul.f32.gmra.mxu0 %v5402
  %v5613 = vpop.f32.mrf.mxu0
  %v5614 = vadd.f32 0.0, %v5613
  %5615 = vmatmul.f32.gmra.mxu0 %v5405
  %v5616 = vpop.f32.mrf.mxu0
  %v5617 = vadd.f32 0.0, %v5616
  %5618 = vmatmul.f32.gmra.mxu0 %v5408
  %v5619 = vpop.f32.mrf.mxu0
  %v5620 = vadd.f32 0.0, %v5619
  %5621 = vmatmul.f32.gmra.mxu0 %v5411
  %v5622 = vpop.f32.mrf.mxu0
  %v5623 = vadd.f32 0.0, %v5622
  %5624 = vmatmul.f32.gmra.mxu0 %v5414
  %v5625 = vpop.f32.mrf.mxu0
  %v5626 = vadd.f32 0.0, %v5625
  %5627 = vmatmul.f32.gmra.mxu0 %v5417
  %v5628 = vpop.f32.mrf.mxu0
  %v5629 = vadd.f32 0.0, %v5628
  %5630 = vmatmul.f32.gmra.mxu0 %v5420
  %v5631 = vpop.f32.mrf.mxu0
  %v5632 = vadd.f32 0.0, %v5631
  %5633 = vmatmul.f32.gmra.mxu0 %v5423
  %v5634 = vpop.f32.mrf.mxu0
  %v5635 = vadd.f32 0.0, %v5634
  %5636 = vmatmul.f32.gmra.mxu0 %v5426
  %v5637 = vpop.f32.mrf.mxu0
  %v5638 = vadd.f32 0.0, %v5637
  %5639 = vmatmul.f32.gmra.mxu0 %v5429
  %v5640 = vpop.f32.mrf.mxu0
  %v5641 = vadd.f32 0.0, %v5640
  %5642 = vmatmul.f32.gmra.mxu0 %v5432
  %v5643 = vpop.f32.mrf.mxu0
  %v5644 = vadd.f32 0.0, %v5643
  %5645 = vmatmul.f32.gmra.mxu0 %v5435
  %v5646 = vpop.f32.mrf.mxu0
  %v5647 = vadd.f32 0.0, %v5646
  %5648 = vmatmul.f32.gmra.mxu0 %v5438
  %v5649 = vpop.f32.mrf.mxu0
  %v5650 = vadd.f32 0.0, %v5649
  %5651 = vmatmul.f32.gmra.mxu0 %v5441
  %v5652 = vpop.f32.mrf.mxu0
  %v5653 = vadd.f32 0.0, %v5652
  %5654 = vmatmul.f32.gmra.mxu0 %v5444
  %v5655 = vpop.f32.mrf.mxu0
  %v5656 = vadd.f32 0.0, %v5655
  %5657 = vmatmul.f32.gmra.mxu0 %v5447
  %v5658 = vpop.f32.mrf.mxu0
  %v5659 = vadd.f32 0.0, %v5658
  %5660 = vmatmul.f32.gmra.mxu0 %v5450
  %v5661 = vpop.f32.mrf.mxu0
  %v5662 = vadd.f32 0.0, %v5661
  %5663 = vmatmul.f32.gmra.mxu0 %v5453
  %v5664 = vpop.f32.mrf.mxu0
  %v5665 = vadd.f32 0.0, %v5664
  %5666 = vmatmul.f32.gmra.mxu0 %v5456
  %v5667 = vpop.f32.mrf.mxu0
  %v5668 = vadd.f32 0.0, %v5667
  %5669 = vmatmul.f32.gmra.mxu0 %v5459
  %v5670 = vpop.f32.mrf.mxu0
  %v5671 = vadd.f32 0.0, %v5670
  %5672 = vmatmul.f32.gmra.mxu0 %v5462
  %v5673 = vpop.f32.mrf.mxu0
  %v5674 = vadd.f32 0.0, %v5673
  %5675 = vmatmul.f32.gmra.mxu0 %v5465
  %v5676 = vpop.f32.mrf.mxu0
  %v5677 = vadd.f32 0.0, %v5676
  %5678 = vmatmul.f32.gmra.mxu0 %v5468
  %v5679 = vpop.f32.mrf.mxu0
  %v5680 = vadd.f32 0.0, %v5679
  %5681 = vmatmul.f32.gmra.mxu0 %v5471
  %v5682 = vpop.f32.mrf.mxu0
  %v5683 = vadd.f32 0.0, %v5682
  %5684 = vmatmul.f32.gmra.mxu0 %v5474
  %v5685 = vpop.f32.mrf.mxu0
  %v5686 = vadd.f32 0.0, %v5685
  %5687 = vmatmul.f32.gmra.mxu0 %v5477
  %v5688 = vpop.f32.mrf.mxu0
  %v5689 = vadd.f32 0.0, %v5688
  %5690 = vmatmul.f32.gmra.mxu0 %v5480
  %v5691 = vpop.f32.mrf.mxu0
  %v5692 = vadd.f32 0.0, %v5691
  %5693 = vmatmul.f32.gmra.mxu0 %v5483
  %v5694 = vpop.f32.mrf.mxu0
  %v5695 = vadd.f32 0.0, %v5694
  %5696 = vmatmul.f32.gmra.mxu0 %v5486
  %v5697 = vpop.f32.mrf.mxu0
  %v5698 = vadd.f32 0.0, %v5697
  %5699 = vmatmul.f32.gmra.mxu0 %v5489
  %v5700 = vpop.f32.mrf.mxu0
  %v5701 = vadd.f32 0.0, %v5700
  %5702 = vmatmul.f32.gmra.mxu0 %v5492
  %v5703 = vpop.f32.mrf.mxu0
  %v5704 = vadd.f32 0.0, %v5703
  %5705 = vmatmul.f32.gmra.mxu0 %v5495
  %v5706 = vpop.f32.mrf.mxu0
  %v5707 = vadd.f32 0.0, %v5706
  %5708 = vmatmul.f32.gmra.mxu0 %v5498
  %v5709 = vpop.f32.mrf.mxu0
  %v5710 = vadd.f32 0.0, %v5709
  %5711 = vmatmul.f32.gmra.mxu0 %v5501
  %v5712 = vpop.f32.mrf.mxu0
  %v5713 = vadd.f32 0.0, %v5712
  %5714 = vmatmul.f32.gmra.mxu0 %v5504
  %v5715 = vpop.f32.mrf.mxu0
  %v5716 = vadd.f32 0.0, %v5715
  %5717 = vmatmul.f32.gmra.mxu0 %v5507
  %v5718 = vpop.f32.mrf.mxu0
  %v5719 = vadd.f32 0.0, %v5718
  %5720 = vmatmul.f32.gmra.mxu0 %v5510
  %v5721 = vpop.f32.mrf.mxu0
  %v5722 = vadd.f32 0.0, %v5721
  %5723 = vmatmul.f32.gmra.mxu0 %v5513
  %v5724 = vpop.f32.mrf.mxu0
  %v5725 = vadd.f32 0.0, %v5724
  %5726 = vmatmul.f32.gmra.mxu0 %v5516
  %v5727 = vpop.f32.mrf.mxu0
  %v5728 = vadd.f32 0.0, %v5727
  %5729 = vmatmul.f32.gmra.mxu0 %v5519
  %v5730 = vpop.f32.mrf.mxu0
  %v5731 = vadd.f32 0.0, %v5730
  %5732 = vmatmul.f32.gmra.mxu0 %v5522
  %v5733 = vpop.f32.mrf.mxu0
  %v5734 = vadd.f32 0.0, %v5733
  %5735 = vmatmul.f32.gmra.mxu0 %v5525
  %v5736 = vpop.f32.mrf.mxu0
  %v5737 = vadd.f32 0.0, %v5736
  %5738 = vmatmul.f32.gmra.mxu0 %v5528
  %v5739 = vpop.f32.mrf.mxu0
  %v5740 = vadd.f32 0.0, %v5739
  %5741 = vmatmul.f32.gmra.mxu0 %v5531
  %v5742 = vpop.f32.mrf.mxu0
  %v5743 = vadd.f32 0.0, %v5742
  %5744 = vmatmul.f32.gmra.mxu0 %v5534
  %v5745 = vpop.f32.mrf.mxu0
  %v5746 = vadd.f32 0.0, %v5745
  %5747 = vmatmul.f32.gmra.mxu0 %v5537
  %v5748 = vpop.f32.mrf.mxu0
  %v5749 = vadd.f32 0.0, %v5748
  %5750 = vmatmul.f32.gmra.mxu0 %v5540
  %v5751 = vpop.f32.mrf.mxu0
  %v5752 = vadd.f32 0.0, %v5751
  %5753 = vmatmul.f32.gmra.mxu0 %v5543
  %v5754 = vpop.f32.mrf.mxu0
  %v5755 = vadd.f32 0.0, %v5754
  %5756 = vmatmul.f32.gmra.mxu0 %v5546
  %v5757 = vpop.f32.mrf.mxu0
  %v5758 = vadd.f32 0.0, %v5757
  %5759 = vmatmul.f32.gmra.mxu0 %v5549
  %v5760 = vpop.f32.mrf.mxu0
  %v5761 = vadd.f32 0.0, %v5760
  %5762 = vmatmul.f32.gmra.mxu0 %v5552
  %v5763 = vpop.f32.mrf.mxu0
  %v5764 = vadd.f32 0.0, %v5763
  %5765 = vmatmul.f32.gmra.mxu0 %v5555
  %v5766 = vpop.f32.mrf.mxu0
  %v5767 = vadd.f32 0.0, %v5766
  %5768 = vmatmul.f32.gmra.mxu0 %v5558
  %v5769 = vpop.f32.mrf.mxu0
  %v5770 = vadd.f32 0.0, %v5769
  %5771 = vmatmul.f32.gmra.mxu0 %v5561
  %v5772 = vpop.f32.mrf.mxu0
  %v5773 = vadd.f32 0.0, %v5772
  %5774 = vmatmul.f32.gmra.mxu0 %v5564
  %v5775 = vpop.f32.mrf.mxu0
  %v5776 = vadd.f32 0.0, %v5775
  %5777 = vmatmul.f32.gmra.mxu0 %v5567
  %v5778 = vpop.f32.mrf.mxu0
  %v5779 = vadd.f32 0.0, %v5778
  %5780 = vmatmul.f32.gmra.mxu0 %v5570
  %v5781 = vpop.f32.mrf.mxu0
  %v5782 = vadd.f32 0.0, %v5781
  %5783 = vmatmul.f32.gmra.mxu0 %v5573
  %v5784 = vpop.f32.mrf.mxu0
  %v5785 = vadd.f32 0.0, %v5784
  %5786 = vmatmul.f32.gmra.mxu0 %v5576
  %v5787 = vpop.f32.mrf.mxu0
  %v5788 = vadd.f32 0.0, %v5787
  %5789 = vmatmul.f32.gmra.mxu0 %v5579
  %v5790 = vpop.f32.mrf.mxu0
  %v5791 = vadd.f32 0.0, %v5790
  %5792 = vdwg.mxu0
  %v5793 = vadd.f32 %v5323, %v5602
  %v5794 = vadd.f32 %v5324, %v5605
  %v5795 = vadd.f32 %v5325, %v5608
  %v5796 = vadd.f32 %v5326, %v5611
  %v5797 = vadd.f32 %v5327, %v5614
  %v5798 = vadd.f32 %v5328, %v5617
  %v5799 = vadd.f32 %v5329, %v5620
  %v5800 = vadd.f32 %v5330, %v5623
  %v5801 = vadd.f32 %v5331, %v5626
  %v5802 = vadd.f32 %v5332, %v5629
  %v5803 = vadd.f32 %v5333, %v5632
  %v5804 = vadd.f32 %v5334, %v5635
  %v5805 = vadd.f32 %v5335, %v5638
  %v5806 = vadd.f32 %v5336, %v5641
  %v5807 = vadd.f32 %v5337, %v5644
  %v5808 = vadd.f32 %v5338, %v5647
  %v5809 = vadd.f32 %v5339, %v5650
  %v5810 = vadd.f32 %v5340, %v5653
  %v5811 = vadd.f32 %v5341, %v5656
  %v5812 = vadd.f32 %v5342, %v5659
  %v5813 = vadd.f32 %v5343, %v5662
  %v5814 = vadd.f32 %v5344, %v5665
  %v5815 = vadd.f32 %v5345, %v5668
  %v5816 = vadd.f32 %v5346, %v5671
  %v5817 = vadd.f32 %v5347, %v5674
  %v5818 = vadd.f32 %v5348, %v5677
  %v5819 = vadd.f32 %v5349, %v5680
  %v5820 = vadd.f32 %v5350, %v5683
  %v5821 = vadd.f32 %v5351, %v5686
  %v5822 = vadd.f32 %v5352, %v5689
  %v5823 = vadd.f32 %v5353, %v5692
  %v5824 = vadd.f32 %v5354, %v5695
  %v5825 = vadd.f32 %v5355, %v5698
  %v5826 = vadd.f32 %v5356, %v5701
  %v5827 = vadd.f32 %v5357, %v5704
  %v5828 = vadd.f32 %v5358, %v5707
  %v5829 = vadd.f32 %v5359, %v5710
  %v5830 = vadd.f32 %v5360, %v5713
  %v5831 = vadd.f32 %v5361, %v5716
  %v5832 = vadd.f32 %v5362, %v5719
  %v5833 = vadd.f32 %v5363, %v5722
  %v5834 = vadd.f32 %v5364, %v5725
  %v5835 = vadd.f32 %v5365, %v5728
  %v5836 = vadd.f32 %v5366, %v5731
  %v5837 = vadd.f32 %v5367, %v5734
  %v5838 = vadd.f32 %v5368, %v5737
  %v5839 = vadd.f32 %v5369, %v5740
  %v5840 = vadd.f32 %v5370, %v5743
  %v5841 = vadd.f32 %v5371, %v5746
  %v5842 = vadd.f32 %v5372, %v5749
  %v5843 = vadd.f32 %v5373, %v5752
  %v5844 = vadd.f32 %v5374, %v5755
  %v5845 = vadd.f32 %v5375, %v5758
  %v5846 = vadd.f32 %v5376, %v5761
  %v5847 = vadd.f32 %v5377, %v5764
  %v5848 = vadd.f32 %v5378, %v5767
  %v5849 = vadd.f32 %v5379, %v5770
  %v5850 = vadd.f32 %v5380, %v5773
  %v5851 = vadd.f32 %v5381, %v5776
  %v5852 = vadd.f32 %v5382, %v5779
  %v5853 = vadd.f32 %v5383, %v5782
  %v5854 = vadd.f32 %v5384, %v5785
  %v5855 = vadd.f32 %v5385, %v5788
  %v5856 = vadd.f32 %v5386, %v5791
  %5857 = vst [vmem:[%s3] sm:$0xff] %v5793
  %5858 = vst [vmem:[%s3 + $0x8] sm:$0xff] %v5794
  %5859 = vst [vmem:[%s3 + $0x10] sm:$0xff] %v5795
  %5860 = vst [vmem:[%s3 + $0x18] sm:$0xff] %v5796
  %5861 = vst [vmem:[%s3 + $0x20] sm:$0xff] %v5797
  %5862 = vst [vmem:[%s3 + $0x28] sm:$0xff] %v5798
  %5863 = vst [vmem:[%s3 + $0x30] sm:$0xff] %v5799
  %5864 = vst [vmem:[%s3 + $0x38] sm:$0xff] %v5800
  %5865 = vst [vmem:[%s3 + $0x40] sm:$0xff] %v5801
  %5866 = vst [vmem:[%s3 + $0x48] sm:$0xff] %v5802
  %5867 = vst [vmem:[%s3 + $0x50] sm:$0xff] %v5803
  %5868 = vst [vmem:[%s3 + $0x58] sm:$0xff] %v5804
  %5869 = vst [vmem:[%s3 + $0x60] sm:$0xff] %v5805
  %5870 = vst [vmem:[%s3 + $0x68] sm:$0xff] %v5806
  %5871 = vst [vmem:[%s3 + $0x70] sm:$0xff] %v5807
  %5872 = vst [vmem:[%s3 + $0x78] sm:$0xff] %v5808
  %5873 = vst [vmem:[%s3 + $0x80] sm:$0xff] %v5809
  %5874 = vst [vmem:[%s3 + $0x88] sm:$0xff] %v5810
  %5875 = vst [vmem:[%s3 + $0x90] sm:$0xff] %v5811
  %5876 = vst [vmem:[%s3 + $0x98] sm:$0xff] %v5812
  %5877 = vst [vmem:[%s3 + $0xa0] sm:$0xff] %v5813
  %5878 = vst [vmem:[%s3 + $0xa8] sm:$0xff] %v5814
  %5879 = vst [vmem:[%s3 + $0xb0] sm:$0xff] %v5815
  %5880 = vst [vmem:[%s3 + $0xb8] sm:$0xff] %v5816
  %5881 = vst [vmem:[%s3 + $0xc0] sm:$0xff] %v5817
  %5882 = vst [vmem:[%s3 + $0xc8] sm:$0xff] %v5818
  %5883 = vst [vmem:[%s3 + $0xd0] sm:$0xff] %v5819
  %5884 = vst [vmem:[%s3 + $0xd8] sm:$0xff] %v5820
  %5885 = vst [vmem:[%s3 + $0xe0] sm:$0xff] %v5821
  %5886 = vst [vmem:[%s3 + $0xe8] sm:$0xff] %v5822
  %5887 = vst [vmem:[%s3 + $0xf0] sm:$0xff] %v5823
  %5888 = vst [vmem:[%s3 + $0xf8] sm:$0xff] %v5824
  %5889 = vst [vmem:[%s3 + $0x100] sm:$0xff] %v5825
  %5890 = vst [vmem:[%s3 + $0x108] sm:$0xff] %v5826
  %5891 = vst [vmem:[%s3 + $0x110] sm:$0xff] %v5827
  %5892 = vst [vmem:[%s3 + $0x118] sm:$0xff] %v5828
  %5893 = vst [vmem:[%s3 + $0x120] sm:$0xff] %v5829
  %5894 = vst [vmem:[%s3 + $0x128] sm:$0xff] %v5830
  %5895 = vst [vmem:[%s3 + $0x130] sm:$0xff] %v5831
  %5896 = vst [vmem:[%s3 + $0x138] sm:$0xff] %v5832
  %5897 = vst [vmem:[%s3 + $0x140] sm:$0xff] %v5833
  %5898 = vst [vmem:[%s3 + $0x148] sm:$0xff] %v5834
  %5899 = vst [vmem:[%s3 + $0x150] sm:$0xff] %v5835
  %5900 = vst [vmem:[%s3 + $0x158] sm:$0xff] %v5836
  %5901 = vst [vmem:[%s3 + $0x160] sm:$0xff] %v5837
  %5902 = vst [vmem:[%s3 + $0x168] sm:$0xff] %v5838
  %5903 = vst [vmem:[%s3 + $0x170] sm:$0xff] %v5839
  %5904 = vst [vmem:[%s3 + $0x178] sm:$0xff] %v5840
  %5905 = vst [vmem:[%s3 + $0x180] sm:$0xff] %v5841
  %5906 = vst [vmem:[%s3 + $0x188] sm:$0xff] %v5842
  %5907 = vst [vmem:[%s3 + $0x190] sm:$0xff] %v5843
  %5908 = vst [vmem:[%s3 + $0x198] sm:$0xff] %v5844
  %5909 = vst [vmem:[%s3 + $0x1a0] sm:$0xff] %v5845
  %5910 = vst [vmem:[%s3 + $0x1a8] sm:$0xff] %v5846
  %5911 = vst [vmem:[%s3 + $0x1b0] sm:$0xff] %v5847
  %5912 = vst [vmem:[%s3 + $0x1b8] sm:$0xff] %v5848
  %5913 = vst [vmem:[%s3 + $0x1c0] sm:$0xff] %v5849
  %5914 = vst [vmem:[%s3 + $0x1c8] sm:$0xff] %v5850
  %5915 = vst [vmem:[%s3 + $0x1d0] sm:$0xff] %v5851
  %5916 = vst [vmem:[%s3 + $0x1d8] sm:$0xff] %v5852
  %5917 = vst [vmem:[%s3 + $0x1e0] sm:$0xff] %v5853
  %5918 = vst [vmem:[%s3 + $0x1e8] sm:$0xff] %v5854
  %5919 = vst [vmem:[%s3 + $0x1f0] sm:$0xff] %v5855
  %5920 = vst [vmem:[%s3 + $0x1f8] sm:$0xff] %v5856
  // Predicated region
  $region14: #{t_lsu_forward.3} parent=0 // pred_check
    _
  $region15: #{t_lsu_forward.3} parent=0 // pred_check_branch
    %5922 = sbr.rel (0) target = $region17
  $region16: #{t_lsu_forward.3} parent=0 // pred_region
    _
  $region17: #{t_lsu_forward.3} parent=0 // pred_fallthru
    _
  // Predicated region
  $region18: #{t_lsu_forward.3} parent=0 // pred_check
    _
  $region19: #{t_lsu_forward.3} parent=0 // pred_check_branch
    %5924 = sbr.rel (0) target = $region21
  $region20: #{t_lsu_forward.3} parent=0 // pred_region
    _
  $region21: #{t_lsu_forward.3} parent=0 // pred_fallthru
    _

</llo_original>
